<compile_context>
chip_gen: v5e
topology: v5e:2x2
jax: 0.10.0
libtpu: 0.0.40
codegen_flags: <defaults>
</compile_context>

<pallas_src>
import functools

import jax
import jax.numpy as jnp
from jax import lax
from jax.experimental import pallas as pl
from jax.experimental.pallas import tpu as pltpu


# ----------------------------------------------------------------------------
# Fused dual-path kernel: BiLSTM + Linear + GroupNorm + residual
# ----------------------------------------------------------------------------
def _dp_path_kernel(xcat_ref, wih_ref, whh_ref, bg_ref, pw_ref, pb_ref,
                    gam_ref, bet_ref, gmask_ref, out_ref, gx_scr, cat_scr,
                    *, Bg, P, T, H, N, eps):
    """One dual-path branch for Bg batch elements folded into the LSTM rows.

    Row order everywhere is time-major: row = t*(Bg*P) + b*P + p.

    xcat_ref : [T*Bg*P, 2N] f32  lanes = [x_t | x_{T-1-t}]  (host-prepared)
    wih_ref  : [2N, 8H] bf16     packed input->gate weights, interleaved cols
    whh_ref  : [2H, 8H] bf16     packed recurrent weights, same column layout
    bg_ref   : [1, 8H]  f32      b_ih + b_hh, both directions
    pw_ref   : [2H+N, N] bf16    Linear weight^T, input order [h_f | h_b | x]
    pb_ref   : [1, N]   f32
    gam/bet  : [1, N]   f32      GroupNorm affine
    gmask_ref: [T*Bg*P, Bg] f32  one-hot row -> batch-element membership
    out_ref  : [T*Bg*P, N] f32   GN(Linear(cat(lstm, x))) + x
    gx_scr   : [T*Bg*P, 8H] f32  hoisted input projection (+ gate bias)
    cat_scr  : [T*Bg*P, 2H+N] f32 sequence-aligned [h_f | h_b | x]
    """
    Pbig = Bg * P
    rows = T * Pbig
    HH = 2 * H

    # (1) hoisted input projection: ONE matmul for all time steps, bias folded.
    gx_scr[...] = jnp.dot(xcat_ref[...].astype(jnp.bfloat16), wih_ref[...],
                          preferred_element_type=jnp.float32) + bg_ref[...]

    # x (lanes [0:N] of xcat) goes straight into the Linear cat buffer.
    cat_scr[:, HH:HH + N] = xcat_ref[:, 0:N]

    # (2) bidirectional LSTM recurrence.  Per step: one small MXU matmul
    # h @ Whh, 2 wide EUP pushes (sigmoid+tanh on all 8H lanes, g-lanes
    # selected by a hoisted mask), a handful of VALU ops.  fwd/bwd share every
    # op via the interleaved gate layout.
    whh = whh_ref[...]
    lane = lax.broadcasted_iota(jnp.int32, (Pbig, 8 * H), 1)
    g_lane = (lane >= 4 * H) & (lane < 6 * H)          # g-gate lanes -> tanh
    h = jnp.zeros((Pbig, HH), jnp.float32)             # [h_f | h_b]
    c = jnp.zeros((Pbig, HH), jnp.float32)             # [c_f | c_b]
    # TODO(synk): switch to lax.fori_loop(..., unroll=k) with h/c carries if
    # T (= K or R) grows past ~16; at T <= 10 static unroll is cheaper.
    for t in range(T):
        r0 = t * Pbig
        rb = (T - 1 - t) * Pbig
        gates = jnp.dot(h.astype(jnp.bfloat16), whh,
                        preferred_element_type=jnp.float32) \
            + gx_scr[r0:r0 + Pbig, :]
        act = jnp.where(g_lane, jnp.tanh(gates), jax.nn.sigmoid(gates))
        i_g = act[:, 0 * HH:1 * HH]
        f_g = act[:, 1 * HH:2 * HH]
        g_g = act[:, 2 * HH:3 * HH]
        o_g = act[:, 3 * HH:4 * HH]
        c = f_g * c + i_g * g_g
        h = o_g * jnp.tanh(c)
        # sequence-time aligned history (no post-loop flip needed):
        cat_scr[r0:r0 + Pbig, 0:H] = h[:, 0:H]         # fwd hidden @ time t
        cat_scr[rb:rb + Pbig, H:HH] = h[:, H:HH]       # bwd hidden @ time T-1-t

    # (3) fused Linear over ALL rows: one matmul.
    p_all = jnp.dot(cat_scr[...].astype(jnp.bfloat16), pw_ref[...],
                    preferred_element_type=jnp.float32) + pb_ref[...]

    # (4) GroupNorm(1 group) per original batch element: two-pass centered
    # statistics (no E[x^2]-E[x]^2 cancellation).
    cnt = float(T * P * N)
    shift = jnp.zeros((rows, 1), jnp.float32)
    for b in range(Bg):
        m = gmask_ref[:, b:b + 1]
        shift = shift + m * (jnp.sum(p_all * m) / cnt)
    d = p_all - shift
    d2 = d * d
    scale = jnp.zeros((rows, 1), jnp.float32)
    for b in range(Bg):
        m = gmask_ref[:, b:b + 1]
        scale = scale + m * lax.rsqrt(jnp.sum(d2 * m) / cnt + eps)

    # (5) normalize + affine + residual; single full-slab store.
    out_ref[...] = d * scale * gam_ref[...] + bet_ref[...] + xcat_ref[:, 0:N]


def dp_path(xcat, gmask, pp, *, G, Bg, P, T, H, N):
    """One SepBlock path.  xcat: [G*T*Bg*P, 2N] -> out: [G*T*Bg*P, N]."""
    rows = T * Bg * P
    kernel = functools.partial(_dp_path_kernel, Bg=Bg, P=P, T=T, H=H, N=N,
                               eps=1e-8)
    return pl.pallas_call(
        kernel,
        out_shape=jax.ShapeDtypeStruct((G * rows, N), jnp.float32),
        grid=(G,),
        in_specs=[
            pl.BlockSpec((rows, 2 * N), lambda g: (g, 0)),       # xcat
            pl.BlockSpec((2 * N, 8 * H), lambda g: (0, 0)),      # Wih packed
            pl.BlockSpec((2 * H, 8 * H), lambda g: (0, 0)),      # Whh packed
            pl.BlockSpec((1, 8 * H), lambda g: (0, 0)),          # gate bias
            pl.BlockSpec((2 * H + N, N), lambda g: (0, 0)),      # Linear W^T
            pl.BlockSpec((1, N), lambda g: (0, 0)),              # Linear b
            pl.BlockSpec((1, N), lambda g: (0, 0)),              # GN gamma
            pl.BlockSpec((1, N), lambda g: (0, 0)),              # GN beta
            pl.BlockSpec((rows, Bg), lambda g: (0, 0)),          # group mask
        ],
        out_specs=pl.BlockSpec((rows, N), lambda g: (g, 0)),
        scratch_shapes=[
            pltpu.VMEM((rows, 8 * H), jnp.float32),              # gx
            pltpu.VMEM((rows, 2 * H + N), jnp.float32),          # [h_f|h_b|x]
        ],
        compiler_params=pltpu.CompilerParams(
            dimension_semantics=("parallel",)),
    )(xcat, pp["wih"], pp["whh"], pp["bg"], pp["pw"], pp["pb"],
      pp["gamma"], pp["beta"], gmask)


# ----------------------------------------------------------------------------
# Host-side layout helpers and SepBlock forward
# ----------------------------------------------------------------------------
def _group_mask(T, Bg, P):
    rows = T * Bg * P
    bid = (jnp.arange(rows) // P) % Bg
    return jax.nn.one_hot(bid, Bg, dtype=jnp.float32)


def sep_block(x, params, *, groups=1):
    """x: [B, N, K, R] -> [B, N, K, R], matching SepBlock.forward
    (MulCat=False, bidirectional=True)."""
    B, N, K, R = x.shape
    G = groups
    assert B % G == 0
    Bg = B // G
    H1 = params["path1"]["whh"].shape[0] // 2
    H2 = params["path2"]["whh"].shape[0] // 2

    # path 1: intra-chunk (time = K, LSTM rows = (b, r))
    x5 = jnp.transpose(x.reshape(G, Bg, N, K, R), (0, 3, 1, 4, 2))  # [G,K,Bg,R,N]
    xcat1 = jnp.concatenate([x5, jnp.flip(x5, axis=1)],
                            axis=-1).reshape(G * K * Bg * R, 2 * N)
    t1 = dp_path(xcat1, _group_mask(K, Bg, R), params["path1"],
                 G=G, Bg=Bg, P=R, T=K, H=H1, N=N)       # rows (g, k, b, r)

    # path 2: inter-chunk (time = R, LSTM rows = (b, k))
    t5 = jnp.transpose(t1.reshape(G, K, Bg, R, N), (0, 3, 2, 1, 4))  # [G,R,Bg,K,N]
    xcat2 = jnp.concatenate([t5, jnp.flip(t5, axis=1)],
                            axis=-1).reshape(G * R * Bg * K, 2 * N)
    o2 = dp_path(xcat2, _group_mask(R, Bg, K), params["path2"],
                 G=G, Bg=Bg, P=K, T=R, H=H2, N=N)       # rows (g, r, b, k)

    y5 = jnp.transpose(o2.reshape(G, R, Bg, K, N), (0, 2, 4, 3, 1))  # [G,Bg,N,K,R]
    return y5.reshape(B, N, K, R)


# ----------------------------------------------------------------------------
# Deterministic parameter construction (PyTorch layouts, packed for the kernel)
# ----------------------------------------------------------------------------
def _uniform(key, shape, scale):
    return jax.random.uniform(key, shape, jnp.float32, -scale, scale)


def _pack_gate_cols(w_f_t, w_b_t, H):
    """[in_f+in_b, 8H] with interleaved columns [i_f i_b | f_f f_b | g_f g_b |
    o_f o_b]; zero blocks keep fwd-input rows driving only fwd columns."""
    in_f, in_b = w_f_t.shape[0], w_b_t.shape[0]
    zf = jnp.zeros((in_f, H), jnp.float32)
    zb = jnp.zeros((in_b, H), jnp.float32)
    cols = []
    for q in range(4):                                   # PyTorch order i,f,g,o
        cols.append(jnp.concatenate([w_f_t[:, q * H:(q + 1) * H], zb], axis=0))
        cols.append(jnp.concatenate([zf, w_b_t[:, q * H:(q + 1) * H]], axis=0))
    return jnp.concatenate(cols, axis=1)


def _pack_gate_bias(b_f, b_b, H):
    segs = []
    for q in range(4):
        segs.append(b_f[q * H:(q + 1) * H])
        segs.append(b_b[q * H:(q + 1) * H])
    return jnp.concatenate(segs).reshape(1, 8 * H)


def make_path_params(key, N, H):
    ks = jax.random.split(key, 10)
    s = 1.0 / (H ** 0.5)
    w_ih_f = _uniform(ks[0], (4 * H, N), s)
    w_hh_f = _uniform(ks[1], (4 * H, H), s)
    b_f = _uniform(ks[2], (4 * H,), s) + _uniform(ks[3], (4 * H,), s)
    w_ih_b = _uniform(ks[4], (4 * H, N), s)
    w_hh_b = _uniform(ks[5], (4 * H, H), s)
    b_b = _uniform(ks[6], (4 * H,), s) + _uniform(ks[7], (4 * H,), s)
    sp = 1.0 / ((2 * H + N) ** 0.5)
    p_w = _uniform(ks[8], (N, 2 * H + N), sp)            # nn.Linear [out, in]
    p_b = _uniform(ks[9], (N,), sp)

    return dict(
        wih=_pack_gate_cols(w_ih_f.T, w_ih_b.T, H).astype(jnp.bfloat16),
        whh=_pack_gate_cols(w_hh_f.T, w_hh_b.T, H).astype(jnp.bfloat16),
        bg=_pack_gate_bias(b_f, b_b, H).astype(jnp.float32),
        pw=jnp.transpose(p_w).astype(jnp.bfloat16),       # [2H+N, N]
        pb=p_b.reshape(1, N).astype(jnp.float32),
        gamma=jnp.ones((1, N), jnp.float32),              # GroupNorm weight=1
        beta=jnp.zeros((1, N), jnp.float32),              # GroupNorm bias=0
    )


# ----------------------------------------------------------------------------
# Main
# ----------------------------------------------------------------------------
if __name__ == "__main__":
    # SepBlock(out_channels=16, hidden_channels=16, num_speakers=2,
    #          bidirectional=True, MulCat=False) on input [B, N, K, R]
    B, N, K, R, H = 2, 16, 8, 10, 16
    key = jax.random.PRNGKey(0)
    k1, k2, kx = jax.random.split(key, 3)
    params = dict(path1=make_path_params(k1, N, H),
                  path2=make_path_params(k2, N, H))
    x = jax.random.normal(kx, (B, N, K, R), jnp.float32)

    fwd = jax.jit(functools.partial(sep_block, groups=1))
    out = jax.block_until_ready(fwd(x, params))

    assert out.shape == (B, N, K, R), out.shape
    assert bool(jnp.all(jnp.isfinite(out)))
    print("KERNEL_OK")
</pallas_src>

<mosaic_0001>
module attributes {stable_mosaic.version = 11 : i64} {
  func.func @_dp_path_kernel(%arg0: i32, %arg1: memref<160x32xf32, #tpu.memory_space<vmem>>, %arg2: memref<32x128xbf16, #tpu.memory_space<vmem>>, %arg3: memref<32x128xbf16, #tpu.memory_space<vmem>>, %arg4: memref<1x128xf32, #tpu.memory_space<vmem>>, %arg5: memref<48x16xbf16, #tpu.memory_space<vmem>>, %arg6: memref<1x16xf32, #tpu.memory_space<vmem>>, %arg7: memref<1x16xf32, #tpu.memory_space<vmem>>, %arg8: memref<1x16xf32, #tpu.memory_space<vmem>>, %arg9: memref<160x2xf32, #tpu.memory_space<vmem>>, %arg10: memref<160x16xf32, #tpu.memory_space<vmem>>, %arg11: memref<160x128xf32, #tpu.memory_space<vmem>>, %arg12: memref<160x48xf32, #tpu.memory_space<vmem>>) attributes {dimension_semantics = [#tpu.dimension_semantics<parallel>], iteration_bounds = array<i64: 1>, scalar_prefetch = 0 : i64, scratch_operands = 2 : i64, tpu.core_type = #tpu.core_type<tc>, window_params = [{transform_indices = @transform_0, window_bounds = array<i64: 160, 32>}, {pipeline_mode = #tpu.pipeline_mode<synchronous>, transform_indices = @transform_1, window_bounds = array<i64: 32, 128>}, {pipeline_mode = #tpu.pipeline_mode<synchronous>, transform_indices = @transform_2, window_bounds = array<i64: 32, 128>}, {pipeline_mode = #tpu.pipeline_mode<synchronous>, transform_indices = @transform_3, window_bounds = array<i64: 1, 128>}, {pipeline_mode = #tpu.pipeline_mode<synchronous>, transform_indices = @transform_4, window_bounds = array<i64: 48, 16>}, {pipeline_mode = #tpu.pipeline_mode<synchronous>, transform_indices = @transform_5, window_bounds = array<i64: 1, 16>}, {pipeline_mode = #tpu.pipeline_mode<synchronous>, transform_indices = @transform_6, window_bounds = array<i64: 1, 16>}, {pipeline_mode = #tpu.pipeline_mode<synchronous>, transform_indices = @transform_7, window_bounds = array<i64: 1, 16>}, {pipeline_mode = #tpu.pipeline_mode<synchronous>, transform_indices = @transform_8, window_bounds = array<i64: 160, 2>}, {transform_indices = @transform_9, window_bounds = array<i64: 160, 16>}]} {
    %c0 = arith.constant 0 : index
    %c0_0 = arith.constant 0 : index
    %0 = vector.load %arg1[%c0, %c0_0] : memref<160x32xf32, #tpu.memory_space<vmem>>, vector<160x32xf32>
    %1 = arith.truncf %0 : vector<160x32xf32> to vector<160x32xbf16>
    %c0_1 = arith.constant 0 : index
    %c0_2 = arith.constant 0 : index
    %2 = vector.load %arg2[%c0_1, %c0_2] : memref<32x128xbf16, #tpu.memory_space<vmem>>, vector<32x128xbf16>
    %cst = arith.constant dense<0.000000e+00> : vector<160x128xf32>
    %3 = tpu.matmul %1, %2, %cst {dimension_numbers = #tpu.dot_dimension_numbers<[1], [0], [0], [1], [0, 0, 1, 1], [], []>} : vector<160x32xbf16>, vector<32x128xbf16>, vector<160x128xf32> -> vector<160x128xf32>
    %c0_3 = arith.constant 0 : index
    %c0_4 = arith.constant 0 : index
    %4 = vector.load %arg4[%c0_3, %c0_4] : memref<1x128xf32, #tpu.memory_space<vmem>>, vector<1x128xf32>
    %5 = vector.broadcast %4 : vector<1x128xf32> to vector<160x128xf32>
    %6 = arith.addf %3, %5 : vector<160x128xf32>
    %c0_5 = arith.constant 0 : index
    %c0_6 = arith.constant 0 : index
    %7 = vector.load %arg11[%c0_5, %c0_6] : memref<160x128xf32, #tpu.memory_space<vmem>>, vector<160x128xf32>
    tpu.vector_store %arg11[%c0_5, %c0_6], %6 {strides = array<i32>} : memref<160x128xf32, #tpu.memory_space<vmem>>, vector<160x128xf32>,
    %c0_7 = arith.constant 0 : index
    %c0_8 = arith.constant 0 : index
    %8 = vector.load %arg1[%c0_7, %c0_8] : memref<160x32xf32, #tpu.memory_space<vmem>>, vector<160x16xf32>
    %c0_9 = arith.constant 0 : index
    %c32 = arith.constant 32 : index
    %9 = vector.load %arg12[%c0_9, %c32] : memref<160x48xf32, #tpu.memory_space<vmem>>, vector<160x16xf32>
    tpu.vector_store %arg12[%c0_9, %c32], %8 {strides = array<i32>} : memref<160x48xf32, #tpu.memory_space<vmem>>, vector<160x16xf32>,
    %c0_10 = arith.constant 0 : index
    %c0_11 = arith.constant 0 : index
    %10 = vector.load %arg3[%c0_10, %c0_11] : memref<32x128xbf16, #tpu.memory_space<vmem>>, vector<32x128xbf16>
    %11 = tpu.iota {dimensions = array<i32: 1>} : vector<20x128xi32>
    %c64_i32 = arith.constant 64 : i32
    %12 = vector.broadcast %c64_i32 : i32 to vector<20x128xi32>
    %13 = arith.cmpi sge, %11, %12 : vector<20x128xi32>
    %c96_i32 = arith.constant 96 : i32
    %14 = vector.broadcast %c96_i32 : i32 to vector<20x128xi32>
    %15 = arith.cmpi slt, %11, %14 : vector<20x128xi32>
    %16 = arith.andi %13, %15 : vector<20x128xi1>
    %cst_12 = arith.constant 0.000000e+00 : f32
    %17 = vector.broadcast %cst_12 : f32 to vector<20x32xf32>
    %cst_13 = arith.constant 0.000000e+00 : f32
    %18 = vector.broadcast %cst_13 : f32 to vector<20x32xf32>
    %19 = arith.truncf %17 : vector<20x32xf32> to vector<20x32xbf16>
    %cst_14 = arith.constant dense<0.000000e+00> : vector<20x128xf32>
    %20 = tpu.matmul %19, %10, %cst_14 {dimension_numbers = #tpu.dot_dimension_numbers<[1], [0], [0], [1], [0, 0, 1, 1], [], []>} : vector<20x32xbf16>, vector<32x128xbf16>, vector<20x128xf32> -> vector<20x128xf32>
    %c0_15 = arith.constant 0 : index
    %c0_16 = arith.constant 0 : index
    %21 = vector.load %arg11[%c0_15, %c0_16] : memref<160x128xf32, #tpu.memory_space<vmem>>, vector<20x128xf32>
    %22 = arith.addf %20, %21 : vector<20x128xf32>
    %23 = math.tanh %22 : vector<20x128xf32>
    %24 = arith.negf %22 : vector<20x128xf32>
    %25 = math.exp %24 : vector<20x128xf32>
    %cst_17 = arith.constant 1.000000e+00 : f32
    %26 = vector.broadcast %cst_17 : f32 to vector<20x128xf32>
    %27 = arith.addf %26, %25 : vector<20x128xf32>
    %28 = arith.divf %26, %27 : vector<20x128xf32>
    %29 = arith.select %16, %23, %28 : vector<20x128xi1>, vector<20x128xf32>
    %30 = vector.extract_strided_slice %29 {offsets = [0, 0], sizes = [20, 32], strides = [1, 1]} : vector<20x128xf32> to vector<20x32xf32>
    %31 = vector.extract_strided_slice %29 {offsets = [0, 32], sizes = [20, 32], strides = [1, 1]} : vector<20x128xf32> to vector<20x32xf32>
    %32 = vector.extract_strided_slice %29 {offsets = [0, 64], sizes = [20, 32], strides = [1, 1]} : vector<20x128xf32> to vector<20x32xf32>
    %33 = vector.extract_strided_slice %29 {offsets = [0, 96], sizes = [20, 32], strides = [1, 1]} : vector<20x128xf32> to vector<20x32xf32>
    %34 = arith.mulf %31, %18 : vector<20x32xf32>
    %35 = arith.mulf %30, %32 : vector<20x32xf32>
    %36 = arith.addf %34, %35 : vector<20x32xf32>
    %37 = math.tanh %36 : vector<20x32xf32>
    %38 = arith.mulf %33, %37 : vector<20x32xf32>
    %39 = vector.extract_strided_slice %38 {offsets = [0, 0], sizes = [20, 16], strides = [1, 1]} : vector<20x32xf32> to vector<20x16xf32>
    %c0_18 = arith.constant 0 : index
    %c0_19 = arith.constant 0 : index
    %40 = vector.load %arg12[%c0_18, %c0_19] : memref<160x48xf32, #tpu.memory_space<vmem>>, vector<20x16xf32>
    tpu.vector_store %arg12[%c0_18, %c0_19], %39 {strides = array<i32>} : memref<160x48xf32, #tpu.memory_space<vmem>>, vector<20x16xf32>,
    %41 = vector.extract_strided_slice %38 {offsets = [0, 16], sizes = [20, 16], strides = [1, 1]} : vector<20x32xf32> to vector<20x16xf32>
    %c140 = arith.constant 140 : index
    %c16 = arith.constant 16 : index
    %42 = vector.load %arg12[%c140, %c16] : memref<160x48xf32, #tpu.memory_space<vmem>>, vector<20x16xf32>
    tpu.vector_store %arg12[%c140, %c16], %41 {strides = array<i32>} : memref<160x48xf32, #tpu.memory_space<vmem>>, vector<20x16xf32>,
    %43 = arith.truncf %38 : vector<20x32xf32> to vector<20x32xbf16>
    %cst_20 = arith.constant dense<0.000000e+00> : vector<20x128xf32>
    %44 = tpu.matmul %43, %10, %cst_20 {dimension_numbers = #tpu.dot_dimension_numbers<[1], [0], [0], [1], [0, 0, 1, 1], [], []>} : vector<20x32xbf16>, vector<32x128xbf16>, vector<20x128xf32> -> vector<20x128xf32>
    %c20 = arith.constant 20 : index
    %c0_21 = arith.constant 0 : index
    %45 = vector.load %arg11[%c20, %c0_21] : memref<160x128xf32, #tpu.memory_space<vmem>>, vector<20x128xf32>
    %46 = arith.addf %44, %45 : vector<20x128xf32>
    %47 = math.tanh %46 : vector<20x128xf32>
    %48 = arith.negf %46 : vector<20x128xf32>
    %49 = math.exp %48 : vector<20x128xf32>
    %cst_22 = arith.constant 1.000000e+00 : f32
    %50 = vector.broadcast %cst_22 : f32 to vector<20x128xf32>
    %51 = arith.addf %50, %49 : vector<20x128xf32>
    %52 = arith.divf %50, %51 : vector<20x128xf32>
    %53 = arith.select %16, %47, %52 : vector<20x128xi1>, vector<20x128xf32>
    %54 = vector.extract_strided_slice %53 {offsets = [0, 0], sizes = [20, 32], strides = [1, 1]} : vector<20x128xf32> to vector<20x32xf32>
    %55 = vector.extract_strided_slice %53 {offsets = [0, 32], sizes = [20, 32], strides = [1, 1]} : vector<20x128xf32> to vector<20x32xf32>
    %56 = vector.extract_strided_slice %53 {offsets = [0, 64], sizes = [20, 32], strides = [1, 1]} : vector<20x128xf32> to vector<20x32xf32>
    %57 = vector.extract_strided_slice %53 {offsets = [0, 96], sizes = [20, 32], strides = [1, 1]} : vector<20x128xf32> to vector<20x32xf32>
    %58 = arith.mulf %55, %36 : vector<20x32xf32>
    %59 = arith.mulf %54, %56 : vector<20x32xf32>
    %60 = arith.addf %58, %59 : vector<20x32xf32>
    %61 = math.tanh %60 : vector<20x32xf32>
    %62 = arith.mulf %57, %61 : vector<20x32xf32>
    %63 = vector.extract_strided_slice %62 {offsets = [0, 0], sizes = [20, 16], strides = [1, 1]} : vector<20x32xf32> to vector<20x16xf32>
    %c20_23 = arith.constant 20 : index
    %c0_24 = arith.constant 0 : index
    %64 = vector.load %arg12[%c20_23, %c0_24] : memref<160x48xf32, #tpu.memory_space<vmem>>, vector<20x16xf32>
    tpu.vector_store %arg12[%c20_23, %c0_24], %63 {strides = array<i32>} : memref<160x48xf32, #tpu.memory_space<vmem>>, vector<20x16xf32>,
    %65 = vector.extract_strided_slice %62 {offsets = [0, 16], sizes = [20, 16], strides = [1, 1]} : vector<20x32xf32> to vector<20x16xf32>
    %c120 = arith.constant 120 : index
    %c16_25 = arith.constant 16 : index
    %66 = vector.load %arg12[%c120, %c16_25] : memref<160x48xf32, #tpu.memory_space<vmem>>, vector<20x16xf32>
    tpu.vector_store %arg12[%c120, %c16_25], %65 {strides = array<i32>} : memref<160x48xf32, #tpu.memory_space<vmem>>, vector<20x16xf32>,
    %67 = arith.truncf %62 : vector<20x32xf32> to vector<20x32xbf16>
    %cst_26 = arith.constant dense<0.000000e+00> : vector<20x128xf32>
    %68 = tpu.matmul %67, %10, %cst_26 {dimension_numbers = #tpu.dot_dimension_numbers<[1], [0], [0], [1], [0, 0, 1, 1], [], []>} : vector<20x32xbf16>, vector<32x128xbf16>, vector<20x128xf32> -> vector<20x128xf32>
    %c40 = arith.constant 40 : index
    %c0_27 = arith.constant 0 : index
    %69 = vector.load %arg11[%c40, %c0_27] : memref<160x128xf32, #tpu.memory_space<vmem>>, vector<20x128xf32>
    %70 = arith.addf %68, %69 : vector<20x128xf32>
    %71 = math.tanh %70 : vector<20x128xf32>
    %72 = arith.negf %70 : vector<20x128xf32>
    %73 = math.exp %72 : vector<20x128xf32>
    %cst_28 = arith.constant 1.000000e+00 : f32
    %74 = vector.broadcast %cst_28 : f32 to vector<20x128xf32>
    %75 = arith.addf %74, %73 : vector<20x128xf32>
    %76 = arith.divf %74, %75 : vector<20x128xf32>
    %77 = arith.select %16, %71, %76 : vector<20x128xi1>, vector<20x128xf32>
    %78 = vector.extract_strided_slice %77 {offsets = [0, 0], sizes = [20, 32], strides = [1, 1]} : vector<20x128xf32> to vector<20x32xf32>
    %79 = vector.extract_strided_slice %77 {offsets = [0, 32], sizes = [20, 32], strides = [1, 1]} : vector<20x128xf32> to vector<20x32xf32>
    %80 = vector.extract_strided_slice %77 {offsets = [0, 64], sizes = [20, 32], strides = [1, 1]} : vector<20x128xf32> to vector<20x32xf32>
    %81 = vector.extract_strided_slice %77 {offsets = [0, 96], sizes = [20, 32], strides = [1, 1]} : vector<20x128xf32> to vector<20x32xf32>
    %82 = arith.mulf %79, %60 : vector<20x32xf32>
    %83 = arith.mulf %78, %80 : vector<20x32xf32>
    %84 = arith.addf %82, %83 : vector<20x32xf32>
    %85 = math.tanh %84 : vector<20x32xf32>
    %86 = arith.mulf %81, %85 : vector<20x32xf32>
    %87 = vector.extract_strided_slice %86 {offsets = [0, 0], sizes = [20, 16], strides = [1, 1]} : vector<20x32xf32> to vector<20x16xf32>
    %c40_29 = arith.constant 40 : index
    %c0_30 = arith.constant 0 : index
    %88 = vector.load %arg12[%c40_29, %c0_30] : memref<160x48xf32, #tpu.memory_space<vmem>>, vector<20x16xf32>
    tpu.vector_store %arg12[%c40_29, %c0_30], %87 {strides = array<i32>} : memref<160x48xf32, #tpu.memory_space<vmem>>, vector<20x16xf32>,
    %89 = vector.extract_strided_slice %86 {offsets = [0, 16], sizes = [20, 16], strides = [1, 1]} : vector<20x32xf32> to vector<20x16xf32>
    %c100 = arith.constant 100 : index
    %c16_31 = arith.constant 16 : index
    %90 = vector.load %arg12[%c100, %c16_31] : memref<160x48xf32, #tpu.memory_space<vmem>>, vector<20x16xf32>
    tpu.vector_store %arg12[%c100, %c16_31], %89 {strides = array<i32>} : memref<160x48xf32, #tpu.memory_space<vmem>>, vector<20x16xf32>,
    %91 = arith.truncf %86 : vector<20x32xf32> to vector<20x32xbf16>
    %cst_32 = arith.constant dense<0.000000e+00> : vector<20x128xf32>
    %92 = tpu.matmul %91, %10, %cst_32 {dimension_numbers = #tpu.dot_dimension_numbers<[1], [0], [0], [1], [0, 0, 1, 1], [], []>} : vector<20x32xbf16>, vector<32x128xbf16>, vector<20x128xf32> -> vector<20x128xf32>
    %c60 = arith.constant 60 : index
    %c0_33 = arith.constant 0 : index
    %93 = vector.load %arg11[%c60, %c0_33] : memref<160x128xf32, #tpu.memory_space<vmem>>, vector<20x128xf32>
    %94 = arith.addf %92, %93 : vector<20x128xf32>
    %95 = math.tanh %94 : vector<20x128xf32>
    %96 = arith.negf %94 : vector<20x128xf32>
    %97 = math.exp %96 : vector<20x128xf32>
    %cst_34 = arith.constant 1.000000e+00 : f32
    %98 = vector.broadcast %cst_34 : f32 to vector<20x128xf32>
    %99 = arith.addf %98, %97 : vector<20x128xf32>
    %100 = arith.divf %98, %99 : vector<20x128xf32>
    %101 = arith.select %16, %95, %100 : vector<20x128xi1>, vector<20x128xf32>
    %102 = vector.extract_strided_slice %101 {offsets = [0, 0], sizes = [20, 32], strides = [1, 1]} : vector<20x128xf32> to vector<20x32xf32>
    %103 = vector.extract_strided_slice %101 {offsets = [0, 32], sizes = [20, 32], strides = [1, 1]} : vector<20x128xf32> to vector<20x32xf32>
    %104 = vector.extract_strided_slice %101 {offsets = [0, 64], sizes = [20, 32], strides = [1, 1]} : vector<20x128xf32> to vector<20x32xf32>
    %105 = vector.extract_strided_slice %101 {offsets = [0, 96], sizes = [20, 32], strides = [1, 1]} : vector<20x128xf32> to vector<20x32xf32>
    %106 = arith.mulf %103, %84 : vector<20x32xf32>
    %107 = arith.mulf %102, %104 : vector<20x32xf32>
    %108 = arith.addf %106, %107 : vector<20x32xf32>
    %109 = math.tanh %108 : vector<20x32xf32>
    %110 = arith.mulf %105, %109 : vector<20x32xf32>
    %111 = vector.extract_strided_slice %110 {offsets = [0, 0], sizes = [20, 16], strides = [1, 1]} : vector<20x32xf32> to vector<20x16xf32>
    %c60_35 = arith.constant 60 : index
    %c0_36 = arith.constant 0 : index
    %112 = vector.load %arg12[%c60_35, %c0_36] : memref<160x48xf32, #tpu.memory_space<vmem>>, vector<20x16xf32>
    tpu.vector_store %arg12[%c60_35, %c0_36], %111 {strides = array<i32>} : memref<160x48xf32, #tpu.memory_space<vmem>>, vector<20x16xf32>,
    %113 = vector.extract_strided_slice %110 {offsets = [0, 16], sizes = [20, 16], strides = [1, 1]} : vector<20x32xf32> to vector<20x16xf32>
    %c80 = arith.constant 80 : index
    %c16_37 = arith.constant 16 : index
    %114 = vector.load %arg12[%c80, %c16_37] : memref<160x48xf32, #tpu.memory_space<vmem>>, vector<20x16xf32>
    tpu.vector_store %arg12[%c80, %c16_37], %113 {strides = array<i32>} : memref<160x48xf32, #tpu.memory_space<vmem>>, vector<20x16xf32>,
    %115 = arith.truncf %110 : vector<20x32xf32> to vector<20x32xbf16>
    %cst_38 = arith.constant dense<0.000000e+00> : vector<20x128xf32>
    %116 = tpu.matmul %115, %10, %cst_38 {dimension_numbers = #tpu.dot_dimension_numbers<[1], [0], [0], [1], [0, 0, 1, 1], [], []>} : vector<20x32xbf16>, vector<32x128xbf16>, vector<20x128xf32> -> vector<20x128xf32>
    %c80_39 = arith.constant 80 : index
    %c0_40 = arith.constant 0 : index
    %117 = vector.load %arg11[%c80_39, %c0_40] : memref<160x128xf32, #tpu.memory_space<vmem>>, vector<20x128xf32>
    %118 = arith.addf %116, %117 : vector<20x128xf32>
    %119 = math.tanh %118 : vector<20x128xf32>
    %120 = arith.negf %118 : vector<20x128xf32>
    %121 = math.exp %120 : vector<20x128xf32>
    %cst_41 = arith.constant 1.000000e+00 : f32
    %122 = vector.broadcast %cst_41 : f32 to vector<20x128xf32>
    %123 = arith.addf %122, %121 : vector<20x128xf32>
    %124 = arith.divf %122, %123 : vector<20x128xf32>
    %125 = arith.select %16, %119, %124 : vector<20x128xi1>, vector<20x128xf32>
    %126 = vector.extract_strided_slice %125 {offsets = [0, 0], sizes = [20, 32], strides = [1, 1]} : vector<20x128xf32> to vector<20x32xf32>
    %127 = vector.extract_strided_slice %125 {offsets = [0, 32], sizes = [20, 32], strides = [1, 1]} : vector<20x128xf32> to vector<20x32xf32>
    %128 = vector.extract_strided_slice %125 {offsets = [0, 64], sizes = [20, 32], strides = [1, 1]} : vector<20x128xf32> to vector<20x32xf32>
    %129 = vector.extract_strided_slice %125 {offsets = [0, 96], sizes = [20, 32], strides = [1, 1]} : vector<20x128xf32> to vector<20x32xf32>
    %130 = arith.mulf %127, %108 : vector<20x32xf32>
    %131 = arith.mulf %126, %128 : vector<20x32xf32>
    %132 = arith.addf %130, %131 : vector<20x32xf32>
    %133 = math.tanh %132 : vector<20x32xf32>
    %134 = arith.mulf %129, %133 : vector<20x32xf32>
    %135 = vector.extract_strided_slice %134 {offsets = [0, 0], sizes = [20, 16], strides = [1, 1]} : vector<20x32xf32> to vector<20x16xf32>
    %c80_42 = arith.constant 80 : index
    %c0_43 = arith.constant 0 : index
    %136 = vector.load %arg12[%c80_42, %c0_43] : memref<160x48xf32, #tpu.memory_space<vmem>>, vector<20x16xf32>
    tpu.vector_store %arg12[%c80_42, %c0_43], %135 {strides = array<i32>} : memref<160x48xf32, #tpu.memory_space<vmem>>, vector<20x16xf32>,
    %137 = vector.extract_strided_slice %134 {offsets = [0, 16], sizes = [20, 16], strides = [1, 1]} : vector<20x32xf32> to vector<20x16xf32>
    %c60_44 = arith.constant 60 : index
    %c16_45 = arith.constant 16 : index
    %138 = vector.load %arg12[%c60_44, %c16_45] : memref<160x48xf32, #tpu.memory_space<vmem>>, vector<20x16xf32>
    tpu.vector_store %arg12[%c60_44, %c16_45], %137 {strides = array<i32>} : memref<160x48xf32, #tpu.memory_space<vmem>>, vector<20x16xf32>,
    %139 = arith.truncf %134 : vector<20x32xf32> to vector<20x32xbf16>
    %cst_46 = arith.constant dense<0.000000e+00> : vector<20x128xf32>
    %140 = tpu.matmul %139, %10, %cst_46 {dimension_numbers = #tpu.dot_dimension_numbers<[1], [0], [0], [1], [0, 0, 1, 1], [], []>} : vector<20x32xbf16>, vector<32x128xbf16>, vector<20x128xf32> -> vector<20x128xf32>
    %c100_47 = arith.constant 100 : index
    %c0_48 = arith.constant 0 : index
    %141 = vector.load %arg11[%c100_47, %c0_48] : memref<160x128xf32, #tpu.memory_space<vmem>>, vector<20x128xf32>
    %142 = arith.addf %140, %141 : vector<20x128xf32>
    %143 = math.tanh %142 : vector<20x128xf32>
    %144 = arith.negf %142 : vector<20x128xf32>
    %145 = math.exp %144 : vector<20x128xf32>
    %cst_49 = arith.constant 1.000000e+00 : f32
    %146 = vector.broadcast %cst_49 : f32 to vector<20x128xf32>
    %147 = arith.addf %146, %145 : vector<20x128xf32>
    %148 = arith.divf %146, %147 : vector<20x128xf32>
    %149 = arith.select %16, %143, %148 : vector<20x128xi1>, vector<20x128xf32>
    %150 = vector.extract_strided_slice %149 {offsets = [0, 0], sizes = [20, 32], strides = [1, 1]} : vector<20x128xf32> to vector<20x32xf32>
    %151 = vector.extract_strided_slice %149 {offsets = [0, 32], sizes = [20, 32], strides = [1, 1]} : vector<20x128xf32> to vector<20x32xf32>
    %152 = vector.extract_strided_slice %149 {offsets = [0, 64], sizes = [20, 32], strides = [1, 1]} : vector<20x128xf32> to vector<20x32xf32>
    %153 = vector.extract_strided_slice %149 {offsets = [0, 96], sizes = [20, 32], strides = [1, 1]} : vector<20x128xf32> to vector<20x32xf32>
    %154 = arith.mulf %151, %132 : vector<20x32xf32>
    %155 = arith.mulf %150, %152 : vector<20x32xf32>
    %156 = arith.addf %154, %155 : vector<20x32xf32>
    %157 = math.tanh %156 : vector<20x32xf32>
    %158 = arith.mulf %153, %157 : vector<20x32xf32>
    %159 = vector.extract_strided_slice %158 {offsets = [0, 0], sizes = [20, 16], strides = [1, 1]} : vector<20x32xf32> to vector<20x16xf32>
    %c100_50 = arith.constant 100 : index
    %c0_51 = arith.constant 0 : index
    %160 = vector.load %arg12[%c100_50, %c0_51] : memref<160x48xf32, #tpu.memory_space<vmem>>, vector<20x16xf32>
    tpu.vector_store %arg12[%c100_50, %c0_51], %159 {strides = array<i32>} : memref<160x48xf32, #tpu.memory_space<vmem>>, vector<20x16xf32>,
    %161 = vector.extract_strided_slice %158 {offsets = [0, 16], sizes = [20, 16], strides = [1, 1]} : vector<20x32xf32> to vector<20x16xf32>
    %c40_52 = arith.constant 40 : index
    %c16_53 = arith.constant 16 : index
    %162 = vector.load %arg12[%c40_52, %c16_53] : memref<160x48xf32, #tpu.memory_space<vmem>>, vector<20x16xf32>
    tpu.vector_store %arg12[%c40_52, %c16_53], %161 {strides = array<i32>} : memref<160x48xf32, #tpu.memory_space<vmem>>, vector<20x16xf32>,
    %163 = arith.truncf %158 : vector<20x32xf32> to vector<20x32xbf16>
    %cst_54 = arith.constant dense<0.000000e+00> : vector<20x128xf32>
    %164 = tpu.matmul %163, %10, %cst_54 {dimension_numbers = #tpu.dot_dimension_numbers<[1], [0], [0], [1], [0, 0, 1, 1], [], []>} : vector<20x32xbf16>, vector<32x128xbf16>, vector<20x128xf32> -> vector<20x128xf32>
    %c120_55 = arith.constant 120 : index
    %c0_56 = arith.constant 0 : index
    %165 = vector.load %arg11[%c120_55, %c0_56] : memref<160x128xf32, #tpu.memory_space<vmem>>, vector<20x128xf32>
    %166 = arith.addf %164, %165 : vector<20x128xf32>
    %167 = math.tanh %166 : vector<20x128xf32>
    %168 = arith.negf %166 : vector<20x128xf32>
    %169 = math.exp %168 : vector<20x128xf32>
    %cst_57 = arith.constant 1.000000e+00 : f32
    %170 = vector.broadcast %cst_57 : f32 to vector<20x128xf32>
    %171 = arith.addf %170, %169 : vector<20x128xf32>
    %172 = arith.divf %170, %171 : vector<20x128xf32>
    %173 = arith.select %16, %167, %172 : vector<20x128xi1>, vector<20x128xf32>
    %174 = vector.extract_strided_slice %173 {offsets = [0, 0], sizes = [20, 32], strides = [1, 1]} : vector<20x128xf32> to vector<20x32xf32>
    %175 = vector.extract_strided_slice %173 {offsets = [0, 32], sizes = [20, 32], strides = [1, 1]} : vector<20x128xf32> to vector<20x32xf32>
    %176 = vector.extract_strided_slice %173 {offsets = [0, 64], sizes = [20, 32], strides = [1, 1]} : vector<20x128xf32> to vector<20x32xf32>
    %177 = vector.extract_strided_slice %173 {offsets = [0, 96], sizes = [20, 32], strides = [1, 1]} : vector<20x128xf32> to vector<20x32xf32>
    %178 = arith.mulf %175, %156 : vector<20x32xf32>
    %179 = arith.mulf %174, %176 : vector<20x32xf32>
    %180 = arith.addf %178, %179 : vector<20x32xf32>
    %181 = math.tanh %180 : vector<20x32xf32>
    %182 = arith.mulf %177, %181 : vector<20x32xf32>
    %183 = vector.extract_strided_slice %182 {offsets = [0, 0], sizes = [20, 16], strides = [1, 1]} : vector<20x32xf32> to vector<20x16xf32>
    %c120_58 = arith.constant 120 : index
    %c0_59 = arith.constant 0 : index
    %184 = vector.load %arg12[%c120_58, %c0_59] : memref<160x48xf32, #tpu.memory_space<vmem>>, vector<20x16xf32>
    tpu.vector_store %arg12[%c120_58, %c0_59], %183 {strides = array<i32>} : memref<160x48xf32, #tpu.memory_space<vmem>>, vector<20x16xf32>,
    %185 = vector.extract_strided_slice %182 {offsets = [0, 16], sizes = [20, 16], strides = [1, 1]} : vector<20x32xf32> to vector<20x16xf32>
    %c20_60 = arith.constant 20 : index
    %c16_61 = arith.constant 16 : index
    %186 = vector.load %arg12[%c20_60, %c16_61] : memref<160x48xf32, #tpu.memory_space<vmem>>, vector<20x16xf32>
    tpu.vector_store %arg12[%c20_60, %c16_61], %185 {strides = array<i32>} : memref<160x48xf32, #tpu.memory_space<vmem>>, vector<20x16xf32>,
    %187 = arith.truncf %182 : vector<20x32xf32> to vector<20x32xbf16>
    %cst_62 = arith.constant dense<0.000000e+00> : vector<20x128xf32>
    %188 = tpu.matmul %187, %10, %cst_62 {dimension_numbers = #tpu.dot_dimension_numbers<[1], [0], [0], [1], [0, 0, 1, 1], [], []>} : vector<20x32xbf16>, vector<32x128xbf16>, vector<20x128xf32> -> vector<20x128xf32>
    %c140_63 = arith.constant 140 : index
    %c0_64 = arith.constant 0 : index
    %189 = vector.load %arg11[%c140_63, %c0_64] : memref<160x128xf32, #tpu.memory_space<vmem>>, vector<20x128xf32>
    %190 = arith.addf %188, %189 : vector<20x128xf32>
    %191 = math.tanh %190 : vector<20x128xf32>
    %192 = arith.negf %190 : vector<20x128xf32>
    %193 = math.exp %192 : vector<20x128xf32>
    %cst_65 = arith.constant 1.000000e+00 : f32
    %194 = vector.broadcast %cst_65 : f32 to vector<20x128xf32>
    %195 = arith.addf %194, %193 : vector<20x128xf32>
    %196 = arith.divf %194, %195 : vector<20x128xf32>
    %197 = arith.select %16, %191, %196 : vector<20x128xi1>, vector<20x128xf32>
    %198 = vector.extract_strided_slice %197 {offsets = [0, 0], sizes = [20, 32], strides = [1, 1]} : vector<20x128xf32> to vector<20x32xf32>
    %199 = vector.extract_strided_slice %197 {offsets = [0, 32], sizes = [20, 32], strides = [1, 1]} : vector<20x128xf32> to vector<20x32xf32>
    %200 = vector.extract_strided_slice %197 {offsets = [0, 64], sizes = [20, 32], strides = [1, 1]} : vector<20x128xf32> to vector<20x32xf32>
    %201 = vector.extract_strided_slice %197 {offsets = [0, 96], sizes = [20, 32], strides = [1, 1]} : vector<20x128xf32> to vector<20x32xf32>
    %202 = arith.mulf %199, %180 : vector<20x32xf32>
    %203 = arith.mulf %198, %200 : vector<20x32xf32>
    %204 = arith.addf %202, %203 : vector<20x32xf32>
    %205 = math.tanh %204 : vector<20x32xf32>
    %206 = arith.mulf %201, %205 : vector<20x32xf32>
    %207 = vector.extract_strided_slice %206 {offsets = [0, 0], sizes = [20, 16], strides = [1, 1]} : vector<20x32xf32> to vector<20x16xf32>
    %c140_66 = arith.constant 140 : index
    %c0_67 = arith.constant 0 : index
    %208 = vector.load %arg12[%c140_66, %c0_67] : memref<160x48xf32, #tpu.memory_space<vmem>>, vector<20x16xf32>
    tpu.vector_store %arg12[%c140_66, %c0_67], %207 {strides = array<i32>} : memref<160x48xf32, #tpu.memory_space<vmem>>, vector<20x16xf32>,
    %209 = vector.extract_strided_slice %206 {offsets = [0, 16], sizes = [20, 16], strides = [1, 1]} : vector<20x32xf32> to vector<20x16xf32>
    %c0_68 = arith.constant 0 : index
    %c16_69 = arith.constant 16 : index
    %210 = vector.load %arg12[%c0_68, %c16_69] : memref<160x48xf32, #tpu.memory_space<vmem>>, vector<20x16xf32>
    tpu.vector_store %arg12[%c0_68, %c16_69], %209 {strides = array<i32>} : memref<160x48xf32, #tpu.memory_space<vmem>>, vector<20x16xf32>,
    %c0_70 = arith.constant 0 : index
    %c0_71 = arith.constant 0 : index
    %211 = vector.load %arg12[%c0_70, %c0_71] : memref<160x48xf32, #tpu.memory_space<vmem>>, vector<160x48xf32>
    %212 = arith.truncf %211 : vector<160x48xf32> to vector<160x48xbf16>
    %c0_72 = arith.constant 0 : index
    %c0_73 = arith.constant 0 : index
    %213 = vector.load %arg5[%c0_72, %c0_73] : memref<48x16xbf16, #tpu.memory_space<vmem>>, vector<48x16xbf16>
    %cst_74 = arith.constant dense<0.000000e+00> : vector<160x16xf32>
    %214 = tpu.matmul %212, %213, %cst_74 {dimension_numbers = #tpu.dot_dimension_numbers<[1], [0], [0], [1], [0, 0, 1, 1], [], []>} : vector<160x48xbf16>, vector<48x16xbf16>, vector<160x16xf32> -> vector<160x16xf32>
    %c0_75 = arith.constant 0 : index
    %c0_76 = arith.constant 0 : index
    %215 = vector.load %arg6[%c0_75, %c0_76] : memref<1x16xf32, #tpu.memory_space<vmem>>, vector<1x16xf32>
    %216 = vector.broadcast %215 : vector<1x16xf32> to vector<160x16xf32>
    %217 = arith.addf %214, %216 : vector<160x16xf32>
    %cst_77 = arith.constant 0.000000e+00 : f32
    %218 = vector.broadcast %cst_77 : f32 to vector<160x1xf32>
    %c0_78 = arith.constant 0 : index
    %c0_79 = arith.constant 0 : index
    %219 = vector.load %arg9[%c0_78, %c0_79] : memref<160x2xf32, #tpu.memory_space<vmem>>, vector<160x1xf32>
    %220 = vector.broadcast %219 : vector<160x1xf32> to vector<160x16xf32>
    %221 = arith.mulf %217, %220 : vector<160x16xf32>
    %222 = vector.shape_cast %221 : vector<160x16xf32> to vector<1x160x16xf32>
    %cst_80 = arith.constant dense<0.000000e+00> : vector<1xf32>
    %223 = vector.multi_reduction <add>, %222, %cst_80 [1, 2] : vector<1x160x16xf32> to vector<1xf32>
    %224 = vector.shape_cast %223 : vector<1xf32> to vector<1x1x1xf32>
    %225 = vector.extract %224[0, 0, 0] : f32 from vector<1x1x1xf32>
    %cst_81 = arith.constant 1.280000e+03 : f32
    %226 = arith.divf %225, %cst_81 : f32
    %227 = vector.broadcast %226 : f32 to vector<160x1xf32>
    %228 = arith.mulf %219, %227 : vector<160x1xf32>
    %229 = arith.addf %218, %228 : vector<160x1xf32>
    %c0_82 = arith.constant 0 : index
    %c1 = arith.constant 1 : index
    %230 = vector.load %arg9[%c0_82, %c1] : memref<160x2xf32, #tpu.memory_space<vmem>>, vector<160x1xf32>
    %231 = vector.broadcast %230 : vector<160x1xf32> to vector<160x16xf32>
    %232 = arith.mulf %217, %231 : vector<160x16xf32>
    %233 = vector.shape_cast %232 : vector<160x16xf32> to vector<1x160x16xf32>
    %cst_83 = arith.constant dense<0.000000e+00> : vector<1xf32>
    %234 = vector.multi_reduction <add>, %233, %cst_83 [1, 2] : vector<1x160x16xf32> to vector<1xf32>
    %235 = vector.shape_cast %234 : vector<1xf32> to vector<1x1x1xf32>
    %236 = vector.extract %235[0, 0, 0] : f32 from vector<1x1x1xf32>
    %cst_84 = arith.constant 1.280000e+03 : f32
    %237 = arith.divf %236, %cst_84 : f32
    %238 = vector.broadcast %237 : f32 to vector<160x1xf32>
    %239 = arith.mulf %230, %238 : vector<160x1xf32>
    %240 = arith.addf %229, %239 : vector<160x1xf32>
    %241 = vector.broadcast %240 : vector<160x1xf32> to vector<160x16xf32>
    %242 = arith.subf %217, %241 : vector<160x16xf32>
    %243 = arith.mulf %242, %242 : vector<160x16xf32>
    %cst_85 = arith.constant 0.000000e+00 : f32
    %244 = vector.broadcast %cst_85 : f32 to vector<160x1xf32>
    %c0_86 = arith.constant 0 : index
    %c0_87 = arith.constant 0 : index
    %245 = vector.load %arg9[%c0_86, %c0_87] : memref<160x2xf32, #tpu.memory_space<vmem>>, vector<160x1xf32>
    %246 = vector.broadcast %245 : vector<160x1xf32> to vector<160x16xf32>
    %247 = arith.mulf %243, %246 : vector<160x16xf32>
    %248 = vector.shape_cast %247 : vector<160x16xf32> to vector<1x160x16xf32>
    %cst_88 = arith.constant dense<0.000000e+00> : vector<1xf32>
    %249 = vector.multi_reduction <add>, %248, %cst_88 [1, 2] : vector<1x160x16xf32> to vector<1xf32>
    %250 = vector.shape_cast %249 : vector<1xf32> to vector<1x1x1xf32>
    %251 = vector.extract %250[0, 0, 0] : f32 from vector<1x1x1xf32>
    %cst_89 = arith.constant 1.280000e+03 : f32
    %252 = arith.divf %251, %cst_89 : f32
    %cst_90 = arith.constant 9.99999993E-9 : f32
    %253 = arith.addf %252, %cst_90 : f32
    %254 = math.rsqrt %253 : f32
    %255 = vector.broadcast %254 : f32 to vector<160x1xf32>
    %256 = arith.mulf %245, %255 : vector<160x1xf32>
    %257 = arith.addf %244, %256 : vector<160x1xf32>
    %c0_91 = arith.constant 0 : index
    %c1_92 = arith.constant 1 : index
    %258 = vector.load %arg9[%c0_91, %c1_92] : memref<160x2xf32, #tpu.memory_space<vmem>>, vector<160x1xf32>
    %259 = vector.broadcast %258 : vector<160x1xf32> to vector<160x16xf32>
    %260 = arith.mulf %243, %259 : vector<160x16xf32>
    %261 = vector.shape_cast %260 : vector<160x16xf32> to vector<1x160x16xf32>
    %cst_93 = arith.constant dense<0.000000e+00> : vector<1xf32>
    %262 = vector.multi_reduction <add>, %261, %cst_93 [1, 2] : vector<1x160x16xf32> to vector<1xf32>
    %263 = vector.shape_cast %262 : vector<1xf32> to vector<1x1x1xf32>
    %264 = vector.extract %263[0, 0, 0] : f32 from vector<1x1x1xf32>
    %cst_94 = arith.constant 1.280000e+03 : f32
    %265 = arith.divf %264, %cst_94 : f32
    %cst_95 = arith.constant 9.99999993E-9 : f32
    %266 = arith.addf %265, %cst_95 : f32
    %267 = math.rsqrt %266 : f32
    %268 = vector.broadcast %267 : f32 to vector<160x1xf32>
    %269 = arith.mulf %258, %268 : vector<160x1xf32>
    %270 = arith.addf %257, %269 : vector<160x1xf32>
    %271 = vector.broadcast %270 : vector<160x1xf32> to vector<160x16xf32>
    %272 = arith.mulf %242, %271 : vector<160x16xf32>
    %c0_96 = arith.constant 0 : index
    %c0_97 = arith.constant 0 : index
    %273 = vector.load %arg7[%c0_96, %c0_97] : memref<1x16xf32, #tpu.memory_space<vmem>>, vector<1x16xf32>
    %274 = vector.broadcast %273 : vector<1x16xf32> to vector<160x16xf32>
    %275 = arith.mulf %272, %274 : vector<160x16xf32>
    %c0_98 = arith.constant 0 : index
    %c0_99 = arith.constant 0 : index
    %276 = vector.load %arg8[%c0_98, %c0_99] : memref<1x16xf32, #tpu.memory_space<vmem>>, vector<1x16xf32>
    %277 = vector.broadcast %276 : vector<1x16xf32> to vector<160x16xf32>
    %278 = arith.addf %275, %277 : vector<160x16xf32>
    %c0_100 = arith.constant 0 : index
    %c0_101 = arith.constant 0 : index
    %279 = vector.load %arg1[%c0_100, %c0_101] : memref<160x32xf32, #tpu.memory_space<vmem>>, vector<160x16xf32>
    %280 = arith.addf %278, %279 : vector<160x16xf32>
    %c0_102 = arith.constant 0 : index
    %c0_103 = arith.constant 0 : index
    %281 = vector.load %arg10[%c0_102, %c0_103] : memref<160x16xf32, #tpu.memory_space<vmem>>, vector<160x16xf32>
    tpu.vector_store %arg10[%c0_102, %c0_103], %280 {strides = array<i32>} : memref<160x16xf32, #tpu.memory_space<vmem>>, vector<160x16xf32>,
    return
  }
  func.func @transform_0(%arg0: i32) -> (i32, i32) {
    %c0_i32 = arith.constant 0 : i32
    %c0_i32_0 = arith.constant 0 : i32
    return %arg0, %c0_i32 : i32, i32
  }
  func.func @transform_1(%arg0: i32) -> (i32, i32) {
    %c0_i32 = arith.constant 0 : i32
    %c0_i32_0 = arith.constant 0 : i32
    %c0_i32_1 = arith.constant 0 : i32
    return %c0_i32, %c0_i32_0 : i32, i32
  }
  func.func @transform_2(%arg0: i32) -> (i32, i32) {
    %c0_i32 = arith.constant 0 : i32
    %c0_i32_0 = arith.constant 0 : i32
    %c0_i32_1 = arith.constant 0 : i32
    return %c0_i32, %c0_i32_0 : i32, i32
  }
  func.func @transform_3(%arg0: i32) -> (i32, i32) {
    %c0_i32 = arith.constant 0 : i32
    %c0_i32_0 = arith.constant 0 : i32
    %c0_i32_1 = arith.constant 0 : i32
    return %c0_i32, %c0_i32_0 : i32, i32
  }
  func.func @transform_4(%arg0: i32) -> (i32, i32) {
    %c0_i32 = arith.constant 0 : i32
    %c0_i32_0 = arith.constant 0 : i32
    %c0_i32_1 = arith.constant 0 : i32
    return %c0_i32, %c0_i32_0 : i32, i32
  }
  func.func @transform_5(%arg0: i32) -> (i32, i32) {
    %c0_i32 = arith.constant 0 : i32
    %c0_i32_0 = arith.constant 0 : i32
    %c0_i32_1 = arith.constant 0 : i32
    return %c0_i32, %c0_i32_0 : i32, i32
  }
  func.func @transform_6(%arg0: i32) -> (i32, i32) {
    %c0_i32 = arith.constant 0 : i32
    %c0_i32_0 = arith.constant 0 : i32
    %c0_i32_1 = arith.constant 0 : i32
    return %c0_i32, %c0_i32_0 : i32, i32
  }
  func.func @transform_7(%arg0: i32) -> (i32, i32) {
    %c0_i32 = arith.constant 0 : i32
    %c0_i32_0 = arith.constant 0 : i32
    %c0_i32_1 = arith.constant 0 : i32
    return %c0_i32, %c0_i32_0 : i32, i32
  }
  func.func @transform_8(%arg0: i32) -> (i32, i32) {
    %c0_i32 = arith.constant 0 : i32
    %c0_i32_0 = arith.constant 0 : i32
    %c0_i32_1 = arith.constant 0 : i32
    return %c0_i32, %c0_i32_0 : i32, i32
  }
  func.func @transform_9(%arg0: i32) -> (i32, i32) {
    %c0_i32 = arith.constant 0 : i32
    %c0_i32_0 = arith.constant 0 : i32
    return %arg0, %c0_i32 : i32, i32
  }
}

module attributes {stable_mosaic.version = 11 : i64} {
  func.func @_dp_path_kernel(%arg0: i32, %arg1: memref<160x32xf32, #tpu.memory_space<vmem>>, %arg2: memref<32x128xbf16, #tpu.memory_space<vmem>>, %arg3: memref<32x128xbf16, #tpu.memory_space<vmem>>, %arg4: memref<1x128xf32, #tpu.memory_space<vmem>>, %arg5: memref<48x16xbf16, #tpu.memory_space<vmem>>, %arg6: memref<1x16xf32, #tpu.memory_space<vmem>>, %arg7: memref<1x16xf32, #tpu.memory_space<vmem>>, %arg8: memref<1x16xf32, #tpu.memory_space<vmem>>, %arg9: memref<160x2xf32, #tpu.memory_space<vmem>>, %arg10: memref<160x16xf32, #tpu.memory_space<vmem>>, %arg11: memref<160x128xf32, #tpu.memory_space<vmem>>, %arg12: memref<160x48xf32, #tpu.memory_space<vmem>>) attributes {dimension_semantics = [#tpu.dimension_semantics<parallel>], iteration_bounds = array<i64: 1>, scalar_prefetch = 0 : i64, scratch_operands = 2 : i64, tpu.core_type = #tpu.core_type<tc>, window_params = [{transform_indices = @transform_0, window_bounds = array<i64: 160, 32>}, {pipeline_mode = #tpu.pipeline_mode<synchronous>, transform_indices = @transform_1, window_bounds = array<i64: 32, 128>}, {pipeline_mode = #tpu.pipeline_mode<synchronous>, transform_indices = @transform_2, window_bounds = array<i64: 32, 128>}, {pipeline_mode = #tpu.pipeline_mode<synchronous>, transform_indices = @transform_3, window_bounds = array<i64: 1, 128>}, {pipeline_mode = #tpu.pipeline_mode<synchronous>, transform_indices = @transform_4, window_bounds = array<i64: 48, 16>}, {pipeline_mode = #tpu.pipeline_mode<synchronous>, transform_indices = @transform_5, window_bounds = array<i64: 1, 16>}, {pipeline_mode = #tpu.pipeline_mode<synchronous>, transform_indices = @transform_6, window_bounds = array<i64: 1, 16>}, {pipeline_mode = #tpu.pipeline_mode<synchronous>, transform_indices = @transform_7, window_bounds = array<i64: 1, 16>}, {pipeline_mode = #tpu.pipeline_mode<synchronous>, transform_indices = @transform_8, window_bounds = array<i64: 160, 2>}, {transform_indices = @transform_9, window_bounds = array<i64: 160, 16>}]} {
    %c0 = arith.constant 0 : index
    %c0_0 = arith.constant 0 : index
    %0 = vector.load %arg1[%c0, %c0_0] : memref<160x32xf32, #tpu.memory_space<vmem>>, vector<160x32xf32>
    %1 = arith.truncf %0 : vector<160x32xf32> to vector<160x32xbf16>
    %c0_1 = arith.constant 0 : index
    %c0_2 = arith.constant 0 : index
    %2 = vector.load %arg2[%c0_1, %c0_2] : memref<32x128xbf16, #tpu.memory_space<vmem>>, vector<32x128xbf16>
    %cst = arith.constant dense<0.000000e+00> : vector<160x128xf32>
    %3 = tpu.matmul %1, %2, %cst {dimension_numbers = #tpu.dot_dimension_numbers<[1], [0], [0], [1], [0, 0, 1, 1], [], []>} : vector<160x32xbf16>, vector<32x128xbf16>, vector<160x128xf32> -> vector<160x128xf32>
    %c0_3 = arith.constant 0 : index
    %c0_4 = arith.constant 0 : index
    %4 = vector.load %arg4[%c0_3, %c0_4] : memref<1x128xf32, #tpu.memory_space<vmem>>, vector<1x128xf32>
    %5 = vector.broadcast %4 : vector<1x128xf32> to vector<160x128xf32>
    %6 = arith.addf %3, %5 : vector<160x128xf32>
    %c0_5 = arith.constant 0 : index
    %c0_6 = arith.constant 0 : index
    %7 = vector.load %arg11[%c0_5, %c0_6] : memref<160x128xf32, #tpu.memory_space<vmem>>, vector<160x128xf32>
    tpu.vector_store %arg11[%c0_5, %c0_6], %6 {strides = array<i32>} : memref<160x128xf32, #tpu.memory_space<vmem>>, vector<160x128xf32>,
    %c0_7 = arith.constant 0 : index
    %c0_8 = arith.constant 0 : index
    %8 = vector.load %arg1[%c0_7, %c0_8] : memref<160x32xf32, #tpu.memory_space<vmem>>, vector<160x16xf32>
    %c0_9 = arith.constant 0 : index
    %c32 = arith.constant 32 : index
    %9 = vector.load %arg12[%c0_9, %c32] : memref<160x48xf32, #tpu.memory_space<vmem>>, vector<160x16xf32>
    tpu.vector_store %arg12[%c0_9, %c32], %8 {strides = array<i32>} : memref<160x48xf32, #tpu.memory_space<vmem>>, vector<160x16xf32>,
    %c0_10 = arith.constant 0 : index
    %c0_11 = arith.constant 0 : index
    %10 = vector.load %arg3[%c0_10, %c0_11] : memref<32x128xbf16, #tpu.memory_space<vmem>>, vector<32x128xbf16>
    %11 = tpu.iota {dimensions = array<i32: 1>} : vector<16x128xi32>
    %c64_i32 = arith.constant 64 : i32
    %12 = vector.broadcast %c64_i32 : i32 to vector<16x128xi32>
    %13 = arith.cmpi sge, %11, %12 : vector<16x128xi32>
    %c96_i32 = arith.constant 96 : i32
    %14 = vector.broadcast %c96_i32 : i32 to vector<16x128xi32>
    %15 = arith.cmpi slt, %11, %14 : vector<16x128xi32>
    %16 = arith.andi %13, %15 : vector<16x128xi1>
    %cst_12 = arith.constant 0.000000e+00 : f32
    %17 = vector.broadcast %cst_12 : f32 to vector<16x32xf32>
    %cst_13 = arith.constant 0.000000e+00 : f32
    %18 = vector.broadcast %cst_13 : f32 to vector<16x32xf32>
    %19 = arith.truncf %17 : vector<16x32xf32> to vector<16x32xbf16>
    %cst_14 = arith.constant dense<0.000000e+00> : vector<16x128xf32>
    %20 = tpu.matmul %19, %10, %cst_14 {dimension_numbers = #tpu.dot_dimension_numbers<[1], [0], [0], [1], [0, 0, 1, 1], [], []>} : vector<16x32xbf16>, vector<32x128xbf16>, vector<16x128xf32> -> vector<16x128xf32>
    %c0_15 = arith.constant 0 : index
    %c0_16 = arith.constant 0 : index
    %21 = vector.load %arg11[%c0_15, %c0_16] : memref<160x128xf32, #tpu.memory_space<vmem>>, vector<16x128xf32>
    %22 = arith.addf %20, %21 : vector<16x128xf32>
    %23 = math.tanh %22 : vector<16x128xf32>
    %24 = arith.negf %22 : vector<16x128xf32>
    %25 = math.exp %24 : vector<16x128xf32>
    %cst_17 = arith.constant 1.000000e+00 : f32
    %26 = vector.broadcast %cst_17 : f32 to vector<16x128xf32>
    %27 = arith.addf %26, %25 : vector<16x128xf32>
    %28 = arith.divf %26, %27 : vector<16x128xf32>
    %29 = arith.select %16, %23, %28 : vector<16x128xi1>, vector<16x128xf32>
    %30 = vector.extract_strided_slice %29 {offsets = [0, 0], sizes = [16, 32], strides = [1, 1]} : vector<16x128xf32> to vector<16x32xf32>
    %31 = vector.extract_strided_slice %29 {offsets = [0, 32], sizes = [16, 32], strides = [1, 1]} : vector<16x128xf32> to vector<16x32xf32>
    %32 = vector.extract_strided_slice %29 {offsets = [0, 64], sizes = [16, 32], strides = [1, 1]} : vector<16x128xf32> to vector<16x32xf32>
    %33 = vector.extract_strided_slice %29 {offsets = [0, 96], sizes = [16, 32], strides = [1, 1]} : vector<16x128xf32> to vector<16x32xf32>
    %34 = arith.mulf %31, %18 : vector<16x32xf32>
    %35 = arith.mulf %30, %32 : vector<16x32xf32>
    %36 = arith.addf %34, %35 : vector<16x32xf32>
    %37 = math.tanh %36 : vector<16x32xf32>
    %38 = arith.mulf %33, %37 : vector<16x32xf32>
    %39 = vector.extract_strided_slice %38 {offsets = [0, 0], sizes = [16, 16], strides = [1, 1]} : vector<16x32xf32> to vector<16x16xf32>
    %c0_18 = arith.constant 0 : index
    %c0_19 = arith.constant 0 : index
    %40 = vector.load %arg12[%c0_18, %c0_19] : memref<160x48xf32, #tpu.memory_space<vmem>>, vector<16x16xf32>
    tpu.vector_store %arg12[%c0_18, %c0_19], %39 {strides = array<i32>} : memref<160x48xf32, #tpu.memory_space<vmem>>, vector<16x16xf32>,
    %41 = vector.extract_strided_slice %38 {offsets = [0, 16], sizes = [16, 16], strides = [1, 1]} : vector<16x32xf32> to vector<16x16xf32>
    %c144 = arith.constant 144 : index
    %c16 = arith.constant 16 : index
    %42 = vector.load %arg12[%c144, %c16] : memref<160x48xf32, #tpu.memory_space<vmem>>, vector<16x16xf32>
    tpu.vector_store %arg12[%c144, %c16], %41 {strides = array<i32>} : memref<160x48xf32, #tpu.memory_space<vmem>>, vector<16x16xf32>,
    %43 = arith.truncf %38 : vector<16x32xf32> to vector<16x32xbf16>
    %cst_20 = arith.constant dense<0.000000e+00> : vector<16x128xf32>
    %44 = tpu.matmul %43, %10, %cst_20 {dimension_numbers = #tpu.dot_dimension_numbers<[1], [0], [0], [1], [0, 0, 1, 1], [], []>} : vector<16x32xbf16>, vector<32x128xbf16>, vector<16x128xf32> -> vector<16x128xf32>
    %c16_21 = arith.constant 16 : index
    %c0_22 = arith.constant 0 : index
    %45 = vector.load %arg11[%c16_21, %c0_22] : memref<160x128xf32, #tpu.memory_space<vmem>>, vector<16x128xf32>
    %46 = arith.addf %44, %45 : vector<16x128xf32>
    %47 = math.tanh %46 : vector<16x128xf32>
    %48 = arith.negf %46 : vector<16x128xf32>
    %49 = math.exp %48 : vector<16x128xf32>
    %cst_23 = arith.constant 1.000000e+00 : f32
    %50 = vector.broadcast %cst_23 : f32 to vector<16x128xf32>
    %51 = arith.addf %50, %49 : vector<16x128xf32>
    %52 = arith.divf %50, %51 : vector<16x128xf32>
    %53 = arith.select %16, %47, %52 : vector<16x128xi1>, vector<16x128xf32>
    %54 = vector.extract_strided_slice %53 {offsets = [0, 0], sizes = [16, 32], strides = [1, 1]} : vector<16x128xf32> to vector<16x32xf32>
    %55 = vector.extract_strided_slice %53 {offsets = [0, 32], sizes = [16, 32], strides = [1, 1]} : vector<16x128xf32> to vector<16x32xf32>
    %56 = vector.extract_strided_slice %53 {offsets = [0, 64], sizes = [16, 32], strides = [1, 1]} : vector<16x128xf32> to vector<16x32xf32>
    %57 = vector.extract_strided_slice %53 {offsets = [0, 96], sizes = [16, 32], strides = [1, 1]} : vector<16x128xf32> to vector<16x32xf32>
    %58 = arith.mulf %55, %36 : vector<16x32xf32>
    %59 = arith.mulf %54, %56 : vector<16x32xf32>
    %60 = arith.addf %58, %59 : vector<16x32xf32>
    %61 = math.tanh %60 : vector<16x32xf32>
    %62 = arith.mulf %57, %61 : vector<16x32xf32>
    %63 = vector.extract_strided_slice %62 {offsets = [0, 0], sizes = [16, 16], strides = [1, 1]} : vector<16x32xf32> to vector<16x16xf32>
    %c16_24 = arith.constant 16 : index
    %c0_25 = arith.constant 0 : index
    %64 = vector.load %arg12[%c16_24, %c0_25] : memref<160x48xf32, #tpu.memory_space<vmem>>, vector<16x16xf32>
    tpu.vector_store %arg12[%c16_24, %c0_25], %63 {strides = array<i32>} : memref<160x48xf32, #tpu.memory_space<vmem>>, vector<16x16xf32>,
    %65 = vector.extract_strided_slice %62 {offsets = [0, 16], sizes = [16, 16], strides = [1, 1]} : vector<16x32xf32> to vector<16x16xf32>
    %c128 = arith.constant 128 : index
    %c16_26 = arith.constant 16 : index
    %66 = vector.load %arg12[%c128, %c16_26] : memref<160x48xf32, #tpu.memory_space<vmem>>, vector<16x16xf32>
    tpu.vector_store %arg12[%c128, %c16_26], %65 {strides = array<i32>} : memref<160x48xf32, #tpu.memory_space<vmem>>, vector<16x16xf32>,
    %67 = arith.truncf %62 : vector<16x32xf32> to vector<16x32xbf16>
    %cst_27 = arith.constant dense<0.000000e+00> : vector<16x128xf32>
    %68 = tpu.matmul %67, %10, %cst_27 {dimension_numbers = #tpu.dot_dimension_numbers<[1], [0], [0], [1], [0, 0, 1, 1], [], []>} : vector<16x32xbf16>, vector<32x128xbf16>, vector<16x128xf32> -> vector<16x128xf32>
    %c32_28 = arith.constant 32 : index
    %c0_29 = arith.constant 0 : index
    %69 = vector.load %arg11[%c32_28, %c0_29] : memref<160x128xf32, #tpu.memory_space<vmem>>, vector<16x128xf32>
    %70 = arith.addf %68, %69 : vector<16x128xf32>
    %71 = math.tanh %70 : vector<16x128xf32>
    %72 = arith.negf %70 : vector<16x128xf32>
    %73 = math.exp %72 : vector<16x128xf32>
    %cst_30 = arith.constant 1.000000e+00 : f32
    %74 = vector.broadcast %cst_30 : f32 to vector<16x128xf32>
    %75 = arith.addf %74, %73 : vector<16x128xf32>
    %76 = arith.divf %74, %75 : vector<16x128xf32>
    %77 = arith.select %16, %71, %76 : vector<16x128xi1>, vector<16x128xf32>
    %78 = vector.extract_strided_slice %77 {offsets = [0, 0], sizes = [16, 32], strides = [1, 1]} : vector<16x128xf32> to vector<16x32xf32>
    %79 = vector.extract_strided_slice %77 {offsets = [0, 32], sizes = [16, 32], strides = [1, 1]} : vector<16x128xf32> to vector<16x32xf32>
    %80 = vector.extract_strided_slice %77 {offsets = [0, 64], sizes = [16, 32], strides = [1, 1]} : vector<16x128xf32> to vector<16x32xf32>
    %81 = vector.extract_strided_slice %77 {offsets = [0, 96], sizes = [16, 32], strides = [1, 1]} : vector<16x128xf32> to vector<16x32xf32>
    %82 = arith.mulf %79, %60 : vector<16x32xf32>
    %83 = arith.mulf %78, %80 : vector<16x32xf32>
    %84 = arith.addf %82, %83 : vector<16x32xf32>
    %85 = math.tanh %84 : vector<16x32xf32>
    %86 = arith.mulf %81, %85 : vector<16x32xf32>
    %87 = vector.extract_strided_slice %86 {offsets = [0, 0], sizes = [16, 16], strides = [1, 1]} : vector<16x32xf32> to vector<16x16xf32>
    %c32_31 = arith.constant 32 : index
    %c0_32 = arith.constant 0 : index
    %88 = vector.load %arg12[%c32_31, %c0_32] : memref<160x48xf32, #tpu.memory_space<vmem>>, vector<16x16xf32>
    tpu.vector_store %arg12[%c32_31, %c0_32], %87 {strides = array<i32>} : memref<160x48xf32, #tpu.memory_space<vmem>>, vector<16x16xf32>,
    %89 = vector.extract_strided_slice %86 {offsets = [0, 16], sizes = [16, 16], strides = [1, 1]} : vector<16x32xf32> to vector<16x16xf32>
    %c112 = arith.constant 112 : index
    %c16_33 = arith.constant 16 : index
    %90 = vector.load %arg12[%c112, %c16_33] : memref<160x48xf32, #tpu.memory_space<vmem>>, vector<16x16xf32>
    tpu.vector_store %arg12[%c112, %c16_33], %89 {strides = array<i32>} : memref<160x48xf32, #tpu.memory_space<vmem>>, vector<16x16xf32>,
    %91 = arith.truncf %86 : vector<16x32xf32> to vector<16x32xbf16>
    %cst_34 = arith.constant dense<0.000000e+00> : vector<16x128xf32>
    %92 = tpu.matmul %91, %10, %cst_34 {dimension_numbers = #tpu.dot_dimension_numbers<[1], [0], [0], [1], [0, 0, 1, 1], [], []>} : vector<16x32xbf16>, vector<32x128xbf16>, vector<16x128xf32> -> vector<16x128xf32>
    %c48 = arith.constant 48 : index
    %c0_35 = arith.constant 0 : index
    %93 = vector.load %arg11[%c48, %c0_35] : memref<160x128xf32, #tpu.memory_space<vmem>>, vector<16x128xf32>
    %94 = arith.addf %92, %93 : vector<16x128xf32>
    %95 = math.tanh %94 : vector<16x128xf32>
    %96 = arith.negf %94 : vector<16x128xf32>
    %97 = math.exp %96 : vector<16x128xf32>
    %cst_36 = arith.constant 1.000000e+00 : f32
    %98 = vector.broadcast %cst_36 : f32 to vector<16x128xf32>
    %99 = arith.addf %98, %97 : vector<16x128xf32>
    %100 = arith.divf %98, %99 : vector<16x128xf32>
    %101 = arith.select %16, %95, %100 : vector<16x128xi1>, vector<16x128xf32>
    %102 = vector.extract_strided_slice %101 {offsets = [0, 0], sizes = [16, 32], strides = [1, 1]} : vector<16x128xf32> to vector<16x32xf32>
    %103 = vector.extract_strided_slice %101 {offsets = [0, 32], sizes = [16, 32], strides = [1, 1]} : vector<16x128xf32> to vector<16x32xf32>
    %104 = vector.extract_strided_slice %101 {offsets = [0, 64], sizes = [16, 32], strides = [1, 1]} : vector<16x128xf32> to vector<16x32xf32>
    %105 = vector.extract_strided_slice %101 {offsets = [0, 96], sizes = [16, 32], strides = [1, 1]} : vector<16x128xf32> to vector<16x32xf32>
    %106 = arith.mulf %103, %84 : vector<16x32xf32>
    %107 = arith.mulf %102, %104 : vector<16x32xf32>
    %108 = arith.addf %106, %107 : vector<16x32xf32>
    %109 = math.tanh %108 : vector<16x32xf32>
    %110 = arith.mulf %105, %109 : vector<16x32xf32>
    %111 = vector.extract_strided_slice %110 {offsets = [0, 0], sizes = [16, 16], strides = [1, 1]} : vector<16x32xf32> to vector<16x16xf32>
    %c48_37 = arith.constant 48 : index
    %c0_38 = arith.constant 0 : index
    %112 = vector.load %arg12[%c48_37, %c0_38] : memref<160x48xf32, #tpu.memory_space<vmem>>, vector<16x16xf32>
    tpu.vector_store %arg12[%c48_37, %c0_38], %111 {strides = array<i32>} : memref<160x48xf32, #tpu.memory_space<vmem>>, vector<16x16xf32>,
    %113 = vector.extract_strided_slice %110 {offsets = [0, 16], sizes = [16, 16], strides = [1, 1]} : vector<16x32xf32> to vector<16x16xf32>
    %c96 = arith.constant 96 : index
    %c16_39 = arith.constant 16 : index
    %114 = vector.load %arg12[%c96, %c16_39] : memref<160x48xf32, #tpu.memory_space<vmem>>, vector<16x16xf32>
    tpu.vector_store %arg12[%c96, %c16_39], %113 {strides = array<i32>} : memref<160x48xf32, #tpu.memory_space<vmem>>, vector<16x16xf32>,
    %115 = arith.truncf %110 : vector<16x32xf32> to vector<16x32xbf16>
    %cst_40 = arith.constant dense<0.000000e+00> : vector<16x128xf32>
    %116 = tpu.matmul %115, %10, %cst_40 {dimension_numbers = #tpu.dot_dimension_numbers<[1], [0], [0], [1], [0, 0, 1, 1], [], []>} : vector<16x32xbf16>, vector<32x128xbf16>, vector<16x128xf32> -> vector<16x128xf32>
    %c64 = arith.constant 64 : index
    %c0_41 = arith.constant 0 : index
    %117 = vector.load %arg11[%c64, %c0_41] : memref<160x128xf32, #tpu.memory_space<vmem>>, vector<16x128xf32>
    %118 = arith.addf %116, %117 : vector<16x128xf32>
    %119 = math.tanh %118 : vector<16x128xf32>
    %120 = arith.negf %118 : vector<16x128xf32>
    %121 = math.exp %120 : vector<16x128xf32>
    %cst_42 = arith.constant 1.000000e+00 : f32
    %122 = vector.broadcast %cst_42 : f32 to vector<16x128xf32>
    %123 = arith.addf %122, %121 : vector<16x128xf32>
    %124 = arith.divf %122, %123 : vector<16x128xf32>
    %125 = arith.select %16, %119, %124 : vector<16x128xi1>, vector<16x128xf32>
    %126 = vector.extract_strided_slice %125 {offsets = [0, 0], sizes = [16, 32], strides = [1, 1]} : vector<16x128xf32> to vector<16x32xf32>
    %127 = vector.extract_strided_slice %125 {offsets = [0, 32], sizes = [16, 32], strides = [1, 1]} : vector<16x128xf32> to vector<16x32xf32>
    %128 = vector.extract_strided_slice %125 {offsets = [0, 64], sizes = [16, 32], strides = [1, 1]} : vector<16x128xf32> to vector<16x32xf32>
    %129 = vector.extract_strided_slice %125 {offsets = [0, 96], sizes = [16, 32], strides = [1, 1]} : vector<16x128xf32> to vector<16x32xf32>
    %130 = arith.mulf %127, %108 : vector<16x32xf32>
    %131 = arith.mulf %126, %128 : vector<16x32xf32>
    %132 = arith.addf %130, %131 : vector<16x32xf32>
    %133 = math.tanh %132 : vector<16x32xf32>
    %134 = arith.mulf %129, %133 : vector<16x32xf32>
    %135 = vector.extract_strided_slice %134 {offsets = [0, 0], sizes = [16, 16], strides = [1, 1]} : vector<16x32xf32> to vector<16x16xf32>
    %c64_43 = arith.constant 64 : index
    %c0_44 = arith.constant 0 : index
    %136 = vector.load %arg12[%c64_43, %c0_44] : memref<160x48xf32, #tpu.memory_space<vmem>>, vector<16x16xf32>
    tpu.vector_store %arg12[%c64_43, %c0_44], %135 {strides = array<i32>} : memref<160x48xf32, #tpu.memory_space<vmem>>, vector<16x16xf32>,
    %137 = vector.extract_strided_slice %134 {offsets = [0, 16], sizes = [16, 16], strides = [1, 1]} : vector<16x32xf32> to vector<16x16xf32>
    %c80 = arith.constant 80 : index
    %c16_45 = arith.constant 16 : index
    %138 = vector.load %arg12[%c80, %c16_45] : memref<160x48xf32, #tpu.memory_space<vmem>>, vector<16x16xf32>
    tpu.vector_store %arg12[%c80, %c16_45], %137 {strides = array<i32>} : memref<160x48xf32, #tpu.memory_space<vmem>>, vector<16x16xf32>,
    %139 = arith.truncf %134 : vector<16x32xf32> to vector<16x32xbf16>
    %cst_46 = arith.constant dense<0.000000e+00> : vector<16x128xf32>
    %140 = tpu.matmul %139, %10, %cst_46 {dimension_numbers = #tpu.dot_dimension_numbers<[1], [0], [0], [1], [0, 0, 1, 1], [], []>} : vector<16x32xbf16>, vector<32x128xbf16>, vector<16x128xf32> -> vector<16x128xf32>
    %c80_47 = arith.constant 80 : index
    %c0_48 = arith.constant 0 : index
    %141 = vector.load %arg11[%c80_47, %c0_48] : memref<160x128xf32, #tpu.memory_space<vmem>>, vector<16x128xf32>
    %142 = arith.addf %140, %141 : vector<16x128xf32>
    %143 = math.tanh %142 : vector<16x128xf32>
    %144 = arith.negf %142 : vector<16x128xf32>
    %145 = math.exp %144 : vector<16x128xf32>
    %cst_49 = arith.constant 1.000000e+00 : f32
    %146 = vector.broadcast %cst_49 : f32 to vector<16x128xf32>
    %147 = arith.addf %146, %145 : vector<16x128xf32>
    %148 = arith.divf %146, %147 : vector<16x128xf32>
    %149 = arith.select %16, %143, %148 : vector<16x128xi1>, vector<16x128xf32>
    %150 = vector.extract_strided_slice %149 {offsets = [0, 0], sizes = [16, 32], strides = [1, 1]} : vector<16x128xf32> to vector<16x32xf32>
    %151 = vector.extract_strided_slice %149 {offsets = [0, 32], sizes = [16, 32], strides = [1, 1]} : vector<16x128xf32> to vector<16x32xf32>
    %152 = vector.extract_strided_slice %149 {offsets = [0, 64], sizes = [16, 32], strides = [1, 1]} : vector<16x128xf32> to vector<16x32xf32>
    %153 = vector.extract_strided_slice %149 {offsets = [0, 96], sizes = [16, 32], strides = [1, 1]} : vector<16x128xf32> to vector<16x32xf32>
    %154 = arith.mulf %151, %132 : vector<16x32xf32>
    %155 = arith.mulf %150, %152 : vector<16x32xf32>
    %156 = arith.addf %154, %155 : vector<16x32xf32>
    %157 = math.tanh %156 : vector<16x32xf32>
    %158 = arith.mulf %153, %157 : vector<16x32xf32>
    %159 = vector.extract_strided_slice %158 {offsets = [0, 0], sizes = [16, 16], strides = [1, 1]} : vector<16x32xf32> to vector<16x16xf32>
    %c80_50 = arith.constant 80 : index
    %c0_51 = arith.constant 0 : index
    %160 = vector.load %arg12[%c80_50, %c0_51] : memref<160x48xf32, #tpu.memory_space<vmem>>, vector<16x16xf32>
    tpu.vector_store %arg12[%c80_50, %c0_51], %159 {strides = array<i32>} : memref<160x48xf32, #tpu.memory_space<vmem>>, vector<16x16xf32>,
    %161 = vector.extract_strided_slice %158 {offsets = [0, 16], sizes = [16, 16], strides = [1, 1]} : vector<16x32xf32> to vector<16x16xf32>
    %c64_52 = arith.constant 64 : index
    %c16_53 = arith.constant 16 : index
    %162 = vector.load %arg12[%c64_52, %c16_53] : memref<160x48xf32, #tpu.memory_space<vmem>>, vector<16x16xf32>
    tpu.vector_store %arg12[%c64_52, %c16_53], %161 {strides = array<i32>} : memref<160x48xf32, #tpu.memory_space<vmem>>, vector<16x16xf32>,
    %163 = arith.truncf %158 : vector<16x32xf32> to vector<16x32xbf16>
    %cst_54 = arith.constant dense<0.000000e+00> : vector<16x128xf32>
    %164 = tpu.matmul %163, %10, %cst_54 {dimension_numbers = #tpu.dot_dimension_numbers<[1], [0], [0], [1], [0, 0, 1, 1], [], []>} : vector<16x32xbf16>, vector<32x128xbf16>, vector<16x128xf32> -> vector<16x128xf32>
    %c96_55 = arith.constant 96 : index
    %c0_56 = arith.constant 0 : index
    %165 = vector.load %arg11[%c96_55, %c0_56] : memref<160x128xf32, #tpu.memory_space<vmem>>, vector<16x128xf32>
    %166 = arith.addf %164, %165 : vector<16x128xf32>
    %167 = math.tanh %166 : vector<16x128xf32>
    %168 = arith.negf %166 : vector<16x128xf32>
    %169 = math.exp %168 : vector<16x128xf32>
    %cst_57 = arith.constant 1.000000e+00 : f32
    %170 = vector.broadcast %cst_57 : f32 to vector<16x128xf32>
    %171 = arith.addf %170, %169 : vector<16x128xf32>
    %172 = arith.divf %170, %171 : vector<16x128xf32>
    %173 = arith.select %16, %167, %172 : vector<16x128xi1>, vector<16x128xf32>
    %174 = vector.extract_strided_slice %173 {offsets = [0, 0], sizes = [16, 32], strides = [1, 1]} : vector<16x128xf32> to vector<16x32xf32>
    %175 = vector.extract_strided_slice %173 {offsets = [0, 32], sizes = [16, 32], strides = [1, 1]} : vector<16x128xf32> to vector<16x32xf32>
    %176 = vector.extract_strided_slice %173 {offsets = [0, 64], sizes = [16, 32], strides = [1, 1]} : vector<16x128xf32> to vector<16x32xf32>
    %177 = vector.extract_strided_slice %173 {offsets = [0, 96], sizes = [16, 32], strides = [1, 1]} : vector<16x128xf32> to vector<16x32xf32>
    %178 = arith.mulf %175, %156 : vector<16x32xf32>
    %179 = arith.mulf %174, %176 : vector<16x32xf32>
    %180 = arith.addf %178, %179 : vector<16x32xf32>
    %181 = math.tanh %180 : vector<16x32xf32>
    %182 = arith.mulf %177, %181 : vector<16x32xf32>
    %183 = vector.extract_strided_slice %182 {offsets = [0, 0], sizes = [16, 16], strides = [1, 1]} : vector<16x32xf32> to vector<16x16xf32>
    %c96_58 = arith.constant 96 : index
    %c0_59 = arith.constant 0 : index
    %184 = vector.load %arg12[%c96_58, %c0_59] : memref<160x48xf32, #tpu.memory_space<vmem>>, vector<16x16xf32>
    tpu.vector_store %arg12[%c96_58, %c0_59], %183 {strides = array<i32>} : memref<160x48xf32, #tpu.memory_space<vmem>>, vector<16x16xf32>,
    %185 = vector.extract_strided_slice %182 {offsets = [0, 16], sizes = [16, 16], strides = [1, 1]} : vector<16x32xf32> to vector<16x16xf32>
    %c48_60 = arith.constant 48 : index
    %c16_61 = arith.constant 16 : index
    %186 = vector.load %arg12[%c48_60, %c16_61] : memref<160x48xf32, #tpu.memory_space<vmem>>, vector<16x16xf32>
    tpu.vector_store %arg12[%c48_60, %c16_61], %185 {strides = array<i32>} : memref<160x48xf32, #tpu.memory_space<vmem>>, vector<16x16xf32>,
    %187 = arith.truncf %182 : vector<16x32xf32> to vector<16x32xbf16>
    %cst_62 = arith.constant dense<0.000000e+00> : vector<16x128xf32>
    %188 = tpu.matmul %187, %10, %cst_62 {dimension_numbers = #tpu.dot_dimension_numbers<[1], [0], [0], [1], [0, 0, 1, 1], [], []>} : vector<16x32xbf16>, vector<32x128xbf16>, vector<16x128xf32> -> vector<16x128xf32>
    %c112_63 = arith.constant 112 : index
    %c0_64 = arith.constant 0 : index
    %189 = vector.load %arg11[%c112_63, %c0_64] : memref<160x128xf32, #tpu.memory_space<vmem>>, vector<16x128xf32>
    %190 = arith.addf %188, %189 : vector<16x128xf32>
    %191 = math.tanh %190 : vector<16x128xf32>
    %192 = arith.negf %190 : vector<16x128xf32>
    %193 = math.exp %192 : vector<16x128xf32>
    %cst_65 = arith.constant 1.000000e+00 : f32
    %194 = vector.broadcast %cst_65 : f32 to vector<16x128xf32>
    %195 = arith.addf %194, %193 : vector<16x128xf32>
    %196 = arith.divf %194, %195 : vector<16x128xf32>
    %197 = arith.select %16, %191, %196 : vector<16x128xi1>, vector<16x128xf32>
    %198 = vector.extract_strided_slice %197 {offsets = [0, 0], sizes = [16, 32], strides = [1, 1]} : vector<16x128xf32> to vector<16x32xf32>
    %199 = vector.extract_strided_slice %197 {offsets = [0, 32], sizes = [16, 32], strides = [1, 1]} : vector<16x128xf32> to vector<16x32xf32>
    %200 = vector.extract_strided_slice %197 {offsets = [0, 64], sizes = [16, 32], strides = [1, 1]} : vector<16x128xf32> to vector<16x32xf32>
    %201 = vector.extract_strided_slice %197 {offsets = [0, 96], sizes = [16, 32], strides = [1, 1]} : vector<16x128xf32> to vector<16x32xf32>
    %202 = arith.mulf %199, %180 : vector<16x32xf32>
    %203 = arith.mulf %198, %200 : vector<16x32xf32>
    %204 = arith.addf %202, %203 : vector<16x32xf32>
    %205 = math.tanh %204 : vector<16x32xf32>
    %206 = arith.mulf %201, %205 : vector<16x32xf32>
    %207 = vector.extract_strided_slice %206 {offsets = [0, 0], sizes = [16, 16], strides = [1, 1]} : vector<16x32xf32> to vector<16x16xf32>
    %c112_66 = arith.constant 112 : index
    %c0_67 = arith.constant 0 : index
    %208 = vector.load %arg12[%c112_66, %c0_67] : memref<160x48xf32, #tpu.memory_space<vmem>>, vector<16x16xf32>
    tpu.vector_store %arg12[%c112_66, %c0_67], %207 {strides = array<i32>} : memref<160x48xf32, #tpu.memory_space<vmem>>, vector<16x16xf32>,
    %209 = vector.extract_strided_slice %206 {offsets = [0, 16], sizes = [16, 16], strides = [1, 1]} : vector<16x32xf32> to vector<16x16xf32>
    %c32_68 = arith.constant 32 : index
    %c16_69 = arith.constant 16 : index
    %210 = vector.load %arg12[%c32_68, %c16_69] : memref<160x48xf32, #tpu.memory_space<vmem>>, vector<16x16xf32>
    tpu.vector_store %arg12[%c32_68, %c16_69], %209 {strides = array<i32>} : memref<160x48xf32, #tpu.memory_space<vmem>>, vector<16x16xf32>,
    %211 = arith.truncf %206 : vector<16x32xf32> to vector<16x32xbf16>
    %cst_70 = arith.constant dense<0.000000e+00> : vector<16x128xf32>
    %212 = tpu.matmul %211, %10, %cst_70 {dimension_numbers = #tpu.dot_dimension_numbers<[1], [0], [0], [1], [0, 0, 1, 1], [], []>} : vector<16x32xbf16>, vector<32x128xbf16>, vector<16x128xf32> -> vector<16x128xf32>
    %c128_71 = arith.constant 128 : index
    %c0_72 = arith.constant 0 : index
    %213 = vector.load %arg11[%c128_71, %c0_72] : memref<160x128xf32, #tpu.memory_space<vmem>>, vector<16x128xf32>
    %214 = arith.addf %212, %213 : vector<16x128xf32>
    %215 = math.tanh %214 : vector<16x128xf32>
    %216 = arith.negf %214 : vector<16x128xf32>
    %217 = math.exp %216 : vector<16x128xf32>
    %cst_73 = arith.constant 1.000000e+00 : f32
    %218 = vector.broadcast %cst_73 : f32 to vector<16x128xf32>
    %219 = arith.addf %218, %217 : vector<16x128xf32>
    %220 = arith.divf %218, %219 : vector<16x128xf32>
    %221 = arith.select %16, %215, %220 : vector<16x128xi1>, vector<16x128xf32>
    %222 = vector.extract_strided_slice %221 {offsets = [0, 0], sizes = [16, 32], strides = [1, 1]} : vector<16x128xf32> to vector<16x32xf32>
    %223 = vector.extract_strided_slice %221 {offsets = [0, 32], sizes = [16, 32], strides = [1, 1]} : vector<16x128xf32> to vector<16x32xf32>
    %224 = vector.extract_strided_slice %221 {offsets = [0, 64], sizes = [16, 32], strides = [1, 1]} : vector<16x128xf32> to vector<16x32xf32>
    %225 = vector.extract_strided_slice %221 {offsets = [0, 96], sizes = [16, 32], strides = [1, 1]} : vector<16x128xf32> to vector<16x32xf32>
    %226 = arith.mulf %223, %204 : vector<16x32xf32>
    %227 = arith.mulf %222, %224 : vector<16x32xf32>
    %228 = arith.addf %226, %227 : vector<16x32xf32>
    %229 = math.tanh %228 : vector<16x32xf32>
    %230 = arith.mulf %225, %229 : vector<16x32xf32>
    %231 = vector.extract_strided_slice %230 {offsets = [0, 0], sizes = [16, 16], strides = [1, 1]} : vector<16x32xf32> to vector<16x16xf32>
    %c128_74 = arith.constant 128 : index
    %c0_75 = arith.constant 0 : index
    %232 = vector.load %arg12[%c128_74, %c0_75] : memref<160x48xf32, #tpu.memory_space<vmem>>, vector<16x16xf32>
    tpu.vector_store %arg12[%c128_74, %c0_75], %231 {strides = array<i32>} : memref<160x48xf32, #tpu.memory_space<vmem>>, vector<16x16xf32>,
    %233 = vector.extract_strided_slice %230 {offsets = [0, 16], sizes = [16, 16], strides = [1, 1]} : vector<16x32xf32> to vector<16x16xf32>
    %c16_76 = arith.constant 16 : index
    %c16_77 = arith.constant 16 : index
    %234 = vector.load %arg12[%c16_76, %c16_77] : memref<160x48xf32, #tpu.memory_space<vmem>>, vector<16x16xf32>
    tpu.vector_store %arg12[%c16_76, %c16_77], %233 {strides = array<i32>} : memref<160x48xf32, #tpu.memory_space<vmem>>, vector<16x16xf32>,
    %235 = arith.truncf %230 : vector<16x32xf32> to vector<16x32xbf16>
    %cst_78 = arith.constant dense<0.000000e+00> : vector<16x128xf32>
    %236 = tpu.matmul %235, %10, %cst_78 {dimension_numbers = #tpu.dot_dimension_numbers<[1], [0], [0], [1], [0, 0, 1, 1], [], []>} : vector<16x32xbf16>, vector<32x128xbf16>, vector<16x128xf32> -> vector<16x128xf32>
    %c144_79 = arith.constant 144 : index
    %c0_80 = arith.constant 0 : index
    %237 = vector.load %arg11[%c144_79, %c0_80] : memref<160x128xf32, #tpu.memory_space<vmem>>, vector<16x128xf32>
    %238 = arith.addf %236, %237 : vector<16x128xf32>
    %239 = math.tanh %238 : vector<16x128xf32>
    %240 = arith.negf %238 : vector<16x128xf32>
    %241 = math.exp %240 : vector<16x128xf32>
    %cst_81 = arith.constant 1.000000e+00 : f32
    %242 = vector.broadcast %cst_81 : f32 to vector<16x128xf32>
    %243 = arith.addf %242, %241 : vector<16x128xf32>
    %244 = arith.divf %242, %243 : vector<16x128xf32>
    %245 = arith.select %16, %239, %244 : vector<16x128xi1>, vector<16x128xf32>
    %246 = vector.extract_strided_slice %245 {offsets = [0, 0], sizes = [16, 32], strides = [1, 1]} : vector<16x128xf32> to vector<16x32xf32>
    %247 = vector.extract_strided_slice %245 {offsets = [0, 32], sizes = [16, 32], strides = [1, 1]} : vector<16x128xf32> to vector<16x32xf32>
    %248 = vector.extract_strided_slice %245 {offsets = [0, 64], sizes = [16, 32], strides = [1, 1]} : vector<16x128xf32> to vector<16x32xf32>
    %249 = vector.extract_strided_slice %245 {offsets = [0, 96], sizes = [16, 32], strides = [1, 1]} : vector<16x128xf32> to vector<16x32xf32>
    %250 = arith.mulf %247, %228 : vector<16x32xf32>
    %251 = arith.mulf %246, %248 : vector<16x32xf32>
    %252 = arith.addf %250, %251 : vector<16x32xf32>
    %253 = math.tanh %252 : vector<16x32xf32>
    %254 = arith.mulf %249, %253 : vector<16x32xf32>
    %255 = vector.extract_strided_slice %254 {offsets = [0, 0], sizes = [16, 16], strides = [1, 1]} : vector<16x32xf32> to vector<16x16xf32>
    %c144_82 = arith.constant 144 : index
    %c0_83 = arith.constant 0 : index
    %256 = vector.load %arg12[%c144_82, %c0_83] : memref<160x48xf32, #tpu.memory_space<vmem>>, vector<16x16xf32>
    tpu.vector_store %arg12[%c144_82, %c0_83], %255 {strides = array<i32>} : memref<160x48xf32, #tpu.memory_space<vmem>>, vector<16x16xf32>,
    %257 = vector.extract_strided_slice %254 {offsets = [0, 16], sizes = [16, 16], strides = [1, 1]} : vector<16x32xf32> to vector<16x16xf32>
    %c0_84 = arith.constant 0 : index
    %c16_85 = arith.constant 16 : index
    %258 = vector.load %arg12[%c0_84, %c16_85] : memref<160x48xf32, #tpu.memory_space<vmem>>, vector<16x16xf32>
    tpu.vector_store %arg12[%c0_84, %c16_85], %257 {strides = array<i32>} : memref<160x48xf32, #tpu.memory_space<vmem>>, vector<16x16xf32>,
    %c0_86 = arith.constant 0 : index
    %c0_87 = arith.constant 0 : index
    %259 = vector.load %arg12[%c0_86, %c0_87] : memref<160x48xf32, #tpu.memory_space<vmem>>, vector<160x48xf32>
    %260 = arith.truncf %259 : vector<160x48xf32> to vector<160x48xbf16>
    %c0_88 = arith.constant 0 : index
    %c0_89 = arith.constant 0 : index
    %261 = vector.load %arg5[%c0_88, %c0_89] : memref<48x16xbf16, #tpu.memory_space<vmem>>, vector<48x16xbf16>
    %cst_90 = arith.constant dense<0.000000e+00> : vector<160x16xf32>
    %262 = tpu.matmul %260, %261, %cst_90 {dimension_numbers = #tpu.dot_dimension_numbers<[1], [0], [0], [1], [0, 0, 1, 1], [], []>} : vector<160x48xbf16>, vector<48x16xbf16>, vector<160x16xf32> -> vector<160x16xf32>
    %c0_91 = arith.constant 0 : index
    %c0_92 = arith.constant 0 : index
    %263 = vector.load %arg6[%c0_91, %c0_92] : memref<1x16xf32, #tpu.memory_space<vmem>>, vector<1x16xf32>
    %264 = vector.broadcast %263 : vector<1x16xf32> to vector<160x16xf32>
    %265 = arith.addf %262, %264 : vector<160x16xf32>
    %cst_93 = arith.constant 0.000000e+00 : f32
    %266 = vector.broadcast %cst_93 : f32 to vector<160x1xf32>
    %c0_94 = arith.constant 0 : index
    %c0_95 = arith.constant 0 : index
    %267 = vector.load %arg9[%c0_94, %c0_95] : memref<160x2xf32, #tpu.memory_space<vmem>>, vector<160x1xf32>
    %268 = vector.broadcast %267 : vector<160x1xf32> to vector<160x16xf32>
    %269 = arith.mulf %265, %268 : vector<160x16xf32>
    %270 = vector.shape_cast %269 : vector<160x16xf32> to vector<1x160x16xf32>
    %cst_96 = arith.constant dense<0.000000e+00> : vector<1xf32>
    %271 = vector.multi_reduction <add>, %270, %cst_96 [1, 2] : vector<1x160x16xf32> to vector<1xf32>
    %272 = vector.shape_cast %271 : vector<1xf32> to vector<1x1x1xf32>
    %273 = vector.extract %272[0, 0, 0] : f32 from vector<1x1x1xf32>
    %cst_97 = arith.constant 1.280000e+03 : f32
    %274 = arith.divf %273, %cst_97 : f32
    %275 = vector.broadcast %274 : f32 to vector<160x1xf32>
    %276 = arith.mulf %267, %275 : vector<160x1xf32>
    %277 = arith.addf %266, %276 : vector<160x1xf32>
    %c0_98 = arith.constant 0 : index
    %c1 = arith.constant 1 : index
    %278 = vector.load %arg9[%c0_98, %c1] : memref<160x2xf32, #tpu.memory_space<vmem>>, vector<160x1xf32>
    %279 = vector.broadcast %278 : vector<160x1xf32> to vector<160x16xf32>
    %280 = arith.mulf %265, %279 : vector<160x16xf32>
    %281 = vector.shape_cast %280 : vector<160x16xf32> to vector<1x160x16xf32>
    %cst_99 = arith.constant dense<0.000000e+00> : vector<1xf32>
    %282 = vector.multi_reduction <add>, %281, %cst_99 [1, 2] : vector<1x160x16xf32> to vector<1xf32>
    %283 = vector.shape_cast %282 : vector<1xf32> to vector<1x1x1xf32>
    %284 = vector.extract %283[0, 0, 0] : f32 from vector<1x1x1xf32>
    %cst_100 = arith.constant 1.280000e+03 : f32
    %285 = arith.divf %284, %cst_100 : f32
    %286 = vector.broadcast %285 : f32 to vector<160x1xf32>
    %287 = arith.mulf %278, %286 : vector<160x1xf32>
    %288 = arith.addf %277, %287 : vector<160x1xf32>
    %289 = vector.broadcast %288 : vector<160x1xf32> to vector<160x16xf32>
    %290 = arith.subf %265, %289 : vector<160x16xf32>
    %291 = arith.mulf %290, %290 : vector<160x16xf32>
    %cst_101 = arith.constant 0.000000e+00 : f32
    %292 = vector.broadcast %cst_101 : f32 to vector<160x1xf32>
    %c0_102 = arith.constant 0 : index
    %c0_103 = arith.constant 0 : index
    %293 = vector.load %arg9[%c0_102, %c0_103] : memref<160x2xf32, #tpu.memory_space<vmem>>, vector<160x1xf32>
    %294 = vector.broadcast %293 : vector<160x1xf32> to vector<160x16xf32>
    %295 = arith.mulf %291, %294 : vector<160x16xf32>
    %296 = vector.shape_cast %295 : vector<160x16xf32> to vector<1x160x16xf32>
    %cst_104 = arith.constant dense<0.000000e+00> : vector<1xf32>
    %297 = vector.multi_reduction <add>, %296, %cst_104 [1, 2] : vector<1x160x16xf32> to vector<1xf32>
    %298 = vector.shape_cast %297 : vector<1xf32> to vector<1x1x1xf32>
    %299 = vector.extract %298[0, 0, 0] : f32 from vector<1x1x1xf32>
    %cst_105 = arith.constant 1.280000e+03 : f32
    %300 = arith.divf %299, %cst_105 : f32
    %cst_106 = arith.constant 9.99999993E-9 : f32
    %301 = arith.addf %300, %cst_106 : f32
    %302 = math.rsqrt %301 : f32
    %303 = vector.broadcast %302 : f32 to vector<160x1xf32>
    %304 = arith.mulf %293, %303 : vector<160x1xf32>
    %305 = arith.addf %292, %304 : vector<160x1xf32>
    %c0_107 = arith.constant 0 : index
    %c1_108 = arith.constant 1 : index
    %306 = vector.load %arg9[%c0_107, %c1_108] : memref<160x2xf32, #tpu.memory_space<vmem>>, vector<160x1xf32>
    %307 = vector.broadcast %306 : vector<160x1xf32> to vector<160x16xf32>
    %308 = arith.mulf %291, %307 : vector<160x16xf32>
    %309 = vector.shape_cast %308 : vector<160x16xf32> to vector<1x160x16xf32>
    %cst_109 = arith.constant dense<0.000000e+00> : vector<1xf32>
    %310 = vector.multi_reduction <add>, %309, %cst_109 [1, 2] : vector<1x160x16xf32> to vector<1xf32>
    %311 = vector.shape_cast %310 : vector<1xf32> to vector<1x1x1xf32>
    %312 = vector.extract %311[0, 0, 0] : f32 from vector<1x1x1xf32>
    %cst_110 = arith.constant 1.280000e+03 : f32
    %313 = arith.divf %312, %cst_110 : f32
    %cst_111 = arith.constant 9.99999993E-9 : f32
    %314 = arith.addf %313, %cst_111 : f32
    %315 = math.rsqrt %314 : f32
    %316 = vector.broadcast %315 : f32 to vector<160x1xf32>
    %317 = arith.mulf %306, %316 : vector<160x1xf32>
    %318 = arith.addf %305, %317 : vector<160x1xf32>
    %319 = vector.broadcast %318 : vector<160x1xf32> to vector<160x16xf32>
    %320 = arith.mulf %290, %319 : vector<160x16xf32>
    %c0_112 = arith.constant 0 : index
    %c0_113 = arith.constant 0 : index
    %321 = vector.load %arg7[%c0_112, %c0_113] : memref<1x16xf32, #tpu.memory_space<vmem>>, vector<1x16xf32>
    %322 = vector.broadcast %321 : vector<1x16xf32> to vector<160x16xf32>
    %323 = arith.mulf %320, %322 : vector<160x16xf32>
    %c0_114 = arith.constant 0 : index
    %c0_115 = arith.constant 0 : index
    %324 = vector.load %arg8[%c0_114, %c0_115] : memref<1x16xf32, #tpu.memory_space<vmem>>, vector<1x16xf32>
    %325 = vector.broadcast %324 : vector<1x16xf32> to vector<160x16xf32>
    %326 = arith.addf %323, %325 : vector<160x16xf32>
    %c0_116 = arith.constant 0 : index
    %c0_117 = arith.constant 0 : index
    %327 = vector.load %arg1[%c0_116, %c0_117] : memref<160x32xf32, #tpu.memory_space<vmem>>, vector<160x16xf32>
    %328 = arith.addf %326, %327 : vector<160x16xf32>
    %c0_118 = arith.constant 0 : index
    %c0_119 = arith.constant 0 : index
    %329 = vector.load %arg10[%c0_118, %c0_119] : memref<160x16xf32, #tpu.memory_space<vmem>>, vector<160x16xf32>
    tpu.vector_store %arg10[%c0_118, %c0_119], %328 {strides = array<i32>} : memref<160x16xf32, #tpu.memory_space<vmem>>, vector<160x16xf32>,
    return
  }
  func.func @transform_0(%arg0: i32) -> (i32, i32) {
    %c0_i32 = arith.constant 0 : i32
    %c0_i32_0 = arith.constant 0 : i32
    return %arg0, %c0_i32 : i32, i32
  }
  func.func @transform_1(%arg0: i32) -> (i32, i32) {
    %c0_i32 = arith.constant 0 : i32
    %c0_i32_0 = arith.constant 0 : i32
    %c0_i32_1 = arith.constant 0 : i32
    return %c0_i32, %c0_i32_0 : i32, i32
  }
  func.func @transform_2(%arg0: i32) -> (i32, i32) {
    %c0_i32 = arith.constant 0 : i32
    %c0_i32_0 = arith.constant 0 : i32
    %c0_i32_1 = arith.constant 0 : i32
    return %c0_i32, %c0_i32_0 : i32, i32
  }
  func.func @transform_3(%arg0: i32) -> (i32, i32) {
    %c0_i32 = arith.constant 0 : i32
    %c0_i32_0 = arith.constant 0 : i32
    %c0_i32_1 = arith.constant 0 : i32
    return %c0_i32, %c0_i32_0 : i32, i32
  }
  func.func @transform_4(%arg0: i32) -> (i32, i32) {
    %c0_i32 = arith.constant 0 : i32
    %c0_i32_0 = arith.constant 0 : i32
    %c0_i32_1 = arith.constant 0 : i32
    return %c0_i32, %c0_i32_0 : i32, i32
  }
  func.func @transform_5(%arg0: i32) -> (i32, i32) {
    %c0_i32 = arith.constant 0 : i32
    %c0_i32_0 = arith.constant 0 : i32
    %c0_i32_1 = arith.constant 0 : i32
    return %c0_i32, %c0_i32_0 : i32, i32
  }
  func.func @transform_6(%arg0: i32) -> (i32, i32) {
    %c0_i32 = arith.constant 0 : i32
    %c0_i32_0 = arith.constant 0 : i32
    %c0_i32_1 = arith.constant 0 : i32
    return %c0_i32, %c0_i32_0 : i32, i32
  }
  func.func @transform_7(%arg0: i32) -> (i32, i32) {
    %c0_i32 = arith.constant 0 : i32
    %c0_i32_0 = arith.constant 0 : i32
    %c0_i32_1 = arith.constant 0 : i32
    return %c0_i32, %c0_i32_0 : i32, i32
  }
  func.func @transform_8(%arg0: i32) -> (i32, i32) {
    %c0_i32 = arith.constant 0 : i32
    %c0_i32_0 = arith.constant 0 : i32
    %c0_i32_1 = arith.constant 0 : i32
    return %c0_i32, %c0_i32_0 : i32, i32
  }
  func.func @transform_9(%arg0: i32) -> (i32, i32) {
    %c0_i32 = arith.constant 0 : i32
    %c0_i32_0 = arith.constant 0 : i32
    return %arg0, %c0_i32 : i32, i32
  }
}

</mosaic_0001>

<llo_original>
// kernel: sep_block.2
$region0: #{sep_block.2}
  #allocation0 [shape = 'u32[]', space=smem, size = 0x4, offset = 0x4, fixed_abs, tag = 'smem constant byte address 0x4 - core index']
  #allocation1 [shape = 'u32[72,128]{1,0:T(1,128)}', space=vmem, size = 0x9000, scoped, tag = 'internal scratch']
  #allocation2 [shape = 'f32[160,128]{1,0:T(8,128)}', space=vmem, size = 0x14000, scoped, tag = 'scratch operand']
  #allocation3 [shape = 'f32[160,48]{1,0:T(8,128)}', space=vmem, size = 0x14000, scoped, tag = 'scratch operand']
  %s0 = inlined_call_operand.vmem [shape: f32[160,32], index: 0, kind: input, shape index: {}]
  %s1 = inlined_call_operand.vmem [shape: bf16[32,128], index: 1, kind: input, shape index: {}]
  %s2 = inlined_call_operand.vmem [shape: bf16[32,128], index: 2, kind: input, shape index: {}]
  %s3 = inlined_call_operand.vmem [shape: f32[1,128], index: 3, kind: input, shape index: {}]
  %s4 = inlined_call_operand.vmem [shape: bf16[48,16], index: 4, kind: input, shape index: {}]
  %s5 = inlined_call_operand.vmem [shape: f32[1,16], index: 5, kind: input, shape index: {}]
  %s6 = inlined_call_operand.vmem [shape: f32[1,16], index: 6, kind: input, shape index: {}]
  %s7 = inlined_call_operand.vmem [shape: f32[1,16], index: 7, kind: input, shape index: {}]
  %s8 = inlined_call_operand.vmem [shape: f32[160,2], index: 8, kind: input, shape index: {}]
  %s9 = inlined_call_operand.vmem [shape: f32[160,16], index: 9, kind: output, shape index: {}]
  %s10 = sld [smem:[#allocation0]]
  $region46: #{sep_block.2} parent=0
    _
  %s12 = ssub.s32 1, %s10
  %s13 = scalar_select 0, %s12, %s10
  // Predicated region
  $region2: #{sep_block.2} parent=0 // pred_check
    _
  $region3: #{sep_block.2} parent=0 // pred_check_branch
    %15 = sbr.rel (0) target = $region5
  $region4: #{sep_block.2} parent=0 // pred_region
    _
  $region5: #{sep_block.2} parent=0 // pred_fallthru
    _
  // Predicated region
  $region6: #{sep_block.2} parent=0 // pred_check
    _
  $region7: #{sep_block.2} parent=0 // pred_check_branch
    %17 = sbr.rel (0) target = $region9
  $region8: #{sep_block.2} parent=0 // pred_region
    _
  $region9: #{sep_block.2} parent=0 // pred_fallthru
    _
  // Predicated region
  $region10: #{sep_block.2} parent=0 // pred_check
    _
  $region11: #{sep_block.2} parent=0 // pred_check_branch
    %19 = sbr.rel (0) target = $region13
  $region12: #{sep_block.2} parent=0 // pred_region
    _
  $region13: #{sep_block.2} parent=0 // pred_fallthru
    _
  // Predicated region
  $region14: #{sep_block.2} parent=0 // pred_check
    _
  $region15: #{sep_block.2} parent=0 // pred_check_branch
    %21 = sbr.rel (0) target = $region17
  $region16: #{sep_block.2} parent=0 // pred_region
    _
  $region17: #{sep_block.2} parent=0 // pred_fallthru
    _
  // Predicated region
  $region18: #{sep_block.2} parent=0 // pred_check
    _
  $region19: #{sep_block.2} parent=0 // pred_check_branch
    %23 = sbr.rel (0) target = $region21
  $region20: #{sep_block.2} parent=0 // pred_region
    _
  $region21: #{sep_block.2} parent=0 // pred_fallthru
    _
  // Predicated region
  $region22: #{sep_block.2} parent=0 // pred_check
    _
  $region23: #{sep_block.2} parent=0 // pred_check_branch
    %25 = sbr.rel (0) target = $region25
  $region24: #{sep_block.2} parent=0 // pred_region
    _
  $region25: #{sep_block.2} parent=0 // pred_fallthru
    _
  // Predicated region
  $region26: #{sep_block.2} parent=0 // pred_check
    _
  $region27: #{sep_block.2} parent=0 // pred_check_branch
    %27 = sbr.rel (0) target = $region29
  $region28: #{sep_block.2} parent=0 // pred_region
    _
  $region29: #{sep_block.2} parent=0 // pred_fallthru
    _
  // Predicated region
  $region30: #{sep_block.2} parent=0 // pred_check
    _
  $region31: #{sep_block.2} parent=0 // pred_check_branch
    %29 = sbr.rel (0) target = $region33
  $region32: #{sep_block.2} parent=0 // pred_region
    _
  $region33: #{sep_block.2} parent=0 // pred_fallthru
    _
  // Predicated region
  $region34: #{sep_block.2} parent=0 // pred_check
    _
  $region35: #{sep_block.2} parent=0 // pred_check_branch
    %31 = sbr.rel (0) target = $region37
  $region36: #{sep_block.2} parent=0 // pred_region
    _
  $region37: #{sep_block.2} parent=0 // pred_fallthru
    _
  %v33 = vld [vmem:[%s0] sm:$0xff]
  %v34 = vld [vmem:[%s0 + $0x8] sm:$0xff]
  %v35 = vld [vmem:[%s0 + $0x10] sm:$0xff]
  %v36 = vld [vmem:[%s0 + $0x18] sm:$0xff]
  %v37 = vld [vmem:[%s0 + $0x20] sm:$0xff]
  %v38 = vld [vmem:[%s0 + $0x28] sm:$0xff]
  %v39 = vld [vmem:[%s0 + $0x30] sm:$0xff]
  %v40 = vld [vmem:[%s0 + $0x38] sm:$0xff]
  %v41 = vld [vmem:[%s0 + $0x40] sm:$0xff]
  %v42 = vld [vmem:[%s0 + $0x48] sm:$0xff]
  %v43 = vld [vmem:[%s0 + $0x50] sm:$0xff]
  %v44 = vld [vmem:[%s0 + $0x58] sm:$0xff]
  %v45 = vld [vmem:[%s0 + $0x60] sm:$0xff]
  %v46 = vld [vmem:[%s0 + $0x68] sm:$0xff]
  %v47 = vld [vmem:[%s0 + $0x70] sm:$0xff]
  %v48 = vld [vmem:[%s0 + $0x78] sm:$0xff]
  %v49 = vld [vmem:[%s0 + $0x80] sm:$0xff]
  %v50 = vld [vmem:[%s0 + $0x88] sm:$0xff]
  %v51 = vld [vmem:[%s0 + $0x90] sm:$0xff]
  %v52 = vld [vmem:[%s0 + $0x98] sm:$0xff]
  %v53 = vpack.c.bf16 %v34, %v33
  %v54 = vpack.c.bf16 %v36, %v35
  %v55 = vpack.c.bf16 %v38, %v37
  %v56 = vpack.c.bf16 %v40, %v39
  %v57 = vpack.c.bf16 %v42, %v41
  %v58 = vpack.c.bf16 %v44, %v43
  %v59 = vpack.c.bf16 %v46, %v45
  %v60 = vpack.c.bf16 %v48, %v47
  %v61 = vpack.c.bf16 %v50, %v49
  %v62 = vpack.c.bf16 %v52, %v51
  %v63 = vld [vmem:[%s1] sm:$0xf]
  %v64 = vld [vmem:[%s1 + $0x4] sm:$0xf]
  %v65 = vld [vmem:[%s1 + $0x8] sm:$0xf]
  %v66 = vld [vmem:[%s1 + $0xc] sm:$0xf]
  %v67 = vld [vmem:[%s3] sm:$0x1]
  %v69 = vperm.slane %v67, 0
  %v75 = vunpack.c.l.b16 %v63
  %v76 = vunpack.c.l.b16 %v64
  %v77 = vunpack.c.l.b16 %v65
  %v78 = vunpack.c.l.b16 %v66
  %v79 = vpack.c.b16 %v76, %v75
  %v80 = vpack.c.b16 %v78, %v77
  %vm83 = vcmask 261120
  %v85 = vsel %vm83, %v53, 0
  %v88 = vsel %vm83, %v54, 0
  %v91 = vsel %vm83, %v55, 0
  %v94 = vsel %vm83, %v56, 0
  %v97 = vsel %vm83, %v57, 0
  %v100 = vsel %vm83, %v58, 0
  %v103 = vsel %vm83, %v59, 0
  %v106 = vsel %vm83, %v60, 0
  %v109 = vsel %vm83, %v61, 0
  %v112 = vsel %vm83, %v62, 0
  %114 = vmatpush.bf16.msra.mxu0 0
  %115 = vmatpush.bf16.msra.mxu0 0
  %116 = vmatpush.bf16.msra.mxu0 0
  %117 = vmatpush.bf16.msra.mxu0 0
  %118 = vmatpush.bf16.msra.mxu0 0
  %119 = vmatpush.bf16.msra.mxu0 0
  %120 = vmatpush.bf16.msra.mxu0 %v80
  %121 = vmatpush.bf16.msra.mxu0 %v79
  %122 = vmatmul.bf16.gmra.mxu0 %v85
  %v123 = vpop.f32.mrf.mxu0
  %v124 = vadd.f32 %v69, %v123
  %v125 = vpop.f32.mrf.mxu0
  %v126 = vadd.f32 %v69, %v125
  %127 = vmatmul.bf16.gmra.mxu0 %v88
  %v128 = vpop.f32.mrf.mxu0
  %v129 = vadd.f32 %v69, %v128
  %v130 = vpop.f32.mrf.mxu0
  %v131 = vadd.f32 %v69, %v130
  %132 = vmatmul.bf16.gmra.mxu0 %v91
  %v133 = vpop.f32.mrf.mxu0
  %v134 = vadd.f32 %v69, %v133
  %v135 = vpop.f32.mrf.mxu0
  %v136 = vadd.f32 %v69, %v135
  %137 = vmatmul.bf16.gmra.mxu0 %v94
  %v138 = vpop.f32.mrf.mxu0
  %v139 = vadd.f32 %v69, %v138
  %v140 = vpop.f32.mrf.mxu0
  %v141 = vadd.f32 %v69, %v140
  %142 = vmatmul.bf16.gmra.mxu0 %v97
  %v143 = vpop.f32.mrf.mxu0
  %v144 = vadd.f32 %v69, %v143
  %v145 = vpop.f32.mrf.mxu0
  %v146 = vadd.f32 %v69, %v145
  %147 = vmatmul.bf16.gmra.mxu0 %v100
  %v148 = vpop.f32.mrf.mxu0
  %v149 = vadd.f32 %v69, %v148
  %v150 = vpop.f32.mrf.mxu0
  %v151 = vadd.f32 %v69, %v150
  %152 = vmatmul.bf16.gmra.mxu0 %v103
  %v153 = vpop.f32.mrf.mxu0
  %v154 = vadd.f32 %v69, %v153
  %v155 = vpop.f32.mrf.mxu0
  %v156 = vadd.f32 %v69, %v155
  %157 = vmatmul.bf16.gmra.mxu0 %v106
  %v158 = vpop.f32.mrf.mxu0
  %v159 = vadd.f32 %v69, %v158
  %v160 = vpop.f32.mrf.mxu0
  %v161 = vadd.f32 %v69, %v160
  %162 = vmatmul.bf16.gmra.mxu0 %v109
  %v163 = vpop.f32.mrf.mxu0
  %v164 = vadd.f32 %v69, %v163
  %v165 = vpop.f32.mrf.mxu0
  %v166 = vadd.f32 %v69, %v165
  %167 = vmatmul.bf16.gmra.mxu0 %v112
  %v168 = vpop.f32.mrf.mxu0
  %v169 = vadd.f32 %v69, %v168
  %v170 = vpop.f32.mrf.mxu0
  %v171 = vadd.f32 %v69, %v170
  %172 = vdwg.mxu0
  %173 = vst [vmem:[#allocation2] sm:$0xff] %v124
  %174 = vst [vmem:[#allocation2 + $0x8] sm:$0xff] %v126
  %175 = vst [vmem:[#allocation2 + $0x10] sm:$0xff] %v129
  %176 = vst [vmem:[#allocation2 + $0x18] sm:$0xff] %v131
  %177 = vst [vmem:[#allocation2 + $0x20] sm:$0xff] %v134
  %178 = vst [vmem:[#allocation2 + $0x28] sm:$0xff] %v136
  %179 = vst [vmem:[#allocation2 + $0x30] sm:$0xff] %v139
  %180 = vst [vmem:[#allocation2 + $0x38] sm:$0xff] %v141
  %181 = vst [vmem:[#allocation2 + $0x40] sm:$0xff] %v144
  %182 = vst [vmem:[#allocation2 + $0x48] sm:$0xff] %v146
  %183 = vst [vmem:[#allocation2 + $0x50] sm:$0xff] %v149
  %184 = vst [vmem:[#allocation2 + $0x58] sm:$0xff] %v151
  %185 = vst [vmem:[#allocation2 + $0x60] sm:$0xff] %v154
  %186 = vst [vmem:[#allocation2 + $0x68] sm:$0xff] %v156
  %187 = vst [vmem:[#allocation2 + $0x70] sm:$0xff] %v159
  %188 = vst [vmem:[#allocation2 + $0x78] sm:$0xff] %v161
  %189 = vst [vmem:[#allocation2 + $0x80] sm:$0xff] %v164
  %190 = vst [vmem:[#allocation2 + $0x88] sm:$0xff] %v166
  %191 = vst [vmem:[#allocation2 + $0x90] sm:$0xff] %v169
  %192 = vst [vmem:[#allocation2 + $0x98] sm:$0xff] %v171
  %v193 = vld [vmem:[%s0] sm:$0xff]
  %v194 = vld [vmem:[%s0 + $0x8] sm:$0xff]
  %v195 = vld [vmem:[%s0 + $0x10] sm:$0xff]
  %v196 = vld [vmem:[%s0 + $0x18] sm:$0xff]
  %v197 = vld [vmem:[%s0 + $0x20] sm:$0xff]
  %v198 = vld [vmem:[%s0 + $0x28] sm:$0xff]
  %v199 = vld [vmem:[%s0 + $0x30] sm:$0xff]
  %v200 = vld [vmem:[%s0 + $0x38] sm:$0xff]
  %v201 = vld [vmem:[%s0 + $0x40] sm:$0xff]
  %v202 = vld [vmem:[%s0 + $0x48] sm:$0xff]
  %v203 = vld [vmem:[%s0 + $0x50] sm:$0xff]
  %v204 = vld [vmem:[%s0 + $0x58] sm:$0xff]
  %v205 = vld [vmem:[%s0 + $0x60] sm:$0xff]
  %v206 = vld [vmem:[%s0 + $0x68] sm:$0xff]
  %v207 = vld [vmem:[%s0 + $0x70] sm:$0xff]
  %v208 = vld [vmem:[%s0 + $0x78] sm:$0xff]
  %v209 = vld [vmem:[%s0 + $0x80] sm:$0xff]
  %v210 = vld [vmem:[%s0 + $0x88] sm:$0xff]
  %v211 = vld [vmem:[%s0 + $0x90] sm:$0xff]
  %v212 = vld [vmem:[%s0 + $0x98] sm:$0xff]
  %233 = vrot.lane.b32.xlu0 %v193, 32
  %v234 = vpop.permute.xlu0 %233
  %235 = vrot.lane.b32.xlu0 %v194, 32
  %v236 = vpop.permute.xlu0 %235
  %237 = vrot.lane.b32.xlu0 %v195, 32
  %v238 = vpop.permute.xlu0 %237
  %239 = vrot.lane.b32.xlu0 %v196, 32
  %v240 = vpop.permute.xlu0 %239
  %241 = vrot.lane.b32.xlu0 %v197, 32
  %v242 = vpop.permute.xlu0 %241
  %243 = vrot.lane.b32.xlu0 %v198, 32
  %v244 = vpop.permute.xlu0 %243
  %245 = vrot.lane.b32.xlu0 %v199, 32
  %v246 = vpop.permute.xlu0 %245
  %247 = vrot.lane.b32.xlu0 %v200, 32
  %v248 = vpop.permute.xlu0 %247
  %249 = vrot.lane.b32.xlu0 %v201, 32
  %v250 = vpop.permute.xlu0 %249
  %251 = vrot.lane.b32.xlu0 %v202, 32
  %v252 = vpop.permute.xlu0 %251
  %253 = vrot.lane.b32.xlu0 %v203, 32
  %v254 = vpop.permute.xlu0 %253
  %255 = vrot.lane.b32.xlu0 %v204, 32
  %v256 = vpop.permute.xlu0 %255
  %257 = vrot.lane.b32.xlu0 %v205, 32
  %v258 = vpop.permute.xlu0 %257
  %259 = vrot.lane.b32.xlu0 %v206, 32
  %v260 = vpop.permute.xlu0 %259
  %261 = vrot.lane.b32.xlu0 %v207, 32
  %v262 = vpop.permute.xlu0 %261
  %263 = vrot.lane.b32.xlu0 %v208, 32
  %v264 = vpop.permute.xlu0 %263
  %265 = vrot.lane.b32.xlu0 %v209, 32
  %v266 = vpop.permute.xlu0 %265
  %267 = vrot.lane.b32.xlu0 %v210, 32
  %v268 = vpop.permute.xlu0 %267
  %269 = vrot.lane.b32.xlu0 %v211, 32
  %v270 = vpop.permute.xlu0 %269
  %271 = vrot.lane.b32.xlu0 %v212, 32
  %v272 = vpop.permute.xlu0 %271
  %vm293 = vcmask 392448
  %294 = vst.msk [vmem:[#allocation3] sm:$0xff] %vm293, %v234
  %295 = vst.msk [vmem:[#allocation3 + $0x8] sm:$0xff] %vm293, %v236
  %296 = vst.msk [vmem:[#allocation3 + $0x10] sm:$0xff] %vm293, %v238
  %297 = vst.msk [vmem:[#allocation3 + $0x18] sm:$0xff] %vm293, %v240
  %298 = vst.msk [vmem:[#allocation3 + $0x20] sm:$0xff] %vm293, %v242
  %299 = vst.msk [vmem:[#allocation3 + $0x28] sm:$0xff] %vm293, %v244
  %300 = vst.msk [vmem:[#allocation3 + $0x30] sm:$0xff] %vm293, %v246
  %301 = vst.msk [vmem:[#allocation3 + $0x38] sm:$0xff] %vm293, %v248
  %302 = vst.msk [vmem:[#allocation3 + $0x40] sm:$0xff] %vm293, %v250
  %303 = vst.msk [vmem:[#allocation3 + $0x48] sm:$0xff] %vm293, %v252
  %304 = vst.msk [vmem:[#allocation3 + $0x50] sm:$0xff] %vm293, %v254
  %305 = vst.msk [vmem:[#allocation3 + $0x58] sm:$0xff] %vm293, %v256
  %306 = vst.msk [vmem:[#allocation3 + $0x60] sm:$0xff] %vm293, %v258
  %307 = vst.msk [vmem:[#allocation3 + $0x68] sm:$0xff] %vm293, %v260
  %308 = vst.msk [vmem:[#allocation3 + $0x70] sm:$0xff] %vm293, %v262
  %309 = vst.msk [vmem:[#allocation3 + $0x78] sm:$0xff] %vm293, %v264
  %310 = vst.msk [vmem:[#allocation3 + $0x80] sm:$0xff] %vm293, %v266
  %311 = vst.msk [vmem:[#allocation3 + $0x88] sm:$0xff] %vm293, %v268
  %312 = vst.msk [vmem:[#allocation3 + $0x90] sm:$0xff] %vm293, %v270
  %313 = vst.msk [vmem:[#allocation3 + $0x98] sm:$0xff] %vm293, %v272
  %v314 = vld [vmem:[%s2] sm:$0xf]
  %v315 = vld [vmem:[%s2 + $0x4] sm:$0xf]
  %v316 = vld [vmem:[%s2 + $0x8] sm:$0xf]
  %v317 = vld [vmem:[%s2 + $0xc] sm:$0xf]
  %v318 = vlaneseq
  %v319 = vand.u32 %v318, 127
  %vm320 = vcmp.ge.s32.totalorder %v319, 64
  %vm321 = vcmp.lt.s32.totalorder %v319, 96
  %vm322 = vmand %vm320, %vm321
  %v323 = vld [vmem:[#allocation2] sm:$0xff]
  %v324 = vld [vmem:[#allocation2 + $0x8] sm:$0xff]
  %v325 = vld [vmem:[#allocation2 + $0x10] sm:$0xf]
  %v330 = vunpack.c.l.b16 %v314
  %v331 = vunpack.c.l.b16 %v315
  %v332 = vunpack.c.l.b16 %v316
  %v333 = vunpack.c.l.b16 %v317
  %v334 = vpack.c.b16 %v331, %v330
  %v335 = vpack.c.b16 %v333, %v332
  %v339 = vsel %vm83, 0, 0
  %341 = vmatpush.bf16.msra.mxu0 0
  %342 = vmatpush.bf16.msra.mxu0 0
  %343 = vmatpush.bf16.msra.mxu0 0
  %344 = vmatpush.bf16.msra.mxu0 0
  %345 = vmatpush.bf16.msra.mxu0 0
  %346 = vmatpush.bf16.msra.mxu0 0
  %347 = vmatpush.bf16.msra.mxu0 %v335
  %348 = vmatpush.bf16.msra.mxu0 %v334
  %349 = vmatmul.bf16.gmra.mxu0 %v339
  %v350 = vpop.f32.mrf.mxu0
  %v351 = vadd.f32 %v323, %v350
  %v352 = vpop.f32.mrf.mxu0
  %v353 = vadd.f32 %v324, %v352
  %354 = vmatmul.bf16.gmra.mxu0 %v339
  %v355 = vpop.f32.mrf.mxu0
  %v356 = vadd.f32 %v325, %v355
  %v357 = vpop.f32.mrf.mxu0
  %358 = vdwg.mxu0
  %v359 = vtanh.pop %v351
  %v360 = vtanh.pop %v353
  %v361 = vtanh.pop %v356
  %v362 = vxor.u32 %v351, 2147483648
  %v363 = vxor.u32 %v353, 2147483648
  %v364 = vxor.u32 %v356, 2147483648
  %v365 = vmul.f32 %v362, 1.442695
  %v366 = vpow.pop %v365
  %v367 = vmul.f32 %v363, 1.442695
  %v368 = vpow.pop %v367
  %v369 = vmul.f32 %v364, 1.442695
  %v370 = vpow.pop %v369
  %v371 = vadd.f32 %v366, 1.0
  %v372 = vadd.f32 %v368, 1.0
  %v373 = vadd.f32 %v370, 1.0
  %v374 = vrcp.pop %v371
  %v375 = vmul.f32 %v371, %v374
  %v376 = vsub.f32 1.0, %v375
  %v377 = vmul.f32 %v374, %v376
  %v378 = vadd.f32 %v374, %v377
  %vm379 = vweird.f32 %v371
  %vm380 = vweird.f32 %v374
  %vm381 = vmor %vm379, %vm380
  %v382 = vsel %vm381, %v374, %v378
  %v383 = vand.u32 2147483647, %v371
  %vm384 = vcmp.eq.f32.partialorder %v383, 8.507059e+37
  %v385 = vand.u32 %v371, 2147483648
  %v386 = vor.u32 1.1754944e-38, %v385
  %v387 = vsel %vm384, %v386, %v382
  %v388 = vmul.f32 1.0, %v387
  %v389 = vrcp.pop %v372
  %v390 = vmul.f32 %v372, %v389
  %v391 = vsub.f32 1.0, %v390
  %v392 = vmul.f32 %v389, %v391
  %v393 = vadd.f32 %v389, %v392
  %vm394 = vweird.f32 %v372
  %vm395 = vweird.f32 %v389
  %vm396 = vmor %vm394, %vm395
  %v397 = vsel %vm396, %v389, %v393
  %v398 = vand.u32 2147483647, %v372
  %vm399 = vcmp.eq.f32.partialorder %v398, 8.507059e+37
  %v400 = vand.u32 %v372, 2147483648
  %v401 = vor.u32 1.1754944e-38, %v400
  %v402 = vsel %vm399, %v401, %v397
  %v403 = vmul.f32 1.0, %v402
  %v404 = vrcp.pop %v373
  %v405 = vmul.f32 %v373, %v404
  %v406 = vsub.f32 1.0, %v405
  %v407 = vmul.f32 %v404, %v406
  %v408 = vadd.f32 %v404, %v407
  %vm409 = vweird.f32 %v373
  %vm410 = vweird.f32 %v404
  %vm411 = vmor %vm409, %vm410
  %v412 = vsel %vm411, %v404, %v408
  %v413 = vand.u32 2147483647, %v373
  %vm414 = vcmp.eq.f32.partialorder %v413, 8.507059e+37
  %v415 = vand.u32 %v373, 2147483648
  %v416 = vor.u32 1.1754944e-38, %v415
  %v417 = vsel %vm414, %v416, %v412
  %v418 = vmul.f32 1.0, %v417
  %v419 = vsel %vm322, %v359, %v388
  %v420 = vsel %vm322, %v360, %v403
  %v421 = vsel %vm322, %v361, %v418
  %v422 = vmul.f32 %v419, 0.0
  %v423 = vmul.f32 %v420, 0.0
  %v424 = vmul.f32 %v421, 0.0
  %428 = vrot.lane.b32.xlu0 %v419, 64
  %v429 = vpop.permute.xlu0 %428
  %430 = vrot.lane.b32.xlu0 %v420, 64
  %v431 = vpop.permute.xlu0 %430
  %432 = vrot.lane.b32.xlu0 %v421, 64
  %v433 = vpop.permute.xlu0 %432
  %v437 = vmul.f32 %v419, %v429
  %v438 = vmul.f32 %v420, %v431
  %v439 = vmul.f32 %v421, %v433
  %443 = vrot.lane.b32.xlu0 %v437, 32
  %v444 = vpop.permute.xlu0 %443
  %445 = vrot.lane.b32.xlu0 %v438, 32
  %v446 = vpop.permute.xlu0 %445
  %447 = vrot.lane.b32.xlu0 %v439, 32
  %v448 = vpop.permute.xlu0 %447
  %v452 = vadd.f32 %v422, %v444
  %v453 = vadd.f32 %v423, %v446
  %v454 = vadd.f32 %v424, %v448
  %v455 = vtanh.pop %v452
  %v456 = vtanh.pop %v453
  %v457 = vtanh.pop %v454
  %461 = vrot.lane.b32.xlu0 %v455, 64
  %v462 = vpop.permute.xlu0 %461
  %463 = vrot.lane.b32.xlu0 %v456, 64
  %v464 = vpop.permute.xlu0 %463
  %465 = vrot.lane.b32.xlu0 %v457, 64
  %v466 = vpop.permute.xlu0 %465
  %v470 = vmul.f32 %v419, %v462
  %v471 = vmul.f32 %v420, %v464
  %v472 = vmul.f32 %v421, %v466
  %476 = vrot.lane.b32.xlu0 %v470, 32
  %v477 = vpop.permute.xlu0 %476
  %478 = vrot.lane.b32.xlu0 %v471, 32
  %v479 = vpop.permute.xlu0 %478
  %480 = vrot.lane.b32.xlu0 %v472, 32
  %v481 = vpop.permute.xlu0 %480
  %vm485 = vcmask 130048
  %486 = vst.msk [vmem:[#allocation3] sm:$0xff] %vm485, %v477
  %487 = vst.msk [vmem:[#allocation3 + $0x8] sm:$0xff] %vm485, %v479
  %vm488 = vcmask 125952
  %489 = vst.msk [vmem:[#allocation3 + $0x10] sm:$0xf] %vm488, %v481
  %vm490 = vcmask 261248
  %491 = vst.msk [vmem:[#allocation3 + $0x8c] sm:$0xff] %vm490, %v477
  %492 = vst.msk [vmem:[#allocation3 + $0x94] sm:$0xff] %vm490, %v479
  %vm493 = vcmask 257152
  %494 = vst.msk [vmem:[#allocation3 + $0x9c] sm:$0xf] %vm493, %v481
  %v495 = vpack.c.bf16 %v471, %v470
  %v496 = vpack.c.bf16 %v472, %v472
  %v497 = vld [vmem:[#allocation2 + $0x14] sm:$0xff]
  %v498 = vld [vmem:[#allocation2 + $0x1c] sm:$0xff]
  %v499 = vld [vmem:[#allocation2 + $0x24] sm:$0xf]
  %502 = vrot.lane.b32.xlu0 %v495, 32
  %v503 = vpop.permute.xlu0 %502
  %504 = vrot.lane.b32.xlu0 %v496, 32
  %v505 = vpop.permute.xlu0 %504
  %v507 = vsel %vm83, %v503, 0
  %v510 = vsel %vm83, %v505, 0
  %512 = vmatpush.bf16.msra.mxu0 0
  %513 = vmatpush.bf16.msra.mxu0 0
  %514 = vmatpush.bf16.msra.mxu0 0
  %515 = vmatpush.bf16.msra.mxu0 0
  %516 = vmatpush.bf16.msra.mxu0 0
  %517 = vmatpush.bf16.msra.mxu0 0
  %518 = vmatpush.bf16.msra.mxu0 %v335
  %519 = vmatpush.bf16.msra.mxu0 %v334
  %520 = vmatmul.bf16.gmra.mxu0 %v507
  %v521 = vpop.f32.mrf.mxu0
  %v522 = vadd.f32 %v497, %v521
  %v523 = vpop.f32.mrf.mxu0
  %v524 = vadd.f32 %v498, %v523
  %525 = vmatmul.bf16.gmra.mxu0 %v510
  %v526 = vpop.f32.mrf.mxu0
  %v527 = vadd.f32 %v499, %v526
  %v528 = vpop.f32.mrf.mxu0
  %529 = vdwg.mxu0
  %v530 = vtanh.pop %v522
  %v531 = vtanh.pop %v524
  %v532 = vtanh.pop %v527
  %v533 = vxor.u32 %v522, 2147483648
  %v534 = vxor.u32 %v524, 2147483648
  %v535 = vxor.u32 %v527, 2147483648
  %v536 = vmul.f32 %v533, 1.442695
  %v537 = vpow.pop %v536
  %v538 = vmul.f32 %v534, 1.442695
  %v539 = vpow.pop %v538
  %v540 = vmul.f32 %v535, 1.442695
  %v541 = vpow.pop %v540
  %v542 = vadd.f32 %v537, 1.0
  %v543 = vadd.f32 %v539, 1.0
  %v544 = vadd.f32 %v541, 1.0
  %v545 = vrcp.pop %v542
  %v546 = vmul.f32 %v542, %v545
  %v547 = vsub.f32 1.0, %v546
  %v548 = vmul.f32 %v545, %v547
  %v549 = vadd.f32 %v545, %v548
  %vm550 = vweird.f32 %v542
  %vm551 = vweird.f32 %v545
  %vm552 = vmor %vm550, %vm551
  %v553 = vsel %vm552, %v545, %v549
  %v554 = vand.u32 2147483647, %v542
  %vm555 = vcmp.eq.f32.partialorder %v554, 8.507059e+37
  %v556 = vand.u32 %v542, 2147483648
  %v557 = vor.u32 1.1754944e-38, %v556
  %v558 = vsel %vm555, %v557, %v553
  %v559 = vmul.f32 1.0, %v558
  %v560 = vrcp.pop %v543
  %v561 = vmul.f32 %v543, %v560
  %v562 = vsub.f32 1.0, %v561
  %v563 = vmul.f32 %v560, %v562
  %v564 = vadd.f32 %v560, %v563
  %vm565 = vweird.f32 %v543
  %vm566 = vweird.f32 %v560
  %vm567 = vmor %vm565, %vm566
  %v568 = vsel %vm567, %v560, %v564
  %v569 = vand.u32 2147483647, %v543
  %vm570 = vcmp.eq.f32.partialorder %v569, 8.507059e+37
  %v571 = vand.u32 %v543, 2147483648
  %v572 = vor.u32 1.1754944e-38, %v571
  %v573 = vsel %vm570, %v572, %v568
  %v574 = vmul.f32 1.0, %v573
  %v575 = vrcp.pop %v544
  %v576 = vmul.f32 %v544, %v575
  %v577 = vsub.f32 1.0, %v576
  %v578 = vmul.f32 %v575, %v577
  %v579 = vadd.f32 %v575, %v578
  %vm580 = vweird.f32 %v544
  %vm581 = vweird.f32 %v575
  %vm582 = vmor %vm580, %vm581
  %v583 = vsel %vm582, %v575, %v579
  %v584 = vand.u32 2147483647, %v544
  %vm585 = vcmp.eq.f32.partialorder %v584, 8.507059e+37
  %v586 = vand.u32 %v544, 2147483648
  %v587 = vor.u32 1.1754944e-38, %v586
  %v588 = vsel %vm585, %v587, %v583
  %v589 = vmul.f32 1.0, %v588
  %v590 = vsel %vm322, %v530, %v559
  %v591 = vsel %vm322, %v531, %v574
  %v592 = vsel %vm322, %v532, %v589
  %v593 = vmul.f32 %v590, %v452
  %v594 = vmul.f32 %v591, %v453
  %v595 = vmul.f32 %v592, %v454
  %599 = vrot.lane.b32.xlu0 %v590, 64
  %v600 = vpop.permute.xlu0 %599
  %601 = vrot.lane.b32.xlu0 %v591, 64
  %v602 = vpop.permute.xlu0 %601
  %603 = vrot.lane.b32.xlu0 %v592, 64
  %v604 = vpop.permute.xlu0 %603
  %v608 = vmul.f32 %v590, %v600
  %v609 = vmul.f32 %v591, %v602
  %v610 = vmul.f32 %v592, %v604
  %614 = vrot.lane.b32.xlu0 %v608, 32
  %v615 = vpop.permute.xlu0 %614
  %616 = vrot.lane.b32.xlu0 %v609, 32
  %v617 = vpop.permute.xlu0 %616
  %618 = vrot.lane.b32.xlu0 %v610, 32
  %v619 = vpop.permute.xlu0 %618
  %v623 = vadd.f32 %v593, %v615
  %v624 = vadd.f32 %v594, %v617
  %v625 = vadd.f32 %v595, %v619
  %v626 = vtanh.pop %v623
  %v627 = vtanh.pop %v624
  %v628 = vtanh.pop %v625
  %632 = vrot.lane.b32.xlu0 %v626, 64
  %v633 = vpop.permute.xlu0 %632
  %634 = vrot.lane.b32.xlu0 %v627, 64
  %v635 = vpop.permute.xlu0 %634
  %636 = vrot.lane.b32.xlu0 %v628, 64
  %v637 = vpop.permute.xlu0 %636
  %v641 = vmul.f32 %v590, %v633
  %v642 = vmul.f32 %v591, %v635
  %v643 = vmul.f32 %v592, %v637
  %647 = vrot.lane.b32.xlu0 %v641, 32
  %v648 = vpop.permute.xlu0 %647
  %649 = vrot.lane.b32.xlu0 %v642, 32
  %v650 = vpop.permute.xlu0 %649
  %651 = vrot.lane.b32.xlu0 %v643, 32
  %v652 = vpop.permute.xlu0 %651
  %656 = vst.msk [vmem:[#allocation3 + $0x14] sm:$0xff] %vm485, %v648
  %657 = vst.msk [vmem:[#allocation3 + $0x1c] sm:$0xff] %vm485, %v650
  %658 = vst.msk [vmem:[#allocation3 + $0x24] sm:$0xf] %vm488, %v652
  %659 = vst.msk [vmem:[#allocation3 + $0x78] sm:$0xff] %vm490, %v648
  %660 = vst.msk [vmem:[#allocation3 + $0x80] sm:$0xff] %vm490, %v650
  %661 = vst.msk [vmem:[#allocation3 + $0x88] sm:$0xf] %vm493, %v652
  %v662 = vpack.c.bf16 %v642, %v641
  %v663 = vpack.c.bf16 %v643, %v643
  %v664 = vld [vmem:[#allocation2 + $0x28] sm:$0xff]
  %v665 = vld [vmem:[#allocation2 + $0x30] sm:$0xff]
  %v666 = vld [vmem:[#allocation2 + $0x38] sm:$0xf]
  %669 = vrot.lane.b32.xlu0 %v662, 32
  %v670 = vpop.permute.xlu0 %669
  %671 = vrot.lane.b32.xlu0 %v663, 32
  %v672 = vpop.permute.xlu0 %671
  %v674 = vsel %vm83, %v670, 0
  %v677 = vsel %vm83, %v672, 0
  %679 = vmatpush.bf16.msra.mxu0 0
  %680 = vmatpush.bf16.msra.mxu0 0
  %681 = vmatpush.bf16.msra.mxu0 0
  %682 = vmatpush.bf16.msra.mxu0 0
  %683 = vmatpush.bf16.msra.mxu0 0
  %684 = vmatpush.bf16.msra.mxu0 0
  %685 = vmatpush.bf16.msra.mxu0 %v335
  %686 = vmatpush.bf16.msra.mxu0 %v334
  %687 = vmatmul.bf16.gmra.mxu0 %v674
  %v688 = vpop.f32.mrf.mxu0
  %v689 = vadd.f32 %v664, %v688
  %v690 = vpop.f32.mrf.mxu0
  %v691 = vadd.f32 %v665, %v690
  %692 = vmatmul.bf16.gmra.mxu0 %v677
  %v693 = vpop.f32.mrf.mxu0
  %v694 = vadd.f32 %v666, %v693
  %v695 = vpop.f32.mrf.mxu0
  %696 = vdwg.mxu0
  %v697 = vtanh.pop %v689
  %v698 = vtanh.pop %v691
  %v699 = vtanh.pop %v694
  %v700 = vxor.u32 %v689, 2147483648
  %v701 = vxor.u32 %v691, 2147483648
  %v702 = vxor.u32 %v694, 2147483648
  %v703 = vmul.f32 %v700, 1.442695
  %v704 = vpow.pop %v703
  %v705 = vmul.f32 %v701, 1.442695
  %v706 = vpow.pop %v705
  %v707 = vmul.f32 %v702, 1.442695
  %v708 = vpow.pop %v707
  %v709 = vadd.f32 %v704, 1.0
  %v710 = vadd.f32 %v706, 1.0
  %v711 = vadd.f32 %v708, 1.0
  %v712 = vrcp.pop %v709
  %v713 = vmul.f32 %v709, %v712
  %v714 = vsub.f32 1.0, %v713
  %v715 = vmul.f32 %v712, %v714
  %v716 = vadd.f32 %v712, %v715
  %vm717 = vweird.f32 %v709
  %vm718 = vweird.f32 %v712
  %vm719 = vmor %vm717, %vm718
  %v720 = vsel %vm719, %v712, %v716
  %v721 = vand.u32 2147483647, %v709
  %vm722 = vcmp.eq.f32.partialorder %v721, 8.507059e+37
  %v723 = vand.u32 %v709, 2147483648
  %v724 = vor.u32 1.1754944e-38, %v723
  %v725 = vsel %vm722, %v724, %v720
  %v726 = vmul.f32 1.0, %v725
  %v727 = vrcp.pop %v710
  %v728 = vmul.f32 %v710, %v727
  %v729 = vsub.f32 1.0, %v728
  %v730 = vmul.f32 %v727, %v729
  %v731 = vadd.f32 %v727, %v730
  %vm732 = vweird.f32 %v710
  %vm733 = vweird.f32 %v727
  %vm734 = vmor %vm732, %vm733
  %v735 = vsel %vm734, %v727, %v731
  %v736 = vand.u32 2147483647, %v710
  %vm737 = vcmp.eq.f32.partialorder %v736, 8.507059e+37
  %v738 = vand.u32 %v710, 2147483648
  %v739 = vor.u32 1.1754944e-38, %v738
  %v740 = vsel %vm737, %v739, %v735
  %v741 = vmul.f32 1.0, %v740
  %v742 = vrcp.pop %v711
  %v743 = vmul.f32 %v711, %v742
  %v744 = vsub.f32 1.0, %v743
  %v745 = vmul.f32 %v742, %v744
  %v746 = vadd.f32 %v742, %v745
  %vm747 = vweird.f32 %v711
  %vm748 = vweird.f32 %v742
  %vm749 = vmor %vm747, %vm748
  %v750 = vsel %vm749, %v742, %v746
  %v751 = vand.u32 2147483647, %v711
  %vm752 = vcmp.eq.f32.partialorder %v751, 8.507059e+37
  %v753 = vand.u32 %v711, 2147483648
  %v754 = vor.u32 1.1754944e-38, %v753
  %v755 = vsel %vm752, %v754, %v750
  %v756 = vmul.f32 1.0, %v755
  %v757 = vsel %vm322, %v697, %v726
  %v758 = vsel %vm322, %v698, %v741
  %v759 = vsel %vm322, %v699, %v756
  %v760 = vmul.f32 %v757, %v623
  %v761 = vmul.f32 %v758, %v624
  %v762 = vmul.f32 %v759, %v625
  %766 = vrot.lane.b32.xlu0 %v757, 64
  %v767 = vpop.permute.xlu0 %766
  %768 = vrot.lane.b32.xlu0 %v758, 64
  %v769 = vpop.permute.xlu0 %768
  %770 = vrot.lane.b32.xlu0 %v759, 64
  %v771 = vpop.permute.xlu0 %770
  %v775 = vmul.f32 %v757, %v767
  %v776 = vmul.f32 %v758, %v769
  %v777 = vmul.f32 %v759, %v771
  %781 = vrot.lane.b32.xlu0 %v775, 32
  %v782 = vpop.permute.xlu0 %781
  %783 = vrot.lane.b32.xlu0 %v776, 32
  %v784 = vpop.permute.xlu0 %783
  %785 = vrot.lane.b32.xlu0 %v777, 32
  %v786 = vpop.permute.xlu0 %785
  %v790 = vadd.f32 %v760, %v782
  %v791 = vadd.f32 %v761, %v784
  %v792 = vadd.f32 %v762, %v786
  %v793 = vtanh.pop %v790
  %v794 = vtanh.pop %v791
  %v795 = vtanh.pop %v792
  %799 = vrot.lane.b32.xlu0 %v793, 64
  %v800 = vpop.permute.xlu0 %799
  %801 = vrot.lane.b32.xlu0 %v794, 64
  %v802 = vpop.permute.xlu0 %801
  %803 = vrot.lane.b32.xlu0 %v795, 64
  %v804 = vpop.permute.xlu0 %803
  %v808 = vmul.f32 %v757, %v800
  %v809 = vmul.f32 %v758, %v802
  %v810 = vmul.f32 %v759, %v804
  %814 = vrot.lane.b32.xlu0 %v808, 32
  %v815 = vpop.permute.xlu0 %814
  %816 = vrot.lane.b32.xlu0 %v809, 32
  %v817 = vpop.permute.xlu0 %816
  %818 = vrot.lane.b32.xlu0 %v810, 32
  %v819 = vpop.permute.xlu0 %818
  %823 = vst.msk [vmem:[#allocation3 + $0x28] sm:$0xff] %vm485, %v815
  %824 = vst.msk [vmem:[#allocation3 + $0x30] sm:$0xff] %vm485, %v817
  %825 = vst.msk [vmem:[#allocation3 + $0x38] sm:$0xf] %vm488, %v819
  %826 = vst.msk [vmem:[#allocation3 + $0x64] sm:$0xff] %vm490, %v815
  %827 = vst.msk [vmem:[#allocation3 + $0x6c] sm:$0xff] %vm490, %v817
  %828 = vst.msk [vmem:[#allocation3 + $0x74] sm:$0xf] %vm493, %v819
  %v829 = vpack.c.bf16 %v809, %v808
  %v830 = vpack.c.bf16 %v810, %v810
  %v831 = vld [vmem:[#allocation2 + $0x3c] sm:$0xff]
  %v832 = vld [vmem:[#allocation2 + $0x44] sm:$0xff]
  %v833 = vld [vmem:[#allocation2 + $0x4c] sm:$0xf]
  %836 = vrot.lane.b32.xlu0 %v829, 32
  %v837 = vpop.permute.xlu0 %836
  %838 = vrot.lane.b32.xlu0 %v830, 32
  %v839 = vpop.permute.xlu0 %838
  %v841 = vsel %vm83, %v837, 0
  %v844 = vsel %vm83, %v839, 0
  %846 = vmatpush.bf16.msra.mxu0 0
  %847 = vmatpush.bf16.msra.mxu0 0
  %848 = vmatpush.bf16.msra.mxu0 0
  %849 = vmatpush.bf16.msra.mxu0 0
  %850 = vmatpush.bf16.msra.mxu0 0
  %851 = vmatpush.bf16.msra.mxu0 0
  %852 = vmatpush.bf16.msra.mxu0 %v335
  %853 = vmatpush.bf16.msra.mxu0 %v334
  %854 = vmatmul.bf16.gmra.mxu0 %v841
  %v855 = vpop.f32.mrf.mxu0
  %v856 = vadd.f32 %v831, %v855
  %v857 = vpop.f32.mrf.mxu0
  %v858 = vadd.f32 %v832, %v857
  %859 = vmatmul.bf16.gmra.mxu0 %v844
  %v860 = vpop.f32.mrf.mxu0
  %v861 = vadd.f32 %v833, %v860
  %v862 = vpop.f32.mrf.mxu0
  %863 = vdwg.mxu0
  %v864 = vtanh.pop %v856
  %v865 = vtanh.pop %v858
  %v866 = vtanh.pop %v861
  %v867 = vxor.u32 %v856, 2147483648
  %v868 = vxor.u32 %v858, 2147483648
  %v869 = vxor.u32 %v861, 2147483648
  %v870 = vmul.f32 %v867, 1.442695
  %v871 = vpow.pop %v870
  %v872 = vmul.f32 %v868, 1.442695
  %v873 = vpow.pop %v872
  %v874 = vmul.f32 %v869, 1.442695
  %v875 = vpow.pop %v874
  %v876 = vadd.f32 %v871, 1.0
  %v877 = vadd.f32 %v873, 1.0
  %v878 = vadd.f32 %v875, 1.0
  %v879 = vrcp.pop %v876
  %v880 = vmul.f32 %v876, %v879
  %v881 = vsub.f32 1.0, %v880
  %v882 = vmul.f32 %v879, %v881
  %v883 = vadd.f32 %v879, %v882
  %vm884 = vweird.f32 %v876
  %vm885 = vweird.f32 %v879
  %vm886 = vmor %vm884, %vm885
  %v887 = vsel %vm886, %v879, %v883
  %v888 = vand.u32 2147483647, %v876
  %vm889 = vcmp.eq.f32.partialorder %v888, 8.507059e+37
  %v890 = vand.u32 %v876, 2147483648
  %v891 = vor.u32 1.1754944e-38, %v890
  %v892 = vsel %vm889, %v891, %v887
  %v893 = vmul.f32 1.0, %v892
  %v894 = vrcp.pop %v877
  %v895 = vmul.f32 %v877, %v894
  %v896 = vsub.f32 1.0, %v895
  %v897 = vmul.f32 %v894, %v896
  %v898 = vadd.f32 %v894, %v897
  %vm899 = vweird.f32 %v877
  %vm900 = vweird.f32 %v894
  %vm901 = vmor %vm899, %vm900
  %v902 = vsel %vm901, %v894, %v898
  %v903 = vand.u32 2147483647, %v877
  %vm904 = vcmp.eq.f32.partialorder %v903, 8.507059e+37
  %v905 = vand.u32 %v877, 2147483648
  %v906 = vor.u32 1.1754944e-38, %v905
  %v907 = vsel %vm904, %v906, %v902
  %v908 = vmul.f32 1.0, %v907
  %v909 = vrcp.pop %v878
  %v910 = vmul.f32 %v878, %v909
  %v911 = vsub.f32 1.0, %v910
  %v912 = vmul.f32 %v909, %v911
  %v913 = vadd.f32 %v909, %v912
  %vm914 = vweird.f32 %v878
  %vm915 = vweird.f32 %v909
  %vm916 = vmor %vm914, %vm915
  %v917 = vsel %vm916, %v909, %v913
  %v918 = vand.u32 2147483647, %v878
  %vm919 = vcmp.eq.f32.partialorder %v918, 8.507059e+37
  %v920 = vand.u32 %v878, 2147483648
  %v921 = vor.u32 1.1754944e-38, %v920
  %v922 = vsel %vm919, %v921, %v917
  %v923 = vmul.f32 1.0, %v922
  %v924 = vsel %vm322, %v864, %v893
  %v925 = vsel %vm322, %v865, %v908
  %v926 = vsel %vm322, %v866, %v923
  %v927 = vmul.f32 %v924, %v790
  %v928 = vmul.f32 %v925, %v791
  %v929 = vmul.f32 %v926, %v792
  %933 = vrot.lane.b32.xlu0 %v924, 64
  %v934 = vpop.permute.xlu0 %933
  %935 = vrot.lane.b32.xlu0 %v925, 64
  %v936 = vpop.permute.xlu0 %935
  %937 = vrot.lane.b32.xlu0 %v926, 64
  %v938 = vpop.permute.xlu0 %937
  %v942 = vmul.f32 %v924, %v934
  %v943 = vmul.f32 %v925, %v936
  %v944 = vmul.f32 %v926, %v938
  %948 = vrot.lane.b32.xlu0 %v942, 32
  %v949 = vpop.permute.xlu0 %948
  %950 = vrot.lane.b32.xlu0 %v943, 32
  %v951 = vpop.permute.xlu0 %950
  %952 = vrot.lane.b32.xlu0 %v944, 32
  %v953 = vpop.permute.xlu0 %952
  %v957 = vadd.f32 %v927, %v949
  %v958 = vadd.f32 %v928, %v951
  %v959 = vadd.f32 %v929, %v953
  %v960 = vtanh.pop %v957
  %v961 = vtanh.pop %v958
  %v962 = vtanh.pop %v959
  %966 = vrot.lane.b32.xlu0 %v960, 64
  %v967 = vpop.permute.xlu0 %966
  %968 = vrot.lane.b32.xlu0 %v961, 64
  %v969 = vpop.permute.xlu0 %968
  %970 = vrot.lane.b32.xlu0 %v962, 64
  %v971 = vpop.permute.xlu0 %970
  %v975 = vmul.f32 %v924, %v967
  %v976 = vmul.f32 %v925, %v969
  %v977 = vmul.f32 %v926, %v971
  %981 = vrot.lane.b32.xlu0 %v975, 32
  %v982 = vpop.permute.xlu0 %981
  %983 = vrot.lane.b32.xlu0 %v976, 32
  %v984 = vpop.permute.xlu0 %983
  %985 = vrot.lane.b32.xlu0 %v977, 32
  %v986 = vpop.permute.xlu0 %985
  %990 = vst.msk [vmem:[#allocation3 + $0x3c] sm:$0xff] %vm485, %v982
  %991 = vst.msk [vmem:[#allocation3 + $0x44] sm:$0xff] %vm485, %v984
  %992 = vst.msk [vmem:[#allocation3 + $0x4c] sm:$0xf] %vm488, %v986
  %993 = vst.msk [vmem:[#allocation3 + $0x50] sm:$0xff] %vm490, %v982
  %994 = vst.msk [vmem:[#allocation3 + $0x58] sm:$0xff] %vm490, %v984
  %995 = vst.msk [vmem:[#allocation3 + $0x60] sm:$0xf] %vm493, %v986
  %v996 = vpack.c.bf16 %v976, %v975
  %v997 = vpack.c.bf16 %v977, %v977
  %v998 = vld [vmem:[#allocation2 + $0x50] sm:$0xff]
  %v999 = vld [vmem:[#allocation2 + $0x58] sm:$0xff]
  %v1000 = vld [vmem:[#allocation2 + $0x60] sm:$0xf]
  %1003 = vrot.lane.b32.xlu0 %v996, 32
  %v1004 = vpop.permute.xlu0 %1003
  %1005 = vrot.lane.b32.xlu0 %v997, 32
  %v1006 = vpop.permute.xlu0 %1005
  %v1008 = vsel %vm83, %v1004, 0
  %v1011 = vsel %vm83, %v1006, 0
  %1013 = vmatpush.bf16.msra.mxu0 0
  %1014 = vmatpush.bf16.msra.mxu0 0
  %1015 = vmatpush.bf16.msra.mxu0 0
  %1016 = vmatpush.bf16.msra.mxu0 0
  %1017 = vmatpush.bf16.msra.mxu0 0
  %1018 = vmatpush.bf16.msra.mxu0 0
  %1019 = vmatpush.bf16.msra.mxu0 %v335
  %1020 = vmatpush.bf16.msra.mxu0 %v334
  %1021 = vmatmul.bf16.gmra.mxu0 %v1008
  %v1022 = vpop.f32.mrf.mxu0
  %v1023 = vadd.f32 %v998, %v1022
  %v1024 = vpop.f32.mrf.mxu0
  %v1025 = vadd.f32 %v999, %v1024
  %1026 = vmatmul.bf16.gmra.mxu0 %v1011
  %v1027 = vpop.f32.mrf.mxu0
  %v1028 = vadd.f32 %v1000, %v1027
  %v1029 = vpop.f32.mrf.mxu0
  %1030 = vdwg.mxu0
  %v1031 = vtanh.pop %v1023
  %v1032 = vtanh.pop %v1025
  %v1033 = vtanh.pop %v1028
  %v1034 = vxor.u32 %v1023, 2147483648
  %v1035 = vxor.u32 %v1025, 2147483648
  %v1036 = vxor.u32 %v1028, 2147483648
  %v1037 = vmul.f32 %v1034, 1.442695
  %v1038 = vpow.pop %v1037
  %v1039 = vmul.f32 %v1035, 1.442695
  %v1040 = vpow.pop %v1039
  %v1041 = vmul.f32 %v1036, 1.442695
  %v1042 = vpow.pop %v1041
  %v1043 = vadd.f32 %v1038, 1.0
  %v1044 = vadd.f32 %v1040, 1.0
  %v1045 = vadd.f32 %v1042, 1.0
  %v1046 = vrcp.pop %v1043
  %v1047 = vmul.f32 %v1043, %v1046
  %v1048 = vsub.f32 1.0, %v1047
  %v1049 = vmul.f32 %v1046, %v1048
  %v1050 = vadd.f32 %v1046, %v1049
  %vm1051 = vweird.f32 %v1043
  %vm1052 = vweird.f32 %v1046
  %vm1053 = vmor %vm1051, %vm1052
  %v1054 = vsel %vm1053, %v1046, %v1050
  %v1055 = vand.u32 2147483647, %v1043
  %vm1056 = vcmp.eq.f32.partialorder %v1055, 8.507059e+37
  %v1057 = vand.u32 %v1043, 2147483648
  %v1058 = vor.u32 1.1754944e-38, %v1057
  %v1059 = vsel %vm1056, %v1058, %v1054
  %v1060 = vmul.f32 1.0, %v1059
  %v1061 = vrcp.pop %v1044
  %v1062 = vmul.f32 %v1044, %v1061
  %v1063 = vsub.f32 1.0, %v1062
  %v1064 = vmul.f32 %v1061, %v1063
  %v1065 = vadd.f32 %v1061, %v1064
  %vm1066 = vweird.f32 %v1044
  %vm1067 = vweird.f32 %v1061
  %vm1068 = vmor %vm1066, %vm1067
  %v1069 = vsel %vm1068, %v1061, %v1065
  %v1070 = vand.u32 2147483647, %v1044
  %vm1071 = vcmp.eq.f32.partialorder %v1070, 8.507059e+37
  %v1072 = vand.u32 %v1044, 2147483648
  %v1073 = vor.u32 1.1754944e-38, %v1072
  %v1074 = vsel %vm1071, %v1073, %v1069
  %v1075 = vmul.f32 1.0, %v1074
  %v1076 = vrcp.pop %v1045
  %v1077 = vmul.f32 %v1045, %v1076
  %v1078 = vsub.f32 1.0, %v1077
  %v1079 = vmul.f32 %v1076, %v1078
  %v1080 = vadd.f32 %v1076, %v1079
  %vm1081 = vweird.f32 %v1045
  %vm1082 = vweird.f32 %v1076
  %vm1083 = vmor %vm1081, %vm1082
  %v1084 = vsel %vm1083, %v1076, %v1080
  %v1085 = vand.u32 2147483647, %v1045
  %vm1086 = vcmp.eq.f32.partialorder %v1085, 8.507059e+37
  %v1087 = vand.u32 %v1045, 2147483648
  %v1088 = vor.u32 1.1754944e-38, %v1087
  %v1089 = vsel %vm1086, %v1088, %v1084
  %v1090 = vmul.f32 1.0, %v1089
  %v1091 = vsel %vm322, %v1031, %v1060
  %v1092 = vsel %vm322, %v1032, %v1075
  %v1093 = vsel %vm322, %v1033, %v1090
  %v1094 = vmul.f32 %v1091, %v957
  %v1095 = vmul.f32 %v1092, %v958
  %v1096 = vmul.f32 %v1093, %v959
  %1100 = vrot.lane.b32.xlu0 %v1091, 64
  %v1101 = vpop.permute.xlu0 %1100
  %1102 = vrot.lane.b32.xlu0 %v1092, 64
  %v1103 = vpop.permute.xlu0 %1102
  %1104 = vrot.lane.b32.xlu0 %v1093, 64
  %v1105 = vpop.permute.xlu0 %1104
  %v1109 = vmul.f32 %v1091, %v1101
  %v1110 = vmul.f32 %v1092, %v1103
  %v1111 = vmul.f32 %v1093, %v1105
  %1115 = vrot.lane.b32.xlu0 %v1109, 32
  %v1116 = vpop.permute.xlu0 %1115
  %1117 = vrot.lane.b32.xlu0 %v1110, 32
  %v1118 = vpop.permute.xlu0 %1117
  %1119 = vrot.lane.b32.xlu0 %v1111, 32
  %v1120 = vpop.permute.xlu0 %1119
  %v1124 = vadd.f32 %v1094, %v1116
  %v1125 = vadd.f32 %v1095, %v1118
  %v1126 = vadd.f32 %v1096, %v1120
  %v1127 = vtanh.pop %v1124
  %v1128 = vtanh.pop %v1125
  %v1129 = vtanh.pop %v1126
  %1133 = vrot.lane.b32.xlu0 %v1127, 64
  %v1134 = vpop.permute.xlu0 %1133
  %1135 = vrot.lane.b32.xlu0 %v1128, 64
  %v1136 = vpop.permute.xlu0 %1135
  %1137 = vrot.lane.b32.xlu0 %v1129, 64
  %v1138 = vpop.permute.xlu0 %1137
  %v1142 = vmul.f32 %v1091, %v1134
  %v1143 = vmul.f32 %v1092, %v1136
  %v1144 = vmul.f32 %v1093, %v1138
  %1148 = vrot.lane.b32.xlu0 %v1142, 32
  %v1149 = vpop.permute.xlu0 %1148
  %1150 = vrot.lane.b32.xlu0 %v1143, 32
  %v1151 = vpop.permute.xlu0 %1150
  %1152 = vrot.lane.b32.xlu0 %v1144, 32
  %v1153 = vpop.permute.xlu0 %1152
  %1157 = vst.msk [vmem:[#allocation3 + $0x50] sm:$0xff] %vm485, %v1149
  %1158 = vst.msk [vmem:[#allocation3 + $0x58] sm:$0xff] %vm485, %v1151
  %1159 = vst.msk [vmem:[#allocation3 + $0x60] sm:$0xf] %vm488, %v1153
  %1160 = vst.msk [vmem:[#allocation3 + $0x3c] sm:$0xff] %vm490, %v1149
  %1161 = vst.msk [vmem:[#allocation3 + $0x44] sm:$0xff] %vm490, %v1151
  %1162 = vst.msk [vmem:[#allocation3 + $0x4c] sm:$0xf] %vm493, %v1153
  %v1163 = vpack.c.bf16 %v1143, %v1142
  %v1164 = vpack.c.bf16 %v1144, %v1144
  %v1165 = vld [vmem:[#allocation2 + $0x64] sm:$0xff]
  %v1166 = vld [vmem:[#allocation2 + $0x6c] sm:$0xff]
  %v1167 = vld [vmem:[#allocation2 + $0x74] sm:$0xf]
  %1170 = vrot.lane.b32.xlu0 %v1163, 32
  %v1171 = vpop.permute.xlu0 %1170
  %1172 = vrot.lane.b32.xlu0 %v1164, 32
  %v1173 = vpop.permute.xlu0 %1172
  %v1175 = vsel %vm83, %v1171, 0
  %v1178 = vsel %vm83, %v1173, 0
  %1180 = vmatpush.bf16.msra.mxu0 0
  %1181 = vmatpush.bf16.msra.mxu0 0
  %1182 = vmatpush.bf16.msra.mxu0 0
  %1183 = vmatpush.bf16.msra.mxu0 0
  %1184 = vmatpush.bf16.msra.mxu0 0
  %1185 = vmatpush.bf16.msra.mxu0 0
  %1186 = vmatpush.bf16.msra.mxu0 %v335
  %1187 = vmatpush.bf16.msra.mxu0 %v334
  %1188 = vmatmul.bf16.gmra.mxu0 %v1175
  %v1189 = vpop.f32.mrf.mxu0
  %v1190 = vadd.f32 %v1165, %v1189
  %v1191 = vpop.f32.mrf.mxu0
  %v1192 = vadd.f32 %v1166, %v1191
  %1193 = vmatmul.bf16.gmra.mxu0 %v1178
  %v1194 = vpop.f32.mrf.mxu0
  %v1195 = vadd.f32 %v1167, %v1194
  %v1196 = vpop.f32.mrf.mxu0
  %1197 = vdwg.mxu0
  %v1198 = vtanh.pop %v1190
  %v1199 = vtanh.pop %v1192
  %v1200 = vtanh.pop %v1195
  %v1201 = vxor.u32 %v1190, 2147483648
  %v1202 = vxor.u32 %v1192, 2147483648
  %v1203 = vxor.u32 %v1195, 2147483648
  %v1204 = vmul.f32 %v1201, 1.442695
  %v1205 = vpow.pop %v1204
  %v1206 = vmul.f32 %v1202, 1.442695
  %v1207 = vpow.pop %v1206
  %v1208 = vmul.f32 %v1203, 1.442695
  %v1209 = vpow.pop %v1208
  %v1210 = vadd.f32 %v1205, 1.0
  %v1211 = vadd.f32 %v1207, 1.0
  %v1212 = vadd.f32 %v1209, 1.0
  %v1213 = vrcp.pop %v1210
  %v1214 = vmul.f32 %v1210, %v1213
  %v1215 = vsub.f32 1.0, %v1214
  %v1216 = vmul.f32 %v1213, %v1215
  %v1217 = vadd.f32 %v1213, %v1216
  %vm1218 = vweird.f32 %v1210
  %vm1219 = vweird.f32 %v1213
  %vm1220 = vmor %vm1218, %vm1219
  %v1221 = vsel %vm1220, %v1213, %v1217
  %v1222 = vand.u32 2147483647, %v1210
  %vm1223 = vcmp.eq.f32.partialorder %v1222, 8.507059e+37
  %v1224 = vand.u32 %v1210, 2147483648
  %v1225 = vor.u32 1.1754944e-38, %v1224
  %v1226 = vsel %vm1223, %v1225, %v1221
  %v1227 = vmul.f32 1.0, %v1226
  %v1228 = vrcp.pop %v1211
  %v1229 = vmul.f32 %v1211, %v1228
  %v1230 = vsub.f32 1.0, %v1229
  %v1231 = vmul.f32 %v1228, %v1230
  %v1232 = vadd.f32 %v1228, %v1231
  %vm1233 = vweird.f32 %v1211
  %vm1234 = vweird.f32 %v1228
  %vm1235 = vmor %vm1233, %vm1234
  %v1236 = vsel %vm1235, %v1228, %v1232
  %v1237 = vand.u32 2147483647, %v1211
  %vm1238 = vcmp.eq.f32.partialorder %v1237, 8.507059e+37
  %v1239 = vand.u32 %v1211, 2147483648
  %v1240 = vor.u32 1.1754944e-38, %v1239
  %v1241 = vsel %vm1238, %v1240, %v1236
  %v1242 = vmul.f32 1.0, %v1241
  %v1243 = vrcp.pop %v1212
  %v1244 = vmul.f32 %v1212, %v1243
  %v1245 = vsub.f32 1.0, %v1244
  %v1246 = vmul.f32 %v1243, %v1245
  %v1247 = vadd.f32 %v1243, %v1246
  %vm1248 = vweird.f32 %v1212
  %vm1249 = vweird.f32 %v1243
  %vm1250 = vmor %vm1248, %vm1249
  %v1251 = vsel %vm1250, %v1243, %v1247
  %v1252 = vand.u32 2147483647, %v1212
  %vm1253 = vcmp.eq.f32.partialorder %v1252, 8.507059e+37
  %v1254 = vand.u32 %v1212, 2147483648
  %v1255 = vor.u32 1.1754944e-38, %v1254
  %v1256 = vsel %vm1253, %v1255, %v1251
  %v1257 = vmul.f32 1.0, %v1256
  %v1258 = vsel %vm322, %v1198, %v1227
  %v1259 = vsel %vm322, %v1199, %v1242
  %v1260 = vsel %vm322, %v1200, %v1257
  %v1261 = vmul.f32 %v1258, %v1124
  %v1262 = vmul.f32 %v1259, %v1125
  %v1263 = vmul.f32 %v1260, %v1126
  %1267 = vrot.lane.b32.xlu0 %v1258, 64
  %v1268 = vpop.permute.xlu0 %1267
  %1269 = vrot.lane.b32.xlu0 %v1259, 64
  %v1270 = vpop.permute.xlu0 %1269
  %1271 = vrot.lane.b32.xlu0 %v1260, 64
  %v1272 = vpop.permute.xlu0 %1271
  %v1276 = vmul.f32 %v1258, %v1268
  %v1277 = vmul.f32 %v1259, %v1270
  %v1278 = vmul.f32 %v1260, %v1272
  %1282 = vrot.lane.b32.xlu0 %v1276, 32
  %v1283 = vpop.permute.xlu0 %1282
  %1284 = vrot.lane.b32.xlu0 %v1277, 32
  %v1285 = vpop.permute.xlu0 %1284
  %1286 = vrot.lane.b32.xlu0 %v1278, 32
  %v1287 = vpop.permute.xlu0 %1286
  %v1291 = vadd.f32 %v1261, %v1283
  %v1292 = vadd.f32 %v1262, %v1285
  %v1293 = vadd.f32 %v1263, %v1287
  %v1294 = vtanh.pop %v1291
  %v1295 = vtanh.pop %v1292
  %v1296 = vtanh.pop %v1293
  %1300 = vrot.lane.b32.xlu0 %v1294, 64
  %v1301 = vpop.permute.xlu0 %1300
  %1302 = vrot.lane.b32.xlu0 %v1295, 64
  %v1303 = vpop.permute.xlu0 %1302
  %1304 = vrot.lane.b32.xlu0 %v1296, 64
  %v1305 = vpop.permute.xlu0 %1304
  %v1309 = vmul.f32 %v1258, %v1301
  %v1310 = vmul.f32 %v1259, %v1303
  %v1311 = vmul.f32 %v1260, %v1305
  %1315 = vrot.lane.b32.xlu0 %v1309, 32
  %v1316 = vpop.permute.xlu0 %1315
  %1317 = vrot.lane.b32.xlu0 %v1310, 32
  %v1318 = vpop.permute.xlu0 %1317
  %1319 = vrot.lane.b32.xlu0 %v1311, 32
  %v1320 = vpop.permute.xlu0 %1319
  %1324 = vst.msk [vmem:[#allocation3 + $0x64] sm:$0xff] %vm485, %v1316
  %1325 = vst.msk [vmem:[#allocation3 + $0x6c] sm:$0xff] %vm485, %v1318
  %1326 = vst.msk [vmem:[#allocation3 + $0x74] sm:$0xf] %vm488, %v1320
  %1327 = vst.msk [vmem:[#allocation3 + $0x28] sm:$0xff] %vm490, %v1316
  %1328 = vst.msk [vmem:[#allocation3 + $0x30] sm:$0xff] %vm490, %v1318
  %1329 = vst.msk [vmem:[#allocation3 + $0x38] sm:$0xf] %vm493, %v1320
  %v1330 = vpack.c.bf16 %v1310, %v1309
  %v1331 = vpack.c.bf16 %v1311, %v1311
  %v1332 = vld [vmem:[#allocation2 + $0x78] sm:$0xff]
  %v1333 = vld [vmem:[#allocation2 + $0x80] sm:$0xff]
  %v1334 = vld [vmem:[#allocation2 + $0x88] sm:$0xf]
  %1337 = vrot.lane.b32.xlu0 %v1330, 32
  %v1338 = vpop.permute.xlu0 %1337
  %1339 = vrot.lane.b32.xlu0 %v1331, 32
  %v1340 = vpop.permute.xlu0 %1339
  %v1342 = vsel %vm83, %v1338, 0
  %v1345 = vsel %vm83, %v1340, 0
  %1347 = vmatpush.bf16.msra.mxu0 0
  %1348 = vmatpush.bf16.msra.mxu0 0
  %1349 = vmatpush.bf16.msra.mxu0 0
  %1350 = vmatpush.bf16.msra.mxu0 0
  %1351 = vmatpush.bf16.msra.mxu0 0
  %1352 = vmatpush.bf16.msra.mxu0 0
  %1353 = vmatpush.bf16.msra.mxu0 %v335
  %1354 = vmatpush.bf16.msra.mxu0 %v334
  %1355 = vmatmul.bf16.gmra.mxu0 %v1342
  %v1356 = vpop.f32.mrf.mxu0
  %v1357 = vadd.f32 %v1332, %v1356
  %v1358 = vpop.f32.mrf.mxu0
  %v1359 = vadd.f32 %v1333, %v1358
  %1360 = vmatmul.bf16.gmra.mxu0 %v1345
  %v1361 = vpop.f32.mrf.mxu0
  %v1362 = vadd.f32 %v1334, %v1361
  %v1363 = vpop.f32.mrf.mxu0
  %1364 = vdwg.mxu0
  %v1365 = vtanh.pop %v1357
  %v1366 = vtanh.pop %v1359
  %v1367 = vtanh.pop %v1362
  %v1368 = vxor.u32 %v1357, 2147483648
  %v1369 = vxor.u32 %v1359, 2147483648
  %v1370 = vxor.u32 %v1362, 2147483648
  %v1371 = vmul.f32 %v1368, 1.442695
  %v1372 = vpow.pop %v1371
  %v1373 = vmul.f32 %v1369, 1.442695
  %v1374 = vpow.pop %v1373
  %v1375 = vmul.f32 %v1370, 1.442695
  %v1376 = vpow.pop %v1375
  %v1377 = vadd.f32 %v1372, 1.0
  %v1378 = vadd.f32 %v1374, 1.0
  %v1379 = vadd.f32 %v1376, 1.0
  %v1380 = vrcp.pop %v1377
  %v1381 = vmul.f32 %v1377, %v1380
  %v1382 = vsub.f32 1.0, %v1381
  %v1383 = vmul.f32 %v1380, %v1382
  %v1384 = vadd.f32 %v1380, %v1383
  %vm1385 = vweird.f32 %v1377
  %vm1386 = vweird.f32 %v1380
  %vm1387 = vmor %vm1385, %vm1386
  %v1388 = vsel %vm1387, %v1380, %v1384
  %v1389 = vand.u32 2147483647, %v1377
  %vm1390 = vcmp.eq.f32.partialorder %v1389, 8.507059e+37
  %v1391 = vand.u32 %v1377, 2147483648
  %v1392 = vor.u32 1.1754944e-38, %v1391
  %v1393 = vsel %vm1390, %v1392, %v1388
  %v1394 = vmul.f32 1.0, %v1393
  %v1395 = vrcp.pop %v1378
  %v1396 = vmul.f32 %v1378, %v1395
  %v1397 = vsub.f32 1.0, %v1396
  %v1398 = vmul.f32 %v1395, %v1397
  %v1399 = vadd.f32 %v1395, %v1398
  %vm1400 = vweird.f32 %v1378
  %vm1401 = vweird.f32 %v1395
  %vm1402 = vmor %vm1400, %vm1401
  %v1403 = vsel %vm1402, %v1395, %v1399
  %v1404 = vand.u32 2147483647, %v1378
  %vm1405 = vcmp.eq.f32.partialorder %v1404, 8.507059e+37
  %v1406 = vand.u32 %v1378, 2147483648
  %v1407 = vor.u32 1.1754944e-38, %v1406
  %v1408 = vsel %vm1405, %v1407, %v1403
  %v1409 = vmul.f32 1.0, %v1408
  %v1410 = vrcp.pop %v1379
  %v1411 = vmul.f32 %v1379, %v1410
  %v1412 = vsub.f32 1.0, %v1411
  %v1413 = vmul.f32 %v1410, %v1412
  %v1414 = vadd.f32 %v1410, %v1413
  %vm1415 = vweird.f32 %v1379
  %vm1416 = vweird.f32 %v1410
  %vm1417 = vmor %vm1415, %vm1416
  %v1418 = vsel %vm1417, %v1410, %v1414
  %v1419 = vand.u32 2147483647, %v1379
  %vm1420 = vcmp.eq.f32.partialorder %v1419, 8.507059e+37
  %v1421 = vand.u32 %v1379, 2147483648
  %v1422 = vor.u32 1.1754944e-38, %v1421
  %v1423 = vsel %vm1420, %v1422, %v1418
  %v1424 = vmul.f32 1.0, %v1423
  %v1425 = vsel %vm322, %v1365, %v1394
  %v1426 = vsel %vm322, %v1366, %v1409
  %v1427 = vsel %vm322, %v1367, %v1424
  %v1428 = vmul.f32 %v1425, %v1291
  %v1429 = vmul.f32 %v1426, %v1292
  %v1430 = vmul.f32 %v1427, %v1293
  %1434 = vrot.lane.b32.xlu0 %v1425, 64
  %v1435 = vpop.permute.xlu0 %1434
  %1436 = vrot.lane.b32.xlu0 %v1426, 64
  %v1437 = vpop.permute.xlu0 %1436
  %1438 = vrot.lane.b32.xlu0 %v1427, 64
  %v1439 = vpop.permute.xlu0 %1438
  %v1443 = vmul.f32 %v1425, %v1435
  %v1444 = vmul.f32 %v1426, %v1437
  %v1445 = vmul.f32 %v1427, %v1439
  %1449 = vrot.lane.b32.xlu0 %v1443, 32
  %v1450 = vpop.permute.xlu0 %1449
  %1451 = vrot.lane.b32.xlu0 %v1444, 32
  %v1452 = vpop.permute.xlu0 %1451
  %1453 = vrot.lane.b32.xlu0 %v1445, 32
  %v1454 = vpop.permute.xlu0 %1453
  %v1458 = vadd.f32 %v1428, %v1450
  %v1459 = vadd.f32 %v1429, %v1452
  %v1460 = vadd.f32 %v1430, %v1454
  %v1461 = vtanh.pop %v1458
  %v1462 = vtanh.pop %v1459
  %v1463 = vtanh.pop %v1460
  %1467 = vrot.lane.b32.xlu0 %v1461, 64
  %v1468 = vpop.permute.xlu0 %1467
  %1469 = vrot.lane.b32.xlu0 %v1462, 64
  %v1470 = vpop.permute.xlu0 %1469
  %1471 = vrot.lane.b32.xlu0 %v1463, 64
  %v1472 = vpop.permute.xlu0 %1471
  %v1476 = vmul.f32 %v1425, %v1468
  %v1477 = vmul.f32 %v1426, %v1470
  %v1478 = vmul.f32 %v1427, %v1472
  %1482 = vrot.lane.b32.xlu0 %v1476, 32
  %v1483 = vpop.permute.xlu0 %1482
  %1484 = vrot.lane.b32.xlu0 %v1477, 32
  %v1485 = vpop.permute.xlu0 %1484
  %1486 = vrot.lane.b32.xlu0 %v1478, 32
  %v1487 = vpop.permute.xlu0 %1486
  %1491 = vst.msk [vmem:[#allocation3 + $0x78] sm:$0xff] %vm485, %v1483
  %1492 = vst.msk [vmem:[#allocation3 + $0x80] sm:$0xff] %vm485, %v1485
  %1493 = vst.msk [vmem:[#allocation3 + $0x88] sm:$0xf] %vm488, %v1487
  %1494 = vst.msk [vmem:[#allocation3 + $0x14] sm:$0xff] %vm490, %v1483
  %1495 = vst.msk [vmem:[#allocation3 + $0x1c] sm:$0xff] %vm490, %v1485
  %1496 = vst.msk [vmem:[#allocation3 + $0x24] sm:$0xf] %vm493, %v1487
  %v1497 = vpack.c.bf16 %v1477, %v1476
  %v1498 = vpack.c.bf16 %v1478, %v1478
  %v1499 = vld [vmem:[#allocation2 + $0x8c] sm:$0xff]
  %v1500 = vld [vmem:[#allocation2 + $0x94] sm:$0xff]
  %v1501 = vld [vmem:[#allocation2 + $0x9c] sm:$0xf]
  %1504 = vrot.lane.b32.xlu0 %v1497, 32
  %v1505 = vpop.permute.xlu0 %1504
  %1506 = vrot.lane.b32.xlu0 %v1498, 32
  %v1507 = vpop.permute.xlu0 %1506
  %v1509 = vsel %vm83, %v1505, 0
  %v1512 = vsel %vm83, %v1507, 0
  %1514 = vmatpush.bf16.msra.mxu0 0
  %1515 = vmatpush.bf16.msra.mxu0 0
  %1516 = vmatpush.bf16.msra.mxu0 0
  %1517 = vmatpush.bf16.msra.mxu0 0
  %1518 = vmatpush.bf16.msra.mxu0 0
  %1519 = vmatpush.bf16.msra.mxu0 0
  %1520 = vmatpush.bf16.msra.mxu0 %v335
  %1521 = vmatpush.bf16.msra.mxu0 %v334
  %1522 = vmatmul.bf16.gmra.mxu0 %v1509
  %v1523 = vpop.f32.mrf.mxu0
  %v1524 = vadd.f32 %v1499, %v1523
  %v1525 = vpop.f32.mrf.mxu0
  %v1526 = vadd.f32 %v1500, %v1525
  %1527 = vmatmul.bf16.gmra.mxu0 %v1512
  %v1528 = vpop.f32.mrf.mxu0
  %v1529 = vadd.f32 %v1501, %v1528
  %v1530 = vpop.f32.mrf.mxu0
  %1531 = vdwg.mxu0
  %v1532 = vtanh.pop %v1524
  %v1533 = vtanh.pop %v1526
  %v1534 = vtanh.pop %v1529
  %v1535 = vxor.u32 %v1524, 2147483648
  %v1536 = vxor.u32 %v1526, 2147483648
  %v1537 = vxor.u32 %v1529, 2147483648
  %v1538 = vmul.f32 %v1535, 1.442695
  %v1539 = vpow.pop %v1538
  %v1540 = vmul.f32 %v1536, 1.442695
  %v1541 = vpow.pop %v1540
  %v1542 = vmul.f32 %v1537, 1.442695
  %v1543 = vpow.pop %v1542
  %v1544 = vadd.f32 %v1539, 1.0
  %v1545 = vadd.f32 %v1541, 1.0
  %v1546 = vadd.f32 %v1543, 1.0
  %v1547 = vrcp.pop %v1544
  %v1548 = vmul.f32 %v1544, %v1547
  %v1549 = vsub.f32 1.0, %v1548
  %v1550 = vmul.f32 %v1547, %v1549
  %v1551 = vadd.f32 %v1547, %v1550
  %vm1552 = vweird.f32 %v1544
  %vm1553 = vweird.f32 %v1547
  %vm1554 = vmor %vm1552, %vm1553
  %v1555 = vsel %vm1554, %v1547, %v1551
  %v1556 = vand.u32 2147483647, %v1544
  %vm1557 = vcmp.eq.f32.partialorder %v1556, 8.507059e+37
  %v1558 = vand.u32 %v1544, 2147483648
  %v1559 = vor.u32 1.1754944e-38, %v1558
  %v1560 = vsel %vm1557, %v1559, %v1555
  %v1561 = vmul.f32 1.0, %v1560
  %v1562 = vrcp.pop %v1545
  %v1563 = vmul.f32 %v1545, %v1562
  %v1564 = vsub.f32 1.0, %v1563
  %v1565 = vmul.f32 %v1562, %v1564
  %v1566 = vadd.f32 %v1562, %v1565
  %vm1567 = vweird.f32 %v1545
  %vm1568 = vweird.f32 %v1562
  %vm1569 = vmor %vm1567, %vm1568
  %v1570 = vsel %vm1569, %v1562, %v1566
  %v1571 = vand.u32 2147483647, %v1545
  %vm1572 = vcmp.eq.f32.partialorder %v1571, 8.507059e+37
  %v1573 = vand.u32 %v1545, 2147483648
  %v1574 = vor.u32 1.1754944e-38, %v1573
  %v1575 = vsel %vm1572, %v1574, %v1570
  %v1576 = vmul.f32 1.0, %v1575
  %v1577 = vrcp.pop %v1546
  %v1578 = vmul.f32 %v1546, %v1577
  %v1579 = vsub.f32 1.0, %v1578
  %v1580 = vmul.f32 %v1577, %v1579
  %v1581 = vadd.f32 %v1577, %v1580
  %vm1582 = vweird.f32 %v1546
  %vm1583 = vweird.f32 %v1577
  %vm1584 = vmor %vm1582, %vm1583
  %v1585 = vsel %vm1584, %v1577, %v1581
  %v1586 = vand.u32 2147483647, %v1546
  %vm1587 = vcmp.eq.f32.partialorder %v1586, 8.507059e+37
  %v1588 = vand.u32 %v1546, 2147483648
  %v1589 = vor.u32 1.1754944e-38, %v1588
  %v1590 = vsel %vm1587, %v1589, %v1585
  %v1591 = vmul.f32 1.0, %v1590
  %v1592 = vsel %vm322, %v1532, %v1561
  %v1593 = vsel %vm322, %v1533, %v1576
  %v1594 = vsel %vm322, %v1534, %v1591
  %v1595 = vmul.f32 %v1592, %v1458
  %v1596 = vmul.f32 %v1593, %v1459
  %v1597 = vmul.f32 %v1594, %v1460
  %1601 = vrot.lane.b32.xlu0 %v1592, 64
  %v1602 = vpop.permute.xlu0 %1601
  %1603 = vrot.lane.b32.xlu0 %v1593, 64
  %v1604 = vpop.permute.xlu0 %1603
  %1605 = vrot.lane.b32.xlu0 %v1594, 64
  %v1606 = vpop.permute.xlu0 %1605
  %v1610 = vmul.f32 %v1592, %v1602
  %v1611 = vmul.f32 %v1593, %v1604
  %v1612 = vmul.f32 %v1594, %v1606
  %1616 = vrot.lane.b32.xlu0 %v1610, 32
  %v1617 = vpop.permute.xlu0 %1616
  %1618 = vrot.lane.b32.xlu0 %v1611, 32
  %v1619 = vpop.permute.xlu0 %1618
  %1620 = vrot.lane.b32.xlu0 %v1612, 32
  %v1621 = vpop.permute.xlu0 %1620
  %v1625 = vadd.f32 %v1595, %v1617
  %v1626 = vadd.f32 %v1596, %v1619
  %v1627 = vadd.f32 %v1597, %v1621
  %v1628 = vtanh.pop %v1625
  %v1629 = vtanh.pop %v1626
  %v1630 = vtanh.pop %v1627
  %1634 = vrot.lane.b32.xlu0 %v1628, 64
  %v1635 = vpop.permute.xlu0 %1634
  %1636 = vrot.lane.b32.xlu0 %v1629, 64
  %v1637 = vpop.permute.xlu0 %1636
  %1638 = vrot.lane.b32.xlu0 %v1630, 64
  %v1639 = vpop.permute.xlu0 %1638
  %v1643 = vmul.f32 %v1592, %v1635
  %v1644 = vmul.f32 %v1593, %v1637
  %v1645 = vmul.f32 %v1594, %v1639
  %1649 = vrot.lane.b32.xlu0 %v1643, 32
  %v1650 = vpop.permute.xlu0 %1649
  %1651 = vrot.lane.b32.xlu0 %v1644, 32
  %v1652 = vpop.permute.xlu0 %1651
  %1653 = vrot.lane.b32.xlu0 %v1645, 32
  %v1654 = vpop.permute.xlu0 %1653
  %1658 = vst.msk [vmem:[#allocation3 + $0x8c] sm:$0xff] %vm485, %v1650
  %1659 = vst.msk [vmem:[#allocation3 + $0x94] sm:$0xff] %vm485, %v1652
  %1660 = vst.msk [vmem:[#allocation3 + $0x9c] sm:$0xf] %vm488, %v1654
  %1661 = vst.msk [vmem:[#allocation3] sm:$0xff] %vm490, %v1650
  %1662 = vst.msk [vmem:[#allocation3 + $0x8] sm:$0xff] %vm490, %v1652
  %1663 = vst.msk [vmem:[#allocation3 + $0x10] sm:$0xf] %vm493, %v1654
  %v1664 = vld [vmem:[#allocation3] sm:$0xff]
  %v1665 = vld [vmem:[#allocation3 + $0x8] sm:$0xff]
  %v1666 = vld [vmem:[#allocation3 + $0x10] sm:$0xff]
  %v1667 = vld [vmem:[#allocation3 + $0x18] sm:$0xff]
  %v1668 = vld [vmem:[#allocation3 + $0x20] sm:$0xff]
  %v1669 = vld [vmem:[#allocation3 + $0x28] sm:$0xff]
  %v1670 = vld [vmem:[#allocation3 + $0x30] sm:$0xff]
  %v1671 = vld [vmem:[#allocation3 + $0x38] sm:$0xff]
  %v1672 = vld [vmem:[#allocation3 + $0x40] sm:$0xff]
  %v1673 = vld [vmem:[#allocation3 + $0x48] sm:$0xff]
  %v1674 = vld [vmem:[#allocation3 + $0x50] sm:$0xff]
  %v1675 = vld [vmem:[#allocation3 + $0x58] sm:$0xff]
  %v1676 = vld [vmem:[#allocation3 + $0x60] sm:$0xff]
  %v1677 = vld [vmem:[#allocation3 + $0x68] sm:$0xff]
  %v1678 = vld [vmem:[#allocation3 + $0x70] sm:$0xff]
  %v1679 = vld [vmem:[#allocation3 + $0x78] sm:$0xff]
  %v1680 = vld [vmem:[#allocation3 + $0x80] sm:$0xff]
  %v1681 = vld [vmem:[#allocation3 + $0x88] sm:$0xff]
  %v1682 = vld [vmem:[#allocation3 + $0x90] sm:$0xff]
  %v1683 = vld [vmem:[#allocation3 + $0x98] sm:$0xff]
  %v1684 = vpack.c.bf16 %v1665, %v1664
  %v1685 = vpack.c.bf16 %v1667, %v1666
  %v1686 = vpack.c.bf16 %v1669, %v1668
  %v1687 = vpack.c.bf16 %v1671, %v1670
  %v1688 = vpack.c.bf16 %v1673, %v1672
  %v1689 = vpack.c.bf16 %v1675, %v1674
  %v1690 = vpack.c.bf16 %v1677, %v1676
  %v1691 = vpack.c.bf16 %v1679, %v1678
  %v1692 = vpack.c.bf16 %v1681, %v1680
  %v1693 = vpack.c.bf16 %v1683, %v1682
  %v1694 = vld [vmem:[%s4] sm:$0xf]
  %v1695 = vld [vmem:[%s4 + $0x4] sm:$0xf]
  %v1696 = vld [vmem:[%s4 + $0x8] sm:$0xf]
  %v1697 = vld [vmem:[%s4 + $0xc] sm:$0xf]
  %v1698 = vld [vmem:[%s4 + $0x10] sm:$0xf]
  %v1699 = vld [vmem:[%s4 + $0x14] sm:$0xf]
  %v1700 = vld [vmem:[%s5] sm:$0x1]
  %v1702 = vperm.slane %v1700, 0
  %v1710 = vunpack.c.l.b16 %v1694
  %v1711 = vunpack.c.l.b16 %v1695
  %v1712 = vunpack.c.l.b16 %v1696
  %v1713 = vunpack.c.l.b16 %v1697
  %v1714 = vunpack.c.l.b16 %v1698
  %v1715 = vunpack.c.l.b16 %v1699
  %v1716 = vpack.c.b16 %v1711, %v1710
  %v1717 = vpack.c.b16 %v1713, %v1712
  %v1718 = vpack.c.b16 %v1715, %v1714
  %vm1722 = vcmask 392192
  %v1724 = vsel %vm1722, %v1684, 0
  %v1727 = vsel %vm1722, %v1685, 0
  %v1730 = vsel %vm1722, %v1686, 0
  %v1733 = vsel %vm1722, %v1687, 0
  %v1736 = vsel %vm1722, %v1688, 0
  %v1739 = vsel %vm1722, %v1689, 0
  %v1742 = vsel %vm1722, %v1690, 0
  %v1745 = vsel %vm1722, %v1691, 0
  %v1748 = vsel %vm1722, %v1692, 0
  %v1751 = vsel %vm1722, %v1693, 0
  %1753 = vmatpush.bf16.msra.mxu0 0
  %1754 = vmatpush.bf16.msra.mxu0 0
  %1755 = vmatpush.bf16.msra.mxu0 0
  %1756 = vmatpush.bf16.msra.mxu0 0
  %1757 = vmatpush.bf16.msra.mxu0 0
  %1758 = vmatpush.bf16.msra.mxu0 %v1718
  %1759 = vmatpush.bf16.msra.mxu0 %v1717
  %1760 = vmatpush.bf16.msra.mxu0 %v1716
  %1761 = vmatmul.bf16.gmra.mxu0 %v1724
  %v1762 = vpop.f32.mrf.mxu0
  %v1763 = vadd.f32 %v1702, %v1762
  %v1764 = vpop.f32.mrf.mxu0
  %v1765 = vadd.f32 %v1702, %v1764
  %1766 = vmatmul.bf16.gmra.mxu0 %v1727
  %v1767 = vpop.f32.mrf.mxu0
  %v1768 = vadd.f32 %v1702, %v1767
  %v1769 = vpop.f32.mrf.mxu0
  %v1770 = vadd.f32 %v1702, %v1769
  %1771 = vmatmul.bf16.gmra.mxu0 %v1730
  %v1772 = vpop.f32.mrf.mxu0
  %v1773 = vadd.f32 %v1702, %v1772
  %v1774 = vpop.f32.mrf.mxu0
  %v1775 = vadd.f32 %v1702, %v1774
  %1776 = vmatmul.bf16.gmra.mxu0 %v1733
  %v1777 = vpop.f32.mrf.mxu0
  %v1778 = vadd.f32 %v1702, %v1777
  %v1779 = vpop.f32.mrf.mxu0
  %v1780 = vadd.f32 %v1702, %v1779
  %1781 = vmatmul.bf16.gmra.mxu0 %v1736
  %v1782 = vpop.f32.mrf.mxu0
  %v1783 = vadd.f32 %v1702, %v1782
  %v1784 = vpop.f32.mrf.mxu0
  %v1785 = vadd.f32 %v1702, %v1784
  %1786 = vmatmul.bf16.gmra.mxu0 %v1739
  %v1787 = vpop.f32.mrf.mxu0
  %v1788 = vadd.f32 %v1702, %v1787
  %v1789 = vpop.f32.mrf.mxu0
  %v1790 = vadd.f32 %v1702, %v1789
  %1791 = vmatmul.bf16.gmra.mxu0 %v1742
  %v1792 = vpop.f32.mrf.mxu0
  %v1793 = vadd.f32 %v1702, %v1792
  %v1794 = vpop.f32.mrf.mxu0
  %v1795 = vadd.f32 %v1702, %v1794
  %1796 = vmatmul.bf16.gmra.mxu0 %v1745
  %v1797 = vpop.f32.mrf.mxu0
  %v1798 = vadd.f32 %v1702, %v1797
  %v1799 = vpop.f32.mrf.mxu0
  %v1800 = vadd.f32 %v1702, %v1799
  %1801 = vmatmul.bf16.gmra.mxu0 %v1748
  %v1802 = vpop.f32.mrf.mxu0
  %v1803 = vadd.f32 %v1702, %v1802
  %v1804 = vpop.f32.mrf.mxu0
  %v1805 = vadd.f32 %v1702, %v1804
  %1806 = vmatmul.bf16.gmra.mxu0 %v1751
  %v1807 = vpop.f32.mrf.mxu0
  %v1808 = vadd.f32 %v1702, %v1807
  %v1809 = vpop.f32.mrf.mxu0
  %v1810 = vadd.f32 %v1702, %v1809
  %1811 = vdwg.mxu0
  %v1812 = vld [vmem:[%s8] sm:$0xff]
  %v1813 = vld [vmem:[%s8 + $0x8] sm:$0xff]
  %v1814 = vld [vmem:[%s8 + $0x10] sm:$0xff]
  %v1815 = vld [vmem:[%s8 + $0x18] sm:$0xff]
  %v1816 = vld [vmem:[%s8 + $0x20] sm:$0xff]
  %v1817 = vld [vmem:[%s8 + $0x28] sm:$0xff]
  %v1818 = vld [vmem:[%s8 + $0x30] sm:$0xff]
  %v1819 = vld [vmem:[%s8 + $0x38] sm:$0xff]
  %v1820 = vld [vmem:[%s8 + $0x40] sm:$0xff]
  %v1821 = vld [vmem:[%s8 + $0x48] sm:$0xff]
  %v1822 = vld [vmem:[%s8 + $0x50] sm:$0xff]
  %v1823 = vld [vmem:[%s8 + $0x58] sm:$0xff]
  %v1824 = vld [vmem:[%s8 + $0x60] sm:$0xff]
  %v1825 = vld [vmem:[%s8 + $0x68] sm:$0xff]
  %v1826 = vld [vmem:[%s8 + $0x70] sm:$0xff]
  %v1827 = vld [vmem:[%s8 + $0x78] sm:$0xff]
  %v1828 = vld [vmem:[%s8 + $0x80] sm:$0xff]
  %v1829 = vld [vmem:[%s8 + $0x88] sm:$0xff]
  %v1830 = vld [vmem:[%s8 + $0x90] sm:$0xff]
  %v1831 = vld [vmem:[%s8 + $0x98] sm:$0xff]
  %1833 = vset.pattern.permute.xlu0 0
  %1834 = vperm.xlu0 %1833, %v1812
  %v1835 = vpop.permute.xlu0 %1834
  %1838 = vset.pattern.permute.xlu0 0
  %1839 = vperm.xlu0 %1838, %v1813
  %v1840 = vpop.permute.xlu0 %1839
  %1843 = vset.pattern.permute.xlu0 0
  %1844 = vperm.xlu0 %1843, %v1814
  %v1845 = vpop.permute.xlu0 %1844
  %1848 = vset.pattern.permute.xlu0 0
  %1849 = vperm.xlu0 %1848, %v1815
  %v1850 = vpop.permute.xlu0 %1849
  %1853 = vset.pattern.permute.xlu0 0
  %1854 = vperm.xlu0 %1853, %v1816
  %v1855 = vpop.permute.xlu0 %1854
  %1858 = vset.pattern.permute.xlu0 0
  %1859 = vperm.xlu0 %1858, %v1817
  %v1860 = vpop.permute.xlu0 %1859
  %1863 = vset.pattern.permute.xlu0 0
  %1864 = vperm.xlu0 %1863, %v1818
  %v1865 = vpop.permute.xlu0 %1864
  %1868 = vset.pattern.permute.xlu0 0
  %1869 = vperm.xlu0 %1868, %v1819
  %v1870 = vpop.permute.xlu0 %1869
  %1873 = vset.pattern.permute.xlu0 0
  %1874 = vperm.xlu0 %1873, %v1820
  %v1875 = vpop.permute.xlu0 %1874
  %1878 = vset.pattern.permute.xlu0 0
  %1879 = vperm.xlu0 %1878, %v1821
  %v1880 = vpop.permute.xlu0 %1879
  %1883 = vset.pattern.permute.xlu0 0
  %1884 = vperm.xlu0 %1883, %v1822
  %v1885 = vpop.permute.xlu0 %1884
  %1888 = vset.pattern.permute.xlu0 0
  %1889 = vperm.xlu0 %1888, %v1823
  %v1890 = vpop.permute.xlu0 %1889
  %1893 = vset.pattern.permute.xlu0 0
  %1894 = vperm.xlu0 %1893, %v1824
  %v1895 = vpop.permute.xlu0 %1894
  %1898 = vset.pattern.permute.xlu0 0
  %1899 = vperm.xlu0 %1898, %v1825
  %v1900 = vpop.permute.xlu0 %1899
  %1903 = vset.pattern.permute.xlu0 0
  %1904 = vperm.xlu0 %1903, %v1826
  %v1905 = vpop.permute.xlu0 %1904
  %1908 = vset.pattern.permute.xlu0 0
  %1909 = vperm.xlu0 %1908, %v1827
  %v1910 = vpop.permute.xlu0 %1909
  %1913 = vset.pattern.permute.xlu0 0
  %1914 = vperm.xlu0 %1913, %v1828
  %v1915 = vpop.permute.xlu0 %1914
  %1918 = vset.pattern.permute.xlu0 0
  %1919 = vperm.xlu0 %1918, %v1829
  %v1920 = vpop.permute.xlu0 %1919
  %1923 = vset.pattern.permute.xlu0 0
  %1924 = vperm.xlu0 %1923, %v1830
  %v1925 = vpop.permute.xlu0 %1924
  %1928 = vset.pattern.permute.xlu0 0
  %1929 = vperm.xlu0 %1928, %v1831
  %v1930 = vpop.permute.xlu0 %1929
  %v1932 = vmul.f32 %v1763, %v1835
  %v1933 = vmul.f32 %v1765, %v1840
  %v1934 = vmul.f32 %v1768, %v1845
  %v1935 = vmul.f32 %v1770, %v1850
  %v1936 = vmul.f32 %v1773, %v1855
  %v1937 = vmul.f32 %v1775, %v1860
  %v1938 = vmul.f32 %v1778, %v1865
  %v1939 = vmul.f32 %v1780, %v1870
  %v1940 = vmul.f32 %v1783, %v1875
  %v1941 = vmul.f32 %v1785, %v1880
  %v1942 = vmul.f32 %v1788, %v1885
  %v1943 = vmul.f32 %v1790, %v1890
  %v1944 = vmul.f32 %v1793, %v1895
  %v1945 = vmul.f32 %v1795, %v1900
  %v1946 = vmul.f32 %v1798, %v1905
  %v1947 = vmul.f32 %v1800, %v1910
  %v1948 = vmul.f32 %v1803, %v1915
  %v1949 = vmul.f32 %v1805, %v1920
  %v1950 = vmul.f32 %v1808, %v1925
  %v1951 = vmul.f32 %v1810, %v1930
  %v1952 = vsel %vm485, %v1932, 0.0
  %v1953 = vsel %vm485, %v1933, 0.0
  %v1954 = vadd.f32 %v1952, %v1953
  %v1955 = vsel %vm485, %v1934, 0.0
  %v1956 = vadd.f32 %v1954, %v1955
  %v1957 = vsel %vm485, %v1935, 0.0
  %v1958 = vadd.f32 %v1956, %v1957
  %v1959 = vsel %vm485, %v1936, 0.0
  %v1960 = vadd.f32 %v1958, %v1959
  %v1961 = vsel %vm485, %v1937, 0.0
  %v1962 = vadd.f32 %v1960, %v1961
  %v1963 = vsel %vm485, %v1938, 0.0
  %v1964 = vadd.f32 %v1962, %v1963
  %v1965 = vsel %vm485, %v1939, 0.0
  %v1966 = vadd.f32 %v1964, %v1965
  %v1967 = vsel %vm485, %v1940, 0.0
  %v1968 = vadd.f32 %v1966, %v1967
  %v1969 = vsel %vm485, %v1941, 0.0
  %v1970 = vadd.f32 %v1968, %v1969
  %v1971 = vsel %vm485, %v1942, 0.0
  %v1972 = vadd.f32 %v1970, %v1971
  %v1973 = vsel %vm485, %v1943, 0.0
  %v1974 = vadd.f32 %v1972, %v1973
  %v1975 = vsel %vm485, %v1944, 0.0
  %v1976 = vadd.f32 %v1974, %v1975
  %v1977 = vsel %vm485, %v1945, 0.0
  %v1978 = vadd.f32 %v1976, %v1977
  %v1979 = vsel %vm485, %v1946, 0.0
  %v1980 = vadd.f32 %v1978, %v1979
  %v1981 = vsel %vm485, %v1947, 0.0
  %v1982 = vadd.f32 %v1980, %v1981
  %v1983 = vsel %vm485, %v1948, 0.0
  %v1984 = vadd.f32 %v1982, %v1983
  %v1985 = vsel %vm485, %v1949, 0.0
  %v1986 = vadd.f32 %v1984, %v1985
  %v1987 = vsel %vm485, %v1950, 0.0
  %v1988 = vadd.f32 %v1986, %v1987
  %v1989 = vsel %vm485, %v1951, 0.0
  %v1990 = vadd.f32 %v1988, %v1989
  %1991 = vadd.xlane.f32.xlu0 %v1990
  %v1992 = vpop.xlane.xlu0 %1991
  %v1993 = vrot.slane %v1992, 4
  %v1994 = vadd.f32 %v1992, %v1993
  %v1995 = vrot.slane %v1994, 2
  %v1996 = vadd.f32 %v1994, %v1995
  %v1997 = vrot.slane %v1996, 1
  %v1998 = vadd.f32 %v1996, %v1997
  %s1999 = vtos %v1998
  %v2000 = vrcp.pop 1280.0
  %v2001 = vmul.f32 1280.0, %v2000
  %v2002 = vsub.f32 1.0, %v2001
  %v2003 = vmul.f32 %v2000, %v2002
  %v2004 = vadd.f32 %v2000, %v2003
  %vm2005 = vweird.f32 %v2000
  %v2006 = vsel %vm2005, %v2000, %v2004
  %s2007 = vtos %v2006
  %s2008 = smul.f32 %s1999, %s2007
  %v2009 = vstv %s2008
  %v2010 = vmul.f32 %v1812, %v2009
  %v2011 = vmul.f32 %v1813, %v2009
  %v2012 = vmul.f32 %v1814, %v2009
  %v2013 = vmul.f32 %v1815, %v2009
  %v2014 = vmul.f32 %v1816, %v2009
  %v2015 = vmul.f32 %v1817, %v2009
  %v2016 = vmul.f32 %v1818, %v2009
  %v2017 = vmul.f32 %v1819, %v2009
  %v2018 = vmul.f32 %v1820, %v2009
  %v2019 = vmul.f32 %v1821, %v2009
  %v2020 = vmul.f32 %v1822, %v2009
  %v2021 = vmul.f32 %v1823, %v2009
  %v2022 = vmul.f32 %v1824, %v2009
  %v2023 = vmul.f32 %v1825, %v2009
  %v2024 = vmul.f32 %v1826, %v2009
  %v2025 = vmul.f32 %v1827, %v2009
  %v2026 = vmul.f32 %v1828, %v2009
  %v2027 = vmul.f32 %v1829, %v2009
  %v2028 = vmul.f32 %v1830, %v2009
  %v2029 = vmul.f32 %v1831, %v2009
  %v2030 = vadd.f32 %v2010, 0.0
  %v2031 = vadd.f32 %v2011, 0.0
  %v2032 = vadd.f32 %v2012, 0.0
  %v2033 = vadd.f32 %v2013, 0.0
  %v2034 = vadd.f32 %v2014, 0.0
  %v2035 = vadd.f32 %v2015, 0.0
  %v2036 = vadd.f32 %v2016, 0.0
  %v2037 = vadd.f32 %v2017, 0.0
  %v2038 = vadd.f32 %v2018, 0.0
  %v2039 = vadd.f32 %v2019, 0.0
  %v2040 = vadd.f32 %v2020, 0.0
  %v2041 = vadd.f32 %v2021, 0.0
  %v2042 = vadd.f32 %v2022, 0.0
  %v2043 = vadd.f32 %v2023, 0.0
  %v2044 = vadd.f32 %v2024, 0.0
  %v2045 = vadd.f32 %v2025, 0.0
  %v2046 = vadd.f32 %v2026, 0.0
  %v2047 = vadd.f32 %v2027, 0.0
  %v2048 = vadd.f32 %v2028, 0.0
  %v2049 = vadd.f32 %v2029, 0.0
  %2050 = vset.pattern.permute.xlu0 1
  %2051 = vperm.xlu0 %2050, %v1812
  %v2052 = vpop.permute.xlu0 %2051
  %2054 = vset.pattern.permute.xlu0 1
  %2055 = vperm.xlu0 %2054, %v1813
  %v2056 = vpop.permute.xlu0 %2055
  %2058 = vset.pattern.permute.xlu0 1
  %2059 = vperm.xlu0 %2058, %v1814
  %v2060 = vpop.permute.xlu0 %2059
  %2062 = vset.pattern.permute.xlu0 1
  %2063 = vperm.xlu0 %2062, %v1815
  %v2064 = vpop.permute.xlu0 %2063
  %2066 = vset.pattern.permute.xlu0 1
  %2067 = vperm.xlu0 %2066, %v1816
  %v2068 = vpop.permute.xlu0 %2067
  %2070 = vset.pattern.permute.xlu0 1
  %2071 = vperm.xlu0 %2070, %v1817
  %v2072 = vpop.permute.xlu0 %2071
  %2074 = vset.pattern.permute.xlu0 1
  %2075 = vperm.xlu0 %2074, %v1818
  %v2076 = vpop.permute.xlu0 %2075
  %2078 = vset.pattern.permute.xlu0 1
  %2079 = vperm.xlu0 %2078, %v1819
  %v2080 = vpop.permute.xlu0 %2079
  %2082 = vset.pattern.permute.xlu0 1
  %2083 = vperm.xlu0 %2082, %v1820
  %v2084 = vpop.permute.xlu0 %2083
  %2086 = vset.pattern.permute.xlu0 1
  %2087 = vperm.xlu0 %2086, %v1821
  %v2088 = vpop.permute.xlu0 %2087
  %2090 = vset.pattern.permute.xlu0 1
  %2091 = vperm.xlu0 %2090, %v1822
  %v2092 = vpop.permute.xlu0 %2091
  %2094 = vset.pattern.permute.xlu0 1
  %2095 = vperm.xlu0 %2094, %v1823
  %v2096 = vpop.permute.xlu0 %2095
  %2098 = vset.pattern.permute.xlu0 1
  %2099 = vperm.xlu0 %2098, %v1824
  %v2100 = vpop.permute.xlu0 %2099
  %2102 = vset.pattern.permute.xlu0 1
  %2103 = vperm.xlu0 %2102, %v1825
  %v2104 = vpop.permute.xlu0 %2103
  %2106 = vset.pattern.permute.xlu0 1
  %2107 = vperm.xlu0 %2106, %v1826
  %v2108 = vpop.permute.xlu0 %2107
  %2110 = vset.pattern.permute.xlu0 1
  %2111 = vperm.xlu0 %2110, %v1827
  %v2112 = vpop.permute.xlu0 %2111
  %2114 = vset.pattern.permute.xlu0 1
  %2115 = vperm.xlu0 %2114, %v1828
  %v2116 = vpop.permute.xlu0 %2115
  %2118 = vset.pattern.permute.xlu0 1
  %2119 = vperm.xlu0 %2118, %v1829
  %v2120 = vpop.permute.xlu0 %2119
  %2122 = vset.pattern.permute.xlu0 1
  %2123 = vperm.xlu0 %2122, %v1830
  %v2124 = vpop.permute.xlu0 %2123
  %2126 = vset.pattern.permute.xlu0 1
  %2127 = vperm.xlu0 %2126, %v1831
  %v2128 = vpop.permute.xlu0 %2127
  %v2130 = vmul.f32 %v1763, %v2052
  %v2131 = vmul.f32 %v1765, %v2056
  %v2132 = vmul.f32 %v1768, %v2060
  %v2133 = vmul.f32 %v1770, %v2064
  %v2134 = vmul.f32 %v1773, %v2068
  %v2135 = vmul.f32 %v1775, %v2072
  %v2136 = vmul.f32 %v1778, %v2076
  %v2137 = vmul.f32 %v1780, %v2080
  %v2138 = vmul.f32 %v1783, %v2084
  %v2139 = vmul.f32 %v1785, %v2088
  %v2140 = vmul.f32 %v1788, %v2092
  %v2141 = vmul.f32 %v1790, %v2096
  %v2142 = vmul.f32 %v1793, %v2100
  %v2143 = vmul.f32 %v1795, %v2104
  %v2144 = vmul.f32 %v1798, %v2108
  %v2145 = vmul.f32 %v1800, %v2112
  %v2146 = vmul.f32 %v1803, %v2116
  %v2147 = vmul.f32 %v1805, %v2120
  %v2148 = vmul.f32 %v1808, %v2124
  %v2149 = vmul.f32 %v1810, %v2128
  %v2150 = vsel %vm485, %v2130, 0.0
  %v2151 = vsel %vm485, %v2131, 0.0
  %v2152 = vadd.f32 %v2150, %v2151
  %v2153 = vsel %vm485, %v2132, 0.0
  %v2154 = vadd.f32 %v2152, %v2153
  %v2155 = vsel %vm485, %v2133, 0.0
  %v2156 = vadd.f32 %v2154, %v2155
  %v2157 = vsel %vm485, %v2134, 0.0
  %v2158 = vadd.f32 %v2156, %v2157
  %v2159 = vsel %vm485, %v2135, 0.0
  %v2160 = vadd.f32 %v2158, %v2159
  %v2161 = vsel %vm485, %v2136, 0.0
  %v2162 = vadd.f32 %v2160, %v2161
  %v2163 = vsel %vm485, %v2137, 0.0
  %v2164 = vadd.f32 %v2162, %v2163
  %v2165 = vsel %vm485, %v2138, 0.0
  %v2166 = vadd.f32 %v2164, %v2165
  %v2167 = vsel %vm485, %v2139, 0.0
  %v2168 = vadd.f32 %v2166, %v2167
  %v2169 = vsel %vm485, %v2140, 0.0
  %v2170 = vadd.f32 %v2168, %v2169
  %v2171 = vsel %vm485, %v2141, 0.0
  %v2172 = vadd.f32 %v2170, %v2171
  %v2173 = vsel %vm485, %v2142, 0.0
  %v2174 = vadd.f32 %v2172, %v2173
  %v2175 = vsel %vm485, %v2143, 0.0
  %v2176 = vadd.f32 %v2174, %v2175
  %v2177 = vsel %vm485, %v2144, 0.0
  %v2178 = vadd.f32 %v2176, %v2177
  %v2179 = vsel %vm485, %v2145, 0.0
  %v2180 = vadd.f32 %v2178, %v2179
  %v2181 = vsel %vm485, %v2146, 0.0
  %v2182 = vadd.f32 %v2180, %v2181
  %v2183 = vsel %vm485, %v2147, 0.0
  %v2184 = vadd.f32 %v2182, %v2183
  %v2185 = vsel %vm485, %v2148, 0.0
  %v2186 = vadd.f32 %v2184, %v2185
  %v2187 = vsel %vm485, %v2149, 0.0
  %v2188 = vadd.f32 %v2186, %v2187
  %2189 = vadd.xlane.f32.xlu0 %v2188
  %v2190 = vpop.xlane.xlu0 %2189
  %v2191 = vrot.slane %v2190, 4
  %v2192 = vadd.f32 %v2190, %v2191
  %v2193 = vrot.slane %v2192, 2
  %v2194 = vadd.f32 %v2192, %v2193
  %v2195 = vrot.slane %v2194, 1
  %v2196 = vadd.f32 %v2194, %v2195
  %s2197 = vtos %v2196
  %v2198 = vrcp.pop 1280.0
  %v2199 = vmul.f32 1280.0, %v2198
  %v2200 = vsub.f32 1.0, %v2199
  %v2201 = vmul.f32 %v2198, %v2200
  %v2202 = vadd.f32 %v2198, %v2201
  %vm2203 = vweird.f32 %v2198
  %v2204 = vsel %vm2203, %v2198, %v2202
  %s2205 = vtos %v2204
  %s2206 = smul.f32 %s2197, %s2205
  %v2207 = vstv %s2206
  %v2208 = vmul.f32 %v1812, %v2207
  %v2209 = vmul.f32 %v1813, %v2207
  %v2210 = vmul.f32 %v1814, %v2207
  %v2211 = vmul.f32 %v1815, %v2207
  %v2212 = vmul.f32 %v1816, %v2207
  %v2213 = vmul.f32 %v1817, %v2207
  %v2214 = vmul.f32 %v1818, %v2207
  %v2215 = vmul.f32 %v1819, %v2207
  %v2216 = vmul.f32 %v1820, %v2207
  %v2217 = vmul.f32 %v1821, %v2207
  %v2218 = vmul.f32 %v1822, %v2207
  %v2219 = vmul.f32 %v1823, %v2207
  %v2220 = vmul.f32 %v1824, %v2207
  %v2221 = vmul.f32 %v1825, %v2207
  %v2222 = vmul.f32 %v1826, %v2207
  %v2223 = vmul.f32 %v1827, %v2207
  %v2224 = vmul.f32 %v1828, %v2207
  %v2225 = vmul.f32 %v1829, %v2207
  %v2226 = vmul.f32 %v1830, %v2207
  %v2227 = vmul.f32 %v1831, %v2207
  %2248 = vrot.lane.b32.xlu0 %v2208, 127
  %v2249 = vpop.permute.xlu0 %2248
  %2250 = vrot.lane.b32.xlu0 %v2209, 127
  %v2251 = vpop.permute.xlu0 %2250
  %2252 = vrot.lane.b32.xlu0 %v2210, 127
  %v2253 = vpop.permute.xlu0 %2252
  %2254 = vrot.lane.b32.xlu0 %v2211, 127
  %v2255 = vpop.permute.xlu0 %2254
  %2256 = vrot.lane.b32.xlu0 %v2212, 127
  %v2257 = vpop.permute.xlu0 %2256
  %2258 = vrot.lane.b32.xlu0 %v2213, 127
  %v2259 = vpop.permute.xlu0 %2258
  %2260 = vrot.lane.b32.xlu0 %v2214, 127
  %v2261 = vpop.permute.xlu0 %2260
  %2262 = vrot.lane.b32.xlu0 %v2215, 127
  %v2263 = vpop.permute.xlu0 %2262
  %2264 = vrot.lane.b32.xlu0 %v2216, 127
  %v2265 = vpop.permute.xlu0 %2264
  %2266 = vrot.lane.b32.xlu0 %v2217, 127
  %v2267 = vpop.permute.xlu0 %2266
  %2268 = vrot.lane.b32.xlu0 %v2218, 127
  %v2269 = vpop.permute.xlu0 %2268
  %2270 = vrot.lane.b32.xlu0 %v2219, 127
  %v2271 = vpop.permute.xlu0 %2270
  %2272 = vrot.lane.b32.xlu0 %v2220, 127
  %v2273 = vpop.permute.xlu0 %2272
  %2274 = vrot.lane.b32.xlu0 %v2221, 127
  %v2275 = vpop.permute.xlu0 %2274
  %2276 = vrot.lane.b32.xlu0 %v2222, 127
  %v2277 = vpop.permute.xlu0 %2276
  %2278 = vrot.lane.b32.xlu0 %v2223, 127
  %v2279 = vpop.permute.xlu0 %2278
  %2280 = vrot.lane.b32.xlu0 %v2224, 127
  %v2281 = vpop.permute.xlu0 %2280
  %2282 = vrot.lane.b32.xlu0 %v2225, 127
  %v2283 = vpop.permute.xlu0 %2282
  %2284 = vrot.lane.b32.xlu0 %v2226, 127
  %v2285 = vpop.permute.xlu0 %2284
  %2286 = vrot.lane.b32.xlu0 %v2227, 127
  %v2287 = vpop.permute.xlu0 %2286
  %v2308 = vadd.f32 %v2030, %v2249
  %v2309 = vadd.f32 %v2031, %v2251
  %v2310 = vadd.f32 %v2032, %v2253
  %v2311 = vadd.f32 %v2033, %v2255
  %v2312 = vadd.f32 %v2034, %v2257
  %v2313 = vadd.f32 %v2035, %v2259
  %v2314 = vadd.f32 %v2036, %v2261
  %v2315 = vadd.f32 %v2037, %v2263
  %v2316 = vadd.f32 %v2038, %v2265
  %v2317 = vadd.f32 %v2039, %v2267
  %v2318 = vadd.f32 %v2040, %v2269
  %v2319 = vadd.f32 %v2041, %v2271
  %v2320 = vadd.f32 %v2042, %v2273
  %v2321 = vadd.f32 %v2043, %v2275
  %v2322 = vadd.f32 %v2044, %v2277
  %v2323 = vadd.f32 %v2045, %v2279
  %v2324 = vadd.f32 %v2046, %v2281
  %v2325 = vadd.f32 %v2047, %v2283
  %v2326 = vadd.f32 %v2048, %v2285
  %v2327 = vadd.f32 %v2049, %v2287
  %2329 = vset.pattern.permute.xlu0 0
  %2330 = vperm.xlu0 %2329, %v2308
  %v2331 = vpop.permute.xlu0 %2330
  %2334 = vset.pattern.permute.xlu0 0
  %2335 = vperm.xlu0 %2334, %v2309
  %v2336 = vpop.permute.xlu0 %2335
  %2339 = vset.pattern.permute.xlu0 0
  %2340 = vperm.xlu0 %2339, %v2310
  %v2341 = vpop.permute.xlu0 %2340
  %2344 = vset.pattern.permute.xlu0 0
  %2345 = vperm.xlu0 %2344, %v2311
  %v2346 = vpop.permute.xlu0 %2345
  %2349 = vset.pattern.permute.xlu0 0
  %2350 = vperm.xlu0 %2349, %v2312
  %v2351 = vpop.permute.xlu0 %2350
  %2354 = vset.pattern.permute.xlu0 0
  %2355 = vperm.xlu0 %2354, %v2313
  %v2356 = vpop.permute.xlu0 %2355
  %2359 = vset.pattern.permute.xlu0 0
  %2360 = vperm.xlu0 %2359, %v2314
  %v2361 = vpop.permute.xlu0 %2360
  %2364 = vset.pattern.permute.xlu0 0
  %2365 = vperm.xlu0 %2364, %v2315
  %v2366 = vpop.permute.xlu0 %2365
  %2369 = vset.pattern.permute.xlu0 0
  %2370 = vperm.xlu0 %2369, %v2316
  %v2371 = vpop.permute.xlu0 %2370
  %2374 = vset.pattern.permute.xlu0 0
  %2375 = vperm.xlu0 %2374, %v2317
  %v2376 = vpop.permute.xlu0 %2375
  %2379 = vset.pattern.permute.xlu0 0
  %2380 = vperm.xlu0 %2379, %v2318
  %v2381 = vpop.permute.xlu0 %2380
  %2384 = vset.pattern.permute.xlu0 0
  %2385 = vperm.xlu0 %2384, %v2319
  %v2386 = vpop.permute.xlu0 %2385
  %2389 = vset.pattern.permute.xlu0 0
  %2390 = vperm.xlu0 %2389, %v2320
  %v2391 = vpop.permute.xlu0 %2390
  %2394 = vset.pattern.permute.xlu0 0
  %2395 = vperm.xlu0 %2394, %v2321
  %v2396 = vpop.permute.xlu0 %2395
  %2399 = vset.pattern.permute.xlu0 0
  %2400 = vperm.xlu0 %2399, %v2322
  %v2401 = vpop.permute.xlu0 %2400
  %2404 = vset.pattern.permute.xlu0 0
  %2405 = vperm.xlu0 %2404, %v2323
  %v2406 = vpop.permute.xlu0 %2405
  %2409 = vset.pattern.permute.xlu0 0
  %2410 = vperm.xlu0 %2409, %v2324
  %v2411 = vpop.permute.xlu0 %2410
  %2414 = vset.pattern.permute.xlu0 0
  %2415 = vperm.xlu0 %2414, %v2325
  %v2416 = vpop.permute.xlu0 %2415
  %2419 = vset.pattern.permute.xlu0 0
  %2420 = vperm.xlu0 %2419, %v2326
  %v2421 = vpop.permute.xlu0 %2420
  %2424 = vset.pattern.permute.xlu0 0
  %2425 = vperm.xlu0 %2424, %v2327
  %v2426 = vpop.permute.xlu0 %2425
  %v2428 = vsub.f32 %v1763, %v2331
  %v2429 = vsub.f32 %v1765, %v2336
  %v2430 = vsub.f32 %v1768, %v2341
  %v2431 = vsub.f32 %v1770, %v2346
  %v2432 = vsub.f32 %v1773, %v2351
  %v2433 = vsub.f32 %v1775, %v2356
  %v2434 = vsub.f32 %v1778, %v2361
  %v2435 = vsub.f32 %v1780, %v2366
  %v2436 = vsub.f32 %v1783, %v2371
  %v2437 = vsub.f32 %v1785, %v2376
  %v2438 = vsub.f32 %v1788, %v2381
  %v2439 = vsub.f32 %v1790, %v2386
  %v2440 = vsub.f32 %v1793, %v2391
  %v2441 = vsub.f32 %v1795, %v2396
  %v2442 = vsub.f32 %v1798, %v2401
  %v2443 = vsub.f32 %v1800, %v2406
  %v2444 = vsub.f32 %v1803, %v2411
  %v2445 = vsub.f32 %v1805, %v2416
  %v2446 = vsub.f32 %v1808, %v2421
  %v2447 = vsub.f32 %v1810, %v2426
  %v2448 = vmul.f32 %v2428, %v2428
  %v2449 = vmul.f32 %v2429, %v2429
  %v2450 = vmul.f32 %v2430, %v2430
  %v2451 = vmul.f32 %v2431, %v2431
  %v2452 = vmul.f32 %v2432, %v2432
  %v2453 = vmul.f32 %v2433, %v2433
  %v2454 = vmul.f32 %v2434, %v2434
  %v2455 = vmul.f32 %v2435, %v2435
  %v2456 = vmul.f32 %v2436, %v2436
  %v2457 = vmul.f32 %v2437, %v2437
  %v2458 = vmul.f32 %v2438, %v2438
  %v2459 = vmul.f32 %v2439, %v2439
  %v2460 = vmul.f32 %v2440, %v2440
  %v2461 = vmul.f32 %v2441, %v2441
  %v2462 = vmul.f32 %v2442, %v2442
  %v2463 = vmul.f32 %v2443, %v2443
  %v2464 = vmul.f32 %v2444, %v2444
  %v2465 = vmul.f32 %v2445, %v2445
  %v2466 = vmul.f32 %v2446, %v2446
  %v2467 = vmul.f32 %v2447, %v2447
  %v2468 = vmul.f32 %v2448, %v1835
  %v2469 = vmul.f32 %v2449, %v1840
  %v2470 = vmul.f32 %v2450, %v1845
  %v2471 = vmul.f32 %v2451, %v1850
  %v2472 = vmul.f32 %v2452, %v1855
  %v2473 = vmul.f32 %v2453, %v1860
  %v2474 = vmul.f32 %v2454, %v1865
  %v2475 = vmul.f32 %v2455, %v1870
  %v2476 = vmul.f32 %v2456, %v1875
  %v2477 = vmul.f32 %v2457, %v1880
  %v2478 = vmul.f32 %v2458, %v1885
  %v2479 = vmul.f32 %v2459, %v1890
  %v2480 = vmul.f32 %v2460, %v1895
  %v2481 = vmul.f32 %v2461, %v1900
  %v2482 = vmul.f32 %v2462, %v1905
  %v2483 = vmul.f32 %v2463, %v1910
  %v2484 = vmul.f32 %v2464, %v1915
  %v2485 = vmul.f32 %v2465, %v1920
  %v2486 = vmul.f32 %v2466, %v1925
  %v2487 = vmul.f32 %v2467, %v1930
  %v2488 = vsel %vm485, %v2468, 0.0
  %v2489 = vsel %vm485, %v2469, 0.0
  %v2490 = vadd.f32 %v2488, %v2489
  %v2491 = vsel %vm485, %v2470, 0.0
  %v2492 = vadd.f32 %v2490, %v2491
  %v2493 = vsel %vm485, %v2471, 0.0
  %v2494 = vadd.f32 %v2492, %v2493
  %v2495 = vsel %vm485, %v2472, 0.0
  %v2496 = vadd.f32 %v2494, %v2495
  %v2497 = vsel %vm485, %v2473, 0.0
  %v2498 = vadd.f32 %v2496, %v2497
  %v2499 = vsel %vm485, %v2474, 0.0
  %v2500 = vadd.f32 %v2498, %v2499
  %v2501 = vsel %vm485, %v2475, 0.0
  %v2502 = vadd.f32 %v2500, %v2501
  %v2503 = vsel %vm485, %v2476, 0.0
  %v2504 = vadd.f32 %v2502, %v2503
  %v2505 = vsel %vm485, %v2477, 0.0
  %v2506 = vadd.f32 %v2504, %v2505
  %v2507 = vsel %vm485, %v2478, 0.0
  %v2508 = vadd.f32 %v2506, %v2507
  %v2509 = vsel %vm485, %v2479, 0.0
  %v2510 = vadd.f32 %v2508, %v2509
  %v2511 = vsel %vm485, %v2480, 0.0
  %v2512 = vadd.f32 %v2510, %v2511
  %v2513 = vsel %vm485, %v2481, 0.0
  %v2514 = vadd.f32 %v2512, %v2513
  %v2515 = vsel %vm485, %v2482, 0.0
  %v2516 = vadd.f32 %v2514, %v2515
  %v2517 = vsel %vm485, %v2483, 0.0
  %v2518 = vadd.f32 %v2516, %v2517
  %v2519 = vsel %vm485, %v2484, 0.0
  %v2520 = vadd.f32 %v2518, %v2519
  %v2521 = vsel %vm485, %v2485, 0.0
  %v2522 = vadd.f32 %v2520, %v2521
  %v2523 = vsel %vm485, %v2486, 0.0
  %v2524 = vadd.f32 %v2522, %v2523
  %v2525 = vsel %vm485, %v2487, 0.0
  %v2526 = vadd.f32 %v2524, %v2525
  %2527 = vadd.xlane.f32.xlu0 %v2526
  %v2528 = vpop.xlane.xlu0 %2527
  %v2529 = vrot.slane %v2528, 4
  %v2530 = vadd.f32 %v2528, %v2529
  %v2531 = vrot.slane %v2530, 2
  %v2532 = vadd.f32 %v2530, %v2531
  %v2533 = vrot.slane %v2532, 1
  %v2534 = vadd.f32 %v2532, %v2533
  %s2535 = vtos %v2534
  %v2536 = vrcp.pop 1280.0
  %v2537 = vmul.f32 1280.0, %v2536
  %v2538 = vsub.f32 1.0, %v2537
  %v2539 = vmul.f32 %v2536, %v2538
  %v2540 = vadd.f32 %v2536, %v2539
  %vm2541 = vweird.f32 %v2536
  %v2542 = vsel %vm2541, %v2536, %v2540
  %s2543 = vtos %v2542
  %s2544 = smul.f32 %s2535, %s2543
  %s2545 = sadd.f32 %s2544, 1e-08
  %v2546 = vstv %s2545
  %v2547 = vrsqrt.pop %v2546
  %v2548 = vmul.f32 %v2547, %v2546
  %v2549 = vmul.f32 %v2548, %v2547
  %v2550 = vmul.f32 0.5, %v2549
  %v2551 = vsub.f32 1.5, %v2550
  %v2552 = vmul.f32 %v2547, %v2551
  %vm2553 = vweird.f32 %v2546
  %vm2554 = vweird.f32 %v2547
  %vm2555 = vmor %vm2553, %vm2554
  %v2556 = vsel %vm2555, %v2547, %v2552
  %s2557 = vtos %v2556
  %v2558 = vstv %s2557
  %v2559 = vmul.f32 %v1812, %v2558
  %v2560 = vmul.f32 %v1813, %v2558
  %v2561 = vmul.f32 %v1814, %v2558
  %v2562 = vmul.f32 %v1815, %v2558
  %v2563 = vmul.f32 %v1816, %v2558
  %v2564 = vmul.f32 %v1817, %v2558
  %v2565 = vmul.f32 %v1818, %v2558
  %v2566 = vmul.f32 %v1819, %v2558
  %v2567 = vmul.f32 %v1820, %v2558
  %v2568 = vmul.f32 %v1821, %v2558
  %v2569 = vmul.f32 %v1822, %v2558
  %v2570 = vmul.f32 %v1823, %v2558
  %v2571 = vmul.f32 %v1824, %v2558
  %v2572 = vmul.f32 %v1825, %v2558
  %v2573 = vmul.f32 %v1826, %v2558
  %v2574 = vmul.f32 %v1827, %v2558
  %v2575 = vmul.f32 %v1828, %v2558
  %v2576 = vmul.f32 %v1829, %v2558
  %v2577 = vmul.f32 %v1830, %v2558
  %v2578 = vmul.f32 %v1831, %v2558
  %v2579 = vadd.f32 %v2559, 0.0
  %v2580 = vadd.f32 %v2560, 0.0
  %v2581 = vadd.f32 %v2561, 0.0
  %v2582 = vadd.f32 %v2562, 0.0
  %v2583 = vadd.f32 %v2563, 0.0
  %v2584 = vadd.f32 %v2564, 0.0
  %v2585 = vadd.f32 %v2565, 0.0
  %v2586 = vadd.f32 %v2566, 0.0
  %v2587 = vadd.f32 %v2567, 0.0
  %v2588 = vadd.f32 %v2568, 0.0
  %v2589 = vadd.f32 %v2569, 0.0
  %v2590 = vadd.f32 %v2570, 0.0
  %v2591 = vadd.f32 %v2571, 0.0
  %v2592 = vadd.f32 %v2572, 0.0
  %v2593 = vadd.f32 %v2573, 0.0
  %v2594 = vadd.f32 %v2574, 0.0
  %v2595 = vadd.f32 %v2575, 0.0
  %v2596 = vadd.f32 %v2576, 0.0
  %v2597 = vadd.f32 %v2577, 0.0
  %v2598 = vadd.f32 %v2578, 0.0
  %v2599 = vmul.f32 %v2448, %v2052
  %v2600 = vmul.f32 %v2449, %v2056
  %v2601 = vmul.f32 %v2450, %v2060
  %v2602 = vmul.f32 %v2451, %v2064
  %v2603 = vmul.f32 %v2452, %v2068
  %v2604 = vmul.f32 %v2453, %v2072
  %v2605 = vmul.f32 %v2454, %v2076
  %v2606 = vmul.f32 %v2455, %v2080
  %v2607 = vmul.f32 %v2456, %v2084
  %v2608 = vmul.f32 %v2457, %v2088
  %v2609 = vmul.f32 %v2458, %v2092
  %v2610 = vmul.f32 %v2459, %v2096
  %v2611 = vmul.f32 %v2460, %v2100
  %v2612 = vmul.f32 %v2461, %v2104
  %v2613 = vmul.f32 %v2462, %v2108
  %v2614 = vmul.f32 %v2463, %v2112
  %v2615 = vmul.f32 %v2464, %v2116
  %v2616 = vmul.f32 %v2465, %v2120
  %v2617 = vmul.f32 %v2466, %v2124
  %v2618 = vmul.f32 %v2467, %v2128
  %v2619 = vsel %vm485, %v2599, 0.0
  %v2620 = vsel %vm485, %v2600, 0.0
  %v2621 = vadd.f32 %v2619, %v2620
  %v2622 = vsel %vm485, %v2601, 0.0
  %v2623 = vadd.f32 %v2621, %v2622
  %v2624 = vsel %vm485, %v2602, 0.0
  %v2625 = vadd.f32 %v2623, %v2624
  %v2626 = vsel %vm485, %v2603, 0.0
  %v2627 = vadd.f32 %v2625, %v2626
  %v2628 = vsel %vm485, %v2604, 0.0
  %v2629 = vadd.f32 %v2627, %v2628
  %v2630 = vsel %vm485, %v2605, 0.0
  %v2631 = vadd.f32 %v2629, %v2630
  %v2632 = vsel %vm485, %v2606, 0.0
  %v2633 = vadd.f32 %v2631, %v2632
  %v2634 = vsel %vm485, %v2607, 0.0
  %v2635 = vadd.f32 %v2633, %v2634
  %v2636 = vsel %vm485, %v2608, 0.0
  %v2637 = vadd.f32 %v2635, %v2636
  %v2638 = vsel %vm485, %v2609, 0.0
  %v2639 = vadd.f32 %v2637, %v2638
  %v2640 = vsel %vm485, %v2610, 0.0
  %v2641 = vadd.f32 %v2639, %v2640
  %v2642 = vsel %vm485, %v2611, 0.0
  %v2643 = vadd.f32 %v2641, %v2642
  %v2644 = vsel %vm485, %v2612, 0.0
  %v2645 = vadd.f32 %v2643, %v2644
  %v2646 = vsel %vm485, %v2613, 0.0
  %v2647 = vadd.f32 %v2645, %v2646
  %v2648 = vsel %vm485, %v2614, 0.0
  %v2649 = vadd.f32 %v2647, %v2648
  %v2650 = vsel %vm485, %v2615, 0.0
  %v2651 = vadd.f32 %v2649, %v2650
  %v2652 = vsel %vm485, %v2616, 0.0
  %v2653 = vadd.f32 %v2651, %v2652
  %v2654 = vsel %vm485, %v2617, 0.0
  %v2655 = vadd.f32 %v2653, %v2654
  %v2656 = vsel %vm485, %v2618, 0.0
  %v2657 = vadd.f32 %v2655, %v2656
  %2658 = vadd.xlane.f32.xlu0 %v2657
  %v2659 = vpop.xlane.xlu0 %2658
  %v2660 = vrot.slane %v2659, 4
  %v2661 = vadd.f32 %v2659, %v2660
  %v2662 = vrot.slane %v2661, 2
  %v2663 = vadd.f32 %v2661, %v2662
  %v2664 = vrot.slane %v2663, 1
  %v2665 = vadd.f32 %v2663, %v2664
  %s2666 = vtos %v2665
  %v2667 = vrcp.pop 1280.0
  %v2668 = vmul.f32 1280.0, %v2667
  %v2669 = vsub.f32 1.0, %v2668
  %v2670 = vmul.f32 %v2667, %v2669
  %v2671 = vadd.f32 %v2667, %v2670
  %vm2672 = vweird.f32 %v2667
  %v2673 = vsel %vm2672, %v2667, %v2671
  %s2674 = vtos %v2673
  %s2675 = smul.f32 %s2666, %s2674
  %s2676 = sadd.f32 %s2675, 1e-08
  %v2677 = vstv %s2676
  %v2678 = vrsqrt.pop %v2677
  %v2679 = vmul.f32 %v2678, %v2677
  %v2680 = vmul.f32 %v2679, %v2678
  %v2681 = vmul.f32 0.5, %v2680
  %v2682 = vsub.f32 1.5, %v2681
  %v2683 = vmul.f32 %v2678, %v2682
  %vm2684 = vweird.f32 %v2677
  %vm2685 = vweird.f32 %v2678
  %vm2686 = vmor %vm2684, %vm2685
  %v2687 = vsel %vm2686, %v2678, %v2683
  %s2688 = vtos %v2687
  %v2689 = vstv %s2688
  %v2690 = vmul.f32 %v1812, %v2689
  %v2691 = vmul.f32 %v1813, %v2689
  %v2692 = vmul.f32 %v1814, %v2689
  %v2693 = vmul.f32 %v1815, %v2689
  %v2694 = vmul.f32 %v1816, %v2689
  %v2695 = vmul.f32 %v1817, %v2689
  %v2696 = vmul.f32 %v1818, %v2689
  %v2697 = vmul.f32 %v1819, %v2689
  %v2698 = vmul.f32 %v1820, %v2689
  %v2699 = vmul.f32 %v1821, %v2689
  %v2700 = vmul.f32 %v1822, %v2689
  %v2701 = vmul.f32 %v1823, %v2689
  %v2702 = vmul.f32 %v1824, %v2689
  %v2703 = vmul.f32 %v1825, %v2689
  %v2704 = vmul.f32 %v1826, %v2689
  %v2705 = vmul.f32 %v1827, %v2689
  %v2706 = vmul.f32 %v1828, %v2689
  %v2707 = vmul.f32 %v1829, %v2689
  %v2708 = vmul.f32 %v1830, %v2689
  %v2709 = vmul.f32 %v1831, %v2689
  %2730 = vrot.lane.b32.xlu0 %v2690, 127
  %v2731 = vpop.permute.xlu0 %2730
  %2732 = vrot.lane.b32.xlu0 %v2691, 127
  %v2733 = vpop.permute.xlu0 %2732
  %2734 = vrot.lane.b32.xlu0 %v2692, 127
  %v2735 = vpop.permute.xlu0 %2734
  %2736 = vrot.lane.b32.xlu0 %v2693, 127
  %v2737 = vpop.permute.xlu0 %2736
  %2738 = vrot.lane.b32.xlu0 %v2694, 127
  %v2739 = vpop.permute.xlu0 %2738
  %2740 = vrot.lane.b32.xlu0 %v2695, 127
  %v2741 = vpop.permute.xlu0 %2740
  %2742 = vrot.lane.b32.xlu0 %v2696, 127
  %v2743 = vpop.permute.xlu0 %2742
  %2744 = vrot.lane.b32.xlu0 %v2697, 127
  %v2745 = vpop.permute.xlu0 %2744
  %2746 = vrot.lane.b32.xlu0 %v2698, 127
  %v2747 = vpop.permute.xlu0 %2746
  %2748 = vrot.lane.b32.xlu0 %v2699, 127
  %v2749 = vpop.permute.xlu0 %2748
  %2750 = vrot.lane.b32.xlu0 %v2700, 127
  %v2751 = vpop.permute.xlu0 %2750
  %2752 = vrot.lane.b32.xlu0 %v2701, 127
  %v2753 = vpop.permute.xlu0 %2752
  %2754 = vrot.lane.b32.xlu0 %v2702, 127
  %v2755 = vpop.permute.xlu0 %2754
  %2756 = vrot.lane.b32.xlu0 %v2703, 127
  %v2757 = vpop.permute.xlu0 %2756
  %2758 = vrot.lane.b32.xlu0 %v2704, 127
  %v2759 = vpop.permute.xlu0 %2758
  %2760 = vrot.lane.b32.xlu0 %v2705, 127
  %v2761 = vpop.permute.xlu0 %2760
  %2762 = vrot.lane.b32.xlu0 %v2706, 127
  %v2763 = vpop.permute.xlu0 %2762
  %2764 = vrot.lane.b32.xlu0 %v2707, 127
  %v2765 = vpop.permute.xlu0 %2764
  %2766 = vrot.lane.b32.xlu0 %v2708, 127
  %v2767 = vpop.permute.xlu0 %2766
  %2768 = vrot.lane.b32.xlu0 %v2709, 127
  %v2769 = vpop.permute.xlu0 %2768
  %v2790 = vadd.f32 %v2579, %v2731
  %v2791 = vadd.f32 %v2580, %v2733
  %v2792 = vadd.f32 %v2581, %v2735
  %v2793 = vadd.f32 %v2582, %v2737
  %v2794 = vadd.f32 %v2583, %v2739
  %v2795 = vadd.f32 %v2584, %v2741
  %v2796 = vadd.f32 %v2585, %v2743
  %v2797 = vadd.f32 %v2586, %v2745
  %v2798 = vadd.f32 %v2587, %v2747
  %v2799 = vadd.f32 %v2588, %v2749
  %v2800 = vadd.f32 %v2589, %v2751
  %v2801 = vadd.f32 %v2590, %v2753
  %v2802 = vadd.f32 %v2591, %v2755
  %v2803 = vadd.f32 %v2592, %v2757
  %v2804 = vadd.f32 %v2593, %v2759
  %v2805 = vadd.f32 %v2594, %v2761
  %v2806 = vadd.f32 %v2595, %v2763
  %v2807 = vadd.f32 %v2596, %v2765
  %v2808 = vadd.f32 %v2597, %v2767
  %v2809 = vadd.f32 %v2598, %v2769
  %2811 = vset.pattern.permute.xlu0 0
  %2812 = vperm.xlu0 %2811, %v2790
  %v2813 = vpop.permute.xlu0 %2812
  %2816 = vset.pattern.permute.xlu0 0
  %2817 = vperm.xlu0 %2816, %v2791
  %v2818 = vpop.permute.xlu0 %2817
  %2821 = vset.pattern.permute.xlu0 0
  %2822 = vperm.xlu0 %2821, %v2792
  %v2823 = vpop.permute.xlu0 %2822
  %2826 = vset.pattern.permute.xlu0 0
  %2827 = vperm.xlu0 %2826, %v2793
  %v2828 = vpop.permute.xlu0 %2827
  %2831 = vset.pattern.permute.xlu0 0
  %2832 = vperm.xlu0 %2831, %v2794
  %v2833 = vpop.permute.xlu0 %2832
  %2836 = vset.pattern.permute.xlu0 0
  %2837 = vperm.xlu0 %2836, %v2795
  %v2838 = vpop.permute.xlu0 %2837
  %2841 = vset.pattern.permute.xlu0 0
  %2842 = vperm.xlu0 %2841, %v2796
  %v2843 = vpop.permute.xlu0 %2842
  %2846 = vset.pattern.permute.xlu0 0
  %2847 = vperm.xlu0 %2846, %v2797
  %v2848 = vpop.permute.xlu0 %2847
  %2851 = vset.pattern.permute.xlu0 0
  %2852 = vperm.xlu0 %2851, %v2798
  %v2853 = vpop.permute.xlu0 %2852
  %2856 = vset.pattern.permute.xlu0 0
  %2857 = vperm.xlu0 %2856, %v2799
  %v2858 = vpop.permute.xlu0 %2857
  %2861 = vset.pattern.permute.xlu0 0
  %2862 = vperm.xlu0 %2861, %v2800
  %v2863 = vpop.permute.xlu0 %2862
  %2866 = vset.pattern.permute.xlu0 0
  %2867 = vperm.xlu0 %2866, %v2801
  %v2868 = vpop.permute.xlu0 %2867
  %2871 = vset.pattern.permute.xlu0 0
  %2872 = vperm.xlu0 %2871, %v2802
  %v2873 = vpop.permute.xlu0 %2872
  %2876 = vset.pattern.permute.xlu0 0
  %2877 = vperm.xlu0 %2876, %v2803
  %v2878 = vpop.permute.xlu0 %2877
  %2881 = vset.pattern.permute.xlu0 0
  %2882 = vperm.xlu0 %2881, %v2804
  %v2883 = vpop.permute.xlu0 %2882
  %2886 = vset.pattern.permute.xlu0 0
  %2887 = vperm.xlu0 %2886, %v2805
  %v2888 = vpop.permute.xlu0 %2887
  %2891 = vset.pattern.permute.xlu0 0
  %2892 = vperm.xlu0 %2891, %v2806
  %v2893 = vpop.permute.xlu0 %2892
  %2896 = vset.pattern.permute.xlu0 0
  %2897 = vperm.xlu0 %2896, %v2807
  %v2898 = vpop.permute.xlu0 %2897
  %2901 = vset.pattern.permute.xlu0 0
  %2902 = vperm.xlu0 %2901, %v2808
  %v2903 = vpop.permute.xlu0 %2902
  %2906 = vset.pattern.permute.xlu0 0
  %2907 = vperm.xlu0 %2906, %v2809
  %v2908 = vpop.permute.xlu0 %2907
  %v2910 = vmul.f32 %v2428, %v2813
  %v2911 = vmul.f32 %v2429, %v2818
  %v2912 = vmul.f32 %v2430, %v2823
  %v2913 = vmul.f32 %v2431, %v2828
  %v2914 = vmul.f32 %v2432, %v2833
  %v2915 = vmul.f32 %v2433, %v2838
  %v2916 = vmul.f32 %v2434, %v2843
  %v2917 = vmul.f32 %v2435, %v2848
  %v2918 = vmul.f32 %v2436, %v2853
  %v2919 = vmul.f32 %v2437, %v2858
  %v2920 = vmul.f32 %v2438, %v2863
  %v2921 = vmul.f32 %v2439, %v2868
  %v2922 = vmul.f32 %v2440, %v2873
  %v2923 = vmul.f32 %v2441, %v2878
  %v2924 = vmul.f32 %v2442, %v2883
  %v2925 = vmul.f32 %v2443, %v2888
  %v2926 = vmul.f32 %v2444, %v2893
  %v2927 = vmul.f32 %v2445, %v2898
  %v2928 = vmul.f32 %v2446, %v2903
  %v2929 = vmul.f32 %v2447, %v2908
  %v2930 = vld [vmem:[%s6] sm:$0x1]
  %v2932 = vperm.slane %v2930, 0
  %v2934 = vmul.f32 %v2910, %v2932
  %v2935 = vmul.f32 %v2911, %v2932
  %v2936 = vmul.f32 %v2912, %v2932
  %v2937 = vmul.f32 %v2913, %v2932
  %v2938 = vmul.f32 %v2914, %v2932
  %v2939 = vmul.f32 %v2915, %v2932
  %v2940 = vmul.f32 %v2916, %v2932
  %v2941 = vmul.f32 %v2917, %v2932
  %v2942 = vmul.f32 %v2918, %v2932
  %v2943 = vmul.f32 %v2919, %v2932
  %v2944 = vmul.f32 %v2920, %v2932
  %v2945 = vmul.f32 %v2921, %v2932
  %v2946 = vmul.f32 %v2922, %v2932
  %v2947 = vmul.f32 %v2923, %v2932
  %v2948 = vmul.f32 %v2924, %v2932
  %v2949 = vmul.f32 %v2925, %v2932
  %v2950 = vmul.f32 %v2926, %v2932
  %v2951 = vmul.f32 %v2927, %v2932
  %v2952 = vmul.f32 %v2928, %v2932
  %v2953 = vmul.f32 %v2929, %v2932
  %v2954 = vld [vmem:[%s7] sm:$0x1]
  %v2956 = vperm.slane %v2954, 0
  %v2958 = vadd.f32 %v2934, %v2956
  %v2959 = vadd.f32 %v2935, %v2956
  %v2960 = vadd.f32 %v2936, %v2956
  %v2961 = vadd.f32 %v2937, %v2956
  %v2962 = vadd.f32 %v2938, %v2956
  %v2963 = vadd.f32 %v2939, %v2956
  %v2964 = vadd.f32 %v2940, %v2956
  %v2965 = vadd.f32 %v2941, %v2956
  %v2966 = vadd.f32 %v2942, %v2956
  %v2967 = vadd.f32 %v2943, %v2956
  %v2968 = vadd.f32 %v2944, %v2956
  %v2969 = vadd.f32 %v2945, %v2956
  %v2970 = vadd.f32 %v2946, %v2956
  %v2971 = vadd.f32 %v2947, %v2956
  %v2972 = vadd.f32 %v2948, %v2956
  %v2973 = vadd.f32 %v2949, %v2956
  %v2974 = vadd.f32 %v2950, %v2956
  %v2975 = vadd.f32 %v2951, %v2956
  %v2976 = vadd.f32 %v2952, %v2956
  %v2977 = vadd.f32 %v2953, %v2956
  %v2978 = vld [vmem:[%s0] sm:$0xff]
  %v2979 = vld [vmem:[%s0 + $0x8] sm:$0xff]
  %v2980 = vld [vmem:[%s0 + $0x10] sm:$0xff]
  %v2981 = vld [vmem:[%s0 + $0x18] sm:$0xff]
  %v2982 = vld [vmem:[%s0 + $0x20] sm:$0xff]
  %v2983 = vld [vmem:[%s0 + $0x28] sm:$0xff]
  %v2984 = vld [vmem:[%s0 + $0x30] sm:$0xff]
  %v2985 = vld [vmem:[%s0 + $0x38] sm:$0xff]
  %v2986 = vld [vmem:[%s0 + $0x40] sm:$0xff]
  %v2987 = vld [vmem:[%s0 + $0x48] sm:$0xff]
  %v2988 = vld [vmem:[%s0 + $0x50] sm:$0xff]
  %v2989 = vld [vmem:[%s0 + $0x58] sm:$0xff]
  %v2990 = vld [vmem:[%s0 + $0x60] sm:$0xff]
  %v2991 = vld [vmem:[%s0 + $0x68] sm:$0xff]
  %v2992 = vld [vmem:[%s0 + $0x70] sm:$0xff]
  %v2993 = vld [vmem:[%s0 + $0x78] sm:$0xff]
  %v2994 = vld [vmem:[%s0 + $0x80] sm:$0xff]
  %v2995 = vld [vmem:[%s0 + $0x88] sm:$0xff]
  %v2996 = vld [vmem:[%s0 + $0x90] sm:$0xff]
  %v2997 = vld [vmem:[%s0 + $0x98] sm:$0xff]
  %v2998 = vadd.f32 %v2958, %v2978
  %v2999 = vadd.f32 %v2959, %v2979
  %v3000 = vadd.f32 %v2960, %v2980
  %v3001 = vadd.f32 %v2961, %v2981
  %v3002 = vadd.f32 %v2962, %v2982
  %v3003 = vadd.f32 %v2963, %v2983
  %v3004 = vadd.f32 %v2964, %v2984
  %v3005 = vadd.f32 %v2965, %v2985
  %v3006 = vadd.f32 %v2966, %v2986
  %v3007 = vadd.f32 %v2967, %v2987
  %v3008 = vadd.f32 %v2968, %v2988
  %v3009 = vadd.f32 %v2969, %v2989
  %v3010 = vadd.f32 %v2970, %v2990
  %v3011 = vadd.f32 %v2971, %v2991
  %v3012 = vadd.f32 %v2972, %v2992
  %v3013 = vadd.f32 %v2973, %v2993
  %v3014 = vadd.f32 %v2974, %v2994
  %v3015 = vadd.f32 %v2975, %v2995
  %v3016 = vadd.f32 %v2976, %v2996
  %v3017 = vadd.f32 %v2977, %v2997
  %3018 = vst.msk [vmem:[%s9] sm:$0xff] %vm485, %v2998
  %3019 = vst.msk [vmem:[%s9 + $0x8] sm:$0xff] %vm485, %v2999
  %3020 = vst.msk [vmem:[%s9 + $0x10] sm:$0xff] %vm485, %v3000
  %3021 = vst.msk [vmem:[%s9 + $0x18] sm:$0xff] %vm485, %v3001
  %3022 = vst.msk [vmem:[%s9 + $0x20] sm:$0xff] %vm485, %v3002
  %3023 = vst.msk [vmem:[%s9 + $0x28] sm:$0xff] %vm485, %v3003
  %3024 = vst.msk [vmem:[%s9 + $0x30] sm:$0xff] %vm485, %v3004
  %3025 = vst.msk [vmem:[%s9 + $0x38] sm:$0xff] %vm485, %v3005
  %3026 = vst.msk [vmem:[%s9 + $0x40] sm:$0xff] %vm485, %v3006
  %3027 = vst.msk [vmem:[%s9 + $0x48] sm:$0xff] %vm485, %v3007
  %3028 = vst.msk [vmem:[%s9 + $0x50] sm:$0xff] %vm485, %v3008
  %3029 = vst.msk [vmem:[%s9 + $0x58] sm:$0xff] %vm485, %v3009
  %3030 = vst.msk [vmem:[%s9 + $0x60] sm:$0xff] %vm485, %v3010
  %3031 = vst.msk [vmem:[%s9 + $0x68] sm:$0xff] %vm485, %v3011
  %3032 = vst.msk [vmem:[%s9 + $0x70] sm:$0xff] %vm485, %v3012
  %3033 = vst.msk [vmem:[%s9 + $0x78] sm:$0xff] %vm485, %v3013
  %3034 = vst.msk [vmem:[%s9 + $0x80] sm:$0xff] %vm485, %v3014
  %3035 = vst.msk [vmem:[%s9 + $0x88] sm:$0xff] %vm485, %v3015
  %3036 = vst.msk [vmem:[%s9 + $0x90] sm:$0xff] %vm485, %v3016
  %3037 = vst.msk [vmem:[%s9 + $0x98] sm:$0xff] %vm485, %v3017
  // Predicated region
  $region38: #{sep_block.2} parent=0 // pred_check
    _
  $region39: #{sep_block.2} parent=0 // pred_check_branch
    %3039 = sbr.rel (0) target = $region41
  $region40: #{sep_block.2} parent=0 // pred_region
    _
  $region41: #{sep_block.2} parent=0 // pred_fallthru
    _
  // Predicated region
  $region42: #{sep_block.2} parent=0 // pred_check
    _
  $region43: #{sep_block.2} parent=0 // pred_check_branch
    %3041 = sbr.rel (0) target = $region45
  $region44: #{sep_block.2} parent=0 // pred_region
    _
  $region45: #{sep_block.2} parent=0 // pred_fallthru
    _

// kernel: sep_block.3
$region0: #{sep_block.3}
  #allocation0 [shape = 'u32[]', space=smem, size = 0x4, offset = 0x4, fixed_abs, tag = 'smem constant byte address 0x4 - core index']
  #allocation1 [shape = 'u32[72,128]{1,0:T(1,128)}', space=vmem, size = 0x9000, scoped, tag = 'internal scratch']
  #allocation2 [shape = 'f32[160,128]{1,0:T(8,128)}', space=vmem, size = 0x14000, scoped, tag = 'scratch operand']
  #allocation3 [shape = 'f32[160,48]{1,0:T(8,128)}', space=vmem, size = 0x14000, scoped, tag = 'scratch operand']
  %s0 = inlined_call_operand.vmem [shape: f32[160,32], index: 0, kind: input, shape index: {}]
  %s1 = inlined_call_operand.vmem [shape: bf16[32,128], index: 1, kind: input, shape index: {}]
  %s2 = inlined_call_operand.vmem [shape: bf16[32,128], index: 2, kind: input, shape index: {}]
  %s3 = inlined_call_operand.vmem [shape: f32[1,128], index: 3, kind: input, shape index: {}]
  %s4 = inlined_call_operand.vmem [shape: bf16[48,16], index: 4, kind: input, shape index: {}]
  %s5 = inlined_call_operand.vmem [shape: f32[1,16], index: 5, kind: input, shape index: {}]
  %s6 = inlined_call_operand.vmem [shape: f32[1,16], index: 6, kind: input, shape index: {}]
  %s7 = inlined_call_operand.vmem [shape: f32[1,16], index: 7, kind: input, shape index: {}]
  %s8 = inlined_call_operand.vmem [shape: f32[160,2], index: 8, kind: input, shape index: {}]
  %s9 = inlined_call_operand.vmem [shape: f32[160,16], index: 9, kind: output, shape index: {}]
  %s10 = sld [smem:[#allocation0]]
  $region46: #{sep_block.3} parent=0
    _
  %s12 = ssub.s32 1, %s10
  %s13 = scalar_select 0, %s12, %s10
  // Predicated region
  $region2: #{sep_block.3} parent=0 // pred_check
    _
  $region3: #{sep_block.3} parent=0 // pred_check_branch
    %15 = sbr.rel (0) target = $region5
  $region4: #{sep_block.3} parent=0 // pred_region
    _
  $region5: #{sep_block.3} parent=0 // pred_fallthru
    _
  // Predicated region
  $region6: #{sep_block.3} parent=0 // pred_check
    _
  $region7: #{sep_block.3} parent=0 // pred_check_branch
    %17 = sbr.rel (0) target = $region9
  $region8: #{sep_block.3} parent=0 // pred_region
    _
  $region9: #{sep_block.3} parent=0 // pred_fallthru
    _
  // Predicated region
  $region10: #{sep_block.3} parent=0 // pred_check
    _
  $region11: #{sep_block.3} parent=0 // pred_check_branch
    %19 = sbr.rel (0) target = $region13
  $region12: #{sep_block.3} parent=0 // pred_region
    _
  $region13: #{sep_block.3} parent=0 // pred_fallthru
    _
  // Predicated region
  $region14: #{sep_block.3} parent=0 // pred_check
    _
  $region15: #{sep_block.3} parent=0 // pred_check_branch
    %21 = sbr.rel (0) target = $region17
  $region16: #{sep_block.3} parent=0 // pred_region
    _
  $region17: #{sep_block.3} parent=0 // pred_fallthru
    _
  // Predicated region
  $region18: #{sep_block.3} parent=0 // pred_check
    _
  $region19: #{sep_block.3} parent=0 // pred_check_branch
    %23 = sbr.rel (0) target = $region21
  $region20: #{sep_block.3} parent=0 // pred_region
    _
  $region21: #{sep_block.3} parent=0 // pred_fallthru
    _
  // Predicated region
  $region22: #{sep_block.3} parent=0 // pred_check
    _
  $region23: #{sep_block.3} parent=0 // pred_check_branch
    %25 = sbr.rel (0) target = $region25
  $region24: #{sep_block.3} parent=0 // pred_region
    _
  $region25: #{sep_block.3} parent=0 // pred_fallthru
    _
  // Predicated region
  $region26: #{sep_block.3} parent=0 // pred_check
    _
  $region27: #{sep_block.3} parent=0 // pred_check_branch
    %27 = sbr.rel (0) target = $region29
  $region28: #{sep_block.3} parent=0 // pred_region
    _
  $region29: #{sep_block.3} parent=0 // pred_fallthru
    _
  // Predicated region
  $region30: #{sep_block.3} parent=0 // pred_check
    _
  $region31: #{sep_block.3} parent=0 // pred_check_branch
    %29 = sbr.rel (0) target = $region33
  $region32: #{sep_block.3} parent=0 // pred_region
    _
  $region33: #{sep_block.3} parent=0 // pred_fallthru
    _
  // Predicated region
  $region34: #{sep_block.3} parent=0 // pred_check
    _
  $region35: #{sep_block.3} parent=0 // pred_check_branch
    %31 = sbr.rel (0) target = $region37
  $region36: #{sep_block.3} parent=0 // pred_region
    _
  $region37: #{sep_block.3} parent=0 // pred_fallthru
    _
  %v33 = vld [vmem:[%s0] sm:$0xff]
  %v34 = vld [vmem:[%s0 + $0x8] sm:$0xff]
  %v35 = vld [vmem:[%s0 + $0x10] sm:$0xff]
  %v36 = vld [vmem:[%s0 + $0x18] sm:$0xff]
  %v37 = vld [vmem:[%s0 + $0x20] sm:$0xff]
  %v38 = vld [vmem:[%s0 + $0x28] sm:$0xff]
  %v39 = vld [vmem:[%s0 + $0x30] sm:$0xff]
  %v40 = vld [vmem:[%s0 + $0x38] sm:$0xff]
  %v41 = vld [vmem:[%s0 + $0x40] sm:$0xff]
  %v42 = vld [vmem:[%s0 + $0x48] sm:$0xff]
  %v43 = vld [vmem:[%s0 + $0x50] sm:$0xff]
  %v44 = vld [vmem:[%s0 + $0x58] sm:$0xff]
  %v45 = vld [vmem:[%s0 + $0x60] sm:$0xff]
  %v46 = vld [vmem:[%s0 + $0x68] sm:$0xff]
  %v47 = vld [vmem:[%s0 + $0x70] sm:$0xff]
  %v48 = vld [vmem:[%s0 + $0x78] sm:$0xff]
  %v49 = vld [vmem:[%s0 + $0x80] sm:$0xff]
  %v50 = vld [vmem:[%s0 + $0x88] sm:$0xff]
  %v51 = vld [vmem:[%s0 + $0x90] sm:$0xff]
  %v52 = vld [vmem:[%s0 + $0x98] sm:$0xff]
  %v53 = vpack.c.bf16 %v34, %v33
  %v54 = vpack.c.bf16 %v36, %v35
  %v55 = vpack.c.bf16 %v38, %v37
  %v56 = vpack.c.bf16 %v40, %v39
  %v57 = vpack.c.bf16 %v42, %v41
  %v58 = vpack.c.bf16 %v44, %v43
  %v59 = vpack.c.bf16 %v46, %v45
  %v60 = vpack.c.bf16 %v48, %v47
  %v61 = vpack.c.bf16 %v50, %v49
  %v62 = vpack.c.bf16 %v52, %v51
  %v63 = vld [vmem:[%s1] sm:$0xf]
  %v64 = vld [vmem:[%s1 + $0x4] sm:$0xf]
  %v65 = vld [vmem:[%s1 + $0x8] sm:$0xf]
  %v66 = vld [vmem:[%s1 + $0xc] sm:$0xf]
  %v67 = vld [vmem:[%s3] sm:$0x1]
  %v69 = vperm.slane %v67, 0
  %v75 = vunpack.c.l.b16 %v63
  %v76 = vunpack.c.l.b16 %v64
  %v77 = vunpack.c.l.b16 %v65
  %v78 = vunpack.c.l.b16 %v66
  %v79 = vpack.c.b16 %v76, %v75
  %v80 = vpack.c.b16 %v78, %v77
  %vm83 = vcmask 261120
  %v85 = vsel %vm83, %v53, 0
  %v88 = vsel %vm83, %v54, 0
  %v91 = vsel %vm83, %v55, 0
  %v94 = vsel %vm83, %v56, 0
  %v97 = vsel %vm83, %v57, 0
  %v100 = vsel %vm83, %v58, 0
  %v103 = vsel %vm83, %v59, 0
  %v106 = vsel %vm83, %v60, 0
  %v109 = vsel %vm83, %v61, 0
  %v112 = vsel %vm83, %v62, 0
  %114 = vmatpush.bf16.msra.mxu0 0
  %115 = vmatpush.bf16.msra.mxu0 0
  %116 = vmatpush.bf16.msra.mxu0 0
  %117 = vmatpush.bf16.msra.mxu0 0
  %118 = vmatpush.bf16.msra.mxu0 0
  %119 = vmatpush.bf16.msra.mxu0 0
  %120 = vmatpush.bf16.msra.mxu0 %v80
  %121 = vmatpush.bf16.msra.mxu0 %v79
  %122 = vmatmul.bf16.gmra.mxu0 %v85
  %v123 = vpop.f32.mrf.mxu0
  %v124 = vadd.f32 %v69, %v123
  %v125 = vpop.f32.mrf.mxu0
  %v126 = vadd.f32 %v69, %v125
  %127 = vmatmul.bf16.gmra.mxu0 %v88
  %v128 = vpop.f32.mrf.mxu0
  %v129 = vadd.f32 %v69, %v128
  %v130 = vpop.f32.mrf.mxu0
  %v131 = vadd.f32 %v69, %v130
  %132 = vmatmul.bf16.gmra.mxu0 %v91
  %v133 = vpop.f32.mrf.mxu0
  %v134 = vadd.f32 %v69, %v133
  %v135 = vpop.f32.mrf.mxu0
  %v136 = vadd.f32 %v69, %v135
  %137 = vmatmul.bf16.gmra.mxu0 %v94
  %v138 = vpop.f32.mrf.mxu0
  %v139 = vadd.f32 %v69, %v138
  %v140 = vpop.f32.mrf.mxu0
  %v141 = vadd.f32 %v69, %v140
  %142 = vmatmul.bf16.gmra.mxu0 %v97
  %v143 = vpop.f32.mrf.mxu0
  %v144 = vadd.f32 %v69, %v143
  %v145 = vpop.f32.mrf.mxu0
  %v146 = vadd.f32 %v69, %v145
  %147 = vmatmul.bf16.gmra.mxu0 %v100
  %v148 = vpop.f32.mrf.mxu0
  %v149 = vadd.f32 %v69, %v148
  %v150 = vpop.f32.mrf.mxu0
  %v151 = vadd.f32 %v69, %v150
  %152 = vmatmul.bf16.gmra.mxu0 %v103
  %v153 = vpop.f32.mrf.mxu0
  %v154 = vadd.f32 %v69, %v153
  %v155 = vpop.f32.mrf.mxu0
  %v156 = vadd.f32 %v69, %v155
  %157 = vmatmul.bf16.gmra.mxu0 %v106
  %v158 = vpop.f32.mrf.mxu0
  %v159 = vadd.f32 %v69, %v158
  %v160 = vpop.f32.mrf.mxu0
  %v161 = vadd.f32 %v69, %v160
  %162 = vmatmul.bf16.gmra.mxu0 %v109
  %v163 = vpop.f32.mrf.mxu0
  %v164 = vadd.f32 %v69, %v163
  %v165 = vpop.f32.mrf.mxu0
  %v166 = vadd.f32 %v69, %v165
  %167 = vmatmul.bf16.gmra.mxu0 %v112
  %v168 = vpop.f32.mrf.mxu0
  %v169 = vadd.f32 %v69, %v168
  %v170 = vpop.f32.mrf.mxu0
  %v171 = vadd.f32 %v69, %v170
  %172 = vdwg.mxu0
  %173 = vst [vmem:[#allocation2] sm:$0xff] %v124
  %174 = vst [vmem:[#allocation2 + $0x8] sm:$0xff] %v126
  %175 = vst [vmem:[#allocation2 + $0x10] sm:$0xff] %v129
  %176 = vst [vmem:[#allocation2 + $0x18] sm:$0xff] %v131
  %177 = vst [vmem:[#allocation2 + $0x20] sm:$0xff] %v134
  %178 = vst [vmem:[#allocation2 + $0x28] sm:$0xff] %v136
  %179 = vst [vmem:[#allocation2 + $0x30] sm:$0xff] %v139
  %180 = vst [vmem:[#allocation2 + $0x38] sm:$0xff] %v141
  %181 = vst [vmem:[#allocation2 + $0x40] sm:$0xff] %v144
  %182 = vst [vmem:[#allocation2 + $0x48] sm:$0xff] %v146
  %183 = vst [vmem:[#allocation2 + $0x50] sm:$0xff] %v149
  %184 = vst [vmem:[#allocation2 + $0x58] sm:$0xff] %v151
  %185 = vst [vmem:[#allocation2 + $0x60] sm:$0xff] %v154
  %186 = vst [vmem:[#allocation2 + $0x68] sm:$0xff] %v156
  %187 = vst [vmem:[#allocation2 + $0x70] sm:$0xff] %v159
  %188 = vst [vmem:[#allocation2 + $0x78] sm:$0xff] %v161
  %189 = vst [vmem:[#allocation2 + $0x80] sm:$0xff] %v164
  %190 = vst [vmem:[#allocation2 + $0x88] sm:$0xff] %v166
  %191 = vst [vmem:[#allocation2 + $0x90] sm:$0xff] %v169
  %192 = vst [vmem:[#allocation2 + $0x98] sm:$0xff] %v171
  %v193 = vld [vmem:[%s0] sm:$0xff]
  %v194 = vld [vmem:[%s0 + $0x8] sm:$0xff]
  %v195 = vld [vmem:[%s0 + $0x10] sm:$0xff]
  %v196 = vld [vmem:[%s0 + $0x18] sm:$0xff]
  %v197 = vld [vmem:[%s0 + $0x20] sm:$0xff]
  %v198 = vld [vmem:[%s0 + $0x28] sm:$0xff]
  %v199 = vld [vmem:[%s0 + $0x30] sm:$0xff]
  %v200 = vld [vmem:[%s0 + $0x38] sm:$0xff]
  %v201 = vld [vmem:[%s0 + $0x40] sm:$0xff]
  %v202 = vld [vmem:[%s0 + $0x48] sm:$0xff]
  %v203 = vld [vmem:[%s0 + $0x50] sm:$0xff]
  %v204 = vld [vmem:[%s0 + $0x58] sm:$0xff]
  %v205 = vld [vmem:[%s0 + $0x60] sm:$0xff]
  %v206 = vld [vmem:[%s0 + $0x68] sm:$0xff]
  %v207 = vld [vmem:[%s0 + $0x70] sm:$0xff]
  %v208 = vld [vmem:[%s0 + $0x78] sm:$0xff]
  %v209 = vld [vmem:[%s0 + $0x80] sm:$0xff]
  %v210 = vld [vmem:[%s0 + $0x88] sm:$0xff]
  %v211 = vld [vmem:[%s0 + $0x90] sm:$0xff]
  %v212 = vld [vmem:[%s0 + $0x98] sm:$0xff]
  %233 = vrot.lane.b32.xlu0 %v193, 32
  %v234 = vpop.permute.xlu0 %233
  %235 = vrot.lane.b32.xlu0 %v194, 32
  %v236 = vpop.permute.xlu0 %235
  %237 = vrot.lane.b32.xlu0 %v195, 32
  %v238 = vpop.permute.xlu0 %237
  %239 = vrot.lane.b32.xlu0 %v196, 32
  %v240 = vpop.permute.xlu0 %239
  %241 = vrot.lane.b32.xlu0 %v197, 32
  %v242 = vpop.permute.xlu0 %241
  %243 = vrot.lane.b32.xlu0 %v198, 32
  %v244 = vpop.permute.xlu0 %243
  %245 = vrot.lane.b32.xlu0 %v199, 32
  %v246 = vpop.permute.xlu0 %245
  %247 = vrot.lane.b32.xlu0 %v200, 32
  %v248 = vpop.permute.xlu0 %247
  %249 = vrot.lane.b32.xlu0 %v201, 32
  %v250 = vpop.permute.xlu0 %249
  %251 = vrot.lane.b32.xlu0 %v202, 32
  %v252 = vpop.permute.xlu0 %251
  %253 = vrot.lane.b32.xlu0 %v203, 32
  %v254 = vpop.permute.xlu0 %253
  %255 = vrot.lane.b32.xlu0 %v204, 32
  %v256 = vpop.permute.xlu0 %255
  %257 = vrot.lane.b32.xlu0 %v205, 32
  %v258 = vpop.permute.xlu0 %257
  %259 = vrot.lane.b32.xlu0 %v206, 32
  %v260 = vpop.permute.xlu0 %259
  %261 = vrot.lane.b32.xlu0 %v207, 32
  %v262 = vpop.permute.xlu0 %261
  %263 = vrot.lane.b32.xlu0 %v208, 32
  %v264 = vpop.permute.xlu0 %263
  %265 = vrot.lane.b32.xlu0 %v209, 32
  %v266 = vpop.permute.xlu0 %265
  %267 = vrot.lane.b32.xlu0 %v210, 32
  %v268 = vpop.permute.xlu0 %267
  %269 = vrot.lane.b32.xlu0 %v211, 32
  %v270 = vpop.permute.xlu0 %269
  %271 = vrot.lane.b32.xlu0 %v212, 32
  %v272 = vpop.permute.xlu0 %271
  %vm293 = vcmask 392448
  %294 = vst.msk [vmem:[#allocation3] sm:$0xff] %vm293, %v234
  %295 = vst.msk [vmem:[#allocation3 + $0x8] sm:$0xff] %vm293, %v236
  %296 = vst.msk [vmem:[#allocation3 + $0x10] sm:$0xff] %vm293, %v238
  %297 = vst.msk [vmem:[#allocation3 + $0x18] sm:$0xff] %vm293, %v240
  %298 = vst.msk [vmem:[#allocation3 + $0x20] sm:$0xff] %vm293, %v242
  %299 = vst.msk [vmem:[#allocation3 + $0x28] sm:$0xff] %vm293, %v244
  %300 = vst.msk [vmem:[#allocation3 + $0x30] sm:$0xff] %vm293, %v246
  %301 = vst.msk [vmem:[#allocation3 + $0x38] sm:$0xff] %vm293, %v248
  %302 = vst.msk [vmem:[#allocation3 + $0x40] sm:$0xff] %vm293, %v250
  %303 = vst.msk [vmem:[#allocation3 + $0x48] sm:$0xff] %vm293, %v252
  %304 = vst.msk [vmem:[#allocation3 + $0x50] sm:$0xff] %vm293, %v254
  %305 = vst.msk [vmem:[#allocation3 + $0x58] sm:$0xff] %vm293, %v256
  %306 = vst.msk [vmem:[#allocation3 + $0x60] sm:$0xff] %vm293, %v258
  %307 = vst.msk [vmem:[#allocation3 + $0x68] sm:$0xff] %vm293, %v260
  %308 = vst.msk [vmem:[#allocation3 + $0x70] sm:$0xff] %vm293, %v262
  %309 = vst.msk [vmem:[#allocation3 + $0x78] sm:$0xff] %vm293, %v264
  %310 = vst.msk [vmem:[#allocation3 + $0x80] sm:$0xff] %vm293, %v266
  %311 = vst.msk [vmem:[#allocation3 + $0x88] sm:$0xff] %vm293, %v268
  %312 = vst.msk [vmem:[#allocation3 + $0x90] sm:$0xff] %vm293, %v270
  %313 = vst.msk [vmem:[#allocation3 + $0x98] sm:$0xff] %vm293, %v272
  %v314 = vld [vmem:[%s2] sm:$0xf]
  %v315 = vld [vmem:[%s2 + $0x4] sm:$0xf]
  %v316 = vld [vmem:[%s2 + $0x8] sm:$0xf]
  %v317 = vld [vmem:[%s2 + $0xc] sm:$0xf]
  %v318 = vlaneseq
  %v319 = vand.u32 %v318, 127
  %vm320 = vcmp.ge.s32.totalorder %v319, 64
  %vm321 = vcmp.lt.s32.totalorder %v319, 96
  %vm322 = vmand %vm320, %vm321
  %v323 = vld [vmem:[#allocation2] sm:$0xff]
  %v324 = vld [vmem:[#allocation2 + $0x8] sm:$0xff]
  %v329 = vunpack.c.l.b16 %v314
  %v330 = vunpack.c.l.b16 %v315
  %v331 = vunpack.c.l.b16 %v316
  %v332 = vunpack.c.l.b16 %v317
  %v333 = vpack.c.b16 %v330, %v329
  %v334 = vpack.c.b16 %v332, %v331
  %v338 = vsel %vm83, 0, 0
  %340 = vmatpush.bf16.msra.mxu0 0
  %341 = vmatpush.bf16.msra.mxu0 0
  %342 = vmatpush.bf16.msra.mxu0 0
  %343 = vmatpush.bf16.msra.mxu0 0
  %344 = vmatpush.bf16.msra.mxu0 0
  %345 = vmatpush.bf16.msra.mxu0 0
  %346 = vmatpush.bf16.msra.mxu0 %v334
  %347 = vmatpush.bf16.msra.mxu0 %v333
  %348 = vmatmul.bf16.gmra.mxu0 %v338
  %v349 = vpop.f32.mrf.mxu0
  %v350 = vadd.f32 %v323, %v349
  %v351 = vpop.f32.mrf.mxu0
  %v352 = vadd.f32 %v324, %v351
  %353 = vdwg.mxu0
  %v354 = vtanh.pop %v350
  %v355 = vtanh.pop %v352
  %v356 = vxor.u32 %v350, 2147483648
  %v357 = vxor.u32 %v352, 2147483648
  %v358 = vmul.f32 %v356, 1.442695
  %v359 = vpow.pop %v358
  %v360 = vmul.f32 %v357, 1.442695
  %v361 = vpow.pop %v360
  %v362 = vadd.f32 %v359, 1.0
  %v363 = vadd.f32 %v361, 1.0
  %v364 = vrcp.pop %v362
  %v365 = vmul.f32 %v362, %v364
  %v366 = vsub.f32 1.0, %v365
  %v367 = vmul.f32 %v364, %v366
  %v368 = vadd.f32 %v364, %v367
  %vm369 = vweird.f32 %v362
  %vm370 = vweird.f32 %v364
  %vm371 = vmor %vm369, %vm370
  %v372 = vsel %vm371, %v364, %v368
  %v373 = vand.u32 2147483647, %v362
  %vm374 = vcmp.eq.f32.partialorder %v373, 8.507059e+37
  %v375 = vand.u32 %v362, 2147483648
  %v376 = vor.u32 1.1754944e-38, %v375
  %v377 = vsel %vm374, %v376, %v372
  %v378 = vmul.f32 1.0, %v377
  %v379 = vrcp.pop %v363
  %v380 = vmul.f32 %v363, %v379
  %v381 = vsub.f32 1.0, %v380
  %v382 = vmul.f32 %v379, %v381
  %v383 = vadd.f32 %v379, %v382
  %vm384 = vweird.f32 %v363
  %vm385 = vweird.f32 %v379
  %vm386 = vmor %vm384, %vm385
  %v387 = vsel %vm386, %v379, %v383
  %v388 = vand.u32 2147483647, %v363
  %vm389 = vcmp.eq.f32.partialorder %v388, 8.507059e+37
  %v390 = vand.u32 %v363, 2147483648
  %v391 = vor.u32 1.1754944e-38, %v390
  %v392 = vsel %vm389, %v391, %v387
  %v393 = vmul.f32 1.0, %v392
  %v394 = vsel %vm322, %v354, %v378
  %v395 = vsel %vm322, %v355, %v393
  %v396 = vmul.f32 %v394, 0.0
  %v397 = vmul.f32 %v395, 0.0
  %400 = vrot.lane.b32.xlu0 %v394, 64
  %v401 = vpop.permute.xlu0 %400
  %402 = vrot.lane.b32.xlu0 %v395, 64
  %v403 = vpop.permute.xlu0 %402
  %v406 = vmul.f32 %v394, %v401
  %v407 = vmul.f32 %v395, %v403
  %410 = vrot.lane.b32.xlu0 %v406, 32
  %v411 = vpop.permute.xlu0 %410
  %412 = vrot.lane.b32.xlu0 %v407, 32
  %v413 = vpop.permute.xlu0 %412
  %v416 = vadd.f32 %v396, %v411
  %v417 = vadd.f32 %v397, %v413
  %v418 = vtanh.pop %v416
  %v419 = vtanh.pop %v417
  %422 = vrot.lane.b32.xlu0 %v418, 64
  %v423 = vpop.permute.xlu0 %422
  %424 = vrot.lane.b32.xlu0 %v419, 64
  %v425 = vpop.permute.xlu0 %424
  %v428 = vmul.f32 %v394, %v423
  %v429 = vmul.f32 %v395, %v425
  %432 = vrot.lane.b32.xlu0 %v428, 32
  %v433 = vpop.permute.xlu0 %432
  %434 = vrot.lane.b32.xlu0 %v429, 32
  %v435 = vpop.permute.xlu0 %434
  %vm438 = vcmask 130048
  %439 = vst.msk [vmem:[#allocation3] sm:$0xff] %vm438, %v433
  %440 = vst.msk [vmem:[#allocation3 + $0x8] sm:$0xff] %vm438, %v435
  %vm441 = vcmask 261248
  %442 = vst.msk [vmem:[#allocation3 + $0x90] sm:$0xff] %vm441, %v433
  %443 = vst.msk [vmem:[#allocation3 + $0x98] sm:$0xff] %vm441, %v435
  %v444 = vpack.c.bf16 %v429, %v428
  %v445 = vld [vmem:[#allocation2 + $0x10] sm:$0xff]
  %v446 = vld [vmem:[#allocation2 + $0x18] sm:$0xff]
  %448 = vrot.lane.b32.xlu0 %v444, 32
  %v449 = vpop.permute.xlu0 %448
  %v451 = vsel %vm83, %v449, 0
  %453 = vmatpush.bf16.msra.mxu0 0
  %454 = vmatpush.bf16.msra.mxu0 0
  %455 = vmatpush.bf16.msra.mxu0 0
  %456 = vmatpush.bf16.msra.mxu0 0
  %457 = vmatpush.bf16.msra.mxu0 0
  %458 = vmatpush.bf16.msra.mxu0 0
  %459 = vmatpush.bf16.msra.mxu0 %v334
  %460 = vmatpush.bf16.msra.mxu0 %v333
  %461 = vmatmul.bf16.gmra.mxu0 %v451
  %v462 = vpop.f32.mrf.mxu0
  %v463 = vadd.f32 %v445, %v462
  %v464 = vpop.f32.mrf.mxu0
  %v465 = vadd.f32 %v446, %v464
  %466 = vdwg.mxu0
  %v467 = vtanh.pop %v463
  %v468 = vtanh.pop %v465
  %v469 = vxor.u32 %v463, 2147483648
  %v470 = vxor.u32 %v465, 2147483648
  %v471 = vmul.f32 %v469, 1.442695
  %v472 = vpow.pop %v471
  %v473 = vmul.f32 %v470, 1.442695
  %v474 = vpow.pop %v473
  %v475 = vadd.f32 %v472, 1.0
  %v476 = vadd.f32 %v474, 1.0
  %v477 = vrcp.pop %v475
  %v478 = vmul.f32 %v475, %v477
  %v479 = vsub.f32 1.0, %v478
  %v480 = vmul.f32 %v477, %v479
  %v481 = vadd.f32 %v477, %v480
  %vm482 = vweird.f32 %v475
  %vm483 = vweird.f32 %v477
  %vm484 = vmor %vm482, %vm483
  %v485 = vsel %vm484, %v477, %v481
  %v486 = vand.u32 2147483647, %v475
  %vm487 = vcmp.eq.f32.partialorder %v486, 8.507059e+37
  %v488 = vand.u32 %v475, 2147483648
  %v489 = vor.u32 1.1754944e-38, %v488
  %v490 = vsel %vm487, %v489, %v485
  %v491 = vmul.f32 1.0, %v490
  %v492 = vrcp.pop %v476
  %v493 = vmul.f32 %v476, %v492
  %v494 = vsub.f32 1.0, %v493
  %v495 = vmul.f32 %v492, %v494
  %v496 = vadd.f32 %v492, %v495
  %vm497 = vweird.f32 %v476
  %vm498 = vweird.f32 %v492
  %vm499 = vmor %vm497, %vm498
  %v500 = vsel %vm499, %v492, %v496
  %v501 = vand.u32 2147483647, %v476
  %vm502 = vcmp.eq.f32.partialorder %v501, 8.507059e+37
  %v503 = vand.u32 %v476, 2147483648
  %v504 = vor.u32 1.1754944e-38, %v503
  %v505 = vsel %vm502, %v504, %v500
  %v506 = vmul.f32 1.0, %v505
  %v507 = vsel %vm322, %v467, %v491
  %v508 = vsel %vm322, %v468, %v506
  %v509 = vmul.f32 %v507, %v416
  %v510 = vmul.f32 %v508, %v417
  %513 = vrot.lane.b32.xlu0 %v507, 64
  %v514 = vpop.permute.xlu0 %513
  %515 = vrot.lane.b32.xlu0 %v508, 64
  %v516 = vpop.permute.xlu0 %515
  %v519 = vmul.f32 %v507, %v514
  %v520 = vmul.f32 %v508, %v516
  %523 = vrot.lane.b32.xlu0 %v519, 32
  %v524 = vpop.permute.xlu0 %523
  %525 = vrot.lane.b32.xlu0 %v520, 32
  %v526 = vpop.permute.xlu0 %525
  %v529 = vadd.f32 %v509, %v524
  %v530 = vadd.f32 %v510, %v526
  %v531 = vtanh.pop %v529
  %v532 = vtanh.pop %v530
  %535 = vrot.lane.b32.xlu0 %v531, 64
  %v536 = vpop.permute.xlu0 %535
  %537 = vrot.lane.b32.xlu0 %v532, 64
  %v538 = vpop.permute.xlu0 %537
  %v541 = vmul.f32 %v507, %v536
  %v542 = vmul.f32 %v508, %v538
  %545 = vrot.lane.b32.xlu0 %v541, 32
  %v546 = vpop.permute.xlu0 %545
  %547 = vrot.lane.b32.xlu0 %v542, 32
  %v548 = vpop.permute.xlu0 %547
  %551 = vst.msk [vmem:[#allocation3 + $0x10] sm:$0xff] %vm438, %v546
  %552 = vst.msk [vmem:[#allocation3 + $0x18] sm:$0xff] %vm438, %v548
  %553 = vst.msk [vmem:[#allocation3 + $0x80] sm:$0xff] %vm441, %v546
  %554 = vst.msk [vmem:[#allocation3 + $0x88] sm:$0xff] %vm441, %v548
  %v555 = vpack.c.bf16 %v542, %v541
  %v556 = vld [vmem:[#allocation2 + $0x20] sm:$0xff]
  %v557 = vld [vmem:[#allocation2 + $0x28] sm:$0xff]
  %559 = vrot.lane.b32.xlu0 %v555, 32
  %v560 = vpop.permute.xlu0 %559
  %v562 = vsel %vm83, %v560, 0
  %564 = vmatpush.bf16.msra.mxu0 0
  %565 = vmatpush.bf16.msra.mxu0 0
  %566 = vmatpush.bf16.msra.mxu0 0
  %567 = vmatpush.bf16.msra.mxu0 0
  %568 = vmatpush.bf16.msra.mxu0 0
  %569 = vmatpush.bf16.msra.mxu0 0
  %570 = vmatpush.bf16.msra.mxu0 %v334
  %571 = vmatpush.bf16.msra.mxu0 %v333
  %572 = vmatmul.bf16.gmra.mxu0 %v562
  %v573 = vpop.f32.mrf.mxu0
  %v574 = vadd.f32 %v556, %v573
  %v575 = vpop.f32.mrf.mxu0
  %v576 = vadd.f32 %v557, %v575
  %577 = vdwg.mxu0
  %v578 = vtanh.pop %v574
  %v579 = vtanh.pop %v576
  %v580 = vxor.u32 %v574, 2147483648
  %v581 = vxor.u32 %v576, 2147483648
  %v582 = vmul.f32 %v580, 1.442695
  %v583 = vpow.pop %v582
  %v584 = vmul.f32 %v581, 1.442695
  %v585 = vpow.pop %v584
  %v586 = vadd.f32 %v583, 1.0
  %v587 = vadd.f32 %v585, 1.0
  %v588 = vrcp.pop %v586
  %v589 = vmul.f32 %v586, %v588
  %v590 = vsub.f32 1.0, %v589
  %v591 = vmul.f32 %v588, %v590
  %v592 = vadd.f32 %v588, %v591
  %vm593 = vweird.f32 %v586
  %vm594 = vweird.f32 %v588
  %vm595 = vmor %vm593, %vm594
  %v596 = vsel %vm595, %v588, %v592
  %v597 = vand.u32 2147483647, %v586
  %vm598 = vcmp.eq.f32.partialorder %v597, 8.507059e+37
  %v599 = vand.u32 %v586, 2147483648
  %v600 = vor.u32 1.1754944e-38, %v599
  %v601 = vsel %vm598, %v600, %v596
  %v602 = vmul.f32 1.0, %v601
  %v603 = vrcp.pop %v587
  %v604 = vmul.f32 %v587, %v603
  %v605 = vsub.f32 1.0, %v604
  %v606 = vmul.f32 %v603, %v605
  %v607 = vadd.f32 %v603, %v606
  %vm608 = vweird.f32 %v587
  %vm609 = vweird.f32 %v603
  %vm610 = vmor %vm608, %vm609
  %v611 = vsel %vm610, %v603, %v607
  %v612 = vand.u32 2147483647, %v587
  %vm613 = vcmp.eq.f32.partialorder %v612, 8.507059e+37
  %v614 = vand.u32 %v587, 2147483648
  %v615 = vor.u32 1.1754944e-38, %v614
  %v616 = vsel %vm613, %v615, %v611
  %v617 = vmul.f32 1.0, %v616
  %v618 = vsel %vm322, %v578, %v602
  %v619 = vsel %vm322, %v579, %v617
  %v620 = vmul.f32 %v618, %v529
  %v621 = vmul.f32 %v619, %v530
  %624 = vrot.lane.b32.xlu0 %v618, 64
  %v625 = vpop.permute.xlu0 %624
  %626 = vrot.lane.b32.xlu0 %v619, 64
  %v627 = vpop.permute.xlu0 %626
  %v630 = vmul.f32 %v618, %v625
  %v631 = vmul.f32 %v619, %v627
  %634 = vrot.lane.b32.xlu0 %v630, 32
  %v635 = vpop.permute.xlu0 %634
  %636 = vrot.lane.b32.xlu0 %v631, 32
  %v637 = vpop.permute.xlu0 %636
  %v640 = vadd.f32 %v620, %v635
  %v641 = vadd.f32 %v621, %v637
  %v642 = vtanh.pop %v640
  %v643 = vtanh.pop %v641
  %646 = vrot.lane.b32.xlu0 %v642, 64
  %v647 = vpop.permute.xlu0 %646
  %648 = vrot.lane.b32.xlu0 %v643, 64
  %v649 = vpop.permute.xlu0 %648
  %v652 = vmul.f32 %v618, %v647
  %v653 = vmul.f32 %v619, %v649
  %656 = vrot.lane.b32.xlu0 %v652, 32
  %v657 = vpop.permute.xlu0 %656
  %658 = vrot.lane.b32.xlu0 %v653, 32
  %v659 = vpop.permute.xlu0 %658
  %662 = vst.msk [vmem:[#allocation3 + $0x20] sm:$0xff] %vm438, %v657
  %663 = vst.msk [vmem:[#allocation3 + $0x28] sm:$0xff] %vm438, %v659
  %664 = vst.msk [vmem:[#allocation3 + $0x70] sm:$0xff] %vm441, %v657
  %665 = vst.msk [vmem:[#allocation3 + $0x78] sm:$0xff] %vm441, %v659
  %v666 = vpack.c.bf16 %v653, %v652
  %v667 = vld [vmem:[#allocation2 + $0x30] sm:$0xff]
  %v668 = vld [vmem:[#allocation2 + $0x38] sm:$0xff]
  %670 = vrot.lane.b32.xlu0 %v666, 32
  %v671 = vpop.permute.xlu0 %670
  %v673 = vsel %vm83, %v671, 0
  %675 = vmatpush.bf16.msra.mxu0 0
  %676 = vmatpush.bf16.msra.mxu0 0
  %677 = vmatpush.bf16.msra.mxu0 0
  %678 = vmatpush.bf16.msra.mxu0 0
  %679 = vmatpush.bf16.msra.mxu0 0
  %680 = vmatpush.bf16.msra.mxu0 0
  %681 = vmatpush.bf16.msra.mxu0 %v334
  %682 = vmatpush.bf16.msra.mxu0 %v333
  %683 = vmatmul.bf16.gmra.mxu0 %v673
  %v684 = vpop.f32.mrf.mxu0
  %v685 = vadd.f32 %v667, %v684
  %v686 = vpop.f32.mrf.mxu0
  %v687 = vadd.f32 %v668, %v686
  %688 = vdwg.mxu0
  %v689 = vtanh.pop %v685
  %v690 = vtanh.pop %v687
  %v691 = vxor.u32 %v685, 2147483648
  %v692 = vxor.u32 %v687, 2147483648
  %v693 = vmul.f32 %v691, 1.442695
  %v694 = vpow.pop %v693
  %v695 = vmul.f32 %v692, 1.442695
  %v696 = vpow.pop %v695
  %v697 = vadd.f32 %v694, 1.0
  %v698 = vadd.f32 %v696, 1.0
  %v699 = vrcp.pop %v697
  %v700 = vmul.f32 %v697, %v699
  %v701 = vsub.f32 1.0, %v700
  %v702 = vmul.f32 %v699, %v701
  %v703 = vadd.f32 %v699, %v702
  %vm704 = vweird.f32 %v697
  %vm705 = vweird.f32 %v699
  %vm706 = vmor %vm704, %vm705
  %v707 = vsel %vm706, %v699, %v703
  %v708 = vand.u32 2147483647, %v697
  %vm709 = vcmp.eq.f32.partialorder %v708, 8.507059e+37
  %v710 = vand.u32 %v697, 2147483648
  %v711 = vor.u32 1.1754944e-38, %v710
  %v712 = vsel %vm709, %v711, %v707
  %v713 = vmul.f32 1.0, %v712
  %v714 = vrcp.pop %v698
  %v715 = vmul.f32 %v698, %v714
  %v716 = vsub.f32 1.0, %v715
  %v717 = vmul.f32 %v714, %v716
  %v718 = vadd.f32 %v714, %v717
  %vm719 = vweird.f32 %v698
  %vm720 = vweird.f32 %v714
  %vm721 = vmor %vm719, %vm720
  %v722 = vsel %vm721, %v714, %v718
  %v723 = vand.u32 2147483647, %v698
  %vm724 = vcmp.eq.f32.partialorder %v723, 8.507059e+37
  %v725 = vand.u32 %v698, 2147483648
  %v726 = vor.u32 1.1754944e-38, %v725
  %v727 = vsel %vm724, %v726, %v722
  %v728 = vmul.f32 1.0, %v727
  %v729 = vsel %vm322, %v689, %v713
  %v730 = vsel %vm322, %v690, %v728
  %v731 = vmul.f32 %v729, %v640
  %v732 = vmul.f32 %v730, %v641
  %735 = vrot.lane.b32.xlu0 %v729, 64
  %v736 = vpop.permute.xlu0 %735
  %737 = vrot.lane.b32.xlu0 %v730, 64
  %v738 = vpop.permute.xlu0 %737
  %v741 = vmul.f32 %v729, %v736
  %v742 = vmul.f32 %v730, %v738
  %745 = vrot.lane.b32.xlu0 %v741, 32
  %v746 = vpop.permute.xlu0 %745
  %747 = vrot.lane.b32.xlu0 %v742, 32
  %v748 = vpop.permute.xlu0 %747
  %v751 = vadd.f32 %v731, %v746
  %v752 = vadd.f32 %v732, %v748
  %v753 = vtanh.pop %v751
  %v754 = vtanh.pop %v752
  %757 = vrot.lane.b32.xlu0 %v753, 64
  %v758 = vpop.permute.xlu0 %757
  %759 = vrot.lane.b32.xlu0 %v754, 64
  %v760 = vpop.permute.xlu0 %759
  %v763 = vmul.f32 %v729, %v758
  %v764 = vmul.f32 %v730, %v760
  %767 = vrot.lane.b32.xlu0 %v763, 32
  %v768 = vpop.permute.xlu0 %767
  %769 = vrot.lane.b32.xlu0 %v764, 32
  %v770 = vpop.permute.xlu0 %769
  %773 = vst.msk [vmem:[#allocation3 + $0x30] sm:$0xff] %vm438, %v768
  %774 = vst.msk [vmem:[#allocation3 + $0x38] sm:$0xff] %vm438, %v770
  %775 = vst.msk [vmem:[#allocation3 + $0x60] sm:$0xff] %vm441, %v768
  %776 = vst.msk [vmem:[#allocation3 + $0x68] sm:$0xff] %vm441, %v770
  %v777 = vpack.c.bf16 %v764, %v763
  %v778 = vld [vmem:[#allocation2 + $0x40] sm:$0xff]
  %v779 = vld [vmem:[#allocation2 + $0x48] sm:$0xff]
  %781 = vrot.lane.b32.xlu0 %v777, 32
  %v782 = vpop.permute.xlu0 %781
  %v784 = vsel %vm83, %v782, 0
  %786 = vmatpush.bf16.msra.mxu0 0
  %787 = vmatpush.bf16.msra.mxu0 0
  %788 = vmatpush.bf16.msra.mxu0 0
  %789 = vmatpush.bf16.msra.mxu0 0
  %790 = vmatpush.bf16.msra.mxu0 0
  %791 = vmatpush.bf16.msra.mxu0 0
  %792 = vmatpush.bf16.msra.mxu0 %v334
  %793 = vmatpush.bf16.msra.mxu0 %v333
  %794 = vmatmul.bf16.gmra.mxu0 %v784
  %v795 = vpop.f32.mrf.mxu0
  %v796 = vadd.f32 %v778, %v795
  %v797 = vpop.f32.mrf.mxu0
  %v798 = vadd.f32 %v779, %v797
  %799 = vdwg.mxu0
  %v800 = vtanh.pop %v796
  %v801 = vtanh.pop %v798
  %v802 = vxor.u32 %v796, 2147483648
  %v803 = vxor.u32 %v798, 2147483648
  %v804 = vmul.f32 %v802, 1.442695
  %v805 = vpow.pop %v804
  %v806 = vmul.f32 %v803, 1.442695
  %v807 = vpow.pop %v806
  %v808 = vadd.f32 %v805, 1.0
  %v809 = vadd.f32 %v807, 1.0
  %v810 = vrcp.pop %v808
  %v811 = vmul.f32 %v808, %v810
  %v812 = vsub.f32 1.0, %v811
  %v813 = vmul.f32 %v810, %v812
  %v814 = vadd.f32 %v810, %v813
  %vm815 = vweird.f32 %v808
  %vm816 = vweird.f32 %v810
  %vm817 = vmor %vm815, %vm816
  %v818 = vsel %vm817, %v810, %v814
  %v819 = vand.u32 2147483647, %v808
  %vm820 = vcmp.eq.f32.partialorder %v819, 8.507059e+37
  %v821 = vand.u32 %v808, 2147483648
  %v822 = vor.u32 1.1754944e-38, %v821
  %v823 = vsel %vm820, %v822, %v818
  %v824 = vmul.f32 1.0, %v823
  %v825 = vrcp.pop %v809
  %v826 = vmul.f32 %v809, %v825
  %v827 = vsub.f32 1.0, %v826
  %v828 = vmul.f32 %v825, %v827
  %v829 = vadd.f32 %v825, %v828
  %vm830 = vweird.f32 %v809
  %vm831 = vweird.f32 %v825
  %vm832 = vmor %vm830, %vm831
  %v833 = vsel %vm832, %v825, %v829
  %v834 = vand.u32 2147483647, %v809
  %vm835 = vcmp.eq.f32.partialorder %v834, 8.507059e+37
  %v836 = vand.u32 %v809, 2147483648
  %v837 = vor.u32 1.1754944e-38, %v836
  %v838 = vsel %vm835, %v837, %v833
  %v839 = vmul.f32 1.0, %v838
  %v840 = vsel %vm322, %v800, %v824
  %v841 = vsel %vm322, %v801, %v839
  %v842 = vmul.f32 %v840, %v751
  %v843 = vmul.f32 %v841, %v752
  %846 = vrot.lane.b32.xlu0 %v840, 64
  %v847 = vpop.permute.xlu0 %846
  %848 = vrot.lane.b32.xlu0 %v841, 64
  %v849 = vpop.permute.xlu0 %848
  %v852 = vmul.f32 %v840, %v847
  %v853 = vmul.f32 %v841, %v849
  %856 = vrot.lane.b32.xlu0 %v852, 32
  %v857 = vpop.permute.xlu0 %856
  %858 = vrot.lane.b32.xlu0 %v853, 32
  %v859 = vpop.permute.xlu0 %858
  %v862 = vadd.f32 %v842, %v857
  %v863 = vadd.f32 %v843, %v859
  %v864 = vtanh.pop %v862
  %v865 = vtanh.pop %v863
  %868 = vrot.lane.b32.xlu0 %v864, 64
  %v869 = vpop.permute.xlu0 %868
  %870 = vrot.lane.b32.xlu0 %v865, 64
  %v871 = vpop.permute.xlu0 %870
  %v874 = vmul.f32 %v840, %v869
  %v875 = vmul.f32 %v841, %v871
  %878 = vrot.lane.b32.xlu0 %v874, 32
  %v879 = vpop.permute.xlu0 %878
  %880 = vrot.lane.b32.xlu0 %v875, 32
  %v881 = vpop.permute.xlu0 %880
  %884 = vst.msk [vmem:[#allocation3 + $0x40] sm:$0xff] %vm438, %v879
  %885 = vst.msk [vmem:[#allocation3 + $0x48] sm:$0xff] %vm438, %v881
  %886 = vst.msk [vmem:[#allocation3 + $0x50] sm:$0xff] %vm441, %v879
  %887 = vst.msk [vmem:[#allocation3 + $0x58] sm:$0xff] %vm441, %v881
  %v888 = vpack.c.bf16 %v875, %v874
  %v889 = vld [vmem:[#allocation2 + $0x50] sm:$0xff]
  %v890 = vld [vmem:[#allocation2 + $0x58] sm:$0xff]
  %892 = vrot.lane.b32.xlu0 %v888, 32
  %v893 = vpop.permute.xlu0 %892
  %v895 = vsel %vm83, %v893, 0
  %897 = vmatpush.bf16.msra.mxu0 0
  %898 = vmatpush.bf16.msra.mxu0 0
  %899 = vmatpush.bf16.msra.mxu0 0
  %900 = vmatpush.bf16.msra.mxu0 0
  %901 = vmatpush.bf16.msra.mxu0 0
  %902 = vmatpush.bf16.msra.mxu0 0
  %903 = vmatpush.bf16.msra.mxu0 %v334
  %904 = vmatpush.bf16.msra.mxu0 %v333
  %905 = vmatmul.bf16.gmra.mxu0 %v895
  %v906 = vpop.f32.mrf.mxu0
  %v907 = vadd.f32 %v889, %v906
  %v908 = vpop.f32.mrf.mxu0
  %v909 = vadd.f32 %v890, %v908
  %910 = vdwg.mxu0
  %v911 = vtanh.pop %v907
  %v912 = vtanh.pop %v909
  %v913 = vxor.u32 %v907, 2147483648
  %v914 = vxor.u32 %v909, 2147483648
  %v915 = vmul.f32 %v913, 1.442695
  %v916 = vpow.pop %v915
  %v917 = vmul.f32 %v914, 1.442695
  %v918 = vpow.pop %v917
  %v919 = vadd.f32 %v916, 1.0
  %v920 = vadd.f32 %v918, 1.0
  %v921 = vrcp.pop %v919
  %v922 = vmul.f32 %v919, %v921
  %v923 = vsub.f32 1.0, %v922
  %v924 = vmul.f32 %v921, %v923
  %v925 = vadd.f32 %v921, %v924
  %vm926 = vweird.f32 %v919
  %vm927 = vweird.f32 %v921
  %vm928 = vmor %vm926, %vm927
  %v929 = vsel %vm928, %v921, %v925
  %v930 = vand.u32 2147483647, %v919
  %vm931 = vcmp.eq.f32.partialorder %v930, 8.507059e+37
  %v932 = vand.u32 %v919, 2147483648
  %v933 = vor.u32 1.1754944e-38, %v932
  %v934 = vsel %vm931, %v933, %v929
  %v935 = vmul.f32 1.0, %v934
  %v936 = vrcp.pop %v920
  %v937 = vmul.f32 %v920, %v936
  %v938 = vsub.f32 1.0, %v937
  %v939 = vmul.f32 %v936, %v938
  %v940 = vadd.f32 %v936, %v939
  %vm941 = vweird.f32 %v920
  %vm942 = vweird.f32 %v936
  %vm943 = vmor %vm941, %vm942
  %v944 = vsel %vm943, %v936, %v940
  %v945 = vand.u32 2147483647, %v920
  %vm946 = vcmp.eq.f32.partialorder %v945, 8.507059e+37
  %v947 = vand.u32 %v920, 2147483648
  %v948 = vor.u32 1.1754944e-38, %v947
  %v949 = vsel %vm946, %v948, %v944
  %v950 = vmul.f32 1.0, %v949
  %v951 = vsel %vm322, %v911, %v935
  %v952 = vsel %vm322, %v912, %v950
  %v953 = vmul.f32 %v951, %v862
  %v954 = vmul.f32 %v952, %v863
  %957 = vrot.lane.b32.xlu0 %v951, 64
  %v958 = vpop.permute.xlu0 %957
  %959 = vrot.lane.b32.xlu0 %v952, 64
  %v960 = vpop.permute.xlu0 %959
  %v963 = vmul.f32 %v951, %v958
  %v964 = vmul.f32 %v952, %v960
  %967 = vrot.lane.b32.xlu0 %v963, 32
  %v968 = vpop.permute.xlu0 %967
  %969 = vrot.lane.b32.xlu0 %v964, 32
  %v970 = vpop.permute.xlu0 %969
  %v973 = vadd.f32 %v953, %v968
  %v974 = vadd.f32 %v954, %v970
  %v975 = vtanh.pop %v973
  %v976 = vtanh.pop %v974
  %979 = vrot.lane.b32.xlu0 %v975, 64
  %v980 = vpop.permute.xlu0 %979
  %981 = vrot.lane.b32.xlu0 %v976, 64
  %v982 = vpop.permute.xlu0 %981
  %v985 = vmul.f32 %v951, %v980
  %v986 = vmul.f32 %v952, %v982
  %989 = vrot.lane.b32.xlu0 %v985, 32
  %v990 = vpop.permute.xlu0 %989
  %991 = vrot.lane.b32.xlu0 %v986, 32
  %v992 = vpop.permute.xlu0 %991
  %995 = vst.msk [vmem:[#allocation3 + $0x50] sm:$0xff] %vm438, %v990
  %996 = vst.msk [vmem:[#allocation3 + $0x58] sm:$0xff] %vm438, %v992
  %997 = vst.msk [vmem:[#allocation3 + $0x40] sm:$0xff] %vm441, %v990
  %998 = vst.msk [vmem:[#allocation3 + $0x48] sm:$0xff] %vm441, %v992
  %v999 = vpack.c.bf16 %v986, %v985
  %v1000 = vld [vmem:[#allocation2 + $0x60] sm:$0xff]
  %v1001 = vld [vmem:[#allocation2 + $0x68] sm:$0xff]
  %1003 = vrot.lane.b32.xlu0 %v999, 32
  %v1004 = vpop.permute.xlu0 %1003
  %v1006 = vsel %vm83, %v1004, 0
  %1008 = vmatpush.bf16.msra.mxu0 0
  %1009 = vmatpush.bf16.msra.mxu0 0
  %1010 = vmatpush.bf16.msra.mxu0 0
  %1011 = vmatpush.bf16.msra.mxu0 0
  %1012 = vmatpush.bf16.msra.mxu0 0
  %1013 = vmatpush.bf16.msra.mxu0 0
  %1014 = vmatpush.bf16.msra.mxu0 %v334
  %1015 = vmatpush.bf16.msra.mxu0 %v333
  %1016 = vmatmul.bf16.gmra.mxu0 %v1006
  %v1017 = vpop.f32.mrf.mxu0
  %v1018 = vadd.f32 %v1000, %v1017
  %v1019 = vpop.f32.mrf.mxu0
  %v1020 = vadd.f32 %v1001, %v1019
  %1021 = vdwg.mxu0
  %v1022 = vtanh.pop %v1018
  %v1023 = vtanh.pop %v1020
  %v1024 = vxor.u32 %v1018, 2147483648
  %v1025 = vxor.u32 %v1020, 2147483648
  %v1026 = vmul.f32 %v1024, 1.442695
  %v1027 = vpow.pop %v1026
  %v1028 = vmul.f32 %v1025, 1.442695
  %v1029 = vpow.pop %v1028
  %v1030 = vadd.f32 %v1027, 1.0
  %v1031 = vadd.f32 %v1029, 1.0
  %v1032 = vrcp.pop %v1030
  %v1033 = vmul.f32 %v1030, %v1032
  %v1034 = vsub.f32 1.0, %v1033
  %v1035 = vmul.f32 %v1032, %v1034
  %v1036 = vadd.f32 %v1032, %v1035
  %vm1037 = vweird.f32 %v1030
  %vm1038 = vweird.f32 %v1032
  %vm1039 = vmor %vm1037, %vm1038
  %v1040 = vsel %vm1039, %v1032, %v1036
  %v1041 = vand.u32 2147483647, %v1030
  %vm1042 = vcmp.eq.f32.partialorder %v1041, 8.507059e+37
  %v1043 = vand.u32 %v1030, 2147483648
  %v1044 = vor.u32 1.1754944e-38, %v1043
  %v1045 = vsel %vm1042, %v1044, %v1040
  %v1046 = vmul.f32 1.0, %v1045
  %v1047 = vrcp.pop %v1031
  %v1048 = vmul.f32 %v1031, %v1047
  %v1049 = vsub.f32 1.0, %v1048
  %v1050 = vmul.f32 %v1047, %v1049
  %v1051 = vadd.f32 %v1047, %v1050
  %vm1052 = vweird.f32 %v1031
  %vm1053 = vweird.f32 %v1047
  %vm1054 = vmor %vm1052, %vm1053
  %v1055 = vsel %vm1054, %v1047, %v1051
  %v1056 = vand.u32 2147483647, %v1031
  %vm1057 = vcmp.eq.f32.partialorder %v1056, 8.507059e+37
  %v1058 = vand.u32 %v1031, 2147483648
  %v1059 = vor.u32 1.1754944e-38, %v1058
  %v1060 = vsel %vm1057, %v1059, %v1055
  %v1061 = vmul.f32 1.0, %v1060
  %v1062 = vsel %vm322, %v1022, %v1046
  %v1063 = vsel %vm322, %v1023, %v1061
  %v1064 = vmul.f32 %v1062, %v973
  %v1065 = vmul.f32 %v1063, %v974
  %1068 = vrot.lane.b32.xlu0 %v1062, 64
  %v1069 = vpop.permute.xlu0 %1068
  %1070 = vrot.lane.b32.xlu0 %v1063, 64
  %v1071 = vpop.permute.xlu0 %1070
  %v1074 = vmul.f32 %v1062, %v1069
  %v1075 = vmul.f32 %v1063, %v1071
  %1078 = vrot.lane.b32.xlu0 %v1074, 32
  %v1079 = vpop.permute.xlu0 %1078
  %1080 = vrot.lane.b32.xlu0 %v1075, 32
  %v1081 = vpop.permute.xlu0 %1080
  %v1084 = vadd.f32 %v1064, %v1079
  %v1085 = vadd.f32 %v1065, %v1081
  %v1086 = vtanh.pop %v1084
  %v1087 = vtanh.pop %v1085
  %1090 = vrot.lane.b32.xlu0 %v1086, 64
  %v1091 = vpop.permute.xlu0 %1090
  %1092 = vrot.lane.b32.xlu0 %v1087, 64
  %v1093 = vpop.permute.xlu0 %1092
  %v1096 = vmul.f32 %v1062, %v1091
  %v1097 = vmul.f32 %v1063, %v1093
  %1100 = vrot.lane.b32.xlu0 %v1096, 32
  %v1101 = vpop.permute.xlu0 %1100
  %1102 = vrot.lane.b32.xlu0 %v1097, 32
  %v1103 = vpop.permute.xlu0 %1102
  %1106 = vst.msk [vmem:[#allocation3 + $0x60] sm:$0xff] %vm438, %v1101
  %1107 = vst.msk [vmem:[#allocation3 + $0x68] sm:$0xff] %vm438, %v1103
  %1108 = vst.msk [vmem:[#allocation3 + $0x30] sm:$0xff] %vm441, %v1101
  %1109 = vst.msk [vmem:[#allocation3 + $0x38] sm:$0xff] %vm441, %v1103
  %v1110 = vpack.c.bf16 %v1097, %v1096
  %v1111 = vld [vmem:[#allocation2 + $0x70] sm:$0xff]
  %v1112 = vld [vmem:[#allocation2 + $0x78] sm:$0xff]
  %1114 = vrot.lane.b32.xlu0 %v1110, 32
  %v1115 = vpop.permute.xlu0 %1114
  %v1117 = vsel %vm83, %v1115, 0
  %1119 = vmatpush.bf16.msra.mxu0 0
  %1120 = vmatpush.bf16.msra.mxu0 0
  %1121 = vmatpush.bf16.msra.mxu0 0
  %1122 = vmatpush.bf16.msra.mxu0 0
  %1123 = vmatpush.bf16.msra.mxu0 0
  %1124 = vmatpush.bf16.msra.mxu0 0
  %1125 = vmatpush.bf16.msra.mxu0 %v334
  %1126 = vmatpush.bf16.msra.mxu0 %v333
  %1127 = vmatmul.bf16.gmra.mxu0 %v1117
  %v1128 = vpop.f32.mrf.mxu0
  %v1129 = vadd.f32 %v1111, %v1128
  %v1130 = vpop.f32.mrf.mxu0
  %v1131 = vadd.f32 %v1112, %v1130
  %1132 = vdwg.mxu0
  %v1133 = vtanh.pop %v1129
  %v1134 = vtanh.pop %v1131
  %v1135 = vxor.u32 %v1129, 2147483648
  %v1136 = vxor.u32 %v1131, 2147483648
  %v1137 = vmul.f32 %v1135, 1.442695
  %v1138 = vpow.pop %v1137
  %v1139 = vmul.f32 %v1136, 1.442695
  %v1140 = vpow.pop %v1139
  %v1141 = vadd.f32 %v1138, 1.0
  %v1142 = vadd.f32 %v1140, 1.0
  %v1143 = vrcp.pop %v1141
  %v1144 = vmul.f32 %v1141, %v1143
  %v1145 = vsub.f32 1.0, %v1144
  %v1146 = vmul.f32 %v1143, %v1145
  %v1147 = vadd.f32 %v1143, %v1146
  %vm1148 = vweird.f32 %v1141
  %vm1149 = vweird.f32 %v1143
  %vm1150 = vmor %vm1148, %vm1149
  %v1151 = vsel %vm1150, %v1143, %v1147
  %v1152 = vand.u32 2147483647, %v1141
  %vm1153 = vcmp.eq.f32.partialorder %v1152, 8.507059e+37
  %v1154 = vand.u32 %v1141, 2147483648
  %v1155 = vor.u32 1.1754944e-38, %v1154
  %v1156 = vsel %vm1153, %v1155, %v1151
  %v1157 = vmul.f32 1.0, %v1156
  %v1158 = vrcp.pop %v1142
  %v1159 = vmul.f32 %v1142, %v1158
  %v1160 = vsub.f32 1.0, %v1159
  %v1161 = vmul.f32 %v1158, %v1160
  %v1162 = vadd.f32 %v1158, %v1161
  %vm1163 = vweird.f32 %v1142
  %vm1164 = vweird.f32 %v1158
  %vm1165 = vmor %vm1163, %vm1164
  %v1166 = vsel %vm1165, %v1158, %v1162
  %v1167 = vand.u32 2147483647, %v1142
  %vm1168 = vcmp.eq.f32.partialorder %v1167, 8.507059e+37
  %v1169 = vand.u32 %v1142, 2147483648
  %v1170 = vor.u32 1.1754944e-38, %v1169
  %v1171 = vsel %vm1168, %v1170, %v1166
  %v1172 = vmul.f32 1.0, %v1171
  %v1173 = vsel %vm322, %v1133, %v1157
  %v1174 = vsel %vm322, %v1134, %v1172
  %v1175 = vmul.f32 %v1173, %v1084
  %v1176 = vmul.f32 %v1174, %v1085
  %1179 = vrot.lane.b32.xlu0 %v1173, 64
  %v1180 = vpop.permute.xlu0 %1179
  %1181 = vrot.lane.b32.xlu0 %v1174, 64
  %v1182 = vpop.permute.xlu0 %1181
  %v1185 = vmul.f32 %v1173, %v1180
  %v1186 = vmul.f32 %v1174, %v1182
  %1189 = vrot.lane.b32.xlu0 %v1185, 32
  %v1190 = vpop.permute.xlu0 %1189
  %1191 = vrot.lane.b32.xlu0 %v1186, 32
  %v1192 = vpop.permute.xlu0 %1191
  %v1195 = vadd.f32 %v1175, %v1190
  %v1196 = vadd.f32 %v1176, %v1192
  %v1197 = vtanh.pop %v1195
  %v1198 = vtanh.pop %v1196
  %1201 = vrot.lane.b32.xlu0 %v1197, 64
  %v1202 = vpop.permute.xlu0 %1201
  %1203 = vrot.lane.b32.xlu0 %v1198, 64
  %v1204 = vpop.permute.xlu0 %1203
  %v1207 = vmul.f32 %v1173, %v1202
  %v1208 = vmul.f32 %v1174, %v1204
  %1211 = vrot.lane.b32.xlu0 %v1207, 32
  %v1212 = vpop.permute.xlu0 %1211
  %1213 = vrot.lane.b32.xlu0 %v1208, 32
  %v1214 = vpop.permute.xlu0 %1213
  %1217 = vst.msk [vmem:[#allocation3 + $0x70] sm:$0xff] %vm438, %v1212
  %1218 = vst.msk [vmem:[#allocation3 + $0x78] sm:$0xff] %vm438, %v1214
  %1219 = vst.msk [vmem:[#allocation3 + $0x20] sm:$0xff] %vm441, %v1212
  %1220 = vst.msk [vmem:[#allocation3 + $0x28] sm:$0xff] %vm441, %v1214
  %v1221 = vpack.c.bf16 %v1208, %v1207
  %v1222 = vld [vmem:[#allocation2 + $0x80] sm:$0xff]
  %v1223 = vld [vmem:[#allocation2 + $0x88] sm:$0xff]
  %1225 = vrot.lane.b32.xlu0 %v1221, 32
  %v1226 = vpop.permute.xlu0 %1225
  %v1228 = vsel %vm83, %v1226, 0
  %1230 = vmatpush.bf16.msra.mxu0 0
  %1231 = vmatpush.bf16.msra.mxu0 0
  %1232 = vmatpush.bf16.msra.mxu0 0
  %1233 = vmatpush.bf16.msra.mxu0 0
  %1234 = vmatpush.bf16.msra.mxu0 0
  %1235 = vmatpush.bf16.msra.mxu0 0
  %1236 = vmatpush.bf16.msra.mxu0 %v334
  %1237 = vmatpush.bf16.msra.mxu0 %v333
  %1238 = vmatmul.bf16.gmra.mxu0 %v1228
  %v1239 = vpop.f32.mrf.mxu0
  %v1240 = vadd.f32 %v1222, %v1239
  %v1241 = vpop.f32.mrf.mxu0
  %v1242 = vadd.f32 %v1223, %v1241
  %1243 = vdwg.mxu0
  %v1244 = vtanh.pop %v1240
  %v1245 = vtanh.pop %v1242
  %v1246 = vxor.u32 %v1240, 2147483648
  %v1247 = vxor.u32 %v1242, 2147483648
  %v1248 = vmul.f32 %v1246, 1.442695
  %v1249 = vpow.pop %v1248
  %v1250 = vmul.f32 %v1247, 1.442695
  %v1251 = vpow.pop %v1250
  %v1252 = vadd.f32 %v1249, 1.0
  %v1253 = vadd.f32 %v1251, 1.0
  %v1254 = vrcp.pop %v1252
  %v1255 = vmul.f32 %v1252, %v1254
  %v1256 = vsub.f32 1.0, %v1255
  %v1257 = vmul.f32 %v1254, %v1256
  %v1258 = vadd.f32 %v1254, %v1257
  %vm1259 = vweird.f32 %v1252
  %vm1260 = vweird.f32 %v1254
  %vm1261 = vmor %vm1259, %vm1260
  %v1262 = vsel %vm1261, %v1254, %v1258
  %v1263 = vand.u32 2147483647, %v1252
  %vm1264 = vcmp.eq.f32.partialorder %v1263, 8.507059e+37
  %v1265 = vand.u32 %v1252, 2147483648
  %v1266 = vor.u32 1.1754944e-38, %v1265
  %v1267 = vsel %vm1264, %v1266, %v1262
  %v1268 = vmul.f32 1.0, %v1267
  %v1269 = vrcp.pop %v1253
  %v1270 = vmul.f32 %v1253, %v1269
  %v1271 = vsub.f32 1.0, %v1270
  %v1272 = vmul.f32 %v1269, %v1271
  %v1273 = vadd.f32 %v1269, %v1272
  %vm1274 = vweird.f32 %v1253
  %vm1275 = vweird.f32 %v1269
  %vm1276 = vmor %vm1274, %vm1275
  %v1277 = vsel %vm1276, %v1269, %v1273
  %v1278 = vand.u32 2147483647, %v1253
  %vm1279 = vcmp.eq.f32.partialorder %v1278, 8.507059e+37
  %v1280 = vand.u32 %v1253, 2147483648
  %v1281 = vor.u32 1.1754944e-38, %v1280
  %v1282 = vsel %vm1279, %v1281, %v1277
  %v1283 = vmul.f32 1.0, %v1282
  %v1284 = vsel %vm322, %v1244, %v1268
  %v1285 = vsel %vm322, %v1245, %v1283
  %v1286 = vmul.f32 %v1284, %v1195
  %v1287 = vmul.f32 %v1285, %v1196
  %1290 = vrot.lane.b32.xlu0 %v1284, 64
  %v1291 = vpop.permute.xlu0 %1290
  %1292 = vrot.lane.b32.xlu0 %v1285, 64
  %v1293 = vpop.permute.xlu0 %1292
  %v1296 = vmul.f32 %v1284, %v1291
  %v1297 = vmul.f32 %v1285, %v1293
  %1300 = vrot.lane.b32.xlu0 %v1296, 32
  %v1301 = vpop.permute.xlu0 %1300
  %1302 = vrot.lane.b32.xlu0 %v1297, 32
  %v1303 = vpop.permute.xlu0 %1302
  %v1306 = vadd.f32 %v1286, %v1301
  %v1307 = vadd.f32 %v1287, %v1303
  %v1308 = vtanh.pop %v1306
  %v1309 = vtanh.pop %v1307
  %1312 = vrot.lane.b32.xlu0 %v1308, 64
  %v1313 = vpop.permute.xlu0 %1312
  %1314 = vrot.lane.b32.xlu0 %v1309, 64
  %v1315 = vpop.permute.xlu0 %1314
  %v1318 = vmul.f32 %v1284, %v1313
  %v1319 = vmul.f32 %v1285, %v1315
  %1322 = vrot.lane.b32.xlu0 %v1318, 32
  %v1323 = vpop.permute.xlu0 %1322
  %1324 = vrot.lane.b32.xlu0 %v1319, 32
  %v1325 = vpop.permute.xlu0 %1324
  %1328 = vst.msk [vmem:[#allocation3 + $0x80] sm:$0xff] %vm438, %v1323
  %1329 = vst.msk [vmem:[#allocation3 + $0x88] sm:$0xff] %vm438, %v1325
  %1330 = vst.msk [vmem:[#allocation3 + $0x10] sm:$0xff] %vm441, %v1323
  %1331 = vst.msk [vmem:[#allocation3 + $0x18] sm:$0xff] %vm441, %v1325
  %v1332 = vpack.c.bf16 %v1319, %v1318
  %v1333 = vld [vmem:[#allocation2 + $0x90] sm:$0xff]
  %v1334 = vld [vmem:[#allocation2 + $0x98] sm:$0xff]
  %1336 = vrot.lane.b32.xlu0 %v1332, 32
  %v1337 = vpop.permute.xlu0 %1336
  %v1339 = vsel %vm83, %v1337, 0
  %1341 = vmatpush.bf16.msra.mxu0 0
  %1342 = vmatpush.bf16.msra.mxu0 0
  %1343 = vmatpush.bf16.msra.mxu0 0
  %1344 = vmatpush.bf16.msra.mxu0 0
  %1345 = vmatpush.bf16.msra.mxu0 0
  %1346 = vmatpush.bf16.msra.mxu0 0
  %1347 = vmatpush.bf16.msra.mxu0 %v334
  %1348 = vmatpush.bf16.msra.mxu0 %v333
  %1349 = vmatmul.bf16.gmra.mxu0 %v1339
  %v1350 = vpop.f32.mrf.mxu0
  %v1351 = vadd.f32 %v1333, %v1350
  %v1352 = vpop.f32.mrf.mxu0
  %v1353 = vadd.f32 %v1334, %v1352
  %1354 = vdwg.mxu0
  %v1355 = vtanh.pop %v1351
  %v1356 = vtanh.pop %v1353
  %v1357 = vxor.u32 %v1351, 2147483648
  %v1358 = vxor.u32 %v1353, 2147483648
  %v1359 = vmul.f32 %v1357, 1.442695
  %v1360 = vpow.pop %v1359
  %v1361 = vmul.f32 %v1358, 1.442695
  %v1362 = vpow.pop %v1361
  %v1363 = vadd.f32 %v1360, 1.0
  %v1364 = vadd.f32 %v1362, 1.0
  %v1365 = vrcp.pop %v1363
  %v1366 = vmul.f32 %v1363, %v1365
  %v1367 = vsub.f32 1.0, %v1366
  %v1368 = vmul.f32 %v1365, %v1367
  %v1369 = vadd.f32 %v1365, %v1368
  %vm1370 = vweird.f32 %v1363
  %vm1371 = vweird.f32 %v1365
  %vm1372 = vmor %vm1370, %vm1371
  %v1373 = vsel %vm1372, %v1365, %v1369
  %v1374 = vand.u32 2147483647, %v1363
  %vm1375 = vcmp.eq.f32.partialorder %v1374, 8.507059e+37
  %v1376 = vand.u32 %v1363, 2147483648
  %v1377 = vor.u32 1.1754944e-38, %v1376
  %v1378 = vsel %vm1375, %v1377, %v1373
  %v1379 = vmul.f32 1.0, %v1378
  %v1380 = vrcp.pop %v1364
  %v1381 = vmul.f32 %v1364, %v1380
  %v1382 = vsub.f32 1.0, %v1381
  %v1383 = vmul.f32 %v1380, %v1382
  %v1384 = vadd.f32 %v1380, %v1383
  %vm1385 = vweird.f32 %v1364
  %vm1386 = vweird.f32 %v1380
  %vm1387 = vmor %vm1385, %vm1386
  %v1388 = vsel %vm1387, %v1380, %v1384
  %v1389 = vand.u32 2147483647, %v1364
  %vm1390 = vcmp.eq.f32.partialorder %v1389, 8.507059e+37
  %v1391 = vand.u32 %v1364, 2147483648
  %v1392 = vor.u32 1.1754944e-38, %v1391
  %v1393 = vsel %vm1390, %v1392, %v1388
  %v1394 = vmul.f32 1.0, %v1393
  %v1395 = vsel %vm322, %v1355, %v1379
  %v1396 = vsel %vm322, %v1356, %v1394
  %v1397 = vmul.f32 %v1395, %v1306
  %v1398 = vmul.f32 %v1396, %v1307
  %1401 = vrot.lane.b32.xlu0 %v1395, 64
  %v1402 = vpop.permute.xlu0 %1401
  %1403 = vrot.lane.b32.xlu0 %v1396, 64
  %v1404 = vpop.permute.xlu0 %1403
  %v1407 = vmul.f32 %v1395, %v1402
  %v1408 = vmul.f32 %v1396, %v1404
  %1411 = vrot.lane.b32.xlu0 %v1407, 32
  %v1412 = vpop.permute.xlu0 %1411
  %1413 = vrot.lane.b32.xlu0 %v1408, 32
  %v1414 = vpop.permute.xlu0 %1413
  %v1417 = vadd.f32 %v1397, %v1412
  %v1418 = vadd.f32 %v1398, %v1414
  %v1419 = vtanh.pop %v1417
  %v1420 = vtanh.pop %v1418
  %1423 = vrot.lane.b32.xlu0 %v1419, 64
  %v1424 = vpop.permute.xlu0 %1423
  %1425 = vrot.lane.b32.xlu0 %v1420, 64
  %v1426 = vpop.permute.xlu0 %1425
  %v1429 = vmul.f32 %v1395, %v1424
  %v1430 = vmul.f32 %v1396, %v1426
  %1433 = vrot.lane.b32.xlu0 %v1429, 32
  %v1434 = vpop.permute.xlu0 %1433
  %1435 = vrot.lane.b32.xlu0 %v1430, 32
  %v1436 = vpop.permute.xlu0 %1435
  %1439 = vst.msk [vmem:[#allocation3 + $0x90] sm:$0xff] %vm438, %v1434
  %1440 = vst.msk [vmem:[#allocation3 + $0x98] sm:$0xff] %vm438, %v1436
  %1441 = vst.msk [vmem:[#allocation3] sm:$0xff] %vm441, %v1434
  %1442 = vst.msk [vmem:[#allocation3 + $0x8] sm:$0xff] %vm441, %v1436
  %v1443 = vld [vmem:[#allocation3] sm:$0xff]
  %v1444 = vld [vmem:[#allocation3 + $0x8] sm:$0xff]
  %v1445 = vld [vmem:[#allocation3 + $0x10] sm:$0xff]
  %v1446 = vld [vmem:[#allocation3 + $0x18] sm:$0xff]
  %v1447 = vld [vmem:[#allocation3 + $0x20] sm:$0xff]
  %v1448 = vld [vmem:[#allocation3 + $0x28] sm:$0xff]
  %v1449 = vld [vmem:[#allocation3 + $0x30] sm:$0xff]
  %v1450 = vld [vmem:[#allocation3 + $0x38] sm:$0xff]
  %v1451 = vld [vmem:[#allocation3 + $0x40] sm:$0xff]
  %v1452 = vld [vmem:[#allocation3 + $0x48] sm:$0xff]
  %v1453 = vld [vmem:[#allocation3 + $0x50] sm:$0xff]
  %v1454 = vld [vmem:[#allocation3 + $0x58] sm:$0xff]
  %v1455 = vld [vmem:[#allocation3 + $0x60] sm:$0xff]
  %v1456 = vld [vmem:[#allocation3 + $0x68] sm:$0xff]
  %v1457 = vld [vmem:[#allocation3 + $0x70] sm:$0xff]
  %v1458 = vld [vmem:[#allocation3 + $0x78] sm:$0xff]
  %v1459 = vld [vmem:[#allocation3 + $0x80] sm:$0xff]
  %v1460 = vld [vmem:[#allocation3 + $0x88] sm:$0xff]
  %v1461 = vld [vmem:[#allocation3 + $0x90] sm:$0xff]
  %v1462 = vld [vmem:[#allocation3 + $0x98] sm:$0xff]
  %v1463 = vpack.c.bf16 %v1444, %v1443
  %v1464 = vpack.c.bf16 %v1446, %v1445
  %v1465 = vpack.c.bf16 %v1448, %v1447
  %v1466 = vpack.c.bf16 %v1450, %v1449
  %v1467 = vpack.c.bf16 %v1452, %v1451
  %v1468 = vpack.c.bf16 %v1454, %v1453
  %v1469 = vpack.c.bf16 %v1456, %v1455
  %v1470 = vpack.c.bf16 %v1458, %v1457
  %v1471 = vpack.c.bf16 %v1460, %v1459
  %v1472 = vpack.c.bf16 %v1462, %v1461
  %v1473 = vld [vmem:[%s4] sm:$0xf]
  %v1474 = vld [vmem:[%s4 + $0x4] sm:$0xf]
  %v1475 = vld [vmem:[%s4 + $0x8] sm:$0xf]
  %v1476 = vld [vmem:[%s4 + $0xc] sm:$0xf]
  %v1477 = vld [vmem:[%s4 + $0x10] sm:$0xf]
  %v1478 = vld [vmem:[%s4 + $0x14] sm:$0xf]
  %v1479 = vld [vmem:[%s5] sm:$0x1]
  %v1481 = vperm.slane %v1479, 0
  %v1489 = vunpack.c.l.b16 %v1473
  %v1490 = vunpack.c.l.b16 %v1474
  %v1491 = vunpack.c.l.b16 %v1475
  %v1492 = vunpack.c.l.b16 %v1476
  %v1493 = vunpack.c.l.b16 %v1477
  %v1494 = vunpack.c.l.b16 %v1478
  %v1495 = vpack.c.b16 %v1490, %v1489
  %v1496 = vpack.c.b16 %v1492, %v1491
  %v1497 = vpack.c.b16 %v1494, %v1493
  %vm1501 = vcmask 392192
  %v1503 = vsel %vm1501, %v1463, 0
  %v1506 = vsel %vm1501, %v1464, 0
  %v1509 = vsel %vm1501, %v1465, 0
  %v1512 = vsel %vm1501, %v1466, 0
  %v1515 = vsel %vm1501, %v1467, 0
  %v1518 = vsel %vm1501, %v1468, 0
  %v1521 = vsel %vm1501, %v1469, 0
  %v1524 = vsel %vm1501, %v1470, 0
  %v1527 = vsel %vm1501, %v1471, 0
  %v1530 = vsel %vm1501, %v1472, 0
  %1532 = vmatpush.bf16.msra.mxu0 0
  %1533 = vmatpush.bf16.msra.mxu0 0
  %1534 = vmatpush.bf16.msra.mxu0 0
  %1535 = vmatpush.bf16.msra.mxu0 0
  %1536 = vmatpush.bf16.msra.mxu0 0
  %1537 = vmatpush.bf16.msra.mxu0 %v1497
  %1538 = vmatpush.bf16.msra.mxu0 %v1496
  %1539 = vmatpush.bf16.msra.mxu0 %v1495
  %1540 = vmatmul.bf16.gmra.mxu0 %v1503
  %v1541 = vpop.f32.mrf.mxu0
  %v1542 = vadd.f32 %v1481, %v1541
  %v1543 = vpop.f32.mrf.mxu0
  %v1544 = vadd.f32 %v1481, %v1543
  %1545 = vmatmul.bf16.gmra.mxu0 %v1506
  %v1546 = vpop.f32.mrf.mxu0
  %v1547 = vadd.f32 %v1481, %v1546
  %v1548 = vpop.f32.mrf.mxu0
  %v1549 = vadd.f32 %v1481, %v1548
  %1550 = vmatmul.bf16.gmra.mxu0 %v1509
  %v1551 = vpop.f32.mrf.mxu0
  %v1552 = vadd.f32 %v1481, %v1551
  %v1553 = vpop.f32.mrf.mxu0
  %v1554 = vadd.f32 %v1481, %v1553
  %1555 = vmatmul.bf16.gmra.mxu0 %v1512
  %v1556 = vpop.f32.mrf.mxu0
  %v1557 = vadd.f32 %v1481, %v1556
  %v1558 = vpop.f32.mrf.mxu0
  %v1559 = vadd.f32 %v1481, %v1558
  %1560 = vmatmul.bf16.gmra.mxu0 %v1515
  %v1561 = vpop.f32.mrf.mxu0
  %v1562 = vadd.f32 %v1481, %v1561
  %v1563 = vpop.f32.mrf.mxu0
  %v1564 = vadd.f32 %v1481, %v1563
  %1565 = vmatmul.bf16.gmra.mxu0 %v1518
  %v1566 = vpop.f32.mrf.mxu0
  %v1567 = vadd.f32 %v1481, %v1566
  %v1568 = vpop.f32.mrf.mxu0
  %v1569 = vadd.f32 %v1481, %v1568
  %1570 = vmatmul.bf16.gmra.mxu0 %v1521
  %v1571 = vpop.f32.mrf.mxu0
  %v1572 = vadd.f32 %v1481, %v1571
  %v1573 = vpop.f32.mrf.mxu0
  %v1574 = vadd.f32 %v1481, %v1573
  %1575 = vmatmul.bf16.gmra.mxu0 %v1524
  %v1576 = vpop.f32.mrf.mxu0
  %v1577 = vadd.f32 %v1481, %v1576
  %v1578 = vpop.f32.mrf.mxu0
  %v1579 = vadd.f32 %v1481, %v1578
  %1580 = vmatmul.bf16.gmra.mxu0 %v1527
  %v1581 = vpop.f32.mrf.mxu0
  %v1582 = vadd.f32 %v1481, %v1581
  %v1583 = vpop.f32.mrf.mxu0
  %v1584 = vadd.f32 %v1481, %v1583
  %1585 = vmatmul.bf16.gmra.mxu0 %v1530
  %v1586 = vpop.f32.mrf.mxu0
  %v1587 = vadd.f32 %v1481, %v1586
  %v1588 = vpop.f32.mrf.mxu0
  %v1589 = vadd.f32 %v1481, %v1588
  %1590 = vdwg.mxu0
  %v1591 = vld [vmem:[%s8] sm:$0xff]
  %v1592 = vld [vmem:[%s8 + $0x8] sm:$0xff]
  %v1593 = vld [vmem:[%s8 + $0x10] sm:$0xff]
  %v1594 = vld [vmem:[%s8 + $0x18] sm:$0xff]
  %v1595 = vld [vmem:[%s8 + $0x20] sm:$0xff]
  %v1596 = vld [vmem:[%s8 + $0x28] sm:$0xff]
  %v1597 = vld [vmem:[%s8 + $0x30] sm:$0xff]
  %v1598 = vld [vmem:[%s8 + $0x38] sm:$0xff]
  %v1599 = vld [vmem:[%s8 + $0x40] sm:$0xff]
  %v1600 = vld [vmem:[%s8 + $0x48] sm:$0xff]
  %v1601 = vld [vmem:[%s8 + $0x50] sm:$0xff]
  %v1602 = vld [vmem:[%s8 + $0x58] sm:$0xff]
  %v1603 = vld [vmem:[%s8 + $0x60] sm:$0xff]
  %v1604 = vld [vmem:[%s8 + $0x68] sm:$0xff]
  %v1605 = vld [vmem:[%s8 + $0x70] sm:$0xff]
  %v1606 = vld [vmem:[%s8 + $0x78] sm:$0xff]
  %v1607 = vld [vmem:[%s8 + $0x80] sm:$0xff]
  %v1608 = vld [vmem:[%s8 + $0x88] sm:$0xff]
  %v1609 = vld [vmem:[%s8 + $0x90] sm:$0xff]
  %v1610 = vld [vmem:[%s8 + $0x98] sm:$0xff]
  %1612 = vset.pattern.permute.xlu0 0
  %1613 = vperm.xlu0 %1612, %v1591
  %v1614 = vpop.permute.xlu0 %1613
  %1617 = vset.pattern.permute.xlu0 0
  %1618 = vperm.xlu0 %1617, %v1592
  %v1619 = vpop.permute.xlu0 %1618
  %1622 = vset.pattern.permute.xlu0 0
  %1623 = vperm.xlu0 %1622, %v1593
  %v1624 = vpop.permute.xlu0 %1623
  %1627 = vset.pattern.permute.xlu0 0
  %1628 = vperm.xlu0 %1627, %v1594
  %v1629 = vpop.permute.xlu0 %1628
  %1632 = vset.pattern.permute.xlu0 0
  %1633 = vperm.xlu0 %1632, %v1595
  %v1634 = vpop.permute.xlu0 %1633
  %1637 = vset.pattern.permute.xlu0 0
  %1638 = vperm.xlu0 %1637, %v1596
  %v1639 = vpop.permute.xlu0 %1638
  %1642 = vset.pattern.permute.xlu0 0
  %1643 = vperm.xlu0 %1642, %v1597
  %v1644 = vpop.permute.xlu0 %1643
  %1647 = vset.pattern.permute.xlu0 0
  %1648 = vperm.xlu0 %1647, %v1598
  %v1649 = vpop.permute.xlu0 %1648
  %1652 = vset.pattern.permute.xlu0 0
  %1653 = vperm.xlu0 %1652, %v1599
  %v1654 = vpop.permute.xlu0 %1653
  %1657 = vset.pattern.permute.xlu0 0
  %1658 = vperm.xlu0 %1657, %v1600
  %v1659 = vpop.permute.xlu0 %1658
  %1662 = vset.pattern.permute.xlu0 0
  %1663 = vperm.xlu0 %1662, %v1601
  %v1664 = vpop.permute.xlu0 %1663
  %1667 = vset.pattern.permute.xlu0 0
  %1668 = vperm.xlu0 %1667, %v1602
  %v1669 = vpop.permute.xlu0 %1668
  %1672 = vset.pattern.permute.xlu0 0
  %1673 = vperm.xlu0 %1672, %v1603
  %v1674 = vpop.permute.xlu0 %1673
  %1677 = vset.pattern.permute.xlu0 0
  %1678 = vperm.xlu0 %1677, %v1604
  %v1679 = vpop.permute.xlu0 %1678
  %1682 = vset.pattern.permute.xlu0 0
  %1683 = vperm.xlu0 %1682, %v1605
  %v1684 = vpop.permute.xlu0 %1683
  %1687 = vset.pattern.permute.xlu0 0
  %1688 = vperm.xlu0 %1687, %v1606
  %v1689 = vpop.permute.xlu0 %1688
  %1692 = vset.pattern.permute.xlu0 0
  %1693 = vperm.xlu0 %1692, %v1607
  %v1694 = vpop.permute.xlu0 %1693
  %1697 = vset.pattern.permute.xlu0 0
  %1698 = vperm.xlu0 %1697, %v1608
  %v1699 = vpop.permute.xlu0 %1698
  %1702 = vset.pattern.permute.xlu0 0
  %1703 = vperm.xlu0 %1702, %v1609
  %v1704 = vpop.permute.xlu0 %1703
  %1707 = vset.pattern.permute.xlu0 0
  %1708 = vperm.xlu0 %1707, %v1610
  %v1709 = vpop.permute.xlu0 %1708
  %v1711 = vmul.f32 %v1542, %v1614
  %v1712 = vmul.f32 %v1544, %v1619
  %v1713 = vmul.f32 %v1547, %v1624
  %v1714 = vmul.f32 %v1549, %v1629
  %v1715 = vmul.f32 %v1552, %v1634
  %v1716 = vmul.f32 %v1554, %v1639
  %v1717 = vmul.f32 %v1557, %v1644
  %v1718 = vmul.f32 %v1559, %v1649
  %v1719 = vmul.f32 %v1562, %v1654
  %v1720 = vmul.f32 %v1564, %v1659
  %v1721 = vmul.f32 %v1567, %v1664
  %v1722 = vmul.f32 %v1569, %v1669
  %v1723 = vmul.f32 %v1572, %v1674
  %v1724 = vmul.f32 %v1574, %v1679
  %v1725 = vmul.f32 %v1577, %v1684
  %v1726 = vmul.f32 %v1579, %v1689
  %v1727 = vmul.f32 %v1582, %v1694
  %v1728 = vmul.f32 %v1584, %v1699
  %v1729 = vmul.f32 %v1587, %v1704
  %v1730 = vmul.f32 %v1589, %v1709
  %v1731 = vsel %vm438, %v1711, 0.0
  %v1732 = vsel %vm438, %v1712, 0.0
  %v1733 = vadd.f32 %v1731, %v1732
  %v1734 = vsel %vm438, %v1713, 0.0
  %v1735 = vadd.f32 %v1733, %v1734
  %v1736 = vsel %vm438, %v1714, 0.0
  %v1737 = vadd.f32 %v1735, %v1736
  %v1738 = vsel %vm438, %v1715, 0.0
  %v1739 = vadd.f32 %v1737, %v1738
  %v1740 = vsel %vm438, %v1716, 0.0
  %v1741 = vadd.f32 %v1739, %v1740
  %v1742 = vsel %vm438, %v1717, 0.0
  %v1743 = vadd.f32 %v1741, %v1742
  %v1744 = vsel %vm438, %v1718, 0.0
  %v1745 = vadd.f32 %v1743, %v1744
  %v1746 = vsel %vm438, %v1719, 0.0
  %v1747 = vadd.f32 %v1745, %v1746
  %v1748 = vsel %vm438, %v1720, 0.0
  %v1749 = vadd.f32 %v1747, %v1748
  %v1750 = vsel %vm438, %v1721, 0.0
  %v1751 = vadd.f32 %v1749, %v1750
  %v1752 = vsel %vm438, %v1722, 0.0
  %v1753 = vadd.f32 %v1751, %v1752
  %v1754 = vsel %vm438, %v1723, 0.0
  %v1755 = vadd.f32 %v1753, %v1754
  %v1756 = vsel %vm438, %v1724, 0.0
  %v1757 = vadd.f32 %v1755, %v1756
  %v1758 = vsel %vm438, %v1725, 0.0
  %v1759 = vadd.f32 %v1757, %v1758
  %v1760 = vsel %vm438, %v1726, 0.0
  %v1761 = vadd.f32 %v1759, %v1760
  %v1762 = vsel %vm438, %v1727, 0.0
  %v1763 = vadd.f32 %v1761, %v1762
  %v1764 = vsel %vm438, %v1728, 0.0
  %v1765 = vadd.f32 %v1763, %v1764
  %v1766 = vsel %vm438, %v1729, 0.0
  %v1767 = vadd.f32 %v1765, %v1766
  %v1768 = vsel %vm438, %v1730, 0.0
  %v1769 = vadd.f32 %v1767, %v1768
  %1770 = vadd.xlane.f32.xlu0 %v1769
  %v1771 = vpop.xlane.xlu0 %1770
  %v1772 = vrot.slane %v1771, 4
  %v1773 = vadd.f32 %v1771, %v1772
  %v1774 = vrot.slane %v1773, 2
  %v1775 = vadd.f32 %v1773, %v1774
  %v1776 = vrot.slane %v1775, 1
  %v1777 = vadd.f32 %v1775, %v1776
  %s1778 = vtos %v1777
  %v1779 = vrcp.pop 1280.0
  %v1780 = vmul.f32 1280.0, %v1779
  %v1781 = vsub.f32 1.0, %v1780
  %v1782 = vmul.f32 %v1779, %v1781
  %v1783 = vadd.f32 %v1779, %v1782
  %vm1784 = vweird.f32 %v1779
  %v1785 = vsel %vm1784, %v1779, %v1783
  %s1786 = vtos %v1785
  %s1787 = smul.f32 %s1778, %s1786
  %v1788 = vstv %s1787
  %v1789 = vmul.f32 %v1591, %v1788
  %v1790 = vmul.f32 %v1592, %v1788
  %v1791 = vmul.f32 %v1593, %v1788
  %v1792 = vmul.f32 %v1594, %v1788
  %v1793 = vmul.f32 %v1595, %v1788
  %v1794 = vmul.f32 %v1596, %v1788
  %v1795 = vmul.f32 %v1597, %v1788
  %v1796 = vmul.f32 %v1598, %v1788
  %v1797 = vmul.f32 %v1599, %v1788
  %v1798 = vmul.f32 %v1600, %v1788
  %v1799 = vmul.f32 %v1601, %v1788
  %v1800 = vmul.f32 %v1602, %v1788
  %v1801 = vmul.f32 %v1603, %v1788
  %v1802 = vmul.f32 %v1604, %v1788
  %v1803 = vmul.f32 %v1605, %v1788
  %v1804 = vmul.f32 %v1606, %v1788
  %v1805 = vmul.f32 %v1607, %v1788
  %v1806 = vmul.f32 %v1608, %v1788
  %v1807 = vmul.f32 %v1609, %v1788
  %v1808 = vmul.f32 %v1610, %v1788
  %v1809 = vadd.f32 %v1789, 0.0
  %v1810 = vadd.f32 %v1790, 0.0
  %v1811 = vadd.f32 %v1791, 0.0
  %v1812 = vadd.f32 %v1792, 0.0
  %v1813 = vadd.f32 %v1793, 0.0
  %v1814 = vadd.f32 %v1794, 0.0
  %v1815 = vadd.f32 %v1795, 0.0
  %v1816 = vadd.f32 %v1796, 0.0
  %v1817 = vadd.f32 %v1797, 0.0
  %v1818 = vadd.f32 %v1798, 0.0
  %v1819 = vadd.f32 %v1799, 0.0
  %v1820 = vadd.f32 %v1800, 0.0
  %v1821 = vadd.f32 %v1801, 0.0
  %v1822 = vadd.f32 %v1802, 0.0
  %v1823 = vadd.f32 %v1803, 0.0
  %v1824 = vadd.f32 %v1804, 0.0
  %v1825 = vadd.f32 %v1805, 0.0
  %v1826 = vadd.f32 %v1806, 0.0
  %v1827 = vadd.f32 %v1807, 0.0
  %v1828 = vadd.f32 %v1808, 0.0
  %1829 = vset.pattern.permute.xlu0 1
  %1830 = vperm.xlu0 %1829, %v1591
  %v1831 = vpop.permute.xlu0 %1830
  %1833 = vset.pattern.permute.xlu0 1
  %1834 = vperm.xlu0 %1833, %v1592
  %v1835 = vpop.permute.xlu0 %1834
  %1837 = vset.pattern.permute.xlu0 1
  %1838 = vperm.xlu0 %1837, %v1593
  %v1839 = vpop.permute.xlu0 %1838
  %1841 = vset.pattern.permute.xlu0 1
  %1842 = vperm.xlu0 %1841, %v1594
  %v1843 = vpop.permute.xlu0 %1842
  %1845 = vset.pattern.permute.xlu0 1
  %1846 = vperm.xlu0 %1845, %v1595
  %v1847 = vpop.permute.xlu0 %1846
  %1849 = vset.pattern.permute.xlu0 1
  %1850 = vperm.xlu0 %1849, %v1596
  %v1851 = vpop.permute.xlu0 %1850
  %1853 = vset.pattern.permute.xlu0 1
  %1854 = vperm.xlu0 %1853, %v1597
  %v1855 = vpop.permute.xlu0 %1854
  %1857 = vset.pattern.permute.xlu0 1
  %1858 = vperm.xlu0 %1857, %v1598
  %v1859 = vpop.permute.xlu0 %1858
  %1861 = vset.pattern.permute.xlu0 1
  %1862 = vperm.xlu0 %1861, %v1599
  %v1863 = vpop.permute.xlu0 %1862
  %1865 = vset.pattern.permute.xlu0 1
  %1866 = vperm.xlu0 %1865, %v1600
  %v1867 = vpop.permute.xlu0 %1866
  %1869 = vset.pattern.permute.xlu0 1
  %1870 = vperm.xlu0 %1869, %v1601
  %v1871 = vpop.permute.xlu0 %1870
  %1873 = vset.pattern.permute.xlu0 1
  %1874 = vperm.xlu0 %1873, %v1602
  %v1875 = vpop.permute.xlu0 %1874
  %1877 = vset.pattern.permute.xlu0 1
  %1878 = vperm.xlu0 %1877, %v1603
  %v1879 = vpop.permute.xlu0 %1878
  %1881 = vset.pattern.permute.xlu0 1
  %1882 = vperm.xlu0 %1881, %v1604
  %v1883 = vpop.permute.xlu0 %1882
  %1885 = vset.pattern.permute.xlu0 1
  %1886 = vperm.xlu0 %1885, %v1605
  %v1887 = vpop.permute.xlu0 %1886
  %1889 = vset.pattern.permute.xlu0 1
  %1890 = vperm.xlu0 %1889, %v1606
  %v1891 = vpop.permute.xlu0 %1890
  %1893 = vset.pattern.permute.xlu0 1
  %1894 = vperm.xlu0 %1893, %v1607
  %v1895 = vpop.permute.xlu0 %1894
  %1897 = vset.pattern.permute.xlu0 1
  %1898 = vperm.xlu0 %1897, %v1608
  %v1899 = vpop.permute.xlu0 %1898
  %1901 = vset.pattern.permute.xlu0 1
  %1902 = vperm.xlu0 %1901, %v1609
  %v1903 = vpop.permute.xlu0 %1902
  %1905 = vset.pattern.permute.xlu0 1
  %1906 = vperm.xlu0 %1905, %v1610
  %v1907 = vpop.permute.xlu0 %1906
  %v1909 = vmul.f32 %v1542, %v1831
  %v1910 = vmul.f32 %v1544, %v1835
  %v1911 = vmul.f32 %v1547, %v1839
  %v1912 = vmul.f32 %v1549, %v1843
  %v1913 = vmul.f32 %v1552, %v1847
  %v1914 = vmul.f32 %v1554, %v1851
  %v1915 = vmul.f32 %v1557, %v1855
  %v1916 = vmul.f32 %v1559, %v1859
  %v1917 = vmul.f32 %v1562, %v1863
  %v1918 = vmul.f32 %v1564, %v1867
  %v1919 = vmul.f32 %v1567, %v1871
  %v1920 = vmul.f32 %v1569, %v1875
  %v1921 = vmul.f32 %v1572, %v1879
  %v1922 = vmul.f32 %v1574, %v1883
  %v1923 = vmul.f32 %v1577, %v1887
  %v1924 = vmul.f32 %v1579, %v1891
  %v1925 = vmul.f32 %v1582, %v1895
  %v1926 = vmul.f32 %v1584, %v1899
  %v1927 = vmul.f32 %v1587, %v1903
  %v1928 = vmul.f32 %v1589, %v1907
  %v1929 = vsel %vm438, %v1909, 0.0
  %v1930 = vsel %vm438, %v1910, 0.0
  %v1931 = vadd.f32 %v1929, %v1930
  %v1932 = vsel %vm438, %v1911, 0.0
  %v1933 = vadd.f32 %v1931, %v1932
  %v1934 = vsel %vm438, %v1912, 0.0
  %v1935 = vadd.f32 %v1933, %v1934
  %v1936 = vsel %vm438, %v1913, 0.0
  %v1937 = vadd.f32 %v1935, %v1936
  %v1938 = vsel %vm438, %v1914, 0.0
  %v1939 = vadd.f32 %v1937, %v1938
  %v1940 = vsel %vm438, %v1915, 0.0
  %v1941 = vadd.f32 %v1939, %v1940
  %v1942 = vsel %vm438, %v1916, 0.0
  %v1943 = vadd.f32 %v1941, %v1942
  %v1944 = vsel %vm438, %v1917, 0.0
  %v1945 = vadd.f32 %v1943, %v1944
  %v1946 = vsel %vm438, %v1918, 0.0
  %v1947 = vadd.f32 %v1945, %v1946
  %v1948 = vsel %vm438, %v1919, 0.0
  %v1949 = vadd.f32 %v1947, %v1948
  %v1950 = vsel %vm438, %v1920, 0.0
  %v1951 = vadd.f32 %v1949, %v1950
  %v1952 = vsel %vm438, %v1921, 0.0
  %v1953 = vadd.f32 %v1951, %v1952
  %v1954 = vsel %vm438, %v1922, 0.0
  %v1955 = vadd.f32 %v1953, %v1954
  %v1956 = vsel %vm438, %v1923, 0.0
  %v1957 = vadd.f32 %v1955, %v1956
  %v1958 = vsel %vm438, %v1924, 0.0
  %v1959 = vadd.f32 %v1957, %v1958
  %v1960 = vsel %vm438, %v1925, 0.0
  %v1961 = vadd.f32 %v1959, %v1960
  %v1962 = vsel %vm438, %v1926, 0.0
  %v1963 = vadd.f32 %v1961, %v1962
  %v1964 = vsel %vm438, %v1927, 0.0
  %v1965 = vadd.f32 %v1963, %v1964
  %v1966 = vsel %vm438, %v1928, 0.0
  %v1967 = vadd.f32 %v1965, %v1966
  %1968 = vadd.xlane.f32.xlu0 %v1967
  %v1969 = vpop.xlane.xlu0 %1968
  %v1970 = vrot.slane %v1969, 4
  %v1971 = vadd.f32 %v1969, %v1970
  %v1972 = vrot.slane %v1971, 2
  %v1973 = vadd.f32 %v1971, %v1972
  %v1974 = vrot.slane %v1973, 1
  %v1975 = vadd.f32 %v1973, %v1974
  %s1976 = vtos %v1975
  %v1977 = vrcp.pop 1280.0
  %v1978 = vmul.f32 1280.0, %v1977
  %v1979 = vsub.f32 1.0, %v1978
  %v1980 = vmul.f32 %v1977, %v1979
  %v1981 = vadd.f32 %v1977, %v1980
  %vm1982 = vweird.f32 %v1977
  %v1983 = vsel %vm1982, %v1977, %v1981
  %s1984 = vtos %v1983
  %s1985 = smul.f32 %s1976, %s1984
  %v1986 = vstv %s1985
  %v1987 = vmul.f32 %v1591, %v1986
  %v1988 = vmul.f32 %v1592, %v1986
  %v1989 = vmul.f32 %v1593, %v1986
  %v1990 = vmul.f32 %v1594, %v1986
  %v1991 = vmul.f32 %v1595, %v1986
  %v1992 = vmul.f32 %v1596, %v1986
  %v1993 = vmul.f32 %v1597, %v1986
  %v1994 = vmul.f32 %v1598, %v1986
  %v1995 = vmul.f32 %v1599, %v1986
  %v1996 = vmul.f32 %v1600, %v1986
  %v1997 = vmul.f32 %v1601, %v1986
  %v1998 = vmul.f32 %v1602, %v1986
  %v1999 = vmul.f32 %v1603, %v1986
  %v2000 = vmul.f32 %v1604, %v1986
  %v2001 = vmul.f32 %v1605, %v1986
  %v2002 = vmul.f32 %v1606, %v1986
  %v2003 = vmul.f32 %v1607, %v1986
  %v2004 = vmul.f32 %v1608, %v1986
  %v2005 = vmul.f32 %v1609, %v1986
  %v2006 = vmul.f32 %v1610, %v1986
  %2027 = vrot.lane.b32.xlu0 %v1987, 127
  %v2028 = vpop.permute.xlu0 %2027
  %2029 = vrot.lane.b32.xlu0 %v1988, 127
  %v2030 = vpop.permute.xlu0 %2029
  %2031 = vrot.lane.b32.xlu0 %v1989, 127
  %v2032 = vpop.permute.xlu0 %2031
  %2033 = vrot.lane.b32.xlu0 %v1990, 127
  %v2034 = vpop.permute.xlu0 %2033
  %2035 = vrot.lane.b32.xlu0 %v1991, 127
  %v2036 = vpop.permute.xlu0 %2035
  %2037 = vrot.lane.b32.xlu0 %v1992, 127
  %v2038 = vpop.permute.xlu0 %2037
  %2039 = vrot.lane.b32.xlu0 %v1993, 127
  %v2040 = vpop.permute.xlu0 %2039
  %2041 = vrot.lane.b32.xlu0 %v1994, 127
  %v2042 = vpop.permute.xlu0 %2041
  %2043 = vrot.lane.b32.xlu0 %v1995, 127
  %v2044 = vpop.permute.xlu0 %2043
  %2045 = vrot.lane.b32.xlu0 %v1996, 127
  %v2046 = vpop.permute.xlu0 %2045
  %2047 = vrot.lane.b32.xlu0 %v1997, 127
  %v2048 = vpop.permute.xlu0 %2047
  %2049 = vrot.lane.b32.xlu0 %v1998, 127
  %v2050 = vpop.permute.xlu0 %2049
  %2051 = vrot.lane.b32.xlu0 %v1999, 127
  %v2052 = vpop.permute.xlu0 %2051
  %2053 = vrot.lane.b32.xlu0 %v2000, 127
  %v2054 = vpop.permute.xlu0 %2053
  %2055 = vrot.lane.b32.xlu0 %v2001, 127
  %v2056 = vpop.permute.xlu0 %2055
  %2057 = vrot.lane.b32.xlu0 %v2002, 127
  %v2058 = vpop.permute.xlu0 %2057
  %2059 = vrot.lane.b32.xlu0 %v2003, 127
  %v2060 = vpop.permute.xlu0 %2059
  %2061 = vrot.lane.b32.xlu0 %v2004, 127
  %v2062 = vpop.permute.xlu0 %2061
  %2063 = vrot.lane.b32.xlu0 %v2005, 127
  %v2064 = vpop.permute.xlu0 %2063
  %2065 = vrot.lane.b32.xlu0 %v2006, 127
  %v2066 = vpop.permute.xlu0 %2065
  %v2087 = vadd.f32 %v1809, %v2028
  %v2088 = vadd.f32 %v1810, %v2030
  %v2089 = vadd.f32 %v1811, %v2032
  %v2090 = vadd.f32 %v1812, %v2034
  %v2091 = vadd.f32 %v1813, %v2036
  %v2092 = vadd.f32 %v1814, %v2038
  %v2093 = vadd.f32 %v1815, %v2040
  %v2094 = vadd.f32 %v1816, %v2042
  %v2095 = vadd.f32 %v1817, %v2044
  %v2096 = vadd.f32 %v1818, %v2046
  %v2097 = vadd.f32 %v1819, %v2048
  %v2098 = vadd.f32 %v1820, %v2050
  %v2099 = vadd.f32 %v1821, %v2052
  %v2100 = vadd.f32 %v1822, %v2054
  %v2101 = vadd.f32 %v1823, %v2056
  %v2102 = vadd.f32 %v1824, %v2058
  %v2103 = vadd.f32 %v1825, %v2060
  %v2104 = vadd.f32 %v1826, %v2062
  %v2105 = vadd.f32 %v1827, %v2064
  %v2106 = vadd.f32 %v1828, %v2066
  %2108 = vset.pattern.permute.xlu0 0
  %2109 = vperm.xlu0 %2108, %v2087
  %v2110 = vpop.permute.xlu0 %2109
  %2113 = vset.pattern.permute.xlu0 0
  %2114 = vperm.xlu0 %2113, %v2088
  %v2115 = vpop.permute.xlu0 %2114
  %2118 = vset.pattern.permute.xlu0 0
  %2119 = vperm.xlu0 %2118, %v2089
  %v2120 = vpop.permute.xlu0 %2119
  %2123 = vset.pattern.permute.xlu0 0
  %2124 = vperm.xlu0 %2123, %v2090
  %v2125 = vpop.permute.xlu0 %2124
  %2128 = vset.pattern.permute.xlu0 0
  %2129 = vperm.xlu0 %2128, %v2091
  %v2130 = vpop.permute.xlu0 %2129
  %2133 = vset.pattern.permute.xlu0 0
  %2134 = vperm.xlu0 %2133, %v2092
  %v2135 = vpop.permute.xlu0 %2134
  %2138 = vset.pattern.permute.xlu0 0
  %2139 = vperm.xlu0 %2138, %v2093
  %v2140 = vpop.permute.xlu0 %2139
  %2143 = vset.pattern.permute.xlu0 0
  %2144 = vperm.xlu0 %2143, %v2094
  %v2145 = vpop.permute.xlu0 %2144
  %2148 = vset.pattern.permute.xlu0 0
  %2149 = vperm.xlu0 %2148, %v2095
  %v2150 = vpop.permute.xlu0 %2149
  %2153 = vset.pattern.permute.xlu0 0
  %2154 = vperm.xlu0 %2153, %v2096
  %v2155 = vpop.permute.xlu0 %2154
  %2158 = vset.pattern.permute.xlu0 0
  %2159 = vperm.xlu0 %2158, %v2097
  %v2160 = vpop.permute.xlu0 %2159
  %2163 = vset.pattern.permute.xlu0 0
  %2164 = vperm.xlu0 %2163, %v2098
  %v2165 = vpop.permute.xlu0 %2164
  %2168 = vset.pattern.permute.xlu0 0
  %2169 = vperm.xlu0 %2168, %v2099
  %v2170 = vpop.permute.xlu0 %2169
  %2173 = vset.pattern.permute.xlu0 0
  %2174 = vperm.xlu0 %2173, %v2100
  %v2175 = vpop.permute.xlu0 %2174
  %2178 = vset.pattern.permute.xlu0 0
  %2179 = vperm.xlu0 %2178, %v2101
  %v2180 = vpop.permute.xlu0 %2179
  %2183 = vset.pattern.permute.xlu0 0
  %2184 = vperm.xlu0 %2183, %v2102
  %v2185 = vpop.permute.xlu0 %2184
  %2188 = vset.pattern.permute.xlu0 0
  %2189 = vperm.xlu0 %2188, %v2103
  %v2190 = vpop.permute.xlu0 %2189
  %2193 = vset.pattern.permute.xlu0 0
  %2194 = vperm.xlu0 %2193, %v2104
  %v2195 = vpop.permute.xlu0 %2194
  %2198 = vset.pattern.permute.xlu0 0
  %2199 = vperm.xlu0 %2198, %v2105
  %v2200 = vpop.permute.xlu0 %2199
  %2203 = vset.pattern.permute.xlu0 0
  %2204 = vperm.xlu0 %2203, %v2106
  %v2205 = vpop.permute.xlu0 %2204
  %v2207 = vsub.f32 %v1542, %v2110
  %v2208 = vsub.f32 %v1544, %v2115
  %v2209 = vsub.f32 %v1547, %v2120
  %v2210 = vsub.f32 %v1549, %v2125
  %v2211 = vsub.f32 %v1552, %v2130
  %v2212 = vsub.f32 %v1554, %v2135
  %v2213 = vsub.f32 %v1557, %v2140
  %v2214 = vsub.f32 %v1559, %v2145
  %v2215 = vsub.f32 %v1562, %v2150
  %v2216 = vsub.f32 %v1564, %v2155
  %v2217 = vsub.f32 %v1567, %v2160
  %v2218 = vsub.f32 %v1569, %v2165
  %v2219 = vsub.f32 %v1572, %v2170
  %v2220 = vsub.f32 %v1574, %v2175
  %v2221 = vsub.f32 %v1577, %v2180
  %v2222 = vsub.f32 %v1579, %v2185
  %v2223 = vsub.f32 %v1582, %v2190
  %v2224 = vsub.f32 %v1584, %v2195
  %v2225 = vsub.f32 %v1587, %v2200
  %v2226 = vsub.f32 %v1589, %v2205
  %v2227 = vmul.f32 %v2207, %v2207
  %v2228 = vmul.f32 %v2208, %v2208
  %v2229 = vmul.f32 %v2209, %v2209
  %v2230 = vmul.f32 %v2210, %v2210
  %v2231 = vmul.f32 %v2211, %v2211
  %v2232 = vmul.f32 %v2212, %v2212
  %v2233 = vmul.f32 %v2213, %v2213
  %v2234 = vmul.f32 %v2214, %v2214
  %v2235 = vmul.f32 %v2215, %v2215
  %v2236 = vmul.f32 %v2216, %v2216
  %v2237 = vmul.f32 %v2217, %v2217
  %v2238 = vmul.f32 %v2218, %v2218
  %v2239 = vmul.f32 %v2219, %v2219
  %v2240 = vmul.f32 %v2220, %v2220
  %v2241 = vmul.f32 %v2221, %v2221
  %v2242 = vmul.f32 %v2222, %v2222
  %v2243 = vmul.f32 %v2223, %v2223
  %v2244 = vmul.f32 %v2224, %v2224
  %v2245 = vmul.f32 %v2225, %v2225
  %v2246 = vmul.f32 %v2226, %v2226
  %v2247 = vmul.f32 %v2227, %v1614
  %v2248 = vmul.f32 %v2228, %v1619
  %v2249 = vmul.f32 %v2229, %v1624
  %v2250 = vmul.f32 %v2230, %v1629
  %v2251 = vmul.f32 %v2231, %v1634
  %v2252 = vmul.f32 %v2232, %v1639
  %v2253 = vmul.f32 %v2233, %v1644
  %v2254 = vmul.f32 %v2234, %v1649
  %v2255 = vmul.f32 %v2235, %v1654
  %v2256 = vmul.f32 %v2236, %v1659
  %v2257 = vmul.f32 %v2237, %v1664
  %v2258 = vmul.f32 %v2238, %v1669
  %v2259 = vmul.f32 %v2239, %v1674
  %v2260 = vmul.f32 %v2240, %v1679
  %v2261 = vmul.f32 %v2241, %v1684
  %v2262 = vmul.f32 %v2242, %v1689
  %v2263 = vmul.f32 %v2243, %v1694
  %v2264 = vmul.f32 %v2244, %v1699
  %v2265 = vmul.f32 %v2245, %v1704
  %v2266 = vmul.f32 %v2246, %v1709
  %v2267 = vsel %vm438, %v2247, 0.0
  %v2268 = vsel %vm438, %v2248, 0.0
  %v2269 = vadd.f32 %v2267, %v2268
  %v2270 = vsel %vm438, %v2249, 0.0
  %v2271 = vadd.f32 %v2269, %v2270
  %v2272 = vsel %vm438, %v2250, 0.0
  %v2273 = vadd.f32 %v2271, %v2272
  %v2274 = vsel %vm438, %v2251, 0.0
  %v2275 = vadd.f32 %v2273, %v2274
  %v2276 = vsel %vm438, %v2252, 0.0
  %v2277 = vadd.f32 %v2275, %v2276
  %v2278 = vsel %vm438, %v2253, 0.0
  %v2279 = vadd.f32 %v2277, %v2278
  %v2280 = vsel %vm438, %v2254, 0.0
  %v2281 = vadd.f32 %v2279, %v2280
  %v2282 = vsel %vm438, %v2255, 0.0
  %v2283 = vadd.f32 %v2281, %v2282
  %v2284 = vsel %vm438, %v2256, 0.0
  %v2285 = vadd.f32 %v2283, %v2284
  %v2286 = vsel %vm438, %v2257, 0.0
  %v2287 = vadd.f32 %v2285, %v2286
  %v2288 = vsel %vm438, %v2258, 0.0
  %v2289 = vadd.f32 %v2287, %v2288
  %v2290 = vsel %vm438, %v2259, 0.0
  %v2291 = vadd.f32 %v2289, %v2290
  %v2292 = vsel %vm438, %v2260, 0.0
  %v2293 = vadd.f32 %v2291, %v2292
  %v2294 = vsel %vm438, %v2261, 0.0
  %v2295 = vadd.f32 %v2293, %v2294
  %v2296 = vsel %vm438, %v2262, 0.0
  %v2297 = vadd.f32 %v2295, %v2296
  %v2298 = vsel %vm438, %v2263, 0.0
  %v2299 = vadd.f32 %v2297, %v2298
  %v2300 = vsel %vm438, %v2264, 0.0
  %v2301 = vadd.f32 %v2299, %v2300
  %v2302 = vsel %vm438, %v2265, 0.0
  %v2303 = vadd.f32 %v2301, %v2302
  %v2304 = vsel %vm438, %v2266, 0.0
  %v2305 = vadd.f32 %v2303, %v2304
  %2306 = vadd.xlane.f32.xlu0 %v2305
  %v2307 = vpop.xlane.xlu0 %2306
  %v2308 = vrot.slane %v2307, 4
  %v2309 = vadd.f32 %v2307, %v2308
  %v2310 = vrot.slane %v2309, 2
  %v2311 = vadd.f32 %v2309, %v2310
  %v2312 = vrot.slane %v2311, 1
  %v2313 = vadd.f32 %v2311, %v2312
  %s2314 = vtos %v2313
  %v2315 = vrcp.pop 1280.0
  %v2316 = vmul.f32 1280.0, %v2315
  %v2317 = vsub.f32 1.0, %v2316
  %v2318 = vmul.f32 %v2315, %v2317
  %v2319 = vadd.f32 %v2315, %v2318
  %vm2320 = vweird.f32 %v2315
  %v2321 = vsel %vm2320, %v2315, %v2319
  %s2322 = vtos %v2321
  %s2323 = smul.f32 %s2314, %s2322
  %s2324 = sadd.f32 %s2323, 1e-08
  %v2325 = vstv %s2324
  %v2326 = vrsqrt.pop %v2325
  %v2327 = vmul.f32 %v2326, %v2325
  %v2328 = vmul.f32 %v2327, %v2326
  %v2329 = vmul.f32 0.5, %v2328
  %v2330 = vsub.f32 1.5, %v2329
  %v2331 = vmul.f32 %v2326, %v2330
  %vm2332 = vweird.f32 %v2325
  %vm2333 = vweird.f32 %v2326
  %vm2334 = vmor %vm2332, %vm2333
  %v2335 = vsel %vm2334, %v2326, %v2331
  %s2336 = vtos %v2335
  %v2337 = vstv %s2336
  %v2338 = vmul.f32 %v1591, %v2337
  %v2339 = vmul.f32 %v1592, %v2337
  %v2340 = vmul.f32 %v1593, %v2337
  %v2341 = vmul.f32 %v1594, %v2337
  %v2342 = vmul.f32 %v1595, %v2337
  %v2343 = vmul.f32 %v1596, %v2337
  %v2344 = vmul.f32 %v1597, %v2337
  %v2345 = vmul.f32 %v1598, %v2337
  %v2346 = vmul.f32 %v1599, %v2337
  %v2347 = vmul.f32 %v1600, %v2337
  %v2348 = vmul.f32 %v1601, %v2337
  %v2349 = vmul.f32 %v1602, %v2337
  %v2350 = vmul.f32 %v1603, %v2337
  %v2351 = vmul.f32 %v1604, %v2337
  %v2352 = vmul.f32 %v1605, %v2337
  %v2353 = vmul.f32 %v1606, %v2337
  %v2354 = vmul.f32 %v1607, %v2337
  %v2355 = vmul.f32 %v1608, %v2337
  %v2356 = vmul.f32 %v1609, %v2337
  %v2357 = vmul.f32 %v1610, %v2337
  %v2358 = vadd.f32 %v2338, 0.0
  %v2359 = vadd.f32 %v2339, 0.0
  %v2360 = vadd.f32 %v2340, 0.0
  %v2361 = vadd.f32 %v2341, 0.0
  %v2362 = vadd.f32 %v2342, 0.0
  %v2363 = vadd.f32 %v2343, 0.0
  %v2364 = vadd.f32 %v2344, 0.0
  %v2365 = vadd.f32 %v2345, 0.0
  %v2366 = vadd.f32 %v2346, 0.0
  %v2367 = vadd.f32 %v2347, 0.0
  %v2368 = vadd.f32 %v2348, 0.0
  %v2369 = vadd.f32 %v2349, 0.0
  %v2370 = vadd.f32 %v2350, 0.0
  %v2371 = vadd.f32 %v2351, 0.0
  %v2372 = vadd.f32 %v2352, 0.0
  %v2373 = vadd.f32 %v2353, 0.0
  %v2374 = vadd.f32 %v2354, 0.0
  %v2375 = vadd.f32 %v2355, 0.0
  %v2376 = vadd.f32 %v2356, 0.0
  %v2377 = vadd.f32 %v2357, 0.0
  %v2378 = vmul.f32 %v2227, %v1831
  %v2379 = vmul.f32 %v2228, %v1835
  %v2380 = vmul.f32 %v2229, %v1839
  %v2381 = vmul.f32 %v2230, %v1843
  %v2382 = vmul.f32 %v2231, %v1847
  %v2383 = vmul.f32 %v2232, %v1851
  %v2384 = vmul.f32 %v2233, %v1855
  %v2385 = vmul.f32 %v2234, %v1859
  %v2386 = vmul.f32 %v2235, %v1863
  %v2387 = vmul.f32 %v2236, %v1867
  %v2388 = vmul.f32 %v2237, %v1871
  %v2389 = vmul.f32 %v2238, %v1875
  %v2390 = vmul.f32 %v2239, %v1879
  %v2391 = vmul.f32 %v2240, %v1883
  %v2392 = vmul.f32 %v2241, %v1887
  %v2393 = vmul.f32 %v2242, %v1891
  %v2394 = vmul.f32 %v2243, %v1895
  %v2395 = vmul.f32 %v2244, %v1899
  %v2396 = vmul.f32 %v2245, %v1903
  %v2397 = vmul.f32 %v2246, %v1907
  %v2398 = vsel %vm438, %v2378, 0.0
  %v2399 = vsel %vm438, %v2379, 0.0
  %v2400 = vadd.f32 %v2398, %v2399
  %v2401 = vsel %vm438, %v2380, 0.0
  %v2402 = vadd.f32 %v2400, %v2401
  %v2403 = vsel %vm438, %v2381, 0.0
  %v2404 = vadd.f32 %v2402, %v2403
  %v2405 = vsel %vm438, %v2382, 0.0
  %v2406 = vadd.f32 %v2404, %v2405
  %v2407 = vsel %vm438, %v2383, 0.0
  %v2408 = vadd.f32 %v2406, %v2407
  %v2409 = vsel %vm438, %v2384, 0.0
  %v2410 = vadd.f32 %v2408, %v2409
  %v2411 = vsel %vm438, %v2385, 0.0
  %v2412 = vadd.f32 %v2410, %v2411
  %v2413 = vsel %vm438, %v2386, 0.0
  %v2414 = vadd.f32 %v2412, %v2413
  %v2415 = vsel %vm438, %v2387, 0.0
  %v2416 = vadd.f32 %v2414, %v2415
  %v2417 = vsel %vm438, %v2388, 0.0
  %v2418 = vadd.f32 %v2416, %v2417
  %v2419 = vsel %vm438, %v2389, 0.0
  %v2420 = vadd.f32 %v2418, %v2419
  %v2421 = vsel %vm438, %v2390, 0.0
  %v2422 = vadd.f32 %v2420, %v2421
  %v2423 = vsel %vm438, %v2391, 0.0
  %v2424 = vadd.f32 %v2422, %v2423
  %v2425 = vsel %vm438, %v2392, 0.0
  %v2426 = vadd.f32 %v2424, %v2425
  %v2427 = vsel %vm438, %v2393, 0.0
  %v2428 = vadd.f32 %v2426, %v2427
  %v2429 = vsel %vm438, %v2394, 0.0
  %v2430 = vadd.f32 %v2428, %v2429
  %v2431 = vsel %vm438, %v2395, 0.0
  %v2432 = vadd.f32 %v2430, %v2431
  %v2433 = vsel %vm438, %v2396, 0.0
  %v2434 = vadd.f32 %v2432, %v2433
  %v2435 = vsel %vm438, %v2397, 0.0
  %v2436 = vadd.f32 %v2434, %v2435
  %2437 = vadd.xlane.f32.xlu0 %v2436
  %v2438 = vpop.xlane.xlu0 %2437
  %v2439 = vrot.slane %v2438, 4
  %v2440 = vadd.f32 %v2438, %v2439
  %v2441 = vrot.slane %v2440, 2
  %v2442 = vadd.f32 %v2440, %v2441
  %v2443 = vrot.slane %v2442, 1
  %v2444 = vadd.f32 %v2442, %v2443
  %s2445 = vtos %v2444
  %v2446 = vrcp.pop 1280.0
  %v2447 = vmul.f32 1280.0, %v2446
  %v2448 = vsub.f32 1.0, %v2447
  %v2449 = vmul.f32 %v2446, %v2448
  %v2450 = vadd.f32 %v2446, %v2449
  %vm2451 = vweird.f32 %v2446
  %v2452 = vsel %vm2451, %v2446, %v2450
  %s2453 = vtos %v2452
  %s2454 = smul.f32 %s2445, %s2453
  %s2455 = sadd.f32 %s2454, 1e-08
  %v2456 = vstv %s2455
  %v2457 = vrsqrt.pop %v2456
  %v2458 = vmul.f32 %v2457, %v2456
  %v2459 = vmul.f32 %v2458, %v2457
  %v2460 = vmul.f32 0.5, %v2459
  %v2461 = vsub.f32 1.5, %v2460
  %v2462 = vmul.f32 %v2457, %v2461
  %vm2463 = vweird.f32 %v2456
  %vm2464 = vweird.f32 %v2457
  %vm2465 = vmor %vm2463, %vm2464
  %v2466 = vsel %vm2465, %v2457, %v2462
  %s2467 = vtos %v2466
  %v2468 = vstv %s2467
  %v2469 = vmul.f32 %v1591, %v2468
  %v2470 = vmul.f32 %v1592, %v2468
  %v2471 = vmul.f32 %v1593, %v2468
  %v2472 = vmul.f32 %v1594, %v2468
  %v2473 = vmul.f32 %v1595, %v2468
  %v2474 = vmul.f32 %v1596, %v2468
  %v2475 = vmul.f32 %v1597, %v2468
  %v2476 = vmul.f32 %v1598, %v2468
  %v2477 = vmul.f32 %v1599, %v2468
  %v2478 = vmul.f32 %v1600, %v2468
  %v2479 = vmul.f32 %v1601, %v2468
  %v2480 = vmul.f32 %v1602, %v2468
  %v2481 = vmul.f32 %v1603, %v2468
  %v2482 = vmul.f32 %v1604, %v2468
  %v2483 = vmul.f32 %v1605, %v2468
  %v2484 = vmul.f32 %v1606, %v2468
  %v2485 = vmul.f32 %v1607, %v2468
  %v2486 = vmul.f32 %v1608, %v2468
  %v2487 = vmul.f32 %v1609, %v2468
  %v2488 = vmul.f32 %v1610, %v2468
  %2509 = vrot.lane.b32.xlu0 %v2469, 127
  %v2510 = vpop.permute.xlu0 %2509
  %2511 = vrot.lane.b32.xlu0 %v2470, 127
  %v2512 = vpop.permute.xlu0 %2511
  %2513 = vrot.lane.b32.xlu0 %v2471, 127
  %v2514 = vpop.permute.xlu0 %2513
  %2515 = vrot.lane.b32.xlu0 %v2472, 127
  %v2516 = vpop.permute.xlu0 %2515
  %2517 = vrot.lane.b32.xlu0 %v2473, 127
  %v2518 = vpop.permute.xlu0 %2517
  %2519 = vrot.lane.b32.xlu0 %v2474, 127
  %v2520 = vpop.permute.xlu0 %2519
  %2521 = vrot.lane.b32.xlu0 %v2475, 127
  %v2522 = vpop.permute.xlu0 %2521
  %2523 = vrot.lane.b32.xlu0 %v2476, 127
  %v2524 = vpop.permute.xlu0 %2523
  %2525 = vrot.lane.b32.xlu0 %v2477, 127
  %v2526 = vpop.permute.xlu0 %2525
  %2527 = vrot.lane.b32.xlu0 %v2478, 127
  %v2528 = vpop.permute.xlu0 %2527
  %2529 = vrot.lane.b32.xlu0 %v2479, 127
  %v2530 = vpop.permute.xlu0 %2529
  %2531 = vrot.lane.b32.xlu0 %v2480, 127
  %v2532 = vpop.permute.xlu0 %2531
  %2533 = vrot.lane.b32.xlu0 %v2481, 127
  %v2534 = vpop.permute.xlu0 %2533
  %2535 = vrot.lane.b32.xlu0 %v2482, 127
  %v2536 = vpop.permute.xlu0 %2535
  %2537 = vrot.lane.b32.xlu0 %v2483, 127
  %v2538 = vpop.permute.xlu0 %2537
  %2539 = vrot.lane.b32.xlu0 %v2484, 127
  %v2540 = vpop.permute.xlu0 %2539
  %2541 = vrot.lane.b32.xlu0 %v2485, 127
  %v2542 = vpop.permute.xlu0 %2541
  %2543 = vrot.lane.b32.xlu0 %v2486, 127
  %v2544 = vpop.permute.xlu0 %2543
  %2545 = vrot.lane.b32.xlu0 %v2487, 127
  %v2546 = vpop.permute.xlu0 %2545
  %2547 = vrot.lane.b32.xlu0 %v2488, 127
  %v2548 = vpop.permute.xlu0 %2547
  %v2569 = vadd.f32 %v2358, %v2510
  %v2570 = vadd.f32 %v2359, %v2512
  %v2571 = vadd.f32 %v2360, %v2514
  %v2572 = vadd.f32 %v2361, %v2516
  %v2573 = vadd.f32 %v2362, %v2518
  %v2574 = vadd.f32 %v2363, %v2520
  %v2575 = vadd.f32 %v2364, %v2522
  %v2576 = vadd.f32 %v2365, %v2524
  %v2577 = vadd.f32 %v2366, %v2526
  %v2578 = vadd.f32 %v2367, %v2528
  %v2579 = vadd.f32 %v2368, %v2530
  %v2580 = vadd.f32 %v2369, %v2532
  %v2581 = vadd.f32 %v2370, %v2534
  %v2582 = vadd.f32 %v2371, %v2536
  %v2583 = vadd.f32 %v2372, %v2538
  %v2584 = vadd.f32 %v2373, %v2540
  %v2585 = vadd.f32 %v2374, %v2542
  %v2586 = vadd.f32 %v2375, %v2544
  %v2587 = vadd.f32 %v2376, %v2546
  %v2588 = vadd.f32 %v2377, %v2548
  %2590 = vset.pattern.permute.xlu0 0
  %2591 = vperm.xlu0 %2590, %v2569
  %v2592 = vpop.permute.xlu0 %2591
  %2595 = vset.pattern.permute.xlu0 0
  %2596 = vperm.xlu0 %2595, %v2570
  %v2597 = vpop.permute.xlu0 %2596
  %2600 = vset.pattern.permute.xlu0 0
  %2601 = vperm.xlu0 %2600, %v2571
  %v2602 = vpop.permute.xlu0 %2601
  %2605 = vset.pattern.permute.xlu0 0
  %2606 = vperm.xlu0 %2605, %v2572
  %v2607 = vpop.permute.xlu0 %2606
  %2610 = vset.pattern.permute.xlu0 0
  %2611 = vperm.xlu0 %2610, %v2573
  %v2612 = vpop.permute.xlu0 %2611
  %2615 = vset.pattern.permute.xlu0 0
  %2616 = vperm.xlu0 %2615, %v2574
  %v2617 = vpop.permute.xlu0 %2616
  %2620 = vset.pattern.permute.xlu0 0
  %2621 = vperm.xlu0 %2620, %v2575
  %v2622 = vpop.permute.xlu0 %2621
  %2625 = vset.pattern.permute.xlu0 0
  %2626 = vperm.xlu0 %2625, %v2576
  %v2627 = vpop.permute.xlu0 %2626
  %2630 = vset.pattern.permute.xlu0 0
  %2631 = vperm.xlu0 %2630, %v2577
  %v2632 = vpop.permute.xlu0 %2631
  %2635 = vset.pattern.permute.xlu0 0
  %2636 = vperm.xlu0 %2635, %v2578
  %v2637 = vpop.permute.xlu0 %2636
  %2640 = vset.pattern.permute.xlu0 0
  %2641 = vperm.xlu0 %2640, %v2579
  %v2642 = vpop.permute.xlu0 %2641
  %2645 = vset.pattern.permute.xlu0 0
  %2646 = vperm.xlu0 %2645, %v2580
  %v2647 = vpop.permute.xlu0 %2646
  %2650 = vset.pattern.permute.xlu0 0
  %2651 = vperm.xlu0 %2650, %v2581
  %v2652 = vpop.permute.xlu0 %2651
  %2655 = vset.pattern.permute.xlu0 0
  %2656 = vperm.xlu0 %2655, %v2582
  %v2657 = vpop.permute.xlu0 %2656
  %2660 = vset.pattern.permute.xlu0 0
  %2661 = vperm.xlu0 %2660, %v2583
  %v2662 = vpop.permute.xlu0 %2661
  %2665 = vset.pattern.permute.xlu0 0
  %2666 = vperm.xlu0 %2665, %v2584
  %v2667 = vpop.permute.xlu0 %2666
  %2670 = vset.pattern.permute.xlu0 0
  %2671 = vperm.xlu0 %2670, %v2585
  %v2672 = vpop.permute.xlu0 %2671
  %2675 = vset.pattern.permute.xlu0 0
  %2676 = vperm.xlu0 %2675, %v2586
  %v2677 = vpop.permute.xlu0 %2676
  %2680 = vset.pattern.permute.xlu0 0
  %2681 = vperm.xlu0 %2680, %v2587
  %v2682 = vpop.permute.xlu0 %2681
  %2685 = vset.pattern.permute.xlu0 0
  %2686 = vperm.xlu0 %2685, %v2588
  %v2687 = vpop.permute.xlu0 %2686
  %v2689 = vmul.f32 %v2207, %v2592
  %v2690 = vmul.f32 %v2208, %v2597
  %v2691 = vmul.f32 %v2209, %v2602
  %v2692 = vmul.f32 %v2210, %v2607
  %v2693 = vmul.f32 %v2211, %v2612
  %v2694 = vmul.f32 %v2212, %v2617
  %v2695 = vmul.f32 %v2213, %v2622
  %v2696 = vmul.f32 %v2214, %v2627
  %v2697 = vmul.f32 %v2215, %v2632
  %v2698 = vmul.f32 %v2216, %v2637
  %v2699 = vmul.f32 %v2217, %v2642
  %v2700 = vmul.f32 %v2218, %v2647
  %v2701 = vmul.f32 %v2219, %v2652
  %v2702 = vmul.f32 %v2220, %v2657
  %v2703 = vmul.f32 %v2221, %v2662
  %v2704 = vmul.f32 %v2222, %v2667
  %v2705 = vmul.f32 %v2223, %v2672
  %v2706 = vmul.f32 %v2224, %v2677
  %v2707 = vmul.f32 %v2225, %v2682
  %v2708 = vmul.f32 %v2226, %v2687
  %v2709 = vld [vmem:[%s6] sm:$0x1]
  %v2711 = vperm.slane %v2709, 0
  %v2713 = vmul.f32 %v2689, %v2711
  %v2714 = vmul.f32 %v2690, %v2711
  %v2715 = vmul.f32 %v2691, %v2711
  %v2716 = vmul.f32 %v2692, %v2711
  %v2717 = vmul.f32 %v2693, %v2711
  %v2718 = vmul.f32 %v2694, %v2711
  %v2719 = vmul.f32 %v2695, %v2711
  %v2720 = vmul.f32 %v2696, %v2711
  %v2721 = vmul.f32 %v2697, %v2711
  %v2722 = vmul.f32 %v2698, %v2711
  %v2723 = vmul.f32 %v2699, %v2711
  %v2724 = vmul.f32 %v2700, %v2711
  %v2725 = vmul.f32 %v2701, %v2711
  %v2726 = vmul.f32 %v2702, %v2711
  %v2727 = vmul.f32 %v2703, %v2711
  %v2728 = vmul.f32 %v2704, %v2711
  %v2729 = vmul.f32 %v2705, %v2711
  %v2730 = vmul.f32 %v2706, %v2711
  %v2731 = vmul.f32 %v2707, %v2711
  %v2732 = vmul.f32 %v2708, %v2711
  %v2733 = vld [vmem:[%s7] sm:$0x1]
  %v2735 = vperm.slane %v2733, 0
  %v2737 = vadd.f32 %v2713, %v2735
  %v2738 = vadd.f32 %v2714, %v2735
  %v2739 = vadd.f32 %v2715, %v2735
  %v2740 = vadd.f32 %v2716, %v2735
  %v2741 = vadd.f32 %v2717, %v2735
  %v2742 = vadd.f32 %v2718, %v2735
  %v2743 = vadd.f32 %v2719, %v2735
  %v2744 = vadd.f32 %v2720, %v2735
  %v2745 = vadd.f32 %v2721, %v2735
  %v2746 = vadd.f32 %v2722, %v2735
  %v2747 = vadd.f32 %v2723, %v2735
  %v2748 = vadd.f32 %v2724, %v2735
  %v2749 = vadd.f32 %v2725, %v2735
  %v2750 = vadd.f32 %v2726, %v2735
  %v2751 = vadd.f32 %v2727, %v2735
  %v2752 = vadd.f32 %v2728, %v2735
  %v2753 = vadd.f32 %v2729, %v2735
  %v2754 = vadd.f32 %v2730, %v2735
  %v2755 = vadd.f32 %v2731, %v2735
  %v2756 = vadd.f32 %v2732, %v2735
  %v2757 = vld [vmem:[%s0] sm:$0xff]
  %v2758 = vld [vmem:[%s0 + $0x8] sm:$0xff]
  %v2759 = vld [vmem:[%s0 + $0x10] sm:$0xff]
  %v2760 = vld [vmem:[%s0 + $0x18] sm:$0xff]
  %v2761 = vld [vmem:[%s0 + $0x20] sm:$0xff]
  %v2762 = vld [vmem:[%s0 + $0x28] sm:$0xff]
  %v2763 = vld [vmem:[%s0 + $0x30] sm:$0xff]
  %v2764 = vld [vmem:[%s0 + $0x38] sm:$0xff]
  %v2765 = vld [vmem:[%s0 + $0x40] sm:$0xff]
  %v2766 = vld [vmem:[%s0 + $0x48] sm:$0xff]
  %v2767 = vld [vmem:[%s0 + $0x50] sm:$0xff]
  %v2768 = vld [vmem:[%s0 + $0x58] sm:$0xff]
  %v2769 = vld [vmem:[%s0 + $0x60] sm:$0xff]
  %v2770 = vld [vmem:[%s0 + $0x68] sm:$0xff]
  %v2771 = vld [vmem:[%s0 + $0x70] sm:$0xff]
  %v2772 = vld [vmem:[%s0 + $0x78] sm:$0xff]
  %v2773 = vld [vmem:[%s0 + $0x80] sm:$0xff]
  %v2774 = vld [vmem:[%s0 + $0x88] sm:$0xff]
  %v2775 = vld [vmem:[%s0 + $0x90] sm:$0xff]
  %v2776 = vld [vmem:[%s0 + $0x98] sm:$0xff]
  %v2777 = vadd.f32 %v2737, %v2757
  %v2778 = vadd.f32 %v2738, %v2758
  %v2779 = vadd.f32 %v2739, %v2759
  %v2780 = vadd.f32 %v2740, %v2760
  %v2781 = vadd.f32 %v2741, %v2761
  %v2782 = vadd.f32 %v2742, %v2762
  %v2783 = vadd.f32 %v2743, %v2763
  %v2784 = vadd.f32 %v2744, %v2764
  %v2785 = vadd.f32 %v2745, %v2765
  %v2786 = vadd.f32 %v2746, %v2766
  %v2787 = vadd.f32 %v2747, %v2767
  %v2788 = vadd.f32 %v2748, %v2768
  %v2789 = vadd.f32 %v2749, %v2769
  %v2790 = vadd.f32 %v2750, %v2770
  %v2791 = vadd.f32 %v2751, %v2771
  %v2792 = vadd.f32 %v2752, %v2772
  %v2793 = vadd.f32 %v2753, %v2773
  %v2794 = vadd.f32 %v2754, %v2774
  %v2795 = vadd.f32 %v2755, %v2775
  %v2796 = vadd.f32 %v2756, %v2776
  %2797 = vst.msk [vmem:[%s9] sm:$0xff] %vm438, %v2777
  %2798 = vst.msk [vmem:[%s9 + $0x8] sm:$0xff] %vm438, %v2778
  %2799 = vst.msk [vmem:[%s9 + $0x10] sm:$0xff] %vm438, %v2779
  %2800 = vst.msk [vmem:[%s9 + $0x18] sm:$0xff] %vm438, %v2780
  %2801 = vst.msk [vmem:[%s9 + $0x20] sm:$0xff] %vm438, %v2781
  %2802 = vst.msk [vmem:[%s9 + $0x28] sm:$0xff] %vm438, %v2782
  %2803 = vst.msk [vmem:[%s9 + $0x30] sm:$0xff] %vm438, %v2783
  %2804 = vst.msk [vmem:[%s9 + $0x38] sm:$0xff] %vm438, %v2784
  %2805 = vst.msk [vmem:[%s9 + $0x40] sm:$0xff] %vm438, %v2785
  %2806 = vst.msk [vmem:[%s9 + $0x48] sm:$0xff] %vm438, %v2786
  %2807 = vst.msk [vmem:[%s9 + $0x50] sm:$0xff] %vm438, %v2787
  %2808 = vst.msk [vmem:[%s9 + $0x58] sm:$0xff] %vm438, %v2788
  %2809 = vst.msk [vmem:[%s9 + $0x60] sm:$0xff] %vm438, %v2789
  %2810 = vst.msk [vmem:[%s9 + $0x68] sm:$0xff] %vm438, %v2790
  %2811 = vst.msk [vmem:[%s9 + $0x70] sm:$0xff] %vm438, %v2791
  %2812 = vst.msk [vmem:[%s9 + $0x78] sm:$0xff] %vm438, %v2792
  %2813 = vst.msk [vmem:[%s9 + $0x80] sm:$0xff] %vm438, %v2793
  %2814 = vst.msk [vmem:[%s9 + $0x88] sm:$0xff] %vm438, %v2794
  %2815 = vst.msk [vmem:[%s9 + $0x90] sm:$0xff] %vm438, %v2795
  %2816 = vst.msk [vmem:[%s9 + $0x98] sm:$0xff] %vm438, %v2796
  // Predicated region
  $region38: #{sep_block.3} parent=0 // pred_check
    _
  $region39: #{sep_block.3} parent=0 // pred_check_branch
    %2818 = sbr.rel (0) target = $region41
  $region40: #{sep_block.3} parent=0 // pred_region
    _
  $region41: #{sep_block.3} parent=0 // pred_fallthru
    _
  // Predicated region
  $region42: #{sep_block.3} parent=0 // pred_check
    _
  $region43: #{sep_block.3} parent=0 // pred_check_branch
    %2820 = sbr.rel (0) target = $region45
  $region44: #{sep_block.3} parent=0 // pred_region
    _
  $region45: #{sep_block.3} parent=0 // pred_fallthru
    _

</llo_original>
